<compile_context>
chip_gen: v6e
topology: v6e:2x2x1
jax: 0.10.0
libtpu: 0.0.40
codegen_flags: <defaults>
</compile_context>

<pallas_src>
import jax
import jax.numpy as jnp
from jax import lax
from jax.experimental import pallas as pl
from jax.experimental.pallas import tpu as pltpu

# Problem sizes (channel counts are fixed by the module definition).
N, H, W = 2, 16, 16
CIN, CMID = 256, 32
KH = KW = 3
NTAP = KH * KW            # 9
M = N * H * W             # 512 matmul rows
EPS = 1e-5
LEAK = 0.2


def _se_block_kernel(x_ref, w1_ref, g1_ref, be1_ref, w2_ref, g2_ref, be2_ref,
                     out_ref, patches_ref):
    """Whole SE block in one grid step; everything resident in VMEM.

    x_ref      : (N, H, W, CIN)   original input (f32); also used for the gate
    w1_ref     : (CIN, 9*CMID)    conv1 weights, tap-major columns, bf16
    w2_ref     : (9*CMID, CIN)    conv2 weights, tap-major rows, bf16
    g*/be*     : (1, C)           BN gamma / beta (f32)
    out_ref    : (N, H, W, CIN)   f32, aliased with x in HBM
    patches_ref: (M, 9*CMID)      f32 VMEM scratch for conv2's im2col
    """
    f32 = jnp.float32
    bf16 = jnp.bfloat16

    # ---- conv1: ONE (M,256)x(256,288) bf16 MXU matmul on the UNPADDED rows -
    xb = x_ref[...].astype(bf16).reshape(M, CIN)
    r = jnp.dot(xb, w1_ref[...], preferred_element_type=f32)       # (M, 288) f32
    r4 = r.reshape(N, H, W, NTAP * CMID)

    # Zero-pad the per-tap outputs spatially (the conv's padding=1 halo) in
    # registers, then shift-and-add the nine 32-wide tap blocks.
    zr = jnp.zeros((N, 1, W, NTAP * CMID), f32)
    r4p = jnp.concatenate([zr, r4, zr], axis=1)                     # (N, H+2, W, 288)
    zc = jnp.zeros((N, H + 2, 1, NTAP * CMID), f32)
    r4p = jnp.concatenate([zc, r4p, zc], axis=2)                    # (N, H+2, W+2, 288)

    acc1 = None
    for ky in range(KH):
        for kx in range(KW):
            t = ky * KW + kx
            term = r4p[:, ky:ky + H, kx:kx + W, t * CMID:(t + 1) * CMID]
            acc1 = term if acc1 is None else acc1 + term
    acc1 = acc1.reshape(M, CMID)
    # conv1 bias omitted: zero at init and cancels in training-mode BN anyway.

    # ---- bn1 (batch stats over N*H*W, centered variance) + leaky relu ------
    mu1 = jnp.mean(acc1, axis=0, keepdims=True)
    d1 = acc1 - mu1
    var1 = jnp.mean(d1 * d1, axis=0, keepdims=True)
    h = d1 * (g1_ref[...] * lax.rsqrt(var1 + EPS)) + be1_ref[...]
    h = jnp.where(h >= 0, h, LEAK * h)                              # (M, 32) f32

    # ---- conv2: im2col into a VMEM scratch -> ONE (M,288)x(288,256) matmul -
    h4 = h.reshape(N, H, W, CMID)
    zr2 = jnp.zeros((N, 1, W, CMID), f32)
    hp = jnp.concatenate([zr2, h4, zr2], axis=1)                    # (N, H+2, W, 32)
    zc2 = jnp.zeros((N, H + 2, 1, CMID), f32)
    hp = jnp.concatenate([zc2, hp, zc2], axis=2)                    # (N, H+2, W+2, 32)

    for ky in range(KH):
        for kx in range(KW):
            t = ky * KW + kx
            patches_ref[:, t * CMID:(t + 1) * CMID] = (
                hp[:, ky:ky + H, kx:kx + W, :].reshape(M, CMID))

    acc2 = jnp.dot(patches_ref[...].astype(bf16), w2_ref[...],
                   preferred_element_type=f32)                      # (M, 256) f32
    # conv2 bias omitted for the same reason as conv1.

    # ---- bn2 (batch stats, centered variance) -------------------------------
    mu2 = jnp.mean(acc2, axis=0, keepdims=True)
    d2 = acc2 - mu2
    var2 = jnp.mean(d2 * d2, axis=0, keepdims=True)
    y = d2 * (g2_ref[...] * lax.rsqrt(var2 + EPS)) + be2_ref[...]

    # ---- spatial mean -> exact softmax over channels -> gate the input -----
    v = jnp.mean(y.reshape(N, H * W, CIN), axis=1)                  # (N, 256)
    v = v - jnp.max(v, axis=1, keepdims=True)
    e = jnp.exp(v)
    s = e / jnp.sum(e, axis=1, keepdims=True)                       # exact divide

    out_ref[...] = s[:, None, None, :] * x_ref[...]


def _full_spec(shape):
    # Full-array block (single grid step).
    return pl.BlockSpec(shape, lambda i: (0,) * len(shape))


@jax.jit
def se_block_forward(x_nchw, w1, b1, g1, be1, w2, b2, g2, be2):
    """x_nchw: (N, 256, H, W) float32, like the PyTorch module input."""
    del b1, b2  # zero at init; also cancel under training-mode BatchNorm

    x = jnp.transpose(x_nchw, (0, 2, 3, 1))                         # NCHW -> NHWC
    # Repack weights: conv1 -> (256, 9*32) tap-major columns; conv2 -> (9*32, 256).
    w1f = jnp.transpose(w1, (2, 0, 1, 3)).reshape(CIN, NTAP * CMID).astype(jnp.bfloat16)
    w2f = w2.reshape(NTAP * CMID, CIN).astype(jnp.bfloat16)

    out_nhwc = pl.pallas_call(
        _se_block_kernel,
        out_shape=jax.ShapeDtypeStruct((N, H, W, CIN), jnp.float32),
        grid=(1,),
        in_specs=[
            _full_spec((N, H, W, CIN)),
            _full_spec((CIN, NTAP * CMID)),
            _full_spec((1, CMID)), _full_spec((1, CMID)),
            _full_spec((NTAP * CMID, CIN)),
            _full_spec((1, CIN)), _full_spec((1, CIN)),
        ],
        out_specs=_full_spec((N, H, W, CIN)),
        scratch_shapes=[pltpu.VMEM((M, NTAP * CMID), jnp.float32)],
        input_output_aliases={0: 0},
        cost_estimate=pl.CostEstimate(
            flops=2 * (2 * M * CIN * NTAP * CMID),           # conv1 + conv2
            transcendentals=N * CIN,
            bytes_accessed=2 * M * CIN * 4 + 2 * CIN * NTAP * CMID * 2),
        compiler_params=pltpu.CompilerParams(
            dimension_semantics=("arbitrary",)),
    )(x, w1f, g1, be1, w2f, g2, be2)

    return jnp.transpose(out_nhwc, (0, 3, 1, 2))                    # NHWC -> NCHW


def init_params(key):
    k1, k2 = jax.random.split(key)
    # conv weights ~ N(0, 0.001), stored tap-major (ky, kx, Cin, Cout)
    w1 = 0.001 * jax.random.normal(k1, (KH, KW, CIN, CMID), jnp.float32)
    w2 = 0.001 * jax.random.normal(k2, (KH, KW, CMID, CIN), jnp.float32)
    b1 = jnp.zeros((1, CMID), jnp.float32)
    b2 = jnp.zeros((1, CIN), jnp.float32)
    # BatchNorm default init: gamma=1, beta=0
    g1, be1 = jnp.ones((1, CMID), jnp.float32), jnp.zeros((1, CMID), jnp.float32)
    g2, be2 = jnp.ones((1, CIN), jnp.float32), jnp.zeros((1, CIN), jnp.float32)
    return w1, b1, g1, be1, w2, b2, g2, be2


if __name__ == "__main__":
    key = jax.random.PRNGKey(0)
    kx, kp = jax.random.split(key)
    x = jax.random.normal(kx, (N, CIN, H, W), jnp.float32)          # NCHW like PyTorch
    params = init_params(kp)

    out = se_block_forward(x, *params)
    jax.block_until_ready(out)

    assert out.shape == (N, CIN, H, W)
    assert bool(jnp.all(jnp.isfinite(out)))
    print("KERNEL_OK")
</pallas_src>

<mosaic_0001>
module attributes {stable_mosaic.version = 11 : i64} {
  func.func @_se_block_kernel(%arg0: i32, %arg1: memref<2x16x16x256xf32, #tpu.memory_space<vmem>>, %arg2: memref<256x288xbf16, #tpu.memory_space<vmem>>, %arg3: memref<1x32xf32, #tpu.memory_space<vmem>>, %arg4: memref<1x32xf32, #tpu.memory_space<vmem>>, %arg5: memref<288x256xbf16, #tpu.memory_space<vmem>>, %arg6: memref<1x256xf32, #tpu.memory_space<vmem>>, %arg7: memref<1x256xf32, #tpu.memory_space<vmem>>, %arg8: memref<2x16x16x256xf32, #tpu.memory_space<vmem>>, %arg9: memref<512x288xf32, #tpu.memory_space<vmem>>) attributes {dimension_semantics = [#tpu.dimension_semantics<arbitrary>], iteration_bounds = array<i64: 1>, scalar_prefetch = 0 : i64, scratch_operands = 1 : i64, tpu.core_type = #tpu.core_type<tc>, window_params = [{pipeline_mode = #tpu.pipeline_mode<synchronous>, transform_indices = @transform_0, window_bounds = array<i64: 2, 16, 16, 256>}, {pipeline_mode = #tpu.pipeline_mode<synchronous>, transform_indices = @transform_1, window_bounds = array<i64: 256, 288>}, {pipeline_mode = #tpu.pipeline_mode<synchronous>, transform_indices = @transform_2, window_bounds = array<i64: 1, 32>}, {pipeline_mode = #tpu.pipeline_mode<synchronous>, transform_indices = @transform_3, window_bounds = array<i64: 1, 32>}, {pipeline_mode = #tpu.pipeline_mode<synchronous>, transform_indices = @transform_4, window_bounds = array<i64: 288, 256>}, {pipeline_mode = #tpu.pipeline_mode<synchronous>, transform_indices = @transform_5, window_bounds = array<i64: 1, 256>}, {pipeline_mode = #tpu.pipeline_mode<synchronous>, transform_indices = @transform_6, window_bounds = array<i64: 1, 256>}, {pipeline_mode = #tpu.pipeline_mode<synchronous>, transform_indices = @transform_7, window_bounds = array<i64: 2, 16, 16, 256>}]} {
    %c0 = arith.constant 0 : index
    %c0_0 = arith.constant 0 : index
    %c0_1 = arith.constant 0 : index
    %c0_2 = arith.constant 0 : index
    %0 = vector.load %arg1[%c0, %c0_0, %c0_1, %c0_2] : memref<2x16x16x256xf32, #tpu.memory_space<vmem>>, vector<2x16x16x256xf32>
    %1 = arith.truncf %0 : vector<2x16x16x256xf32> to vector<2x16x16x256xbf16>
    %2 = vector.shape_cast %1 : vector<2x16x16x256xbf16> to vector<512x256xbf16>
    %c0_3 = arith.constant 0 : index
    %c0_4 = arith.constant 0 : index
    %3 = vector.load %arg2[%c0_3, %c0_4] : memref<256x288xbf16, #tpu.memory_space<vmem>>, vector<256x288xbf16>
    %cst = arith.constant dense<0.000000e+00> : vector<512x288xf32>
    %4 = tpu.matmul %2, %3, %cst {dimension_numbers = #tpu.dot_dimension_numbers<[1], [0], [0], [1], [0, 0, 1, 1], [], []>} : vector<512x256xbf16>, vector<256x288xbf16>, vector<512x288xf32> -> vector<512x288xf32>
    %5 = vector.shape_cast %4 : vector<512x288xf32> to vector<2x16x16x288xf32>
    %cst_5 = arith.constant 0.000000e+00 : f32
    %6 = vector.broadcast %cst_5 : f32 to vector<2x1x16x288xf32>
    %7 = tpu.concatenate %6, %5, %6 in 1 : vector<2x1x16x288xf32>, vector<2x16x16x288xf32>, vector<2x1x16x288xf32> -> vector<2x18x16x288xf32>
    %cst_6 = arith.constant 0.000000e+00 : f32
    %8 = vector.broadcast %cst_6 : f32 to vector<2x18x1x288xf32>
    %9 = tpu.concatenate %8, %7, %8 in 2 : vector<2x18x1x288xf32>, vector<2x18x16x288xf32>, vector<2x18x1x288xf32> -> vector<2x18x18x288xf32>
    %10 = vector.extract_strided_slice %9 {offsets = [0, 0, 0, 0], sizes = [2, 16, 16, 32], strides = [1, 1, 1, 1]} : vector<2x18x18x288xf32> to vector<2x16x16x32xf32>
    %11 = vector.extract_strided_slice %9 {offsets = [0, 0, 1, 32], sizes = [2, 16, 16, 32], strides = [1, 1, 1, 1]} : vector<2x18x18x288xf32> to vector<2x16x16x32xf32>
    %12 = arith.addf %10, %11 : vector<2x16x16x32xf32>
    %13 = vector.extract_strided_slice %9 {offsets = [0, 0, 2, 64], sizes = [2, 16, 16, 32], strides = [1, 1, 1, 1]} : vector<2x18x18x288xf32> to vector<2x16x16x32xf32>
    %14 = arith.addf %12, %13 : vector<2x16x16x32xf32>
    %15 = vector.extract_strided_slice %9 {offsets = [0, 1, 0, 96], sizes = [2, 16, 16, 32], strides = [1, 1, 1, 1]} : vector<2x18x18x288xf32> to vector<2x16x16x32xf32>
    %16 = arith.addf %14, %15 : vector<2x16x16x32xf32>
    %17 = vector.extract_strided_slice %9 {offsets = [0, 1, 1, 128], sizes = [2, 16, 16, 32], strides = [1, 1, 1, 1]} : vector<2x18x18x288xf32> to vector<2x16x16x32xf32>
    %18 = arith.addf %16, %17 : vector<2x16x16x32xf32>
    %19 = vector.extract_strided_slice %9 {offsets = [0, 1, 2, 160], sizes = [2, 16, 16, 32], strides = [1, 1, 1, 1]} : vector<2x18x18x288xf32> to vector<2x16x16x32xf32>
    %20 = arith.addf %18, %19 : vector<2x16x16x32xf32>
    %21 = vector.extract_strided_slice %9 {offsets = [0, 2, 0, 192], sizes = [2, 16, 16, 32], strides = [1, 1, 1, 1]} : vector<2x18x18x288xf32> to vector<2x16x16x32xf32>
    %22 = arith.addf %20, %21 : vector<2x16x16x32xf32>
    %23 = vector.extract_strided_slice %9 {offsets = [0, 2, 1, 224], sizes = [2, 16, 16, 32], strides = [1, 1, 1, 1]} : vector<2x18x18x288xf32> to vector<2x16x16x32xf32>
    %24 = arith.addf %22, %23 : vector<2x16x16x32xf32>
    %25 = vector.extract_strided_slice %9 {offsets = [0, 2, 2, 256], sizes = [2, 16, 16, 32], strides = [1, 1, 1, 1]} : vector<2x18x18x288xf32> to vector<2x16x16x32xf32>
    %26 = arith.addf %24, %25 : vector<2x16x16x32xf32>
    %27 = vector.shape_cast %26 : vector<2x16x16x32xf32> to vector<512x32xf32>
    %cst_7 = arith.constant dense<0.000000e+00> : vector<32xf32>
    %28 = vector.multi_reduction <add>, %27, %cst_7 [0] : vector<512x32xf32> to vector<32xf32>
    %29 = vector.shape_cast %28 : vector<32xf32> to vector<1x32xf32>
    %cst_8 = arith.constant 5.120000e+02 : f32
    %30 = vector.broadcast %cst_8 : f32 to vector<1x32xf32>
    %31 = arith.divf %29, %30 : vector<1x32xf32>
    %32 = vector.broadcast %31 : vector<1x32xf32> to vector<512x32xf32>
    %33 = arith.subf %27, %32 : vector<512x32xf32>
    %34 = arith.mulf %33, %33 : vector<512x32xf32>
    %cst_9 = arith.constant dense<0.000000e+00> : vector<32xf32>
    %35 = vector.multi_reduction <add>, %34, %cst_9 [0] : vector<512x32xf32> to vector<32xf32>
    %36 = vector.shape_cast %35 : vector<32xf32> to vector<1x32xf32>
    %cst_10 = arith.constant 5.120000e+02 : f32
    %37 = vector.broadcast %cst_10 : f32 to vector<1x32xf32>
    %38 = arith.divf %36, %37 : vector<1x32xf32>
    %c0_11 = arith.constant 0 : index
    %c0_12 = arith.constant 0 : index
    %39 = vector.load %arg3[%c0_11, %c0_12] : memref<1x32xf32, #tpu.memory_space<vmem>>, vector<1x32xf32>
    %cst_13 = arith.constant 9.99999974E-6 : f32
    %40 = vector.broadcast %cst_13 : f32 to vector<1x32xf32>
    %41 = arith.addf %38, %40 : vector<1x32xf32>
    %42 = math.rsqrt %41 : vector<1x32xf32>
    %43 = arith.mulf %39, %42 : vector<1x32xf32>
    %44 = vector.broadcast %43 : vector<1x32xf32> to vector<512x32xf32>
    %45 = arith.mulf %33, %44 : vector<512x32xf32>
    %c0_14 = arith.constant 0 : index
    %c0_15 = arith.constant 0 : index
    %46 = vector.load %arg4[%c0_14, %c0_15] : memref<1x32xf32, #tpu.memory_space<vmem>>, vector<1x32xf32>
    %47 = vector.broadcast %46 : vector<1x32xf32> to vector<512x32xf32>
    %48 = arith.addf %45, %47 : vector<512x32xf32>
    %cst_16 = arith.constant 0.000000e+00 : f32
    %49 = vector.broadcast %cst_16 : f32 to vector<512x32xf32>
    %50 = arith.cmpf oge, %48, %49 : vector<512x32xf32>
    %cst_17 = arith.constant 2.000000e-01 : f32
    %51 = vector.broadcast %cst_17 : f32 to vector<512x32xf32>
    %52 = arith.mulf %51, %48 : vector<512x32xf32>
    %53 = arith.select %50, %48, %52 : vector<512x32xi1>, vector<512x32xf32>
    %54 = vector.shape_cast %53 : vector<512x32xf32> to vector<2x16x16x32xf32>
    %cst_18 = arith.constant 0.000000e+00 : f32
    %55 = vector.broadcast %cst_18 : f32 to vector<2x1x16x32xf32>
    %56 = tpu.concatenate %55, %54, %55 in 1 : vector<2x1x16x32xf32>, vector<2x16x16x32xf32>, vector<2x1x16x32xf32> -> vector<2x18x16x32xf32>
    %cst_19 = arith.constant 0.000000e+00 : f32
    %57 = vector.broadcast %cst_19 : f32 to vector<2x18x1x32xf32>
    %58 = tpu.concatenate %57, %56, %57 in 2 : vector<2x18x1x32xf32>, vector<2x18x16x32xf32>, vector<2x18x1x32xf32> -> vector<2x18x18x32xf32>
    %59 = vector.extract_strided_slice %58 {offsets = [0, 0, 0, 0], sizes = [2, 16, 16, 32], strides = [1, 1, 1, 1]} : vector<2x18x18x32xf32> to vector<2x16x16x32xf32>
    %60 = vector.shape_cast %59 : vector<2x16x16x32xf32> to vector<512x32xf32>
    %c0_20 = arith.constant 0 : index
    %c0_21 = arith.constant 0 : index
    %61 = vector.load %arg9[%c0_20, %c0_21] : memref<512x288xf32, #tpu.memory_space<vmem>>, vector<512x32xf32>
    tpu.vector_store %arg9[%c0_20, %c0_21], %60 {strides = array<i32>} : memref<512x288xf32, #tpu.memory_space<vmem>>, vector<512x32xf32>,
    %62 = vector.extract_strided_slice %58 {offsets = [0, 0, 1, 0], sizes = [2, 16, 16, 32], strides = [1, 1, 1, 1]} : vector<2x18x18x32xf32> to vector<2x16x16x32xf32>
    %63 = vector.shape_cast %62 : vector<2x16x16x32xf32> to vector<512x32xf32>
    %c0_22 = arith.constant 0 : index
    %c32 = arith.constant 32 : index
    %64 = vector.load %arg9[%c0_22, %c32] : memref<512x288xf32, #tpu.memory_space<vmem>>, vector<512x32xf32>
    tpu.vector_store %arg9[%c0_22, %c32], %63 {strides = array<i32>} : memref<512x288xf32, #tpu.memory_space<vmem>>, vector<512x32xf32>,
    %65 = vector.extract_strided_slice %58 {offsets = [0, 0, 2, 0], sizes = [2, 16, 16, 32], strides = [1, 1, 1, 1]} : vector<2x18x18x32xf32> to vector<2x16x16x32xf32>
    %66 = vector.shape_cast %65 : vector<2x16x16x32xf32> to vector<512x32xf32>
    %c0_23 = arith.constant 0 : index
    %c64 = arith.constant 64 : index
    %67 = vector.load %arg9[%c0_23, %c64] : memref<512x288xf32, #tpu.memory_space<vmem>>, vector<512x32xf32>
    tpu.vector_store %arg9[%c0_23, %c64], %66 {strides = array<i32>} : memref<512x288xf32, #tpu.memory_space<vmem>>, vector<512x32xf32>,
    %68 = vector.extract_strided_slice %58 {offsets = [0, 1, 0, 0], sizes = [2, 16, 16, 32], strides = [1, 1, 1, 1]} : vector<2x18x18x32xf32> to vector<2x16x16x32xf32>
    %69 = vector.shape_cast %68 : vector<2x16x16x32xf32> to vector<512x32xf32>
    %c0_24 = arith.constant 0 : index
    %c96 = arith.constant 96 : index
    %70 = vector.load %arg9[%c0_24, %c96] : memref<512x288xf32, #tpu.memory_space<vmem>>, vector<512x32xf32>
    tpu.vector_store %arg9[%c0_24, %c96], %69 {strides = array<i32>} : memref<512x288xf32, #tpu.memory_space<vmem>>, vector<512x32xf32>,
    %71 = vector.extract_strided_slice %58 {offsets = [0, 1, 1, 0], sizes = [2, 16, 16, 32], strides = [1, 1, 1, 1]} : vector<2x18x18x32xf32> to vector<2x16x16x32xf32>
    %72 = vector.shape_cast %71 : vector<2x16x16x32xf32> to vector<512x32xf32>
    %c0_25 = arith.constant 0 : index
    %c128 = arith.constant 128 : index
    %73 = vector.load %arg9[%c0_25, %c128] : memref<512x288xf32, #tpu.memory_space<vmem>>, vector<512x32xf32>
    tpu.vector_store %arg9[%c0_25, %c128], %72 {strides = array<i32>} : memref<512x288xf32, #tpu.memory_space<vmem>>, vector<512x32xf32>,
    %74 = vector.extract_strided_slice %58 {offsets = [0, 1, 2, 0], sizes = [2, 16, 16, 32], strides = [1, 1, 1, 1]} : vector<2x18x18x32xf32> to vector<2x16x16x32xf32>
    %75 = vector.shape_cast %74 : vector<2x16x16x32xf32> to vector<512x32xf32>
    %c0_26 = arith.constant 0 : index
    %c160 = arith.constant 160 : index
    %76 = vector.load %arg9[%c0_26, %c160] : memref<512x288xf32, #tpu.memory_space<vmem>>, vector<512x32xf32>
    tpu.vector_store %arg9[%c0_26, %c160], %75 {strides = array<i32>} : memref<512x288xf32, #tpu.memory_space<vmem>>, vector<512x32xf32>,
    %77 = vector.extract_strided_slice %58 {offsets = [0, 2, 0, 0], sizes = [2, 16, 16, 32], strides = [1, 1, 1, 1]} : vector<2x18x18x32xf32> to vector<2x16x16x32xf32>
    %78 = vector.shape_cast %77 : vector<2x16x16x32xf32> to vector<512x32xf32>
    %c0_27 = arith.constant 0 : index
    %c192 = arith.constant 192 : index
    %79 = vector.load %arg9[%c0_27, %c192] : memref<512x288xf32, #tpu.memory_space<vmem>>, vector<512x32xf32>
    tpu.vector_store %arg9[%c0_27, %c192], %78 {strides = array<i32>} : memref<512x288xf32, #tpu.memory_space<vmem>>, vector<512x32xf32>,
    %80 = vector.extract_strided_slice %58 {offsets = [0, 2, 1, 0], sizes = [2, 16, 16, 32], strides = [1, 1, 1, 1]} : vector<2x18x18x32xf32> to vector<2x16x16x32xf32>
    %81 = vector.shape_cast %80 : vector<2x16x16x32xf32> to vector<512x32xf32>
    %c0_28 = arith.constant 0 : index
    %c224 = arith.constant 224 : index
    %82 = vector.load %arg9[%c0_28, %c224] : memref<512x288xf32, #tpu.memory_space<vmem>>, vector<512x32xf32>
    tpu.vector_store %arg9[%c0_28, %c224], %81 {strides = array<i32>} : memref<512x288xf32, #tpu.memory_space<vmem>>, vector<512x32xf32>,
    %83 = vector.extract_strided_slice %58 {offsets = [0, 2, 2, 0], sizes = [2, 16, 16, 32], strides = [1, 1, 1, 1]} : vector<2x18x18x32xf32> to vector<2x16x16x32xf32>
    %84 = vector.shape_cast %83 : vector<2x16x16x32xf32> to vector<512x32xf32>
    %c0_29 = arith.constant 0 : index
    %c256 = arith.constant 256 : index
    %85 = vector.load %arg9[%c0_29, %c256] : memref<512x288xf32, #tpu.memory_space<vmem>>, vector<512x32xf32>
    tpu.vector_store %arg9[%c0_29, %c256], %84 {strides = array<i32>} : memref<512x288xf32, #tpu.memory_space<vmem>>, vector<512x32xf32>,
    %c0_30 = arith.constant 0 : index
    %c0_31 = arith.constant 0 : index
    %86 = vector.load %arg9[%c0_30, %c0_31] : memref<512x288xf32, #tpu.memory_space<vmem>>, vector<512x288xf32>
    %87 = arith.truncf %86 : vector<512x288xf32> to vector<512x288xbf16>
    %c0_32 = arith.constant 0 : index
    %c0_33 = arith.constant 0 : index
    %88 = vector.load %arg5[%c0_32, %c0_33] : memref<288x256xbf16, #tpu.memory_space<vmem>>, vector<288x256xbf16>
    %cst_34 = arith.constant dense<0.000000e+00> : vector<512x256xf32>
    %89 = tpu.matmul %87, %88, %cst_34 {dimension_numbers = #tpu.dot_dimension_numbers<[1], [0], [0], [1], [0, 0, 1, 1], [], []>} : vector<512x288xbf16>, vector<288x256xbf16>, vector<512x256xf32> -> vector<512x256xf32>
    %cst_35 = arith.constant dense<0.000000e+00> : vector<256xf32>
    %90 = vector.multi_reduction <add>, %89, %cst_35 [0] : vector<512x256xf32> to vector<256xf32>
    %91 = vector.shape_cast %90 : vector<256xf32> to vector<1x256xf32>
    %cst_36 = arith.constant 5.120000e+02 : f32
    %92 = vector.broadcast %cst_36 : f32 to vector<1x256xf32>
    %93 = arith.divf %91, %92 : vector<1x256xf32>
    %94 = vector.broadcast %93 : vector<1x256xf32> to vector<512x256xf32>
    %95 = arith.subf %89, %94 : vector<512x256xf32>
    %96 = arith.mulf %95, %95 : vector<512x256xf32>
    %cst_37 = arith.constant dense<0.000000e+00> : vector<256xf32>
    %97 = vector.multi_reduction <add>, %96, %cst_37 [0] : vector<512x256xf32> to vector<256xf32>
    %98 = vector.shape_cast %97 : vector<256xf32> to vector<1x256xf32>
    %cst_38 = arith.constant 5.120000e+02 : f32
    %99 = vector.broadcast %cst_38 : f32 to vector<1x256xf32>
    %100 = arith.divf %98, %99 : vector<1x256xf32>
    %c0_39 = arith.constant 0 : index
    %c0_40 = arith.constant 0 : index
    %101 = vector.load %arg6[%c0_39, %c0_40] : memref<1x256xf32, #tpu.memory_space<vmem>>, vector<1x256xf32>
    %cst_41 = arith.constant 9.99999974E-6 : f32
    %102 = vector.broadcast %cst_41 : f32 to vector<1x256xf32>
    %103 = arith.addf %100, %102 : vector<1x256xf32>
    %104 = math.rsqrt %103 : vector<1x256xf32>
    %105 = arith.mulf %101, %104 : vector<1x256xf32>
    %106 = vector.broadcast %105 : vector<1x256xf32> to vector<512x256xf32>
    %107 = arith.mulf %95, %106 : vector<512x256xf32>
    %c0_42 = arith.constant 0 : index
    %c0_43 = arith.constant 0 : index
    %108 = vector.load %arg7[%c0_42, %c0_43] : memref<1x256xf32, #tpu.memory_space<vmem>>, vector<1x256xf32>
    %109 = vector.broadcast %108 : vector<1x256xf32> to vector<512x256xf32>
    %110 = arith.addf %107, %109 : vector<512x256xf32>
    %111 = vector.shape_cast %110 : vector<512x256xf32> to vector<2x256x256xf32>
    %cst_44 = arith.constant dense<0.000000e+00> : vector<2x256xf32>
    %112 = vector.multi_reduction <add>, %111, %cst_44 [1] : vector<2x256x256xf32> to vector<2x256xf32>
    %cst_45 = arith.constant 2.560000e+02 : f32
    %113 = vector.broadcast %cst_45 : f32 to vector<2x256xf32>
    %114 = arith.divf %112, %113 : vector<2x256xf32>
    %cst_46 = arith.constant dense<0xFF800000> : vector<2xf32>
    %115 = vector.multi_reduction <maximumf>, %114, %cst_46 [1] : vector<2x256xf32> to vector<2xf32>
    %116 = vector.shape_cast %115 : vector<2xf32> to vector<2x1xf32>
    %117 = vector.broadcast %116 : vector<2x1xf32> to vector<2x256xf32>
    %118 = arith.subf %114, %117 : vector<2x256xf32>
    %119 = math.exp %118 : vector<2x256xf32>
    %cst_47 = arith.constant dense<0.000000e+00> : vector<2xf32>
    %120 = vector.multi_reduction <add>, %119, %cst_47 [1] : vector<2x256xf32> to vector<2xf32>
    %121 = vector.shape_cast %120 : vector<2xf32> to vector<2x1xf32>
    %122 = vector.broadcast %121 : vector<2x1xf32> to vector<2x256xf32>
    %123 = arith.divf %119, %122 : vector<2x256xf32>
    %124 = vector.shape_cast %123 : vector<2x256xf32> to vector<2x1x1x256xf32>
    %c0_48 = arith.constant 0 : index
    %c0_49 = arith.constant 0 : index
    %c0_50 = arith.constant 0 : index
    %c0_51 = arith.constant 0 : index
    %125 = vector.load %arg1[%c0_48, %c0_49, %c0_50, %c0_51] : memref<2x16x16x256xf32, #tpu.memory_space<vmem>>, vector<2x16x16x256xf32>
    %126 = vector.broadcast %124 : vector<2x1x1x256xf32> to vector<2x16x16x256xf32>
    %127 = arith.mulf %126, %125 : vector<2x16x16x256xf32>
    %c0_52 = arith.constant 0 : index
    %c0_53 = arith.constant 0 : index
    %c0_54 = arith.constant 0 : index
    %c0_55 = arith.constant 0 : index
    %128 = vector.load %arg8[%c0_52, %c0_53, %c0_54, %c0_55] : memref<2x16x16x256xf32, #tpu.memory_space<vmem>>, vector<2x16x16x256xf32>
    tpu.vector_store %arg8[%c0_52, %c0_53, %c0_54, %c0_55], %127 {strides = array<i32>} : memref<2x16x16x256xf32, #tpu.memory_space<vmem>>, vector<2x16x16x256xf32>,
    return
  }
  func.func @transform_0(%arg0: i32) -> (i32, i32, i32, i32) {
    %c0_i32 = arith.constant 0 : i32
    %c0_i32_0 = arith.constant 0 : i32
    %c0_i32_1 = arith.constant 0 : i32
    %c0_i32_2 = arith.constant 0 : i32
    %c0_i32_3 = arith.constant 0 : i32
    return %c0_i32, %c0_i32_0, %c0_i32_1, %c0_i32_2 : i32, i32, i32, i32
  }
  func.func @transform_1(%arg0: i32) -> (i32, i32) {
    %c0_i32 = arith.constant 0 : i32
    %c0_i32_0 = arith.constant 0 : i32
    %c0_i32_1 = arith.constant 0 : i32
    return %c0_i32, %c0_i32_0 : i32, i32
  }
  func.func @transform_2(%arg0: i32) -> (i32, i32) {
    %c0_i32 = arith.constant 0 : i32
    %c0_i32_0 = arith.constant 0 : i32
    %c0_i32_1 = arith.constant 0 : i32
    return %c0_i32, %c0_i32_0 : i32, i32
  }
  func.func @transform_3(%arg0: i32) -> (i32, i32) {
    %c0_i32 = arith.constant 0 : i32
    %c0_i32_0 = arith.constant 0 : i32
    %c0_i32_1 = arith.constant 0 : i32
    return %c0_i32, %c0_i32_0 : i32, i32
  }
  func.func @transform_4(%arg0: i32) -> (i32, i32) {
    %c0_i32 = arith.constant 0 : i32
    %c0_i32_0 = arith.constant 0 : i32
    %c0_i32_1 = arith.constant 0 : i32
    return %c0_i32, %c0_i32_0 : i32, i32
  }
  func.func @transform_5(%arg0: i32) -> (i32, i32) {
    %c0_i32 = arith.constant 0 : i32
    %c0_i32_0 = arith.constant 0 : i32
    %c0_i32_1 = arith.constant 0 : i32
    return %c0_i32, %c0_i32_0 : i32, i32
  }
  func.func @transform_6(%arg0: i32) -> (i32, i32) {
    %c0_i32 = arith.constant 0 : i32
    %c0_i32_0 = arith.constant 0 : i32
    %c0_i32_1 = arith.constant 0 : i32
    return %c0_i32, %c0_i32_0 : i32, i32
  }
  func.func @transform_7(%arg0: i32) -> (i32, i32, i32, i32) {
    %c0_i32 = arith.constant 0 : i32
    %c0_i32_0 = arith.constant 0 : i32
    %c0_i32_1 = arith.constant 0 : i32
    %c0_i32_2 = arith.constant 0 : i32
    %c0_i32_3 = arith.constant 0 : i32
    return %c0_i32, %c0_i32_0, %c0_i32_1, %c0_i32_2 : i32, i32, i32, i32
  }
}

</mosaic_0001>

<llo_original>
// kernel: se_block_forward.1
$region0: #{se_block_forward.1}
  #allocation0 [shape = 'u32[]', space=smem, size = 0x4, offset = 0x4, fixed_abs, tag = 'smem constant byte address 0x4 - core index']
  #allocation1 [shape = 'u32[144,128]{1,0:T(1,128)}', space=vmem, size = 0x12000, scoped, tag = 'internal scratch']
  #allocation2 [shape = 'f32[512,288]{1,0:T(8,128)}', space=vmem, size = 0xc0000, scoped, tag = 'scratch operand']
  %s0 = inlined_call_operand.vmem [shape: f32[2,16,16,256], index: 0, kind: input, shape index: {}, may-alias: {0,7}]
  %s1 = inlined_call_operand.vmem [shape: bf16[256,288], index: 1, kind: input, shape index: {}]
  %s2 = inlined_call_operand.vmem [shape: f32[1,32], index: 2, kind: input, shape index: {}]
  %s3 = inlined_call_operand.vmem [shape: f32[1,32], index: 3, kind: input, shape index: {}]
  %s4 = inlined_call_operand.vmem [shape: bf16[288,256], index: 4, kind: input, shape index: {}]
  %s5 = inlined_call_operand.vmem [shape: f32[1,256], index: 5, kind: input, shape index: {}]
  %s6 = inlined_call_operand.vmem [shape: f32[1,256], index: 6, kind: input, shape index: {}]
  %s7 = inlined_call_operand.vmem [shape: f32[2,16,16,256], index: 7, kind: output, shape index: {}, may-alias: {0,7}]
  %s8 = sld [smem:[#allocation0]]
  $region38: #{se_block_forward.1} parent=0
    _
  %s10 = ssub.s32 1, %s8
  %s11 = scalar_select 0, %s10, %s8
  // Predicated region
  $region2: #{se_block_forward.1} parent=0 // pred_check
    _
  $region3: #{se_block_forward.1} parent=0 // pred_check_branch
    %13 = sbr.rel (0) target = $region5
  $region4: #{se_block_forward.1} parent=0 // pred_region
    _
  $region5: #{se_block_forward.1} parent=0 // pred_fallthru
    _
  // Predicated region
  $region6: #{se_block_forward.1} parent=0 // pred_check
    _
  $region7: #{se_block_forward.1} parent=0 // pred_check_branch
    %15 = sbr.rel (0) target = $region9
  $region8: #{se_block_forward.1} parent=0 // pred_region
    _
  $region9: #{se_block_forward.1} parent=0 // pred_fallthru
    _
  // Predicated region
  $region10: #{se_block_forward.1} parent=0 // pred_check
    _
  $region11: #{se_block_forward.1} parent=0 // pred_check_branch
    %17 = sbr.rel (0) target = $region13
  $region12: #{se_block_forward.1} parent=0 // pred_region
    _
  $region13: #{se_block_forward.1} parent=0 // pred_fallthru
    _
  // Predicated region
  $region14: #{se_block_forward.1} parent=0 // pred_check
    _
  $region15: #{se_block_forward.1} parent=0 // pred_check_branch
    %19 = sbr.rel (0) target = $region17
  $region16: #{se_block_forward.1} parent=0 // pred_region
    _
  $region17: #{se_block_forward.1} parent=0 // pred_fallthru
    _
  // Predicated region
  $region18: #{se_block_forward.1} parent=0 // pred_check
    _
  $region19: #{se_block_forward.1} parent=0 // pred_check_branch
    %21 = sbr.rel (0) target = $region21
  $region20: #{se_block_forward.1} parent=0 // pred_region
    _
  $region21: #{se_block_forward.1} parent=0 // pred_fallthru
    _
  // Predicated region
  $region22: #{se_block_forward.1} parent=0 // pred_check
    _
  $region23: #{se_block_forward.1} parent=0 // pred_check_branch
    %23 = sbr.rel (0) target = $region25
  $region24: #{se_block_forward.1} parent=0 // pred_region
    _
  $region25: #{se_block_forward.1} parent=0 // pred_fallthru
    _
  // Predicated region
  $region26: #{se_block_forward.1} parent=0 // pred_check
    _
  $region27: #{se_block_forward.1} parent=0 // pred_check_branch
    %25 = sbr.rel (0) target = $region29
  $region28: #{se_block_forward.1} parent=0 // pred_region
    _
  $region29: #{se_block_forward.1} parent=0 // pred_fallthru
    _
  %v27 = vld [vmem:[%s0] sm:$0xff]
  %v28 = vld [vmem:[%s0 + $0x8] sm:$0xff]
  %v29 = vld [vmem:[%s0 + $0x10] sm:$0xff]
  %v30 = vld [vmem:[%s0 + $0x18] sm:$0xff]
  %v31 = vld [vmem:[%s0 + $0x20] sm:$0xff]
  %v32 = vld [vmem:[%s0 + $0x28] sm:$0xff]
  %v33 = vld [vmem:[%s0 + $0x30] sm:$0xff]
  %v34 = vld [vmem:[%s0 + $0x38] sm:$0xff]
  %v35 = vld [vmem:[%s0 + $0x40] sm:$0xff]
  %v36 = vld [vmem:[%s0 + $0x48] sm:$0xff]
  %v37 = vld [vmem:[%s0 + $0x50] sm:$0xff]
  %v38 = vld [vmem:[%s0 + $0x58] sm:$0xff]
  %v39 = vld [vmem:[%s0 + $0x60] sm:$0xff]
  %v40 = vld [vmem:[%s0 + $0x68] sm:$0xff]
  %v41 = vld [vmem:[%s0 + $0x70] sm:$0xff]
  %v42 = vld [vmem:[%s0 + $0x78] sm:$0xff]
  %v43 = vld [vmem:[%s0 + $0x80] sm:$0xff]
  %v44 = vld [vmem:[%s0 + $0x88] sm:$0xff]
  %v45 = vld [vmem:[%s0 + $0x90] sm:$0xff]
  %v46 = vld [vmem:[%s0 + $0x98] sm:$0xff]
  %v47 = vld [vmem:[%s0 + $0xa0] sm:$0xff]
  %v48 = vld [vmem:[%s0 + $0xa8] sm:$0xff]
  %v49 = vld [vmem:[%s0 + $0xb0] sm:$0xff]
  %v50 = vld [vmem:[%s0 + $0xb8] sm:$0xff]
  %v51 = vld [vmem:[%s0 + $0xc0] sm:$0xff]
  %v52 = vld [vmem:[%s0 + $0xc8] sm:$0xff]
  %v53 = vld [vmem:[%s0 + $0xd0] sm:$0xff]
  %v54 = vld [vmem:[%s0 + $0xd8] sm:$0xff]
  %v55 = vld [vmem:[%s0 + $0xe0] sm:$0xff]
  %v56 = vld [vmem:[%s0 + $0xe8] sm:$0xff]
  %v57 = vld [vmem:[%s0 + $0xf0] sm:$0xff]
  %v58 = vld [vmem:[%s0 + $0xf8] sm:$0xff]
  %v59 = vld [vmem:[%s0 + $0x100] sm:$0xff]
  %v60 = vld [vmem:[%s0 + $0x108] sm:$0xff]
  %v61 = vld [vmem:[%s0 + $0x110] sm:$0xff]
  %v62 = vld [vmem:[%s0 + $0x118] sm:$0xff]
  %v63 = vld [vmem:[%s0 + $0x120] sm:$0xff]
  %v64 = vld [vmem:[%s0 + $0x128] sm:$0xff]
  %v65 = vld [vmem:[%s0 + $0x130] sm:$0xff]
  %v66 = vld [vmem:[%s0 + $0x138] sm:$0xff]
  %v67 = vld [vmem:[%s0 + $0x140] sm:$0xff]
  %v68 = vld [vmem:[%s0 + $0x148] sm:$0xff]
  %v69 = vld [vmem:[%s0 + $0x150] sm:$0xff]
  %v70 = vld [vmem:[%s0 + $0x158] sm:$0xff]
  %v71 = vld [vmem:[%s0 + $0x160] sm:$0xff]
  %v72 = vld [vmem:[%s0 + $0x168] sm:$0xff]
  %v73 = vld [vmem:[%s0 + $0x170] sm:$0xff]
  %v74 = vld [vmem:[%s0 + $0x178] sm:$0xff]
  %v75 = vld [vmem:[%s0 + $0x180] sm:$0xff]
  %v76 = vld [vmem:[%s0 + $0x188] sm:$0xff]
  %v77 = vld [vmem:[%s0 + $0x190] sm:$0xff]
  %v78 = vld [vmem:[%s0 + $0x198] sm:$0xff]
  %v79 = vld [vmem:[%s0 + $0x1a0] sm:$0xff]
  %v80 = vld [vmem:[%s0 + $0x1a8] sm:$0xff]
  %v81 = vld [vmem:[%s0 + $0x1b0] sm:$0xff]
  %v82 = vld [vmem:[%s0 + $0x1b8] sm:$0xff]
  %v83 = vld [vmem:[%s0 + $0x1c0] sm:$0xff]
  %v84 = vld [vmem:[%s0 + $0x1c8] sm:$0xff]
  %v85 = vld [vmem:[%s0 + $0x1d0] sm:$0xff]
  %v86 = vld [vmem:[%s0 + $0x1d8] sm:$0xff]
  %v87 = vld [vmem:[%s0 + $0x1e0] sm:$0xff]
  %v88 = vld [vmem:[%s0 + $0x1e8] sm:$0xff]
  %v89 = vld [vmem:[%s0 + $0x1f0] sm:$0xff]
  %v90 = vld [vmem:[%s0 + $0x1f8] sm:$0xff]
  %v91 = vld [vmem:[%s0 + $0x200] sm:$0xff]
  %v92 = vld [vmem:[%s0 + $0x208] sm:$0xff]
  %v93 = vld [vmem:[%s0 + $0x210] sm:$0xff]
  %v94 = vld [vmem:[%s0 + $0x218] sm:$0xff]
  %v95 = vld [vmem:[%s0 + $0x220] sm:$0xff]
  %v96 = vld [vmem:[%s0 + $0x228] sm:$0xff]
  %v97 = vld [vmem:[%s0 + $0x230] sm:$0xff]
  %v98 = vld [vmem:[%s0 + $0x238] sm:$0xff]
  %v99 = vld [vmem:[%s0 + $0x240] sm:$0xff]
  %v100 = vld [vmem:[%s0 + $0x248] sm:$0xff]
  %v101 = vld [vmem:[%s0 + $0x250] sm:$0xff]
  %v102 = vld [vmem:[%s0 + $0x258] sm:$0xff]
  %v103 = vld [vmem:[%s0 + $0x260] sm:$0xff]
  %v104 = vld [vmem:[%s0 + $0x268] sm:$0xff]
  %v105 = vld [vmem:[%s0 + $0x270] sm:$0xff]
  %v106 = vld [vmem:[%s0 + $0x278] sm:$0xff]
  %v107 = vld [vmem:[%s0 + $0x280] sm:$0xff]
  %v108 = vld [vmem:[%s0 + $0x288] sm:$0xff]
  %v109 = vld [vmem:[%s0 + $0x290] sm:$0xff]
  %v110 = vld [vmem:[%s0 + $0x298] sm:$0xff]
  %v111 = vld [vmem:[%s0 + $0x2a0] sm:$0xff]
  %v112 = vld [vmem:[%s0 + $0x2a8] sm:$0xff]
  %v113 = vld [vmem:[%s0 + $0x2b0] sm:$0xff]
  %v114 = vld [vmem:[%s0 + $0x2b8] sm:$0xff]
  %v115 = vld [vmem:[%s0 + $0x2c0] sm:$0xff]
  %v116 = vld [vmem:[%s0 + $0x2c8] sm:$0xff]
  %v117 = vld [vmem:[%s0 + $0x2d0] sm:$0xff]
  %v118 = vld [vmem:[%s0 + $0x2d8] sm:$0xff]
  %v119 = vld [vmem:[%s0 + $0x2e0] sm:$0xff]
  %v120 = vld [vmem:[%s0 + $0x2e8] sm:$0xff]
  %v121 = vld [vmem:[%s0 + $0x2f0] sm:$0xff]
  %v122 = vld [vmem:[%s0 + $0x2f8] sm:$0xff]
  %v123 = vld [vmem:[%s0 + $0x300] sm:$0xff]
  %v124 = vld [vmem:[%s0 + $0x308] sm:$0xff]
  %v125 = vld [vmem:[%s0 + $0x310] sm:$0xff]
  %v126 = vld [vmem:[%s0 + $0x318] sm:$0xff]
  %v127 = vld [vmem:[%s0 + $0x320] sm:$0xff]
  %v128 = vld [vmem:[%s0 + $0x328] sm:$0xff]
  %v129 = vld [vmem:[%s0 + $0x330] sm:$0xff]
  %v130 = vld [vmem:[%s0 + $0x338] sm:$0xff]
  %v131 = vld [vmem:[%s0 + $0x340] sm:$0xff]
  %v132 = vld [vmem:[%s0 + $0x348] sm:$0xff]
  %v133 = vld [vmem:[%s0 + $0x350] sm:$0xff]
  %v134 = vld [vmem:[%s0 + $0x358] sm:$0xff]
  %v135 = vld [vmem:[%s0 + $0x360] sm:$0xff]
  %v136 = vld [vmem:[%s0 + $0x368] sm:$0xff]
  %v137 = vld [vmem:[%s0 + $0x370] sm:$0xff]
  %v138 = vld [vmem:[%s0 + $0x378] sm:$0xff]
  %v139 = vld [vmem:[%s0 + $0x380] sm:$0xff]
  %v140 = vld [vmem:[%s0 + $0x388] sm:$0xff]
  %v141 = vld [vmem:[%s0 + $0x390] sm:$0xff]
  %v142 = vld [vmem:[%s0 + $0x398] sm:$0xff]
  %v143 = vld [vmem:[%s0 + $0x3a0] sm:$0xff]
  %v144 = vld [vmem:[%s0 + $0x3a8] sm:$0xff]
  %v145 = vld [vmem:[%s0 + $0x3b0] sm:$0xff]
  %v146 = vld [vmem:[%s0 + $0x3b8] sm:$0xff]
  %v147 = vld [vmem:[%s0 + $0x3c0] sm:$0xff]
  %v148 = vld [vmem:[%s0 + $0x3c8] sm:$0xff]
  %v149 = vld [vmem:[%s0 + $0x3d0] sm:$0xff]
  %v150 = vld [vmem:[%s0 + $0x3d8] sm:$0xff]
  %v151 = vld [vmem:[%s0 + $0x3e0] sm:$0xff]
  %v152 = vld [vmem:[%s0 + $0x3e8] sm:$0xff]
  %v153 = vld [vmem:[%s0 + $0x3f0] sm:$0xff]
  %v154 = vld [vmem:[%s0 + $0x3f8] sm:$0xff]
  %v155 = vpack.c.bf16 %v29, %v27
  %v156 = vpack.c.bf16 %v30, %v28
  %v157 = vpack.c.bf16 %v33, %v31
  %v158 = vpack.c.bf16 %v34, %v32
  %v159 = vpack.c.bf16 %v37, %v35
  %v160 = vpack.c.bf16 %v38, %v36
  %v161 = vpack.c.bf16 %v41, %v39
  %v162 = vpack.c.bf16 %v42, %v40
  %v163 = vpack.c.bf16 %v45, %v43
  %v164 = vpack.c.bf16 %v46, %v44
  %v165 = vpack.c.bf16 %v49, %v47
  %v166 = vpack.c.bf16 %v50, %v48
  %v167 = vpack.c.bf16 %v53, %v51
  %v168 = vpack.c.bf16 %v54, %v52
  %v169 = vpack.c.bf16 %v57, %v55
  %v170 = vpack.c.bf16 %v58, %v56
  %v171 = vpack.c.bf16 %v61, %v59
  %v172 = vpack.c.bf16 %v62, %v60
  %v173 = vpack.c.bf16 %v65, %v63
  %v174 = vpack.c.bf16 %v66, %v64
  %v175 = vpack.c.bf16 %v69, %v67
  %v176 = vpack.c.bf16 %v70, %v68
  %v177 = vpack.c.bf16 %v73, %v71
  %v178 = vpack.c.bf16 %v74, %v72
  %v179 = vpack.c.bf16 %v77, %v75
  %v180 = vpack.c.bf16 %v78, %v76
  %v181 = vpack.c.bf16 %v81, %v79
  %v182 = vpack.c.bf16 %v82, %v80
  %v183 = vpack.c.bf16 %v85, %v83
  %v184 = vpack.c.bf16 %v86, %v84
  %v185 = vpack.c.bf16 %v89, %v87
  %v186 = vpack.c.bf16 %v90, %v88
  %v187 = vpack.c.bf16 %v93, %v91
  %v188 = vpack.c.bf16 %v94, %v92
  %v189 = vpack.c.bf16 %v97, %v95
  %v190 = vpack.c.bf16 %v98, %v96
  %v191 = vpack.c.bf16 %v101, %v99
  %v192 = vpack.c.bf16 %v102, %v100
  %v193 = vpack.c.bf16 %v105, %v103
  %v194 = vpack.c.bf16 %v106, %v104
  %v195 = vpack.c.bf16 %v109, %v107
  %v196 = vpack.c.bf16 %v110, %v108
  %v197 = vpack.c.bf16 %v113, %v111
  %v198 = vpack.c.bf16 %v114, %v112
  %v199 = vpack.c.bf16 %v117, %v115
  %v200 = vpack.c.bf16 %v118, %v116
  %v201 = vpack.c.bf16 %v121, %v119
  %v202 = vpack.c.bf16 %v122, %v120
  %v203 = vpack.c.bf16 %v125, %v123
  %v204 = vpack.c.bf16 %v126, %v124
  %v205 = vpack.c.bf16 %v129, %v127
  %v206 = vpack.c.bf16 %v130, %v128
  %v207 = vpack.c.bf16 %v133, %v131
  %v208 = vpack.c.bf16 %v134, %v132
  %v209 = vpack.c.bf16 %v137, %v135
  %v210 = vpack.c.bf16 %v138, %v136
  %v211 = vpack.c.bf16 %v141, %v139
  %v212 = vpack.c.bf16 %v142, %v140
  %v213 = vpack.c.bf16 %v145, %v143
  %v214 = vpack.c.bf16 %v146, %v144
  %v215 = vpack.c.bf16 %v149, %v147
  %v216 = vpack.c.bf16 %v150, %v148
  %v217 = vpack.c.bf16 %v153, %v151
  %v218 = vpack.c.bf16 %v154, %v152
  %v219 = vld [vmem:[%s1] sm:$0xff]
  %v220 = vld [vmem:[%s1 + $0x8] sm:$0xf]
  %v221 = vld [vmem:[%s1 + $0xc] sm:$0xff]
  %v222 = vld [vmem:[%s1 + $0x14] sm:$0xf]
  %v223 = vld [vmem:[%s1 + $0x18] sm:$0xff]
  %v224 = vld [vmem:[%s1 + $0x20] sm:$0xf]
  %v225 = vld [vmem:[%s1 + $0x24] sm:$0xff]
  %v226 = vld [vmem:[%s1 + $0x2c] sm:$0xf]
  %v227 = vld [vmem:[%s1 + $0x30] sm:$0xff]
  %v228 = vld [vmem:[%s1 + $0x38] sm:$0xf]
  %v229 = vld [vmem:[%s1 + $0x3c] sm:$0xff]
  %v230 = vld [vmem:[%s1 + $0x44] sm:$0xf]
  %v231 = vld [vmem:[%s1 + $0x48] sm:$0xff]
  %v232 = vld [vmem:[%s1 + $0x50] sm:$0xf]
  %v233 = vld [vmem:[%s1 + $0x54] sm:$0xff]
  %v234 = vld [vmem:[%s1 + $0x5c] sm:$0xf]
  %v235 = vld [vmem:[%s1 + $0x60] sm:$0xff]
  %v236 = vld [vmem:[%s1 + $0x68] sm:$0xf]
  %v237 = vld [vmem:[%s1 + $0x6c] sm:$0xff]
  %v238 = vld [vmem:[%s1 + $0x74] sm:$0xf]
  %v239 = vld [vmem:[%s1 + $0x78] sm:$0xff]
  %v240 = vld [vmem:[%s1 + $0x80] sm:$0xf]
  %v241 = vld [vmem:[%s1 + $0x84] sm:$0xff]
  %v242 = vld [vmem:[%s1 + $0x8c] sm:$0xf]
  %v243 = vld [vmem:[%s1 + $0x90] sm:$0xff]
  %v244 = vld [vmem:[%s1 + $0x98] sm:$0xf]
  %v245 = vld [vmem:[%s1 + $0x9c] sm:$0xff]
  %v246 = vld [vmem:[%s1 + $0xa4] sm:$0xf]
  %v247 = vld [vmem:[%s1 + $0xa8] sm:$0xff]
  %v248 = vld [vmem:[%s1 + $0xb0] sm:$0xf]
  %v249 = vld [vmem:[%s1 + $0xb4] sm:$0xff]
  %v250 = vld [vmem:[%s1 + $0xbc] sm:$0xf]
  %v251 = vld [vmem:[%s1 + $0xc0] sm:$0xff]
  %v252 = vld [vmem:[%s1 + $0xc8] sm:$0xf]
  %v253 = vld [vmem:[%s1 + $0xcc] sm:$0xff]
  %v254 = vld [vmem:[%s1 + $0xd4] sm:$0xf]
  %v255 = vld [vmem:[%s1 + $0xd8] sm:$0xff]
  %v256 = vld [vmem:[%s1 + $0xe0] sm:$0xf]
  %v257 = vld [vmem:[%s1 + $0xe4] sm:$0xff]
  %v258 = vld [vmem:[%s1 + $0xec] sm:$0xf]
  %v259 = vld [vmem:[%s1 + $0xf0] sm:$0xff]
  %v260 = vld [vmem:[%s1 + $0xf8] sm:$0xf]
  %v261 = vld [vmem:[%s1 + $0xfc] sm:$0xff]
  %v262 = vld [vmem:[%s1 + $0x104] sm:$0xf]
  %v263 = vld [vmem:[%s1 + $0x108] sm:$0xff]
  %v264 = vld [vmem:[%s1 + $0x110] sm:$0xf]
  %v265 = vld [vmem:[%s1 + $0x114] sm:$0xff]
  %v266 = vld [vmem:[%s1 + $0x11c] sm:$0xf]
  %v267 = vld [vmem:[%s1 + $0x120] sm:$0xff]
  %v268 = vld [vmem:[%s1 + $0x128] sm:$0xf]
  %v269 = vld [vmem:[%s1 + $0x12c] sm:$0xff]
  %v270 = vld [vmem:[%s1 + $0x134] sm:$0xf]
  %v271 = vld [vmem:[%s1 + $0x138] sm:$0xff]
  %v272 = vld [vmem:[%s1 + $0x140] sm:$0xf]
  %v273 = vld [vmem:[%s1 + $0x144] sm:$0xff]
  %v274 = vld [vmem:[%s1 + $0x14c] sm:$0xf]
  %v275 = vld [vmem:[%s1 + $0x150] sm:$0xff]
  %v276 = vld [vmem:[%s1 + $0x158] sm:$0xf]
  %v277 = vld [vmem:[%s1 + $0x15c] sm:$0xff]
  %v278 = vld [vmem:[%s1 + $0x164] sm:$0xf]
  %v279 = vld [vmem:[%s1 + $0x168] sm:$0xff]
  %v280 = vld [vmem:[%s1 + $0x170] sm:$0xf]
  %v281 = vld [vmem:[%s1 + $0x174] sm:$0xff]
  %v282 = vld [vmem:[%s1 + $0x17c] sm:$0xf]
  %v347 = vunpack.c.l.b16 %v219
  %v348 = vunpack.c.h.b16 %v219
  %v349 = vunpack.c.l.b16 %v220
  %v350 = vunpack.c.l.b16 %v221
  %v351 = vunpack.c.h.b16 %v221
  %v352 = vunpack.c.l.b16 %v222
  %v353 = vunpack.c.l.b16 %v223
  %v354 = vunpack.c.h.b16 %v223
  %v355 = vunpack.c.l.b16 %v224
  %v356 = vunpack.c.l.b16 %v225
  %v357 = vunpack.c.h.b16 %v225
  %v358 = vunpack.c.l.b16 %v226
  %v359 = vunpack.c.l.b16 %v227
  %v360 = vunpack.c.h.b16 %v227
  %v361 = vunpack.c.l.b16 %v228
  %v362 = vunpack.c.l.b16 %v229
  %v363 = vunpack.c.h.b16 %v229
  %v364 = vunpack.c.l.b16 %v230
  %v365 = vunpack.c.l.b16 %v231
  %v366 = vunpack.c.h.b16 %v231
  %v367 = vunpack.c.l.b16 %v232
  %v368 = vunpack.c.l.b16 %v233
  %v369 = vunpack.c.h.b16 %v233
  %v370 = vunpack.c.l.b16 %v234
  %v371 = vunpack.c.l.b16 %v235
  %v372 = vunpack.c.h.b16 %v235
  %v373 = vunpack.c.l.b16 %v236
  %v374 = vunpack.c.l.b16 %v237
  %v375 = vunpack.c.h.b16 %v237
  %v376 = vunpack.c.l.b16 %v238
  %v377 = vunpack.c.l.b16 %v239
  %v378 = vunpack.c.h.b16 %v239
  %v379 = vunpack.c.l.b16 %v240
  %v380 = vunpack.c.l.b16 %v241
  %v381 = vunpack.c.h.b16 %v241
  %v382 = vunpack.c.l.b16 %v242
  %v383 = vunpack.c.l.b16 %v243
  %v384 = vunpack.c.h.b16 %v243
  %v385 = vunpack.c.l.b16 %v244
  %v386 = vunpack.c.l.b16 %v245
  %v387 = vunpack.c.h.b16 %v245
  %v388 = vunpack.c.l.b16 %v246
  %v389 = vunpack.c.l.b16 %v247
  %v390 = vunpack.c.h.b16 %v247
  %v391 = vunpack.c.l.b16 %v248
  %v392 = vunpack.c.l.b16 %v249
  %v393 = vunpack.c.h.b16 %v249
  %v394 = vunpack.c.l.b16 %v250
  %v395 = vunpack.c.l.b16 %v251
  %v396 = vunpack.c.h.b16 %v251
  %v397 = vunpack.c.l.b16 %v252
  %v398 = vunpack.c.l.b16 %v253
  %v399 = vunpack.c.h.b16 %v253
  %v400 = vunpack.c.l.b16 %v254
  %v401 = vunpack.c.l.b16 %v255
  %v402 = vunpack.c.h.b16 %v255
  %v403 = vunpack.c.l.b16 %v256
  %v404 = vunpack.c.l.b16 %v257
  %v405 = vunpack.c.h.b16 %v257
  %v406 = vunpack.c.l.b16 %v258
  %v407 = vunpack.c.l.b16 %v259
  %v408 = vunpack.c.h.b16 %v259
  %v409 = vunpack.c.l.b16 %v260
  %v410 = vunpack.c.l.b16 %v261
  %v411 = vunpack.c.h.b16 %v261
  %v412 = vunpack.c.l.b16 %v262
  %v413 = vunpack.c.l.b16 %v263
  %v414 = vunpack.c.h.b16 %v263
  %v415 = vunpack.c.l.b16 %v264
  %v416 = vunpack.c.l.b16 %v265
  %v417 = vunpack.c.h.b16 %v265
  %v418 = vunpack.c.l.b16 %v266
  %v419 = vunpack.c.l.b16 %v267
  %v420 = vunpack.c.h.b16 %v267
  %v421 = vunpack.c.l.b16 %v268
  %v422 = vunpack.c.l.b16 %v269
  %v423 = vunpack.c.h.b16 %v269
  %v424 = vunpack.c.l.b16 %v270
  %v425 = vunpack.c.l.b16 %v271
  %v426 = vunpack.c.h.b16 %v271
  %v427 = vunpack.c.l.b16 %v272
  %v428 = vunpack.c.l.b16 %v273
  %v429 = vunpack.c.h.b16 %v273
  %v430 = vunpack.c.l.b16 %v274
  %v431 = vunpack.c.l.b16 %v275
  %v432 = vunpack.c.h.b16 %v275
  %v433 = vunpack.c.l.b16 %v276
  %v434 = vunpack.c.l.b16 %v277
  %v435 = vunpack.c.h.b16 %v277
  %v436 = vunpack.c.l.b16 %v278
  %v437 = vunpack.c.l.b16 %v279
  %v438 = vunpack.c.h.b16 %v279
  %v439 = vunpack.c.l.b16 %v280
  %v440 = vunpack.c.l.b16 %v281
  %v441 = vunpack.c.h.b16 %v281
  %v442 = vunpack.c.l.b16 %v282
  %v443 = vpack.c.b16 %v350, %v347
  %v444 = vpack.c.b16 %v351, %v348
  %v445 = vpack.c.b16 %v352, %v349
  %v446 = vpack.c.b16 %v356, %v353
  %v447 = vpack.c.b16 %v357, %v354
  %v448 = vpack.c.b16 %v358, %v355
  %v449 = vpack.c.b16 %v362, %v359
  %v450 = vpack.c.b16 %v363, %v360
  %v451 = vpack.c.b16 %v364, %v361
  %v452 = vpack.c.b16 %v368, %v365
  %v453 = vpack.c.b16 %v369, %v366
  %v454 = vpack.c.b16 %v370, %v367
  %v455 = vpack.c.b16 %v374, %v371
  %v456 = vpack.c.b16 %v375, %v372
  %v457 = vpack.c.b16 %v376, %v373
  %v458 = vpack.c.b16 %v380, %v377
  %v459 = vpack.c.b16 %v381, %v378
  %v460 = vpack.c.b16 %v382, %v379
  %v461 = vpack.c.b16 %v386, %v383
  %v462 = vpack.c.b16 %v387, %v384
  %v463 = vpack.c.b16 %v388, %v385
  %v464 = vpack.c.b16 %v392, %v389
  %v465 = vpack.c.b16 %v393, %v390
  %v466 = vpack.c.b16 %v394, %v391
  %v467 = vpack.c.b16 %v398, %v395
  %v468 = vpack.c.b16 %v399, %v396
  %v469 = vpack.c.b16 %v400, %v397
  %v470 = vpack.c.b16 %v404, %v401
  %v471 = vpack.c.b16 %v405, %v402
  %v472 = vpack.c.b16 %v406, %v403
  %v473 = vpack.c.b16 %v410, %v407
  %v474 = vpack.c.b16 %v411, %v408
  %v475 = vpack.c.b16 %v412, %v409
  %v476 = vpack.c.b16 %v416, %v413
  %v477 = vpack.c.b16 %v417, %v414
  %v478 = vpack.c.b16 %v418, %v415
  %v479 = vpack.c.b16 %v422, %v419
  %v480 = vpack.c.b16 %v423, %v420
  %v481 = vpack.c.b16 %v424, %v421
  %v482 = vpack.c.b16 %v428, %v425
  %v483 = vpack.c.b16 %v429, %v426
  %v484 = vpack.c.b16 %v430, %v427
  %v485 = vpack.c.b16 %v434, %v431
  %v486 = vpack.c.b16 %v435, %v432
  %v487 = vpack.c.b16 %v436, %v433
  %v488 = vpack.c.b16 %v440, %v437
  %v489 = vpack.c.b16 %v441, %v438
  %v490 = vpack.c.b16 %v442, %v439
  %539 = vmatprep.subr.bf16.mxu0 %v465
  %540 = vmatpush1.bf16.msra.mxu0 %v464
  %541 = vmatprep.subr.bf16.mxu0 %v462
  %542 = vmatpush1.bf16.msra.mxu0 %v461
  %543 = vmatprep.subr.bf16.mxu0 %v459
  %544 = vmatpush1.bf16.msra.mxu0 %v458
  %545 = vmatprep.subr.bf16.mxu0 %v456
  %546 = vmatpush1.bf16.msra.mxu0 %v455
  %547 = vmatprep.subr.bf16.mxu0 %v453
  %548 = vmatpush1.bf16.msra.mxu0 %v452
  %549 = vmatprep.subr.bf16.mxu0 %v450
  %550 = vmatpush1.bf16.msra.mxu0 %v449
  %551 = vmatprep.subr.bf16.mxu0 %v447
  %552 = vmatpush1.bf16.msra.mxu0 %v446
  %553 = vmatprep.subr.bf16.mxu0 %v444
  %554 = vmatpush1.bf16.msra.mxu0 %v443
  %555 = vmatprep.subr.bf16.mxu0 %v489
  %556 = vmatpush2.bf16.msra.mxu0 %v488
  %557 = vmatprep.subr.bf16.mxu0 %v486
  %558 = vmatpush2.bf16.msra.mxu0 %v485
  %559 = vmatprep.subr.bf16.mxu0 %v483
  %560 = vmatpush2.bf16.msra.mxu0 %v482
  %561 = vmatprep.subr.bf16.mxu0 %v480
  %562 = vmatpush2.bf16.msra.mxu0 %v479
  %563 = vmatprep.subr.bf16.mxu0 %v477
  %564 = vmatpush2.bf16.msra.mxu0 %v476
  %565 = vmatprep.subr.bf16.mxu0 %v474
  %566 = vmatpush2.bf16.msra.mxu0 %v473
  %567 = vmatprep.subr.bf16.mxu0 %v471
  %568 = vmatpush2.bf16.msra.mxu0 %v470
  %569 = vmatprep.subr.bf16.mxu0 %v468
  %570 = vmatpush2.bf16.msra.mxu0 %v467
  %571 = vmatprep.mubr.bf16.mxu0 %v156
  %572 = vmatmul.mubr.bf16.gmra.mxu0 %v155
  %v573 = vpop.f32.mrf.mxu0
  %v574 = vadd.f32 0.0, %v573
  %v575 = vpop.f32.mrf.mxu0
  %v576 = vadd.f32 0.0, %v575
  %v577 = vpop.f32.mrf.mxu0
  %v578 = vadd.f32 0.0, %v577
  %v579 = vpop.f32.mrf.mxu0
  %v580 = vadd.f32 0.0, %v579
  %581 = vmatprep.mubr.bf16.mxu0 %v158
  %582 = vmatmul.mubr.bf16.gmra.mxu0 %v157
  %v583 = vpop.f32.mrf.mxu0
  %v584 = vadd.f32 0.0, %v583
  %v585 = vpop.f32.mrf.mxu0
  %v586 = vadd.f32 0.0, %v585
  %v587 = vpop.f32.mrf.mxu0
  %v588 = vadd.f32 0.0, %v587
  %v589 = vpop.f32.mrf.mxu0
  %v590 = vadd.f32 0.0, %v589
  %591 = vmatprep.mubr.bf16.mxu0 %v160
  %592 = vmatmul.mubr.bf16.gmra.mxu0 %v159
  %v593 = vpop.f32.mrf.mxu0
  %v594 = vadd.f32 0.0, %v593
  %v595 = vpop.f32.mrf.mxu0
  %v596 = vadd.f32 0.0, %v595
  %v597 = vpop.f32.mrf.mxu0
  %v598 = vadd.f32 0.0, %v597
  %v599 = vpop.f32.mrf.mxu0
  %v600 = vadd.f32 0.0, %v599
  %601 = vmatprep.mubr.bf16.mxu0 %v162
  %602 = vmatmul.mubr.bf16.gmra.mxu0 %v161
  %v603 = vpop.f32.mrf.mxu0
  %v604 = vadd.f32 0.0, %v603
  %v605 = vpop.f32.mrf.mxu0
  %v606 = vadd.f32 0.0, %v605
  %v607 = vpop.f32.mrf.mxu0
  %v608 = vadd.f32 0.0, %v607
  %v609 = vpop.f32.mrf.mxu0
  %v610 = vadd.f32 0.0, %v609
  %611 = vmatprep.mubr.bf16.mxu0 %v164
  %612 = vmatmul.mubr.bf16.gmra.mxu0 %v163
  %v613 = vpop.f32.mrf.mxu0
  %v614 = vadd.f32 0.0, %v613
  %v615 = vpop.f32.mrf.mxu0
  %v616 = vadd.f32 0.0, %v615
  %v617 = vpop.f32.mrf.mxu0
  %v618 = vadd.f32 0.0, %v617
  %v619 = vpop.f32.mrf.mxu0
  %v620 = vadd.f32 0.0, %v619
  %621 = vmatprep.mubr.bf16.mxu0 %v166
  %622 = vmatmul.mubr.bf16.gmra.mxu0 %v165
  %v623 = vpop.f32.mrf.mxu0
  %v624 = vadd.f32 0.0, %v623
  %v625 = vpop.f32.mrf.mxu0
  %v626 = vadd.f32 0.0, %v625
  %v627 = vpop.f32.mrf.mxu0
  %v628 = vadd.f32 0.0, %v627
  %v629 = vpop.f32.mrf.mxu0
  %v630 = vadd.f32 0.0, %v629
  %631 = vmatprep.mubr.bf16.mxu0 %v168
  %632 = vmatmul.mubr.bf16.gmra.mxu0 %v167
  %v633 = vpop.f32.mrf.mxu0
  %v634 = vadd.f32 0.0, %v633
  %v635 = vpop.f32.mrf.mxu0
  %v636 = vadd.f32 0.0, %v635
  %v637 = vpop.f32.mrf.mxu0
  %v638 = vadd.f32 0.0, %v637
  %v639 = vpop.f32.mrf.mxu0
  %v640 = vadd.f32 0.0, %v639
  %641 = vmatprep.mubr.bf16.mxu0 %v170
  %642 = vmatmul.mubr.bf16.gmra.mxu0 %v169
  %v643 = vpop.f32.mrf.mxu0
  %v644 = vadd.f32 0.0, %v643
  %v645 = vpop.f32.mrf.mxu0
  %v646 = vadd.f32 0.0, %v645
  %v647 = vpop.f32.mrf.mxu0
  %v648 = vadd.f32 0.0, %v647
  %v649 = vpop.f32.mrf.mxu0
  %v650 = vadd.f32 0.0, %v649
  %651 = vmatprep.mubr.bf16.mxu0 %v172
  %652 = vmatmul.mubr.bf16.gmra.mxu0 %v171
  %v653 = vpop.f32.mrf.mxu0
  %v654 = vadd.f32 0.0, %v653
  %v655 = vpop.f32.mrf.mxu0
  %v656 = vadd.f32 0.0, %v655
  %v657 = vpop.f32.mrf.mxu0
  %v658 = vadd.f32 0.0, %v657
  %v659 = vpop.f32.mrf.mxu0
  %v660 = vadd.f32 0.0, %v659
  %661 = vmatprep.mubr.bf16.mxu0 %v174
  %662 = vmatmul.mubr.bf16.gmra.mxu0 %v173
  %v663 = vpop.f32.mrf.mxu0
  %v664 = vadd.f32 0.0, %v663
  %v665 = vpop.f32.mrf.mxu0
  %v666 = vadd.f32 0.0, %v665
  %v667 = vpop.f32.mrf.mxu0
  %v668 = vadd.f32 0.0, %v667
  %v669 = vpop.f32.mrf.mxu0
  %v670 = vadd.f32 0.0, %v669
  %671 = vmatprep.mubr.bf16.mxu0 %v176
  %672 = vmatmul.mubr.bf16.gmra.mxu0 %v175
  %v673 = vpop.f32.mrf.mxu0
  %v674 = vadd.f32 0.0, %v673
  %v675 = vpop.f32.mrf.mxu0
  %v676 = vadd.f32 0.0, %v675
  %v677 = vpop.f32.mrf.mxu0
  %v678 = vadd.f32 0.0, %v677
  %v679 = vpop.f32.mrf.mxu0
  %v680 = vadd.f32 0.0, %v679
  %681 = vmatprep.mubr.bf16.mxu0 %v178
  %682 = vmatmul.mubr.bf16.gmra.mxu0 %v177
  %v683 = vpop.f32.mrf.mxu0
  %v684 = vadd.f32 0.0, %v683
  %v685 = vpop.f32.mrf.mxu0
  %v686 = vadd.f32 0.0, %v685
  %v687 = vpop.f32.mrf.mxu0
  %v688 = vadd.f32 0.0, %v687
  %v689 = vpop.f32.mrf.mxu0
  %v690 = vadd.f32 0.0, %v689
  %691 = vmatprep.mubr.bf16.mxu0 %v180
  %692 = vmatmul.mubr.bf16.gmra.mxu0 %v179
  %v693 = vpop.f32.mrf.mxu0
  %v694 = vadd.f32 0.0, %v693
  %v695 = vpop.f32.mrf.mxu0
  %v696 = vadd.f32 0.0, %v695
  %v697 = vpop.f32.mrf.mxu0
  %v698 = vadd.f32 0.0, %v697
  %v699 = vpop.f32.mrf.mxu0
  %v700 = vadd.f32 0.0, %v699
  %701 = vmatprep.mubr.bf16.mxu0 %v182
  %702 = vmatmul.mubr.bf16.gmra.mxu0 %v181
  %v703 = vpop.f32.mrf.mxu0
  %v704 = vadd.f32 0.0, %v703
  %v705 = vpop.f32.mrf.mxu0
  %v706 = vadd.f32 0.0, %v705
  %v707 = vpop.f32.mrf.mxu0
  %v708 = vadd.f32 0.0, %v707
  %v709 = vpop.f32.mrf.mxu0
  %v710 = vadd.f32 0.0, %v709
  %711 = vmatprep.mubr.bf16.mxu0 %v184
  %712 = vmatmul.mubr.bf16.gmra.mxu0 %v183
  %v713 = vpop.f32.mrf.mxu0
  %v714 = vadd.f32 0.0, %v713
  %v715 = vpop.f32.mrf.mxu0
  %v716 = vadd.f32 0.0, %v715
  %v717 = vpop.f32.mrf.mxu0
  %v718 = vadd.f32 0.0, %v717
  %v719 = vpop.f32.mrf.mxu0
  %v720 = vadd.f32 0.0, %v719
  %721 = vmatprep.mubr.bf16.mxu0 %v186
  %722 = vmatmul.mubr.bf16.gmra.mxu0 %v185
  %v723 = vpop.f32.mrf.mxu0
  %v724 = vadd.f32 0.0, %v723
  %v725 = vpop.f32.mrf.mxu0
  %v726 = vadd.f32 0.0, %v725
  %v727 = vpop.f32.mrf.mxu0
  %v728 = vadd.f32 0.0, %v727
  %v729 = vpop.f32.mrf.mxu0
  %v730 = vadd.f32 0.0, %v729
  %731 = vmatprep.mubr.bf16.mxu0 %v188
  %732 = vmatmul.mubr.bf16.gmra.mxu0 %v187
  %v733 = vpop.f32.mrf.mxu0
  %v734 = vadd.f32 0.0, %v733
  %v735 = vpop.f32.mrf.mxu0
  %v736 = vadd.f32 0.0, %v735
  %v737 = vpop.f32.mrf.mxu0
  %v738 = vadd.f32 0.0, %v737
  %v739 = vpop.f32.mrf.mxu0
  %v740 = vadd.f32 0.0, %v739
  %741 = vmatprep.mubr.bf16.mxu0 %v190
  %742 = vmatmul.mubr.bf16.gmra.mxu0 %v189
  %v743 = vpop.f32.mrf.mxu0
  %v744 = vadd.f32 0.0, %v743
  %v745 = vpop.f32.mrf.mxu0
  %v746 = vadd.f32 0.0, %v745
  %v747 = vpop.f32.mrf.mxu0
  %v748 = vadd.f32 0.0, %v747
  %v749 = vpop.f32.mrf.mxu0
  %v750 = vadd.f32 0.0, %v749
  %751 = vmatprep.mubr.bf16.mxu0 %v192
  %752 = vmatmul.mubr.bf16.gmra.mxu0 %v191
  %v753 = vpop.f32.mrf.mxu0
  %v754 = vadd.f32 0.0, %v753
  %v755 = vpop.f32.mrf.mxu0
  %v756 = vadd.f32 0.0, %v755
  %v757 = vpop.f32.mrf.mxu0
  %v758 = vadd.f32 0.0, %v757
  %v759 = vpop.f32.mrf.mxu0
  %v760 = vadd.f32 0.0, %v759
  %761 = vmatprep.mubr.bf16.mxu0 %v194
  %762 = vmatmul.mubr.bf16.gmra.mxu0 %v193
  %v763 = vpop.f32.mrf.mxu0
  %v764 = vadd.f32 0.0, %v763
  %v765 = vpop.f32.mrf.mxu0
  %v766 = vadd.f32 0.0, %v765
  %v767 = vpop.f32.mrf.mxu0
  %v768 = vadd.f32 0.0, %v767
  %v769 = vpop.f32.mrf.mxu0
  %v770 = vadd.f32 0.0, %v769
  %771 = vmatprep.mubr.bf16.mxu0 %v196
  %772 = vmatmul.mubr.bf16.gmra.mxu0 %v195
  %v773 = vpop.f32.mrf.mxu0
  %v774 = vadd.f32 0.0, %v773
  %v775 = vpop.f32.mrf.mxu0
  %v776 = vadd.f32 0.0, %v775
  %v777 = vpop.f32.mrf.mxu0
  %v778 = vadd.f32 0.0, %v777
  %v779 = vpop.f32.mrf.mxu0
  %v780 = vadd.f32 0.0, %v779
  %781 = vmatprep.mubr.bf16.mxu0 %v198
  %782 = vmatmul.mubr.bf16.gmra.mxu0 %v197
  %v783 = vpop.f32.mrf.mxu0
  %v784 = vadd.f32 0.0, %v783
  %v785 = vpop.f32.mrf.mxu0
  %v786 = vadd.f32 0.0, %v785
  %v787 = vpop.f32.mrf.mxu0
  %v788 = vadd.f32 0.0, %v787
  %v789 = vpop.f32.mrf.mxu0
  %v790 = vadd.f32 0.0, %v789
  %791 = vmatprep.mubr.bf16.mxu0 %v200
  %792 = vmatmul.mubr.bf16.gmra.mxu0 %v199
  %v793 = vpop.f32.mrf.mxu0
  %v794 = vadd.f32 0.0, %v793
  %v795 = vpop.f32.mrf.mxu0
  %v796 = vadd.f32 0.0, %v795
  %v797 = vpop.f32.mrf.mxu0
  %v798 = vadd.f32 0.0, %v797
  %v799 = vpop.f32.mrf.mxu0
  %v800 = vadd.f32 0.0, %v799
  %801 = vmatprep.mubr.bf16.mxu0 %v202
  %802 = vmatmul.mubr.bf16.gmra.mxu0 %v201
  %v803 = vpop.f32.mrf.mxu0
  %v804 = vadd.f32 0.0, %v803
  %v805 = vpop.f32.mrf.mxu0
  %v806 = vadd.f32 0.0, %v805
  %v807 = vpop.f32.mrf.mxu0
  %v808 = vadd.f32 0.0, %v807
  %v809 = vpop.f32.mrf.mxu0
  %v810 = vadd.f32 0.0, %v809
  %811 = vmatprep.mubr.bf16.mxu0 %v204
  %812 = vmatmul.mubr.bf16.gmra.mxu0 %v203
  %v813 = vpop.f32.mrf.mxu0
  %v814 = vadd.f32 0.0, %v813
  %v815 = vpop.f32.mrf.mxu0
  %v816 = vadd.f32 0.0, %v815
  %v817 = vpop.f32.mrf.mxu0
  %v818 = vadd.f32 0.0, %v817
  %v819 = vpop.f32.mrf.mxu0
  %v820 = vadd.f32 0.0, %v819
  %821 = vmatprep.mubr.bf16.mxu0 %v206
  %822 = vmatmul.mubr.bf16.gmra.mxu0 %v205
  %v823 = vpop.f32.mrf.mxu0
  %v824 = vadd.f32 0.0, %v823
  %v825 = vpop.f32.mrf.mxu0
  %v826 = vadd.f32 0.0, %v825
  %v827 = vpop.f32.mrf.mxu0
  %v828 = vadd.f32 0.0, %v827
  %v829 = vpop.f32.mrf.mxu0
  %v830 = vadd.f32 0.0, %v829
  %831 = vmatprep.mubr.bf16.mxu0 %v208
  %832 = vmatmul.mubr.bf16.gmra.mxu0 %v207
  %v833 = vpop.f32.mrf.mxu0
  %v834 = vadd.f32 0.0, %v833
  %v835 = vpop.f32.mrf.mxu0
  %v836 = vadd.f32 0.0, %v835
  %v837 = vpop.f32.mrf.mxu0
  %v838 = vadd.f32 0.0, %v837
  %v839 = vpop.f32.mrf.mxu0
  %v840 = vadd.f32 0.0, %v839
  %841 = vmatprep.mubr.bf16.mxu0 %v210
  %842 = vmatmul.mubr.bf16.gmra.mxu0 %v209
  %v843 = vpop.f32.mrf.mxu0
  %v844 = vadd.f32 0.0, %v843
  %v845 = vpop.f32.mrf.mxu0
  %v846 = vadd.f32 0.0, %v845
  %v847 = vpop.f32.mrf.mxu0
  %v848 = vadd.f32 0.0, %v847
  %v849 = vpop.f32.mrf.mxu0
  %v850 = vadd.f32 0.0, %v849
  %851 = vmatprep.mubr.bf16.mxu0 %v212
  %852 = vmatmul.mubr.bf16.gmra.mxu0 %v211
  %v853 = vpop.f32.mrf.mxu0
  %v854 = vadd.f32 0.0, %v853
  %v855 = vpop.f32.mrf.mxu0
  %v856 = vadd.f32 0.0, %v855
  %v857 = vpop.f32.mrf.mxu0
  %v858 = vadd.f32 0.0, %v857
  %v859 = vpop.f32.mrf.mxu0
  %v860 = vadd.f32 0.0, %v859
  %861 = vmatprep.mubr.bf16.mxu0 %v214
  %862 = vmatmul.mubr.bf16.gmra.mxu0 %v213
  %v863 = vpop.f32.mrf.mxu0
  %v864 = vadd.f32 0.0, %v863
  %v865 = vpop.f32.mrf.mxu0
  %v866 = vadd.f32 0.0, %v865
  %v867 = vpop.f32.mrf.mxu0
  %v868 = vadd.f32 0.0, %v867
  %v869 = vpop.f32.mrf.mxu0
  %v870 = vadd.f32 0.0, %v869
  %871 = vmatprep.mubr.bf16.mxu0 %v216
  %872 = vmatmul.mubr.bf16.gmra.mxu0 %v215
  %v873 = vpop.f32.mrf.mxu0
  %v874 = vadd.f32 0.0, %v873
  %v875 = vpop.f32.mrf.mxu0
  %v876 = vadd.f32 0.0, %v875
  %v877 = vpop.f32.mrf.mxu0
  %v878 = vadd.f32 0.0, %v877
  %v879 = vpop.f32.mrf.mxu0
  %v880 = vadd.f32 0.0, %v879
  %881 = vmatprep.mubr.bf16.mxu0 %v218
  %882 = vmatmul.mubr.bf16.gmra.mxu0 %v217
  %v883 = vpop.f32.mrf.mxu0
  %v884 = vadd.f32 0.0, %v883
  %v885 = vpop.f32.mrf.mxu0
  %v886 = vadd.f32 0.0, %v885
  %v887 = vpop.f32.mrf.mxu0
  %v888 = vadd.f32 0.0, %v887
  %v889 = vpop.f32.mrf.mxu0
  %v890 = vadd.f32 0.0, %v889
  %891 = vdwg.mxu0
  %892 = vmatprep.subr.bf16.mxu0 0
  %893 = vmatpush1.bf16.msra.mxu0 %v466
  %894 = vmatprep.subr.bf16.mxu0 0
  %895 = vmatpush1.bf16.msra.mxu0 %v463
  %896 = vmatprep.subr.bf16.mxu0 0
  %897 = vmatpush1.bf16.msra.mxu0 %v460
  %898 = vmatprep.subr.bf16.mxu0 0
  %899 = vmatpush1.bf16.msra.mxu0 %v457
  %900 = vmatprep.subr.bf16.mxu0 0
  %901 = vmatpush1.bf16.msra.mxu0 %v454
  %902 = vmatprep.subr.bf16.mxu0 0
  %903 = vmatpush1.bf16.msra.mxu0 %v451
  %904 = vmatprep.subr.bf16.mxu0 0
  %905 = vmatpush1.bf16.msra.mxu0 %v448
  %906 = vmatprep.subr.bf16.mxu0 0
  %907 = vmatpush1.bf16.msra.mxu0 %v445
  %908 = vmatprep.subr.bf16.mxu0 0
  %909 = vmatpush2.bf16.msra.mxu0 %v490
  %910 = vmatprep.subr.bf16.mxu0 0
  %911 = vmatpush2.bf16.msra.mxu0 %v487
  %912 = vmatprep.subr.bf16.mxu0 0
  %913 = vmatpush2.bf16.msra.mxu0 %v484
  %914 = vmatprep.subr.bf16.mxu0 0
  %915 = vmatpush2.bf16.msra.mxu0 %v481
  %916 = vmatprep.subr.bf16.mxu0 0
  %917 = vmatpush2.bf16.msra.mxu0 %v478
  %918 = vmatprep.subr.bf16.mxu0 0
  %919 = vmatpush2.bf16.msra.mxu0 %v475
  %920 = vmatprep.subr.bf16.mxu0 0
  %921 = vmatpush2.bf16.msra.mxu0 %v472
  %922 = vmatprep.subr.bf16.mxu0 0
  %923 = vmatpush2.bf16.msra.mxu0 %v469
  %924 = vmatprep.mubr.bf16.mxu0 %v156
  %925 = vmatmul.mubr.bf16.gmra.mxu0 %v155
  %v926 = vpop.f32.mrf.mxu0
  %v927 = vpop.f32.mrf.mxu0
  %v928 = vpop.f32.mrf.mxu0
  %v929 = vpop.f32.mrf.mxu0
  %930 = vmatprep.mubr.bf16.mxu0 %v158
  %931 = vmatmul.mubr.bf16.gmra.mxu0 %v157
  %v932 = vpop.f32.mrf.mxu0
  %v933 = vadd.f32 0.0, %v932
  %v934 = vpop.f32.mrf.mxu0
  %v935 = vpop.f32.mrf.mxu0
  %v936 = vadd.f32 0.0, %v935
  %v937 = vpop.f32.mrf.mxu0
  %938 = vmatprep.mubr.bf16.mxu0 %v160
  %939 = vmatmul.mubr.bf16.gmra.mxu0 %v159
  %v940 = vpop.f32.mrf.mxu0
  %v941 = vadd.f32 0.0, %v940
  %v942 = vpop.f32.mrf.mxu0
  %v943 = vpop.f32.mrf.mxu0
  %v944 = vadd.f32 0.0, %v943
  %v945 = vpop.f32.mrf.mxu0
  %946 = vmatprep.mubr.bf16.mxu0 %v162
  %947 = vmatmul.mubr.bf16.gmra.mxu0 %v161
  %v948 = vpop.f32.mrf.mxu0
  %v949 = vadd.f32 0.0, %v948
  %v950 = vpop.f32.mrf.mxu0
  %v951 = vpop.f32.mrf.mxu0
  %v952 = vadd.f32 0.0, %v951
  %v953 = vpop.f32.mrf.mxu0
  %954 = vmatprep.mubr.bf16.mxu0 %v164
  %955 = vmatmul.mubr.bf16.gmra.mxu0 %v163
  %v956 = vpop.f32.mrf.mxu0
  %v957 = vadd.f32 0.0, %v956
  %v958 = vpop.f32.mrf.mxu0
  %v959 = vpop.f32.mrf.mxu0
  %v960 = vadd.f32 0.0, %v959
  %v961 = vpop.f32.mrf.mxu0
  %962 = vmatprep.mubr.bf16.mxu0 %v166
  %963 = vmatmul.mubr.bf16.gmra.mxu0 %v165
  %v964 = vpop.f32.mrf.mxu0
  %v965 = vadd.f32 0.0, %v964
  %v966 = vpop.f32.mrf.mxu0
  %v967 = vpop.f32.mrf.mxu0
  %v968 = vadd.f32 0.0, %v967
  %v969 = vpop.f32.mrf.mxu0
  %970 = vmatprep.mubr.bf16.mxu0 %v168
  %971 = vmatmul.mubr.bf16.gmra.mxu0 %v167
  %v972 = vpop.f32.mrf.mxu0
  %v973 = vadd.f32 0.0, %v972
  %v974 = vpop.f32.mrf.mxu0
  %v975 = vpop.f32.mrf.mxu0
  %v976 = vadd.f32 0.0, %v975
  %v977 = vpop.f32.mrf.mxu0
  %978 = vmatprep.mubr.bf16.mxu0 %v170
  %979 = vmatmul.mubr.bf16.gmra.mxu0 %v169
  %v980 = vpop.f32.mrf.mxu0
  %v981 = vadd.f32 0.0, %v980
  %v982 = vpop.f32.mrf.mxu0
  %v983 = vpop.f32.mrf.mxu0
  %v984 = vadd.f32 0.0, %v983
  %v985 = vpop.f32.mrf.mxu0
  %986 = vmatprep.mubr.bf16.mxu0 %v172
  %987 = vmatmul.mubr.bf16.gmra.mxu0 %v171
  %v988 = vpop.f32.mrf.mxu0
  %v989 = vadd.f32 0.0, %v988
  %v990 = vpop.f32.mrf.mxu0
  %v991 = vpop.f32.mrf.mxu0
  %v992 = vadd.f32 0.0, %v991
  %v993 = vpop.f32.mrf.mxu0
  %994 = vmatprep.mubr.bf16.mxu0 %v174
  %995 = vmatmul.mubr.bf16.gmra.mxu0 %v173
  %v996 = vpop.f32.mrf.mxu0
  %v997 = vadd.f32 0.0, %v996
  %v998 = vpop.f32.mrf.mxu0
  %v999 = vpop.f32.mrf.mxu0
  %v1000 = vadd.f32 0.0, %v999
  %v1001 = vpop.f32.mrf.mxu0
  %1002 = vmatprep.mubr.bf16.mxu0 %v176
  %1003 = vmatmul.mubr.bf16.gmra.mxu0 %v175
  %v1004 = vpop.f32.mrf.mxu0
  %v1005 = vadd.f32 0.0, %v1004
  %v1006 = vpop.f32.mrf.mxu0
  %v1007 = vpop.f32.mrf.mxu0
  %v1008 = vadd.f32 0.0, %v1007
  %v1009 = vpop.f32.mrf.mxu0
  %1010 = vmatprep.mubr.bf16.mxu0 %v178
  %1011 = vmatmul.mubr.bf16.gmra.mxu0 %v177
  %v1012 = vpop.f32.mrf.mxu0
  %v1013 = vadd.f32 0.0, %v1012
  %v1014 = vpop.f32.mrf.mxu0
  %v1015 = vpop.f32.mrf.mxu0
  %v1016 = vadd.f32 0.0, %v1015
  %v1017 = vpop.f32.mrf.mxu0
  %1018 = vmatprep.mubr.bf16.mxu0 %v180
  %1019 = vmatmul.mubr.bf16.gmra.mxu0 %v179
  %v1020 = vpop.f32.mrf.mxu0
  %v1021 = vadd.f32 0.0, %v1020
  %v1022 = vpop.f32.mrf.mxu0
  %v1023 = vpop.f32.mrf.mxu0
  %v1024 = vadd.f32 0.0, %v1023
  %v1025 = vpop.f32.mrf.mxu0
  %1026 = vmatprep.mubr.bf16.mxu0 %v182
  %1027 = vmatmul.mubr.bf16.gmra.mxu0 %v181
  %v1028 = vpop.f32.mrf.mxu0
  %v1029 = vadd.f32 0.0, %v1028
  %v1030 = vpop.f32.mrf.mxu0
  %v1031 = vpop.f32.mrf.mxu0
  %v1032 = vadd.f32 0.0, %v1031
  %v1033 = vpop.f32.mrf.mxu0
  %1034 = vmatprep.mubr.bf16.mxu0 %v184
  %1035 = vmatmul.mubr.bf16.gmra.mxu0 %v183
  %v1036 = vpop.f32.mrf.mxu0
  %v1037 = vadd.f32 0.0, %v1036
  %v1038 = vpop.f32.mrf.mxu0
  %v1039 = vpop.f32.mrf.mxu0
  %v1040 = vadd.f32 0.0, %v1039
  %v1041 = vpop.f32.mrf.mxu0
  %1042 = vmatprep.mubr.bf16.mxu0 %v186
  %1043 = vmatmul.mubr.bf16.gmra.mxu0 %v185
  %v1044 = vpop.f32.mrf.mxu0
  %v1045 = vadd.f32 0.0, %v1044
  %v1046 = vpop.f32.mrf.mxu0
  %v1047 = vpop.f32.mrf.mxu0
  %v1048 = vadd.f32 0.0, %v1047
  %v1049 = vpop.f32.mrf.mxu0
  %1050 = vmatprep.mubr.bf16.mxu0 %v188
  %1051 = vmatmul.mubr.bf16.gmra.mxu0 %v187
  %v1052 = vpop.f32.mrf.mxu0
  %v1053 = vpop.f32.mrf.mxu0
  %v1054 = vpop.f32.mrf.mxu0
  %v1055 = vpop.f32.mrf.mxu0
  %1056 = vmatprep.mubr.bf16.mxu0 %v190
  %1057 = vmatmul.mubr.bf16.gmra.mxu0 %v189
  %v1058 = vpop.f32.mrf.mxu0
  %v1059 = vadd.f32 0.0, %v1058
  %v1060 = vpop.f32.mrf.mxu0
  %v1061 = vpop.f32.mrf.mxu0
  %v1062 = vadd.f32 0.0, %v1061
  %v1063 = vpop.f32.mrf.mxu0
  %1064 = vmatprep.mubr.bf16.mxu0 %v192
  %1065 = vmatmul.mubr.bf16.gmra.mxu0 %v191
  %v1066 = vpop.f32.mrf.mxu0
  %v1067 = vadd.f32 0.0, %v1066
  %v1068 = vpop.f32.mrf.mxu0
  %v1069 = vpop.f32.mrf.mxu0
  %v1070 = vadd.f32 0.0, %v1069
  %v1071 = vpop.f32.mrf.mxu0
  %1072 = vmatprep.mubr.bf16.mxu0 %v194
  %1073 = vmatmul.mubr.bf16.gmra.mxu0 %v193
  %v1074 = vpop.f32.mrf.mxu0
  %v1075 = vadd.f32 0.0, %v1074
  %v1076 = vpop.f32.mrf.mxu0
  %v1077 = vpop.f32.mrf.mxu0
  %v1078 = vadd.f32 0.0, %v1077
  %v1079 = vpop.f32.mrf.mxu0
  %1080 = vmatprep.mubr.bf16.mxu0 %v196
  %1081 = vmatmul.mubr.bf16.gmra.mxu0 %v195
  %v1082 = vpop.f32.mrf.mxu0
  %v1083 = vadd.f32 0.0, %v1082
  %v1084 = vpop.f32.mrf.mxu0
  %v1085 = vpop.f32.mrf.mxu0
  %v1086 = vadd.f32 0.0, %v1085
  %v1087 = vpop.f32.mrf.mxu0
  %1088 = vmatprep.mubr.bf16.mxu0 %v198
  %1089 = vmatmul.mubr.bf16.gmra.mxu0 %v197
  %v1090 = vpop.f32.mrf.mxu0
  %v1091 = vadd.f32 0.0, %v1090
  %v1092 = vpop.f32.mrf.mxu0
  %v1093 = vpop.f32.mrf.mxu0
  %v1094 = vadd.f32 0.0, %v1093
  %v1095 = vpop.f32.mrf.mxu0
  %1096 = vmatprep.mubr.bf16.mxu0 %v200
  %1097 = vmatmul.mubr.bf16.gmra.mxu0 %v199
  %v1098 = vpop.f32.mrf.mxu0
  %v1099 = vadd.f32 0.0, %v1098
  %v1100 = vpop.f32.mrf.mxu0
  %v1101 = vpop.f32.mrf.mxu0
  %v1102 = vadd.f32 0.0, %v1101
  %v1103 = vpop.f32.mrf.mxu0
  %1104 = vmatprep.mubr.bf16.mxu0 %v202
  %1105 = vmatmul.mubr.bf16.gmra.mxu0 %v201
  %v1106 = vpop.f32.mrf.mxu0
  %v1107 = vadd.f32 0.0, %v1106
  %v1108 = vpop.f32.mrf.mxu0
  %v1109 = vpop.f32.mrf.mxu0
  %v1110 = vadd.f32 0.0, %v1109
  %v1111 = vpop.f32.mrf.mxu0
  %1112 = vmatprep.mubr.bf16.mxu0 %v204
  %1113 = vmatmul.mubr.bf16.gmra.mxu0 %v203
  %v1114 = vpop.f32.mrf.mxu0
  %v1115 = vadd.f32 0.0, %v1114
  %v1116 = vpop.f32.mrf.mxu0
  %v1117 = vpop.f32.mrf.mxu0
  %v1118 = vadd.f32 0.0, %v1117
  %v1119 = vpop.f32.mrf.mxu0
  %1120 = vmatprep.mubr.bf16.mxu0 %v206
  %1121 = vmatmul.mubr.bf16.gmra.mxu0 %v205
  %v1122 = vpop.f32.mrf.mxu0
  %v1123 = vadd.f32 0.0, %v1122
  %v1124 = vpop.f32.mrf.mxu0
  %v1125 = vpop.f32.mrf.mxu0
  %v1126 = vadd.f32 0.0, %v1125
  %v1127 = vpop.f32.mrf.mxu0
  %1128 = vmatprep.mubr.bf16.mxu0 %v208
  %1129 = vmatmul.mubr.bf16.gmra.mxu0 %v207
  %v1130 = vpop.f32.mrf.mxu0
  %v1131 = vadd.f32 0.0, %v1130
  %v1132 = vpop.f32.mrf.mxu0
  %v1133 = vpop.f32.mrf.mxu0
  %v1134 = vadd.f32 0.0, %v1133
  %v1135 = vpop.f32.mrf.mxu0
  %1136 = vmatprep.mubr.bf16.mxu0 %v210
  %1137 = vmatmul.mubr.bf16.gmra.mxu0 %v209
  %v1138 = vpop.f32.mrf.mxu0
  %v1139 = vadd.f32 0.0, %v1138
  %v1140 = vpop.f32.mrf.mxu0
  %v1141 = vpop.f32.mrf.mxu0
  %v1142 = vadd.f32 0.0, %v1141
  %v1143 = vpop.f32.mrf.mxu0
  %1144 = vmatprep.mubr.bf16.mxu0 %v212
  %1145 = vmatmul.mubr.bf16.gmra.mxu0 %v211
  %v1146 = vpop.f32.mrf.mxu0
  %v1147 = vadd.f32 0.0, %v1146
  %v1148 = vpop.f32.mrf.mxu0
  %v1149 = vpop.f32.mrf.mxu0
  %v1150 = vadd.f32 0.0, %v1149
  %v1151 = vpop.f32.mrf.mxu0
  %1152 = vmatprep.mubr.bf16.mxu0 %v214
  %1153 = vmatmul.mubr.bf16.gmra.mxu0 %v213
  %v1154 = vpop.f32.mrf.mxu0
  %v1155 = vadd.f32 0.0, %v1154
  %v1156 = vpop.f32.mrf.mxu0
  %v1157 = vpop.f32.mrf.mxu0
  %v1158 = vadd.f32 0.0, %v1157
  %v1159 = vpop.f32.mrf.mxu0
  %1160 = vmatprep.mubr.bf16.mxu0 %v216
  %1161 = vmatmul.mubr.bf16.gmra.mxu0 %v215
  %v1162 = vpop.f32.mrf.mxu0
  %v1163 = vadd.f32 0.0, %v1162
  %v1164 = vpop.f32.mrf.mxu0
  %v1165 = vpop.f32.mrf.mxu0
  %v1166 = vadd.f32 0.0, %v1165
  %v1167 = vpop.f32.mrf.mxu0
  %1168 = vmatprep.mubr.bf16.mxu0 %v218
  %1169 = vmatmul.mubr.bf16.gmra.mxu0 %v217
  %v1170 = vpop.f32.mrf.mxu0
  %v1171 = vadd.f32 0.0, %v1170
  %v1172 = vpop.f32.mrf.mxu0
  %v1173 = vpop.f32.mrf.mxu0
  %v1174 = vadd.f32 0.0, %v1173
  %v1175 = vpop.f32.mrf.mxu0
  %1176 = vdwg.mxu0
  %vm1366 = vcmask 1040384
  %v1367 = vrot.slane 0.0, 7
  %v1368 = vsel %vm1366, %v1367, %v1367
  %v1369 = vrot.slane %v574, 7
  %v1370 = vrot.slane %v576, 7
  %v1371 = vrot.slane %v578, 7
  %v1372 = vsel %vm1366, %v1369, %v1371
  %v1373 = vrot.slane %v580, 7
  %v1374 = vsel %vm1366, %v1370, %v1373
  %v1375 = vrot.slane %v584, 7
  %v1376 = vrot.slane %v586, 7
  %v1377 = vrot.slane %v933, 7
  %v1378 = vrot.slane %v588, 7
  %v1379 = vsel %vm1366, %v1375, %v1378
  %v1380 = vrot.slane %v590, 7
  %v1381 = vsel %vm1366, %v1376, %v1380
  %v1382 = vrot.slane %v936, 7
  %v1383 = vsel %vm1366, %v1377, %v1382
  %v1384 = vrot.slane %v594, 7
  %v1385 = vrot.slane %v596, 7
  %v1386 = vrot.slane %v941, 7
  %v1387 = vrot.slane %v598, 7
  %v1388 = vsel %vm1366, %v1384, %v1387
  %v1389 = vrot.slane %v600, 7
  %v1390 = vsel %vm1366, %v1385, %v1389
  %v1391 = vrot.slane %v944, 7
  %v1392 = vsel %vm1366, %v1386, %v1391
  %v1393 = vrot.slane %v604, 7
  %v1394 = vrot.slane %v606, 7
  %v1395 = vrot.slane %v949, 7
  %v1396 = vrot.slane %v608, 7
  %v1397 = vsel %vm1366, %v1393, %v1396
  %v1398 = vrot.slane %v610, 7
  %v1399 = vsel %vm1366, %v1394, %v1398
  %v1400 = vrot.slane %v952, 7
  %v1401 = vsel %vm1366, %v1395, %v1400
  %v1402 = vrot.slane %v614, 7
  %v1403 = vrot.slane %v616, 7
  %v1404 = vrot.slane %v957, 7
  %v1405 = vrot.slane %v618, 7
  %v1406 = vsel %vm1366, %v1402, %v1405
  %v1407 = vrot.slane %v620, 7
  %v1408 = vsel %vm1366, %v1403, %v1407
  %v1409 = vrot.slane %v960, 7
  %v1410 = vsel %vm1366, %v1404, %v1409
  %v1411 = vrot.slane %v624, 7
  %v1412 = vrot.slane %v626, 7
  %v1413 = vrot.slane %v965, 7
  %v1414 = vrot.slane %v628, 7
  %v1415 = vsel %vm1366, %v1411, %v1414
  %v1416 = vrot.slane %v630, 7
  %v1417 = vsel %vm1366, %v1412, %v1416
  %v1418 = vrot.slane %v968, 7
  %v1419 = vsel %vm1366, %v1413, %v1418
  %v1420 = vrot.slane %v634, 7
  %v1421 = vrot.slane %v636, 7
  %v1422 = vrot.slane %v973, 7
  %v1423 = vrot.slane %v638, 7
  %v1424 = vsel %vm1366, %v1420, %v1423
  %v1425 = vrot.slane %v640, 7
  %v1426 = vsel %vm1366, %v1421, %v1425
  %v1427 = vrot.slane %v976, 7
  %v1428 = vsel %vm1366, %v1422, %v1427
  %v1429 = vrot.slane %v644, 7
  %v1430 = vrot.slane %v646, 7
  %v1431 = vrot.slane %v981, 7
  %v1432 = vrot.slane %v648, 7
  %v1433 = vsel %vm1366, %v1429, %v1432
  %v1434 = vrot.slane %v650, 7
  %v1435 = vsel %vm1366, %v1430, %v1434
  %v1436 = vrot.slane %v984, 7
  %v1437 = vsel %vm1366, %v1431, %v1436
  %v1438 = vrot.slane %v654, 7
  %v1439 = vrot.slane %v656, 7
  %v1440 = vrot.slane %v989, 7
  %v1441 = vrot.slane %v658, 7
  %v1442 = vsel %vm1366, %v1438, %v1441
  %v1443 = vrot.slane %v660, 7
  %v1444 = vsel %vm1366, %v1439, %v1443
  %v1445 = vrot.slane %v992, 7
  %v1446 = vsel %vm1366, %v1440, %v1445
  %v1447 = vrot.slane %v664, 7
  %v1448 = vrot.slane %v666, 7
  %v1449 = vrot.slane %v997, 7
  %v1450 = vrot.slane %v668, 7
  %v1451 = vsel %vm1366, %v1447, %v1450
  %v1452 = vrot.slane %v670, 7
  %v1453 = vsel %vm1366, %v1448, %v1452
  %v1454 = vrot.slane %v1000, 7
  %v1455 = vsel %vm1366, %v1449, %v1454
  %v1456 = vrot.slane %v674, 7
  %v1457 = vrot.slane %v676, 7
  %v1458 = vrot.slane %v1005, 7
  %v1459 = vrot.slane %v678, 7
  %v1460 = vsel %vm1366, %v1456, %v1459
  %v1461 = vrot.slane %v680, 7
  %v1462 = vsel %vm1366, %v1457, %v1461
  %v1463 = vrot.slane %v1008, 7
  %v1464 = vsel %vm1366, %v1458, %v1463
  %v1465 = vrot.slane %v684, 7
  %v1466 = vrot.slane %v686, 7
  %v1467 = vrot.slane %v1013, 7
  %v1468 = vrot.slane %v688, 7
  %v1469 = vsel %vm1366, %v1465, %v1468
  %v1470 = vrot.slane %v690, 7
  %v1471 = vsel %vm1366, %v1466, %v1470
  %v1472 = vrot.slane %v1016, 7
  %v1473 = vsel %vm1366, %v1467, %v1472
  %v1474 = vrot.slane %v694, 7
  %v1475 = vrot.slane %v696, 7
  %v1476 = vrot.slane %v1021, 7
  %v1477 = vrot.slane %v698, 7
  %v1478 = vsel %vm1366, %v1474, %v1477
  %v1479 = vrot.slane %v700, 7
  %v1480 = vsel %vm1366, %v1475, %v1479
  %v1481 = vrot.slane %v1024, 7
  %v1482 = vsel %vm1366, %v1476, %v1481
  %v1483 = vrot.slane %v704, 7
  %v1484 = vrot.slane %v706, 7
  %v1485 = vrot.slane %v1029, 7
  %v1486 = vrot.slane %v708, 7
  %v1487 = vsel %vm1366, %v1483, %v1486
  %v1488 = vrot.slane %v710, 7
  %v1489 = vsel %vm1366, %v1484, %v1488
  %v1490 = vrot.slane %v1032, 7
  %v1491 = vsel %vm1366, %v1485, %v1490
  %v1492 = vrot.slane %v714, 7
  %v1493 = vrot.slane %v716, 7
  %v1494 = vrot.slane %v1037, 7
  %v1495 = vrot.slane %v718, 7
  %v1496 = vsel %vm1366, %v1492, %v1495
  %v1497 = vrot.slane %v720, 7
  %v1498 = vsel %vm1366, %v1493, %v1497
  %v1499 = vrot.slane %v1040, 7
  %v1500 = vsel %vm1366, %v1494, %v1499
  %v1501 = vrot.slane %v724, 7
  %v1502 = vrot.slane %v726, 7
  %v1503 = vrot.slane %v1045, 7
  %v1504 = vrot.slane %v728, 7
  %v1505 = vsel %vm1366, %v1501, %v1504
  %v1506 = vrot.slane %v730, 7
  %v1507 = vsel %vm1366, %v1502, %v1506
  %v1508 = vrot.slane %v1048, 7
  %v1509 = vsel %vm1366, %v1503, %v1508
  %v1510 = vrot.slane %v734, 7
  %v1511 = vrot.slane %v736, 7
  %v1512 = vrot.slane %v738, 7
  %v1513 = vsel %vm1366, %v1510, %v1512
  %v1514 = vrot.slane %v740, 7
  %v1515 = vsel %vm1366, %v1511, %v1514
  %v1516 = vrot.slane %v744, 7
  %v1517 = vrot.slane %v746, 7
  %v1518 = vrot.slane %v1059, 7
  %v1519 = vrot.slane %v748, 7
  %v1520 = vsel %vm1366, %v1516, %v1519
  %v1521 = vrot.slane %v750, 7
  %v1522 = vsel %vm1366, %v1517, %v1521
  %v1523 = vrot.slane %v1062, 7
  %v1524 = vsel %vm1366, %v1518, %v1523
  %v1525 = vrot.slane %v754, 7
  %v1526 = vrot.slane %v756, 7
  %v1527 = vrot.slane %v1067, 7
  %v1528 = vrot.slane %v758, 7
  %v1529 = vsel %vm1366, %v1525, %v1528
  %v1530 = vrot.slane %v760, 7
  %v1531 = vsel %vm1366, %v1526, %v1530
  %v1532 = vrot.slane %v1070, 7
  %v1533 = vsel %vm1366, %v1527, %v1532
  %v1534 = vrot.slane %v764, 7
  %v1535 = vrot.slane %v766, 7
  %v1536 = vrot.slane %v1075, 7
  %v1537 = vrot.slane %v768, 7
  %v1538 = vsel %vm1366, %v1534, %v1537
  %v1539 = vrot.slane %v770, 7
  %v1540 = vsel %vm1366, %v1535, %v1539
  %v1541 = vrot.slane %v1078, 7
  %v1542 = vsel %vm1366, %v1536, %v1541
  %v1543 = vrot.slane %v774, 7
  %v1544 = vrot.slane %v776, 7
  %v1545 = vrot.slane %v1083, 7
  %v1546 = vrot.slane %v778, 7
  %v1547 = vsel %vm1366, %v1543, %v1546
  %v1548 = vrot.slane %v780, 7
  %v1549 = vsel %vm1366, %v1544, %v1548
  %v1550 = vrot.slane %v1086, 7
  %v1551 = vsel %vm1366, %v1545, %v1550
  %v1552 = vrot.slane %v784, 7
  %v1553 = vrot.slane %v786, 7
  %v1554 = vrot.slane %v1091, 7
  %v1555 = vrot.slane %v788, 7
  %v1556 = vsel %vm1366, %v1552, %v1555
  %v1557 = vrot.slane %v790, 7
  %v1558 = vsel %vm1366, %v1553, %v1557
  %v1559 = vrot.slane %v1094, 7
  %v1560 = vsel %vm1366, %v1554, %v1559
  %v1561 = vrot.slane %v794, 7
  %v1562 = vrot.slane %v796, 7
  %v1563 = vrot.slane %v1099, 7
  %v1564 = vrot.slane %v798, 7
  %v1565 = vsel %vm1366, %v1561, %v1564
  %v1566 = vrot.slane %v800, 7
  %v1567 = vsel %vm1366, %v1562, %v1566
  %v1568 = vrot.slane %v1102, 7
  %v1569 = vsel %vm1366, %v1563, %v1568
  %v1570 = vrot.slane %v804, 7
  %v1571 = vrot.slane %v806, 7
  %v1572 = vrot.slane %v1107, 7
  %v1573 = vrot.slane %v808, 7
  %v1574 = vsel %vm1366, %v1570, %v1573
  %v1575 = vrot.slane %v810, 7
  %v1576 = vsel %vm1366, %v1571, %v1575
  %v1577 = vrot.slane %v1110, 7
  %v1578 = vsel %vm1366, %v1572, %v1577
  %v1579 = vrot.slane %v814, 7
  %v1580 = vrot.slane %v816, 7
  %v1581 = vrot.slane %v1115, 7
  %v1582 = vrot.slane %v818, 7
  %v1583 = vsel %vm1366, %v1579, %v1582
  %v1584 = vrot.slane %v820, 7
  %v1585 = vsel %vm1366, %v1580, %v1584
  %v1586 = vrot.slane %v1118, 7
  %v1587 = vsel %vm1366, %v1581, %v1586
  %v1588 = vrot.slane %v824, 7
  %v1589 = vrot.slane %v826, 7
  %v1590 = vrot.slane %v1123, 7
  %v1591 = vrot.slane %v828, 7
  %v1592 = vsel %vm1366, %v1588, %v1591
  %v1593 = vrot.slane %v830, 7
  %v1594 = vsel %vm1366, %v1589, %v1593
  %v1595 = vrot.slane %v1126, 7
  %v1596 = vsel %vm1366, %v1590, %v1595
  %v1597 = vrot.slane %v834, 7
  %v1598 = vrot.slane %v836, 7
  %v1599 = vrot.slane %v1131, 7
  %v1600 = vrot.slane %v838, 7
  %v1601 = vsel %vm1366, %v1597, %v1600
  %v1602 = vrot.slane %v840, 7
  %v1603 = vsel %vm1366, %v1598, %v1602
  %v1604 = vrot.slane %v1134, 7
  %v1605 = vsel %vm1366, %v1599, %v1604
  %v1606 = vrot.slane %v844, 7
  %v1607 = vrot.slane %v846, 7
  %v1608 = vrot.slane %v1139, 7
  %v1609 = vrot.slane %v848, 7
  %v1610 = vsel %vm1366, %v1606, %v1609
  %v1611 = vrot.slane %v850, 7
  %v1612 = vsel %vm1366, %v1607, %v1611
  %v1613 = vrot.slane %v1142, 7
  %v1614 = vsel %vm1366, %v1608, %v1613
  %v1615 = vrot.slane %v854, 7
  %v1616 = vrot.slane %v856, 7
  %v1617 = vrot.slane %v1147, 7
  %v1618 = vrot.slane %v858, 7
  %v1619 = vsel %vm1366, %v1615, %v1618
  %v1620 = vrot.slane %v860, 7
  %v1621 = vsel %vm1366, %v1616, %v1620
  %v1622 = vrot.slane %v1150, 7
  %v1623 = vsel %vm1366, %v1617, %v1622
  %v1624 = vrot.slane %v864, 7
  %v1625 = vrot.slane %v866, 7
  %v1626 = vrot.slane %v1155, 7
  %v1627 = vrot.slane %v868, 7
  %v1628 = vsel %vm1366, %v1624, %v1627
  %v1629 = vrot.slane %v870, 7
  %v1630 = vsel %vm1366, %v1625, %v1629
  %v1631 = vrot.slane %v1158, 7
  %v1632 = vsel %vm1366, %v1626, %v1631
  %v1633 = vrot.slane %v874, 7
  %v1634 = vrot.slane %v876, 7
  %v1635 = vrot.slane %v1163, 7
  %v1636 = vrot.slane %v878, 7
  %v1637 = vsel %vm1366, %v1633, %v1636
  %v1638 = vrot.slane %v880, 7
  %v1639 = vsel %vm1366, %v1634, %v1638
  %v1640 = vrot.slane %v1166, 7
  %v1641 = vsel %vm1366, %v1635, %v1640
  %v1642 = vrot.slane %v884, 7
  %v1643 = vrot.slane %v886, 7
  %v1644 = vrot.slane %v1171, 7
  %v1645 = vrot.slane %v888, 7
  %v1646 = vsel %vm1366, %v1642, %v1645
  %v1647 = vrot.slane %v890, 7
  %v1648 = vsel %vm1366, %v1643, %v1647
  %v1649 = vrot.slane %v1174, 7
  %v1650 = vsel %vm1366, %v1644, %v1649
  %v1869 = vsel %vm1366, 0.0, %v1367
  %v1870 = vsel %vm1366, 0.0, %v1369
  %v1871 = vsel %vm1366, 0.0, %v1370
  %v1872 = vsel %vm1366, 0.0, %v1375
  %v1873 = vsel %vm1366, 0.0, %v1376
  %v1874 = vsel %vm1366, 0.0, %v1377
  %v1875 = vsel %vm1366, 0.0, %v1384
  %v1876 = vsel %vm1366, 0.0, %v1385
  %v1877 = vsel %vm1366, 0.0, %v1386
  %v1878 = vsel %vm1366, 0.0, %v1393
  %v1879 = vsel %vm1366, 0.0, %v1394
  %v1880 = vsel %vm1366, 0.0, %v1395
  %v1881 = vsel %vm1366, 0.0, %v1402
  %v1882 = vsel %vm1366, 0.0, %v1403
  %v1883 = vsel %vm1366, 0.0, %v1404
  %v1884 = vsel %vm1366, 0.0, %v1411
  %v1885 = vsel %vm1366, 0.0, %v1412
  %v1886 = vsel %vm1366, 0.0, %v1413
  %v1887 = vsel %vm1366, 0.0, %v1420
  %v1888 = vsel %vm1366, 0.0, %v1421
  %v1889 = vsel %vm1366, 0.0, %v1422
  %v1890 = vsel %vm1366, 0.0, %v1429
  %v1891 = vsel %vm1366, 0.0, %v1430
  %v1892 = vsel %vm1366, 0.0, %v1431
  %v1893 = vsel %vm1366, 0.0, %v1438
  %v1894 = vsel %vm1366, 0.0, %v1439
  %v1895 = vsel %vm1366, 0.0, %v1440
  %v1896 = vsel %vm1366, 0.0, %v1447
  %v1897 = vsel %vm1366, 0.0, %v1448
  %v1898 = vsel %vm1366, 0.0, %v1449
  %v1899 = vsel %vm1366, 0.0, %v1456
  %v1900 = vsel %vm1366, 0.0, %v1457
  %v1901 = vsel %vm1366, 0.0, %v1458
  %v1902 = vsel %vm1366, 0.0, %v1465
  %v1903 = vsel %vm1366, 0.0, %v1466
  %v1904 = vsel %vm1366, 0.0, %v1467
  %v1905 = vsel %vm1366, 0.0, %v1474
  %v1906 = vsel %vm1366, 0.0, %v1475
  %v1907 = vsel %vm1366, 0.0, %v1476
  %v1908 = vsel %vm1366, 0.0, %v1483
  %v1909 = vsel %vm1366, 0.0, %v1484
  %v1910 = vsel %vm1366, 0.0, %v1485
  %v1911 = vsel %vm1366, 0.0, %v1492
  %v1912 = vsel %vm1366, 0.0, %v1493
  %v1913 = vsel %vm1366, 0.0, %v1494
  %v1914 = vsel %vm1366, 0.0, %v1501
  %v1915 = vsel %vm1366, 0.0, %v1502
  %v1916 = vsel %vm1366, 0.0, %v1503
  %v1917 = vsel %vm1366, 0.0, %v1510
  %v1918 = vsel %vm1366, 0.0, %v1511
  %v1919 = vsel %vm1366, 0.0, %v1516
  %v1920 = vsel %vm1366, 0.0, %v1517
  %v1921 = vsel %vm1366, 0.0, %v1518
  %v1922 = vsel %vm1366, 0.0, %v1525
  %v1923 = vsel %vm1366, 0.0, %v1526
  %v1924 = vsel %vm1366, 0.0, %v1527
  %v1925 = vsel %vm1366, 0.0, %v1534
  %v1926 = vsel %vm1366, 0.0, %v1535
  %v1927 = vsel %vm1366, 0.0, %v1536
  %v1928 = vsel %vm1366, 0.0, %v1543
  %v1929 = vsel %vm1366, 0.0, %v1544
  %v1930 = vsel %vm1366, 0.0, %v1545
  %v1931 = vsel %vm1366, 0.0, %v1552
  %v1932 = vsel %vm1366, 0.0, %v1553
  %v1933 = vsel %vm1366, 0.0, %v1554
  %v1934 = vsel %vm1366, 0.0, %v1561
  %v1935 = vsel %vm1366, 0.0, %v1562
  %v1936 = vsel %vm1366, 0.0, %v1563
  %v1937 = vsel %vm1366, 0.0, %v1570
  %v1938 = vsel %vm1366, 0.0, %v1571
  %v1939 = vsel %vm1366, 0.0, %v1572
  %v1940 = vsel %vm1366, 0.0, %v1579
  %v1941 = vsel %vm1366, 0.0, %v1580
  %v1942 = vsel %vm1366, 0.0, %v1581
  %v1943 = vsel %vm1366, 0.0, %v1588
  %v1944 = vsel %vm1366, 0.0, %v1589
  %v1945 = vsel %vm1366, 0.0, %v1590
  %v1946 = vsel %vm1366, 0.0, %v1597
  %v1947 = vsel %vm1366, 0.0, %v1598
  %v1948 = vsel %vm1366, 0.0, %v1599
  %v1949 = vsel %vm1366, 0.0, %v1606
  %v1950 = vsel %vm1366, 0.0, %v1607
  %v1951 = vsel %vm1366, 0.0, %v1608
  %v1952 = vsel %vm1366, 0.0, %v1615
  %v1953 = vsel %vm1366, 0.0, %v1616
  %v1954 = vsel %vm1366, 0.0, %v1617
  %v1955 = vsel %vm1366, 0.0, %v1624
  %v1956 = vsel %vm1366, 0.0, %v1625
  %v1957 = vsel %vm1366, 0.0, %v1626
  %v1958 = vsel %vm1366, 0.0, %v1633
  %v1959 = vsel %vm1366, 0.0, %v1634
  %v1960 = vsel %vm1366, 0.0, %v1635
  %v1961 = vsel %vm1366, 0.0, %v1642
  %v1962 = vsel %vm1366, 0.0, %v1643
  %v1963 = vsel %vm1366, 0.0, %v1644
  %v1964 = vsel %vm1366, %v1367, 0.0
  %v1965 = vsel %vm1366, %v1371, 0.0
  %v1966 = vsel %vm1366, %v1373, 0.0
  %v1967 = vsel %vm1366, %v1378, 0.0
  %v1968 = vsel %vm1366, %v1380, 0.0
  %v1969 = vsel %vm1366, %v1382, 0.0
  %v1970 = vsel %vm1366, %v1387, 0.0
  %v1971 = vsel %vm1366, %v1389, 0.0
  %v1972 = vsel %vm1366, %v1391, 0.0
  %v1973 = vsel %vm1366, %v1396, 0.0
  %v1974 = vsel %vm1366, %v1398, 0.0
  %v1975 = vsel %vm1366, %v1400, 0.0
  %v1976 = vsel %vm1366, %v1405, 0.0
  %v1977 = vsel %vm1366, %v1407, 0.0
  %v1978 = vsel %vm1366, %v1409, 0.0
  %v1979 = vsel %vm1366, %v1414, 0.0
  %v1980 = vsel %vm1366, %v1416, 0.0
  %v1981 = vsel %vm1366, %v1418, 0.0
  %v1982 = vsel %vm1366, %v1423, 0.0
  %v1983 = vsel %vm1366, %v1425, 0.0
  %v1984 = vsel %vm1366, %v1427, 0.0
  %v1985 = vsel %vm1366, %v1432, 0.0
  %v1986 = vsel %vm1366, %v1434, 0.0
  %v1987 = vsel %vm1366, %v1436, 0.0
  %v1988 = vsel %vm1366, %v1441, 0.0
  %v1989 = vsel %vm1366, %v1443, 0.0
  %v1990 = vsel %vm1366, %v1445, 0.0
  %v1991 = vsel %vm1366, %v1450, 0.0
  %v1992 = vsel %vm1366, %v1452, 0.0
  %v1993 = vsel %vm1366, %v1454, 0.0
  %v1994 = vsel %vm1366, %v1459, 0.0
  %v1995 = vsel %vm1366, %v1461, 0.0
  %v1996 = vsel %vm1366, %v1463, 0.0
  %v1997 = vsel %vm1366, %v1468, 0.0
  %v1998 = vsel %vm1366, %v1470, 0.0
  %v1999 = vsel %vm1366, %v1472, 0.0
  %v2000 = vsel %vm1366, %v1477, 0.0
  %v2001 = vsel %vm1366, %v1479, 0.0
  %v2002 = vsel %vm1366, %v1481, 0.0
  %v2003 = vsel %vm1366, %v1486, 0.0
  %v2004 = vsel %vm1366, %v1488, 0.0
  %v2005 = vsel %vm1366, %v1490, 0.0
  %v2006 = vsel %vm1366, %v1495, 0.0
  %v2007 = vsel %vm1366, %v1497, 0.0
  %v2008 = vsel %vm1366, %v1499, 0.0
  %v2009 = vsel %vm1366, %v1506, 0.0
  %v2010 = vsel %vm1366, %v1508, 0.0
  %v2011 = vsel %vm1366, %v1512, 0.0
  %v2012 = vsel %vm1366, %v1514, 0.0
  %v2013 = vsel %vm1366, %v1519, 0.0
  %v2014 = vsel %vm1366, %v1521, 0.0
  %v2015 = vsel %vm1366, %v1523, 0.0
  %v2016 = vsel %vm1366, %v1528, 0.0
  %v2017 = vsel %vm1366, %v1530, 0.0
  %v2018 = vsel %vm1366, %v1532, 0.0
  %v2019 = vsel %vm1366, %v1537, 0.0
  %v2020 = vsel %vm1366, %v1539, 0.0
  %v2021 = vsel %vm1366, %v1541, 0.0
  %v2022 = vsel %vm1366, %v1546, 0.0
  %v2023 = vsel %vm1366, %v1548, 0.0
  %v2024 = vsel %vm1366, %v1550, 0.0
  %v2025 = vsel %vm1366, %v1555, 0.0
  %v2026 = vsel %vm1366, %v1557, 0.0
  %v2027 = vsel %vm1366, %v1559, 0.0
  %v2028 = vsel %vm1366, %v1564, 0.0
  %v2029 = vsel %vm1366, %v1566, 0.0
  %v2030 = vsel %vm1366, %v1568, 0.0
  %v2031 = vsel %vm1366, %v1573, 0.0
  %v2032 = vsel %vm1366, %v1575, 0.0
  %v2033 = vsel %vm1366, %v1577, 0.0
  %v2034 = vsel %vm1366, %v1582, 0.0
  %v2035 = vsel %vm1366, %v1584, 0.0
  %v2036 = vsel %vm1366, %v1586, 0.0
  %v2037 = vsel %vm1366, %v1591, 0.0
  %v2038 = vsel %vm1366, %v1593, 0.0
  %v2039 = vsel %vm1366, %v1595, 0.0
  %v2040 = vsel %vm1366, %v1600, 0.0
  %v2041 = vsel %vm1366, %v1602, 0.0
  %v2042 = vsel %vm1366, %v1604, 0.0
  %v2043 = vsel %vm1366, %v1609, 0.0
  %v2044 = vsel %vm1366, %v1611, 0.0
  %v2045 = vsel %vm1366, %v1613, 0.0
  %v2046 = vsel %vm1366, %v1618, 0.0
  %v2047 = vsel %vm1366, %v1620, 0.0
  %v2048 = vsel %vm1366, %v1622, 0.0
  %v2049 = vsel %vm1366, %v1627, 0.0
  %v2050 = vsel %vm1366, %v1629, 0.0
  %v2051 = vsel %vm1366, %v1631, 0.0
  %v2052 = vsel %vm1366, %v1636, 0.0
  %v2053 = vsel %vm1366, %v1638, 0.0
  %v2054 = vsel %vm1366, %v1640, 0.0
  %v2055 = vsel %vm1366, %v1647, 0.0
  %v2056 = vsel %vm1366, %v1649, 0.0
  %vm2119 = vcmask 1046528
  %v2120 = vrot.slane %v1869, 1
  %v2121 = vrot.slane %v1368, 1
  %v2122 = vsel %vm2119, %v2120, %v2121
  %v2123 = vrot.slane %v1964, 1
  %v2124 = vsel %vm2119, %v2121, %v2123
  %v2125 = vrot.slane %v1870, 1
  %v2126 = vrot.slane %v1372, 1
  %v2127 = vsel %vm2119, %v2125, %v2126
  %v2128 = vrot.slane %v1965, 1
  %v2129 = vsel %vm2119, %v2126, %v2128
  %v2130 = vrot.slane %v1872, 1
  %v2131 = vrot.slane %v1379, 1
  %v2132 = vsel %vm2119, %v2130, %v2131
  %v2133 = vrot.slane %v1967, 1
  %v2134 = vsel %vm2119, %v2131, %v2133
  %v2135 = vrot.slane %v1875, 1
  %v2136 = vrot.slane %v1388, 1
  %v2137 = vsel %vm2119, %v2135, %v2136
  %v2138 = vrot.slane %v1970, 1
  %v2139 = vsel %vm2119, %v2136, %v2138
  %v2140 = vrot.slane %v1878, 1
  %v2141 = vrot.slane %v1397, 1
  %v2142 = vsel %vm2119, %v2140, %v2141
  %v2143 = vrot.slane %v1973, 1
  %v2144 = vsel %vm2119, %v2141, %v2143
  %v2145 = vrot.slane %v1881, 1
  %v2146 = vrot.slane %v1406, 1
  %v2147 = vsel %vm2119, %v2145, %v2146
  %v2148 = vrot.slane %v1976, 1
  %v2149 = vsel %vm2119, %v2146, %v2148
  %v2150 = vrot.slane %v1884, 1
  %v2151 = vrot.slane %v1415, 1
  %v2152 = vsel %vm2119, %v2150, %v2151
  %v2153 = vrot.slane %v1979, 1
  %v2154 = vsel %vm2119, %v2151, %v2153
  %v2155 = vrot.slane %v1887, 1
  %v2156 = vrot.slane %v1424, 1
  %v2157 = vsel %vm2119, %v2155, %v2156
  %v2158 = vrot.slane %v1982, 1
  %v2159 = vsel %vm2119, %v2156, %v2158
  %v2160 = vrot.slane %v1890, 1
  %v2161 = vrot.slane %v1433, 1
  %v2162 = vsel %vm2119, %v2160, %v2161
  %v2163 = vrot.slane %v1985, 1
  %v2164 = vsel %vm2119, %v2161, %v2163
  %v2165 = vrot.slane %v1893, 1
  %v2166 = vrot.slane %v1442, 1
  %v2167 = vsel %vm2119, %v2165, %v2166
  %v2168 = vrot.slane %v1988, 1
  %v2169 = vsel %vm2119, %v2166, %v2168
  %v2170 = vrot.slane %v1896, 1
  %v2171 = vrot.slane %v1451, 1
  %v2172 = vsel %vm2119, %v2170, %v2171
  %v2173 = vrot.slane %v1991, 1
  %v2174 = vsel %vm2119, %v2171, %v2173
  %v2175 = vrot.slane %v1899, 1
  %v2176 = vrot.slane %v1460, 1
  %v2177 = vsel %vm2119, %v2175, %v2176
  %v2178 = vrot.slane %v1994, 1
  %v2179 = vsel %vm2119, %v2176, %v2178
  %v2180 = vrot.slane %v1902, 1
  %v2181 = vrot.slane %v1469, 1
  %v2182 = vsel %vm2119, %v2180, %v2181
  %v2183 = vrot.slane %v1997, 1
  %v2184 = vsel %vm2119, %v2181, %v2183
  %v2185 = vrot.slane %v1905, 1
  %v2186 = vrot.slane %v1478, 1
  %v2187 = vsel %vm2119, %v2185, %v2186
  %v2188 = vrot.slane %v2000, 1
  %v2189 = vsel %vm2119, %v2186, %v2188
  %v2190 = vrot.slane %v1908, 1
  %v2191 = vrot.slane %v1487, 1
  %v2192 = vsel %vm2119, %v2190, %v2191
  %v2193 = vrot.slane %v2003, 1
  %v2194 = vsel %vm2119, %v2191, %v2193
  %v2195 = vrot.slane %v1911, 1
  %v2196 = vrot.slane %v1496, 1
  %v2197 = vsel %vm2119, %v2195, %v2196
  %v2198 = vrot.slane %v2006, 1
  %v2199 = vsel %vm2119, %v2196, %v2198
  %v2200 = vrot.slane %v1917, 1
  %v2201 = vrot.slane %v1513, 1
  %v2202 = vsel %vm2119, %v2200, %v2201
  %v2203 = vrot.slane %v2011, 1
  %v2204 = vsel %vm2119, %v2201, %v2203
  %v2205 = vrot.slane %v1919, 1
  %v2206 = vrot.slane %v1520, 1
  %v2207 = vsel %vm2119, %v2205, %v2206
  %v2208 = vrot.slane %v2013, 1
  %v2209 = vsel %vm2119, %v2206, %v2208
  %v2210 = vrot.slane %v1922, 1
  %v2211 = vrot.slane %v1529, 1
  %v2212 = vsel %vm2119, %v2210, %v2211
  %v2213 = vrot.slane %v2016, 1
  %v2214 = vsel %vm2119, %v2211, %v2213
  %v2215 = vrot.slane %v1925, 1
  %v2216 = vrot.slane %v1538, 1
  %v2217 = vsel %vm2119, %v2215, %v2216
  %v2218 = vrot.slane %v2019, 1
  %v2219 = vsel %vm2119, %v2216, %v2218
  %v2220 = vrot.slane %v1928, 1
  %v2221 = vrot.slane %v1547, 1
  %v2222 = vsel %vm2119, %v2220, %v2221
  %v2223 = vrot.slane %v2022, 1
  %v2224 = vsel %vm2119, %v2221, %v2223
  %v2225 = vrot.slane %v1931, 1
  %v2226 = vrot.slane %v1556, 1
  %v2227 = vsel %vm2119, %v2225, %v2226
  %v2228 = vrot.slane %v2025, 1
  %v2229 = vsel %vm2119, %v2226, %v2228
  %v2230 = vrot.slane %v1934, 1
  %v2231 = vrot.slane %v1565, 1
  %v2232 = vsel %vm2119, %v2230, %v2231
  %v2233 = vrot.slane %v2028, 1
  %v2234 = vsel %vm2119, %v2231, %v2233
  %v2235 = vrot.slane %v1937, 1
  %v2236 = vrot.slane %v1574, 1
  %v2237 = vsel %vm2119, %v2235, %v2236
  %v2238 = vrot.slane %v2031, 1
  %v2239 = vsel %vm2119, %v2236, %v2238
  %v2240 = vrot.slane %v1940, 1
  %v2241 = vrot.slane %v1583, 1
  %v2242 = vsel %vm2119, %v2240, %v2241
  %v2243 = vrot.slane %v2034, 1
  %v2244 = vsel %vm2119, %v2241, %v2243
  %v2245 = vrot.slane %v1943, 1
  %v2246 = vrot.slane %v1592, 1
  %v2247 = vsel %vm2119, %v2245, %v2246
  %v2248 = vrot.slane %v2037, 1
  %v2249 = vsel %vm2119, %v2246, %v2248
  %v2250 = vrot.slane %v1946, 1
  %v2251 = vrot.slane %v1601, 1
  %v2252 = vsel %vm2119, %v2250, %v2251
  %v2253 = vrot.slane %v2040, 1
  %v2254 = vsel %vm2119, %v2251, %v2253
  %v2255 = vrot.slane %v1949, 1
  %v2256 = vrot.slane %v1610, 1
  %v2257 = vsel %vm2119, %v2255, %v2256
  %v2258 = vrot.slane %v2043, 1
  %v2259 = vsel %vm2119, %v2256, %v2258
  %v2260 = vrot.slane %v1952, 1
  %v2261 = vrot.slane %v1619, 1
  %v2262 = vsel %vm2119, %v2260, %v2261
  %v2263 = vrot.slane %v2046, 1
  %v2264 = vsel %vm2119, %v2261, %v2263
  %v2265 = vrot.slane %v1955, 1
  %v2266 = vrot.slane %v1628, 1
  %v2267 = vsel %vm2119, %v2265, %v2266
  %v2268 = vrot.slane %v2049, 1
  %v2269 = vsel %vm2119, %v2266, %v2268
  %v2270 = vrot.slane %v1958, 1
  %v2271 = vrot.slane %v1637, 1
  %v2272 = vsel %vm2119, %v2270, %v2271
  %v2273 = vrot.slane %v2052, 1
  %v2274 = vsel %vm2119, %v2271, %v2273
  %2275 = vrot.lane.b32.xlu0 %v2122, 96
  %v2276 = vpop.permute.xlu0 %2275
  %2277 = vrot.lane.b32.xlu0 %v2124, 96
  %v2278 = vpop.permute.xlu0 %2277
  %2279 = vrot.lane.b32.xlu0 %v2127, 96
  %v2280 = vpop.permute.xlu0 %2279
  %2281 = vrot.lane.b32.xlu0 %v2129, 96
  %v2282 = vpop.permute.xlu0 %2281
  %2283 = vrot.lane.b32.xlu0 %v2132, 96
  %v2284 = vpop.permute.xlu0 %2283
  %2285 = vrot.lane.b32.xlu0 %v2134, 96
  %v2286 = vpop.permute.xlu0 %2285
  %2287 = vrot.lane.b32.xlu0 %v2137, 96
  %v2288 = vpop.permute.xlu0 %2287
  %2289 = vrot.lane.b32.xlu0 %v2139, 96
  %v2290 = vpop.permute.xlu0 %2289
  %2291 = vrot.lane.b32.xlu0 %v2142, 96
  %v2292 = vpop.permute.xlu0 %2291
  %2293 = vrot.lane.b32.xlu0 %v2144, 96
  %v2294 = vpop.permute.xlu0 %2293
  %2295 = vrot.lane.b32.xlu0 %v2147, 96
  %v2296 = vpop.permute.xlu0 %2295
  %2297 = vrot.lane.b32.xlu0 %v2149, 96
  %v2298 = vpop.permute.xlu0 %2297
  %2299 = vrot.lane.b32.xlu0 %v2152, 96
  %v2300 = vpop.permute.xlu0 %2299
  %2301 = vrot.lane.b32.xlu0 %v2154, 96
  %v2302 = vpop.permute.xlu0 %2301
  %2303 = vrot.lane.b32.xlu0 %v2157, 96
  %v2304 = vpop.permute.xlu0 %2303
  %2305 = vrot.lane.b32.xlu0 %v2159, 96
  %v2306 = vpop.permute.xlu0 %2305
  %2307 = vrot.lane.b32.xlu0 %v2162, 96
  %v2308 = vpop.permute.xlu0 %2307
  %2309 = vrot.lane.b32.xlu0 %v2164, 96
  %v2310 = vpop.permute.xlu0 %2309
  %2311 = vrot.lane.b32.xlu0 %v2167, 96
  %v2312 = vpop.permute.xlu0 %2311
  %2313 = vrot.lane.b32.xlu0 %v2169, 96
  %v2314 = vpop.permute.xlu0 %2313
  %2315 = vrot.lane.b32.xlu0 %v2172, 96
  %v2316 = vpop.permute.xlu0 %2315
  %2317 = vrot.lane.b32.xlu0 %v2174, 96
  %v2318 = vpop.permute.xlu0 %2317
  %2319 = vrot.lane.b32.xlu0 %v2177, 96
  %v2320 = vpop.permute.xlu0 %2319
  %2321 = vrot.lane.b32.xlu0 %v2179, 96
  %v2322 = vpop.permute.xlu0 %2321
  %2323 = vrot.lane.b32.xlu0 %v2182, 96
  %v2324 = vpop.permute.xlu0 %2323
  %2325 = vrot.lane.b32.xlu0 %v2184, 96
  %v2326 = vpop.permute.xlu0 %2325
  %2327 = vrot.lane.b32.xlu0 %v2187, 96
  %v2328 = vpop.permute.xlu0 %2327
  %2329 = vrot.lane.b32.xlu0 %v2189, 96
  %v2330 = vpop.permute.xlu0 %2329
  %2331 = vrot.lane.b32.xlu0 %v2192, 96
  %v2332 = vpop.permute.xlu0 %2331
  %2333 = vrot.lane.b32.xlu0 %v2194, 96
  %v2334 = vpop.permute.xlu0 %2333
  %2335 = vrot.lane.b32.xlu0 %v2197, 96
  %v2336 = vpop.permute.xlu0 %2335
  %2337 = vrot.lane.b32.xlu0 %v2199, 96
  %v2338 = vpop.permute.xlu0 %2337
  %2339 = vrot.lane.b32.xlu0 %v2202, 96
  %v2340 = vpop.permute.xlu0 %2339
  %2341 = vrot.lane.b32.xlu0 %v2204, 96
  %v2342 = vpop.permute.xlu0 %2341
  %2343 = vrot.lane.b32.xlu0 %v2207, 96
  %v2344 = vpop.permute.xlu0 %2343
  %2345 = vrot.lane.b32.xlu0 %v2209, 96
  %v2346 = vpop.permute.xlu0 %2345
  %2347 = vrot.lane.b32.xlu0 %v2212, 96
  %v2348 = vpop.permute.xlu0 %2347
  %2349 = vrot.lane.b32.xlu0 %v2214, 96
  %v2350 = vpop.permute.xlu0 %2349
  %2351 = vrot.lane.b32.xlu0 %v2217, 96
  %v2352 = vpop.permute.xlu0 %2351
  %2353 = vrot.lane.b32.xlu0 %v2219, 96
  %v2354 = vpop.permute.xlu0 %2353
  %2355 = vrot.lane.b32.xlu0 %v2222, 96
  %v2356 = vpop.permute.xlu0 %2355
  %2357 = vrot.lane.b32.xlu0 %v2224, 96
  %v2358 = vpop.permute.xlu0 %2357
  %2359 = vrot.lane.b32.xlu0 %v2227, 96
  %v2360 = vpop.permute.xlu0 %2359
  %2361 = vrot.lane.b32.xlu0 %v2229, 96
  %v2362 = vpop.permute.xlu0 %2361
  %2363 = vrot.lane.b32.xlu0 %v2232, 96
  %v2364 = vpop.permute.xlu0 %2363
  %2365 = vrot.lane.b32.xlu0 %v2234, 96
  %v2366 = vpop.permute.xlu0 %2365
  %2367 = vrot.lane.b32.xlu0 %v2237, 96
  %v2368 = vpop.permute.xlu0 %2367
  %2369 = vrot.lane.b32.xlu0 %v2239, 96
  %v2370 = vpop.permute.xlu0 %2369
  %2371 = vrot.lane.b32.xlu0 %v2242, 96
  %v2372 = vpop.permute.xlu0 %2371
  %2373 = vrot.lane.b32.xlu0 %v2244, 96
  %v2374 = vpop.permute.xlu0 %2373
  %2375 = vrot.lane.b32.xlu0 %v2247, 96
  %v2376 = vpop.permute.xlu0 %2375
  %2377 = vrot.lane.b32.xlu0 %v2249, 96
  %v2378 = vpop.permute.xlu0 %2377
  %2379 = vrot.lane.b32.xlu0 %v2252, 96
  %v2380 = vpop.permute.xlu0 %2379
  %2381 = vrot.lane.b32.xlu0 %v2254, 96
  %v2382 = vpop.permute.xlu0 %2381
  %2383 = vrot.lane.b32.xlu0 %v2257, 96
  %v2384 = vpop.permute.xlu0 %2383
  %2385 = vrot.lane.b32.xlu0 %v2259, 96
  %v2386 = vpop.permute.xlu0 %2385
  %2387 = vrot.lane.b32.xlu0 %v2262, 96
  %v2388 = vpop.permute.xlu0 %2387
  %2389 = vrot.lane.b32.xlu0 %v2264, 96
  %v2390 = vpop.permute.xlu0 %2389
  %2391 = vrot.lane.b32.xlu0 %v2267, 96
  %v2392 = vpop.permute.xlu0 %2391
  %2393 = vrot.lane.b32.xlu0 %v2269, 96
  %v2394 = vpop.permute.xlu0 %2393
  %2395 = vrot.lane.b32.xlu0 %v2272, 96
  %v2396 = vpop.permute.xlu0 %2395
  %2397 = vrot.lane.b32.xlu0 %v2274, 96
  %v2398 = vpop.permute.xlu0 %2397
  %v2461 = vadd.f32 %v1869, %v2276
  %v2462 = vadd.f32 %v1368, %v2278
  %v2463 = vadd.f32 %v1870, %v2280
  %v2464 = vadd.f32 %v1372, %v2282
  %v2465 = vadd.f32 %v1872, %v2284
  %v2466 = vadd.f32 %v1379, %v2286
  %v2467 = vadd.f32 %v1875, %v2288
  %v2468 = vadd.f32 %v1388, %v2290
  %v2469 = vadd.f32 %v1878, %v2292
  %v2470 = vadd.f32 %v1397, %v2294
  %v2471 = vadd.f32 %v1881, %v2296
  %v2472 = vadd.f32 %v1406, %v2298
  %v2473 = vadd.f32 %v1884, %v2300
  %v2474 = vadd.f32 %v1415, %v2302
  %v2475 = vadd.f32 %v1887, %v2304
  %v2476 = vadd.f32 %v1424, %v2306
  %v2477 = vadd.f32 %v1890, %v2308
  %v2478 = vadd.f32 %v1433, %v2310
  %v2479 = vadd.f32 %v1893, %v2312
  %v2480 = vadd.f32 %v1442, %v2314
  %v2481 = vadd.f32 %v1896, %v2316
  %v2482 = vadd.f32 %v1451, %v2318
  %v2483 = vadd.f32 %v1899, %v2320
  %v2484 = vadd.f32 %v1460, %v2322
  %v2485 = vadd.f32 %v1902, %v2324
  %v2486 = vadd.f32 %v1469, %v2326
  %v2487 = vadd.f32 %v1905, %v2328
  %v2488 = vadd.f32 %v1478, %v2330
  %v2489 = vadd.f32 %v1908, %v2332
  %v2490 = vadd.f32 %v1487, %v2334
  %v2491 = vadd.f32 %v1911, %v2336
  %v2492 = vadd.f32 %v1496, %v2338
  %v2493 = vadd.f32 %v1917, %v2340
  %v2494 = vadd.f32 %v1513, %v2342
  %v2495 = vadd.f32 %v1919, %v2344
  %v2496 = vadd.f32 %v1520, %v2346
  %v2497 = vadd.f32 %v1922, %v2348
  %v2498 = vadd.f32 %v1529, %v2350
  %v2499 = vadd.f32 %v1925, %v2352
  %v2500 = vadd.f32 %v1538, %v2354
  %v2501 = vadd.f32 %v1928, %v2356
  %v2502 = vadd.f32 %v1547, %v2358
  %v2503 = vadd.f32 %v1931, %v2360
  %v2504 = vadd.f32 %v1556, %v2362
  %v2505 = vadd.f32 %v1934, %v2364
  %v2506 = vadd.f32 %v1565, %v2366
  %v2507 = vadd.f32 %v1937, %v2368
  %v2508 = vadd.f32 %v1574, %v2370
  %v2509 = vadd.f32 %v1940, %v2372
  %v2510 = vadd.f32 %v1583, %v2374
  %v2511 = vadd.f32 %v1943, %v2376
  %v2512 = vadd.f32 %v1592, %v2378
  %v2513 = vadd.f32 %v1946, %v2380
  %v2514 = vadd.f32 %v1601, %v2382
  %v2515 = vadd.f32 %v1949, %v2384
  %v2516 = vadd.f32 %v1610, %v2386
  %v2517 = vadd.f32 %v1952, %v2388
  %v2518 = vadd.f32 %v1619, %v2390
  %v2519 = vadd.f32 %v1955, %v2392
  %v2520 = vadd.f32 %v1628, %v2394
  %v2521 = vadd.f32 %v1958, %v2396
  %v2522 = vadd.f32 %v1637, %v2398
  %vm2523 = vcmask 1045504
  %v2524 = vrot.slane %v1869, 2
  %v2525 = vrot.slane %v1368, 2
  %v2526 = vsel %vm2523, %v2524, %v2525
  %v2527 = vrot.slane %v1964, 2
  %v2528 = vsel %vm2523, %v2525, %v2527
  %v2529 = vrot.slane %v1870, 2
  %v2530 = vrot.slane %v1372, 2
  %v2531 = vsel %vm2523, %v2529, %v2530
  %v2532 = vrot.slane %v1965, 2
  %v2533 = vsel %vm2523, %v2530, %v2532
  %v2534 = vrot.slane %v1872, 2
  %v2535 = vrot.slane %v1379, 2
  %v2536 = vsel %vm2523, %v2534, %v2535
  %v2537 = vrot.slane %v1967, 2
  %v2538 = vsel %vm2523, %v2535, %v2537
  %v2539 = vrot.slane %v1875, 2
  %v2540 = vrot.slane %v1388, 2
  %v2541 = vsel %vm2523, %v2539, %v2540
  %v2542 = vrot.slane %v1970, 2
  %v2543 = vsel %vm2523, %v2540, %v2542
  %v2544 = vrot.slane %v1878, 2
  %v2545 = vrot.slane %v1397, 2
  %v2546 = vsel %vm2523, %v2544, %v2545
  %v2547 = vrot.slane %v1973, 2
  %v2548 = vsel %vm2523, %v2545, %v2547
  %v2549 = vrot.slane %v1881, 2
  %v2550 = vrot.slane %v1406, 2
  %v2551 = vsel %vm2523, %v2549, %v2550
  %v2552 = vrot.slane %v1976, 2
  %v2553 = vsel %vm2523, %v2550, %v2552
  %v2554 = vrot.slane %v1884, 2
  %v2555 = vrot.slane %v1415, 2
  %v2556 = vsel %vm2523, %v2554, %v2555
  %v2557 = vrot.slane %v1979, 2
  %v2558 = vsel %vm2523, %v2555, %v2557
  %v2559 = vrot.slane %v1887, 2
  %v2560 = vrot.slane %v1424, 2
  %v2561 = vsel %vm2523, %v2559, %v2560
  %v2562 = vrot.slane %v1982, 2
  %v2563 = vsel %vm2523, %v2560, %v2562
  %v2564 = vrot.slane %v1890, 2
  %v2565 = vrot.slane %v1433, 2
  %v2566 = vsel %vm2523, %v2564, %v2565
  %v2567 = vrot.slane %v1985, 2
  %v2568 = vsel %vm2523, %v2565, %v2567
  %v2569 = vrot.slane %v1893, 2
  %v2570 = vrot.slane %v1442, 2
  %v2571 = vsel %vm2523, %v2569, %v2570
  %v2572 = vrot.slane %v1988, 2
  %v2573 = vsel %vm2523, %v2570, %v2572
  %v2574 = vrot.slane %v1896, 2
  %v2575 = vrot.slane %v1451, 2
  %v2576 = vsel %vm2523, %v2574, %v2575
  %v2577 = vrot.slane %v1991, 2
  %v2578 = vsel %vm2523, %v2575, %v2577
  %v2579 = vrot.slane %v1899, 2
  %v2580 = vrot.slane %v1460, 2
  %v2581 = vsel %vm2523, %v2579, %v2580
  %v2582 = vrot.slane %v1994, 2
  %v2583 = vsel %vm2523, %v2580, %v2582
  %v2584 = vrot.slane %v1902, 2
  %v2585 = vrot.slane %v1469, 2
  %v2586 = vsel %vm2523, %v2584, %v2585
  %v2587 = vrot.slane %v1997, 2
  %v2588 = vsel %vm2523, %v2585, %v2587
  %v2589 = vrot.slane %v1905, 2
  %v2590 = vrot.slane %v1478, 2
  %v2591 = vsel %vm2523, %v2589, %v2590
  %v2592 = vrot.slane %v2000, 2
  %v2593 = vsel %vm2523, %v2590, %v2592
  %v2594 = vrot.slane %v1908, 2
  %v2595 = vrot.slane %v1487, 2
  %v2596 = vsel %vm2523, %v2594, %v2595
  %v2597 = vrot.slane %v2003, 2
  %v2598 = vsel %vm2523, %v2595, %v2597
  %v2599 = vrot.slane %v1911, 2
  %v2600 = vrot.slane %v1496, 2
  %v2601 = vsel %vm2523, %v2599, %v2600
  %v2602 = vrot.slane %v2006, 2
  %v2603 = vsel %vm2523, %v2600, %v2602
  %v2604 = vrot.slane %v1917, 2
  %v2605 = vrot.slane %v1513, 2
  %v2606 = vsel %vm2523, %v2604, %v2605
  %v2607 = vrot.slane %v2011, 2
  %v2608 = vsel %vm2523, %v2605, %v2607
  %v2609 = vrot.slane %v1919, 2
  %v2610 = vrot.slane %v1520, 2
  %v2611 = vsel %vm2523, %v2609, %v2610
  %v2612 = vrot.slane %v2013, 2
  %v2613 = vsel %vm2523, %v2610, %v2612
  %v2614 = vrot.slane %v1922, 2
  %v2615 = vrot.slane %v1529, 2
  %v2616 = vsel %vm2523, %v2614, %v2615
  %v2617 = vrot.slane %v2016, 2
  %v2618 = vsel %vm2523, %v2615, %v2617
  %v2619 = vrot.slane %v1925, 2
  %v2620 = vrot.slane %v1538, 2
  %v2621 = vsel %vm2523, %v2619, %v2620
  %v2622 = vrot.slane %v2019, 2
  %v2623 = vsel %vm2523, %v2620, %v2622
  %v2624 = vrot.slane %v1928, 2
  %v2625 = vrot.slane %v1547, 2
  %v2626 = vsel %vm2523, %v2624, %v2625
  %v2627 = vrot.slane %v2022, 2
  %v2628 = vsel %vm2523, %v2625, %v2627
  %v2629 = vrot.slane %v1931, 2
  %v2630 = vrot.slane %v1556, 2
  %v2631 = vsel %vm2523, %v2629, %v2630
  %v2632 = vrot.slane %v2025, 2
  %v2633 = vsel %vm2523, %v2630, %v2632
  %v2634 = vrot.slane %v1934, 2
  %v2635 = vrot.slane %v1565, 2
  %v2636 = vsel %vm2523, %v2634, %v2635
  %v2637 = vrot.slane %v2028, 2
  %v2638 = vsel %vm2523, %v2635, %v2637
  %v2639 = vrot.slane %v1937, 2
  %v2640 = vrot.slane %v1574, 2
  %v2641 = vsel %vm2523, %v2639, %v2640
  %v2642 = vrot.slane %v2031, 2
  %v2643 = vsel %vm2523, %v2640, %v2642
  %v2644 = vrot.slane %v1940, 2
  %v2645 = vrot.slane %v1583, 2
  %v2646 = vsel %vm2523, %v2644, %v2645
  %v2647 = vrot.slane %v2034, 2
  %v2648 = vsel %vm2523, %v2645, %v2647
  %v2649 = vrot.slane %v1943, 2
  %v2650 = vrot.slane %v1592, 2
  %v2651 = vsel %vm2523, %v2649, %v2650
  %v2652 = vrot.slane %v2037, 2
  %v2653 = vsel %vm2523, %v2650, %v2652
  %v2654 = vrot.slane %v1946, 2
  %v2655 = vrot.slane %v1601, 2
  %v2656 = vsel %vm2523, %v2654, %v2655
  %v2657 = vrot.slane %v2040, 2
  %v2658 = vsel %vm2523, %v2655, %v2657
  %v2659 = vrot.slane %v1949, 2
  %v2660 = vrot.slane %v1610, 2
  %v2661 = vsel %vm2523, %v2659, %v2660
  %v2662 = vrot.slane %v2043, 2
  %v2663 = vsel %vm2523, %v2660, %v2662
  %v2664 = vrot.slane %v1952, 2
  %v2665 = vrot.slane %v1619, 2
  %v2666 = vsel %vm2523, %v2664, %v2665
  %v2667 = vrot.slane %v2046, 2
  %v2668 = vsel %vm2523, %v2665, %v2667
  %v2669 = vrot.slane %v1955, 2
  %v2670 = vrot.slane %v1628, 2
  %v2671 = vsel %vm2523, %v2669, %v2670
  %v2672 = vrot.slane %v2049, 2
  %v2673 = vsel %vm2523, %v2670, %v2672
  %v2674 = vrot.slane %v1958, 2
  %v2675 = vrot.slane %v1637, 2
  %v2676 = vsel %vm2523, %v2674, %v2675
  %v2677 = vrot.slane %v2052, 2
  %v2678 = vsel %vm2523, %v2675, %v2677
  %2679 = vrot.lane.b32.xlu0 %v2526, 64
  %v2680 = vpop.permute.xlu0 %2679
  %2681 = vrot.lane.b32.xlu0 %v2528, 64
  %v2682 = vpop.permute.xlu0 %2681
  %2683 = vrot.lane.b32.xlu0 %v2531, 64
  %v2684 = vpop.permute.xlu0 %2683
  %2685 = vrot.lane.b32.xlu0 %v2533, 64
  %v2686 = vpop.permute.xlu0 %2685
  %2687 = vrot.lane.b32.xlu0 %v2536, 64
  %v2688 = vpop.permute.xlu0 %2687
  %2689 = vrot.lane.b32.xlu0 %v2538, 64
  %v2690 = vpop.permute.xlu0 %2689
  %2691 = vrot.lane.b32.xlu0 %v2541, 64
  %v2692 = vpop.permute.xlu0 %2691
  %2693 = vrot.lane.b32.xlu0 %v2543, 64
  %v2694 = vpop.permute.xlu0 %2693
  %2695 = vrot.lane.b32.xlu0 %v2546, 64
  %v2696 = vpop.permute.xlu0 %2695
  %2697 = vrot.lane.b32.xlu0 %v2548, 64
  %v2698 = vpop.permute.xlu0 %2697
  %2699 = vrot.lane.b32.xlu0 %v2551, 64
  %v2700 = vpop.permute.xlu0 %2699
  %2701 = vrot.lane.b32.xlu0 %v2553, 64
  %v2702 = vpop.permute.xlu0 %2701
  %2703 = vrot.lane.b32.xlu0 %v2556, 64
  %v2704 = vpop.permute.xlu0 %2703
  %2705 = vrot.lane.b32.xlu0 %v2558, 64
  %v2706 = vpop.permute.xlu0 %2705
  %2707 = vrot.lane.b32.xlu0 %v2561, 64
  %v2708 = vpop.permute.xlu0 %2707
  %2709 = vrot.lane.b32.xlu0 %v2563, 64
  %v2710 = vpop.permute.xlu0 %2709
  %2711 = vrot.lane.b32.xlu0 %v2566, 64
  %v2712 = vpop.permute.xlu0 %2711
  %2713 = vrot.lane.b32.xlu0 %v2568, 64
  %v2714 = vpop.permute.xlu0 %2713
  %2715 = vrot.lane.b32.xlu0 %v2571, 64
  %v2716 = vpop.permute.xlu0 %2715
  %2717 = vrot.lane.b32.xlu0 %v2573, 64
  %v2718 = vpop.permute.xlu0 %2717
  %2719 = vrot.lane.b32.xlu0 %v2576, 64
  %v2720 = vpop.permute.xlu0 %2719
  %2721 = vrot.lane.b32.xlu0 %v2578, 64
  %v2722 = vpop.permute.xlu0 %2721
  %2723 = vrot.lane.b32.xlu0 %v2581, 64
  %v2724 = vpop.permute.xlu0 %2723
  %2725 = vrot.lane.b32.xlu0 %v2583, 64
  %v2726 = vpop.permute.xlu0 %2725
  %2727 = vrot.lane.b32.xlu0 %v2586, 64
  %v2728 = vpop.permute.xlu0 %2727
  %2729 = vrot.lane.b32.xlu0 %v2588, 64
  %v2730 = vpop.permute.xlu0 %2729
  %2731 = vrot.lane.b32.xlu0 %v2591, 64
  %v2732 = vpop.permute.xlu0 %2731
  %2733 = vrot.lane.b32.xlu0 %v2593, 64
  %v2734 = vpop.permute.xlu0 %2733
  %2735 = vrot.lane.b32.xlu0 %v2596, 64
  %v2736 = vpop.permute.xlu0 %2735
  %2737 = vrot.lane.b32.xlu0 %v2598, 64
  %v2738 = vpop.permute.xlu0 %2737
  %2739 = vrot.lane.b32.xlu0 %v2601, 64
  %v2740 = vpop.permute.xlu0 %2739
  %2741 = vrot.lane.b32.xlu0 %v2603, 64
  %v2742 = vpop.permute.xlu0 %2741
  %2743 = vrot.lane.b32.xlu0 %v2606, 64
  %v2744 = vpop.permute.xlu0 %2743
  %2745 = vrot.lane.b32.xlu0 %v2608, 64
  %v2746 = vpop.permute.xlu0 %2745
  %2747 = vrot.lane.b32.xlu0 %v2611, 64
  %v2748 = vpop.permute.xlu0 %2747
  %2749 = vrot.lane.b32.xlu0 %v2613, 64
  %v2750 = vpop.permute.xlu0 %2749
  %2751 = vrot.lane.b32.xlu0 %v2616, 64
  %v2752 = vpop.permute.xlu0 %2751
  %2753 = vrot.lane.b32.xlu0 %v2618, 64
  %v2754 = vpop.permute.xlu0 %2753
  %2755 = vrot.lane.b32.xlu0 %v2621, 64
  %v2756 = vpop.permute.xlu0 %2755
  %2757 = vrot.lane.b32.xlu0 %v2623, 64
  %v2758 = vpop.permute.xlu0 %2757
  %2759 = vrot.lane.b32.xlu0 %v2626, 64
  %v2760 = vpop.permute.xlu0 %2759
  %2761 = vrot.lane.b32.xlu0 %v2628, 64
  %v2762 = vpop.permute.xlu0 %2761
  %2763 = vrot.lane.b32.xlu0 %v2631, 64
  %v2764 = vpop.permute.xlu0 %2763
  %2765 = vrot.lane.b32.xlu0 %v2633, 64
  %v2766 = vpop.permute.xlu0 %2765
  %2767 = vrot.lane.b32.xlu0 %v2636, 64
  %v2768 = vpop.permute.xlu0 %2767
  %2769 = vrot.lane.b32.xlu0 %v2638, 64
  %v2770 = vpop.permute.xlu0 %2769
  %2771 = vrot.lane.b32.xlu0 %v2641, 64
  %v2772 = vpop.permute.xlu0 %2771
  %2773 = vrot.lane.b32.xlu0 %v2643, 64
  %v2774 = vpop.permute.xlu0 %2773
  %2775 = vrot.lane.b32.xlu0 %v2646, 64
  %v2776 = vpop.permute.xlu0 %2775
  %2777 = vrot.lane.b32.xlu0 %v2648, 64
  %v2778 = vpop.permute.xlu0 %2777
  %2779 = vrot.lane.b32.xlu0 %v2651, 64
  %v2780 = vpop.permute.xlu0 %2779
  %2781 = vrot.lane.b32.xlu0 %v2653, 64
  %v2782 = vpop.permute.xlu0 %2781
  %2783 = vrot.lane.b32.xlu0 %v2656, 64
  %v2784 = vpop.permute.xlu0 %2783
  %2785 = vrot.lane.b32.xlu0 %v2658, 64
  %v2786 = vpop.permute.xlu0 %2785
  %2787 = vrot.lane.b32.xlu0 %v2661, 64
  %v2788 = vpop.permute.xlu0 %2787
  %2789 = vrot.lane.b32.xlu0 %v2663, 64
  %v2790 = vpop.permute.xlu0 %2789
  %2791 = vrot.lane.b32.xlu0 %v2666, 64
  %v2792 = vpop.permute.xlu0 %2791
  %2793 = vrot.lane.b32.xlu0 %v2668, 64
  %v2794 = vpop.permute.xlu0 %2793
  %2795 = vrot.lane.b32.xlu0 %v2671, 64
  %v2796 = vpop.permute.xlu0 %2795
  %2797 = vrot.lane.b32.xlu0 %v2673, 64
  %v2798 = vpop.permute.xlu0 %2797
  %2799 = vrot.lane.b32.xlu0 %v2676, 64
  %v2800 = vpop.permute.xlu0 %2799
  %2801 = vrot.lane.b32.xlu0 %v2678, 64
  %v2802 = vpop.permute.xlu0 %2801
  %v2865 = vadd.f32 %v2461, %v2680
  %v2866 = vadd.f32 %v2462, %v2682
  %v2867 = vadd.f32 %v2463, %v2684
  %v2868 = vadd.f32 %v2464, %v2686
  %v2869 = vadd.f32 %v2465, %v2688
  %v2870 = vadd.f32 %v2466, %v2690
  %v2871 = vadd.f32 %v2467, %v2692
  %v2872 = vadd.f32 %v2468, %v2694
  %v2873 = vadd.f32 %v2469, %v2696
  %v2874 = vadd.f32 %v2470, %v2698
  %v2875 = vadd.f32 %v2471, %v2700
  %v2876 = vadd.f32 %v2472, %v2702
  %v2877 = vadd.f32 %v2473, %v2704
  %v2878 = vadd.f32 %v2474, %v2706
  %v2879 = vadd.f32 %v2475, %v2708
  %v2880 = vadd.f32 %v2476, %v2710
  %v2881 = vadd.f32 %v2477, %v2712
  %v2882 = vadd.f32 %v2478, %v2714
  %v2883 = vadd.f32 %v2479, %v2716
  %v2884 = vadd.f32 %v2480, %v2718
  %v2885 = vadd.f32 %v2481, %v2720
  %v2886 = vadd.f32 %v2482, %v2722
  %v2887 = vadd.f32 %v2483, %v2724
  %v2888 = vadd.f32 %v2484, %v2726
  %v2889 = vadd.f32 %v2485, %v2728
  %v2890 = vadd.f32 %v2486, %v2730
  %v2891 = vadd.f32 %v2487, %v2732
  %v2892 = vadd.f32 %v2488, %v2734
  %v2893 = vadd.f32 %v2489, %v2736
  %v2894 = vadd.f32 %v2490, %v2738
  %v2895 = vadd.f32 %v2491, %v2740
  %v2896 = vadd.f32 %v2492, %v2742
  %v2897 = vadd.f32 %v2493, %v2744
  %v2898 = vadd.f32 %v2494, %v2746
  %v2899 = vadd.f32 %v2495, %v2748
  %v2900 = vadd.f32 %v2496, %v2750
  %v2901 = vadd.f32 %v2497, %v2752
  %v2902 = vadd.f32 %v2498, %v2754
  %v2903 = vadd.f32 %v2499, %v2756
  %v2904 = vadd.f32 %v2500, %v2758
  %v2905 = vadd.f32 %v2501, %v2760
  %v2906 = vadd.f32 %v2502, %v2762
  %v2907 = vadd.f32 %v2503, %v2764
  %v2908 = vadd.f32 %v2504, %v2766
  %v2909 = vadd.f32 %v2505, %v2768
  %v2910 = vadd.f32 %v2506, %v2770
  %v2911 = vadd.f32 %v2507, %v2772
  %v2912 = vadd.f32 %v2508, %v2774
  %v2913 = vadd.f32 %v2509, %v2776
  %v2914 = vadd.f32 %v2510, %v2778
  %v2915 = vadd.f32 %v2511, %v2780
  %v2916 = vadd.f32 %v2512, %v2782
  %v2917 = vadd.f32 %v2513, %v2784
  %v2918 = vadd.f32 %v2514, %v2786
  %v2919 = vadd.f32 %v2515, %v2788
  %v2920 = vadd.f32 %v2516, %v2790
  %v2921 = vadd.f32 %v2517, %v2792
  %v2922 = vadd.f32 %v2518, %v2794
  %v2923 = vadd.f32 %v2519, %v2796
  %v2924 = vadd.f32 %v2520, %v2798
  %v2925 = vadd.f32 %v2521, %v2800
  %v2926 = vadd.f32 %v2522, %v2802
  %2929 = vrot.lane.b32.xlu0 %v1870, 32
  %v2930 = vpop.permute.xlu0 %2929
  %2931 = vrot.lane.b32.xlu0 %v1372, 32
  %v2932 = vpop.permute.xlu0 %2931
  %2933 = vrot.lane.b32.xlu0 %v1872, 32
  %v2934 = vpop.permute.xlu0 %2933
  %2935 = vrot.lane.b32.xlu0 %v1379, 32
  %v2936 = vpop.permute.xlu0 %2935
  %2937 = vrot.lane.b32.xlu0 %v1875, 32
  %v2938 = vpop.permute.xlu0 %2937
  %2939 = vrot.lane.b32.xlu0 %v1388, 32
  %v2940 = vpop.permute.xlu0 %2939
  %2941 = vrot.lane.b32.xlu0 %v1878, 32
  %v2942 = vpop.permute.xlu0 %2941
  %2943 = vrot.lane.b32.xlu0 %v1397, 32
  %v2944 = vpop.permute.xlu0 %2943
  %2945 = vrot.lane.b32.xlu0 %v1881, 32
  %v2946 = vpop.permute.xlu0 %2945
  %2947 = vrot.lane.b32.xlu0 %v1406, 32
  %v2948 = vpop.permute.xlu0 %2947
  %2949 = vrot.lane.b32.xlu0 %v1884, 32
  %v2950 = vpop.permute.xlu0 %2949
  %2951 = vrot.lane.b32.xlu0 %v1415, 32
  %v2952 = vpop.permute.xlu0 %2951
  %2953 = vrot.lane.b32.xlu0 %v1887, 32
  %v2954 = vpop.permute.xlu0 %2953
  %2955 = vrot.lane.b32.xlu0 %v1424, 32
  %v2956 = vpop.permute.xlu0 %2955
  %2957 = vrot.lane.b32.xlu0 %v1890, 32
  %v2958 = vpop.permute.xlu0 %2957
  %2959 = vrot.lane.b32.xlu0 %v1433, 32
  %v2960 = vpop.permute.xlu0 %2959
  %2961 = vrot.lane.b32.xlu0 %v1893, 32
  %v2962 = vpop.permute.xlu0 %2961
  %2963 = vrot.lane.b32.xlu0 %v1442, 32
  %v2964 = vpop.permute.xlu0 %2963
  %2965 = vrot.lane.b32.xlu0 %v1896, 32
  %v2966 = vpop.permute.xlu0 %2965
  %2967 = vrot.lane.b32.xlu0 %v1451, 32
  %v2968 = vpop.permute.xlu0 %2967
  %2969 = vrot.lane.b32.xlu0 %v1899, 32
  %v2970 = vpop.permute.xlu0 %2969
  %2971 = vrot.lane.b32.xlu0 %v1460, 32
  %v2972 = vpop.permute.xlu0 %2971
  %2973 = vrot.lane.b32.xlu0 %v1902, 32
  %v2974 = vpop.permute.xlu0 %2973
  %2975 = vrot.lane.b32.xlu0 %v1469, 32
  %v2976 = vpop.permute.xlu0 %2975
  %2977 = vrot.lane.b32.xlu0 %v1905, 32
  %v2978 = vpop.permute.xlu0 %2977
  %2979 = vrot.lane.b32.xlu0 %v1478, 32
  %v2980 = vpop.permute.xlu0 %2979
  %2981 = vrot.lane.b32.xlu0 %v1908, 32
  %v2982 = vpop.permute.xlu0 %2981
  %2983 = vrot.lane.b32.xlu0 %v1487, 32
  %v2984 = vpop.permute.xlu0 %2983
  %2985 = vrot.lane.b32.xlu0 %v1911, 32
  %v2986 = vpop.permute.xlu0 %2985
  %2987 = vrot.lane.b32.xlu0 %v1496, 32
  %v2988 = vpop.permute.xlu0 %2987
  %2989 = vrot.lane.b32.xlu0 %v1914, 32
  %v2990 = vpop.permute.xlu0 %2989
  %2991 = vrot.lane.b32.xlu0 %v1505, 32
  %v2992 = vpop.permute.xlu0 %2991
  %2993 = vrot.lane.b32.xlu0 %v1917, 32
  %v2994 = vpop.permute.xlu0 %2993
  %2995 = vrot.lane.b32.xlu0 %v1513, 32
  %v2996 = vpop.permute.xlu0 %2995
  %2997 = vrot.lane.b32.xlu0 %v1919, 32
  %v2998 = vpop.permute.xlu0 %2997
  %2999 = vrot.lane.b32.xlu0 %v1520, 32
  %v3000 = vpop.permute.xlu0 %2999
  %3001 = vrot.lane.b32.xlu0 %v1922, 32
  %v3002 = vpop.permute.xlu0 %3001
  %3003 = vrot.lane.b32.xlu0 %v1529, 32
  %v3004 = vpop.permute.xlu0 %3003
  %3005 = vrot.lane.b32.xlu0 %v1925, 32
  %v3006 = vpop.permute.xlu0 %3005
  %3007 = vrot.lane.b32.xlu0 %v1538, 32
  %v3008 = vpop.permute.xlu0 %3007
  %3009 = vrot.lane.b32.xlu0 %v1928, 32
  %v3010 = vpop.permute.xlu0 %3009
  %3011 = vrot.lane.b32.xlu0 %v1547, 32
  %v3012 = vpop.permute.xlu0 %3011
  %3013 = vrot.lane.b32.xlu0 %v1931, 32
  %v3014 = vpop.permute.xlu0 %3013
  %3015 = vrot.lane.b32.xlu0 %v1556, 32
  %v3016 = vpop.permute.xlu0 %3015
  %3017 = vrot.lane.b32.xlu0 %v1934, 32
  %v3018 = vpop.permute.xlu0 %3017
  %3019 = vrot.lane.b32.xlu0 %v1565, 32
  %v3020 = vpop.permute.xlu0 %3019
  %3021 = vrot.lane.b32.xlu0 %v1937, 32
  %v3022 = vpop.permute.xlu0 %3021
  %3023 = vrot.lane.b32.xlu0 %v1574, 32
  %v3024 = vpop.permute.xlu0 %3023
  %3025 = vrot.lane.b32.xlu0 %v1940, 32
  %v3026 = vpop.permute.xlu0 %3025
  %3027 = vrot.lane.b32.xlu0 %v1583, 32
  %v3028 = vpop.permute.xlu0 %3027
  %3029 = vrot.lane.b32.xlu0 %v1943, 32
  %v3030 = vpop.permute.xlu0 %3029
  %3031 = vrot.lane.b32.xlu0 %v1592, 32
  %v3032 = vpop.permute.xlu0 %3031
  %3033 = vrot.lane.b32.xlu0 %v1946, 32
  %v3034 = vpop.permute.xlu0 %3033
  %3035 = vrot.lane.b32.xlu0 %v1601, 32
  %v3036 = vpop.permute.xlu0 %3035
  %3037 = vrot.lane.b32.xlu0 %v1949, 32
  %v3038 = vpop.permute.xlu0 %3037
  %3039 = vrot.lane.b32.xlu0 %v1610, 32
  %v3040 = vpop.permute.xlu0 %3039
  %3041 = vrot.lane.b32.xlu0 %v1952, 32
  %v3042 = vpop.permute.xlu0 %3041
  %3043 = vrot.lane.b32.xlu0 %v1619, 32
  %v3044 = vpop.permute.xlu0 %3043
  %3045 = vrot.lane.b32.xlu0 %v1955, 32
  %v3046 = vpop.permute.xlu0 %3045
  %3047 = vrot.lane.b32.xlu0 %v1628, 32
  %v3048 = vpop.permute.xlu0 %3047
  %3049 = vrot.lane.b32.xlu0 %v1958, 32
  %v3050 = vpop.permute.xlu0 %3049
  %3051 = vrot.lane.b32.xlu0 %v1637, 32
  %v3052 = vpop.permute.xlu0 %3051
  %3053 = vrot.lane.b32.xlu0 %v1961, 32
  %v3054 = vpop.permute.xlu0 %3053
  %3055 = vrot.lane.b32.xlu0 %v1646, 32
  %v3056 = vpop.permute.xlu0 %3055
  %v3121 = vadd.f32 %v2865, %v2930
  %v3122 = vadd.f32 %v2866, %v2932
  %v3123 = vadd.f32 %v2867, %v2934
  %v3124 = vadd.f32 %v2868, %v2936
  %v3125 = vadd.f32 %v2869, %v2938
  %v3126 = vadd.f32 %v2870, %v2940
  %v3127 = vadd.f32 %v2871, %v2942
  %v3128 = vadd.f32 %v2872, %v2944
  %v3129 = vadd.f32 %v2873, %v2946
  %v3130 = vadd.f32 %v2874, %v2948
  %v3131 = vadd.f32 %v2875, %v2950
  %v3132 = vadd.f32 %v2876, %v2952
  %v3133 = vadd.f32 %v2877, %v2954
  %v3134 = vadd.f32 %v2878, %v2956
  %v3135 = vadd.f32 %v2879, %v2958
  %v3136 = vadd.f32 %v2880, %v2960
  %v3137 = vadd.f32 %v2881, %v2962
  %v3138 = vadd.f32 %v2882, %v2964
  %v3139 = vadd.f32 %v2883, %v2966
  %v3140 = vadd.f32 %v2884, %v2968
  %v3141 = vadd.f32 %v2885, %v2970
  %v3142 = vadd.f32 %v2886, %v2972
  %v3143 = vadd.f32 %v2887, %v2974
  %v3144 = vadd.f32 %v2888, %v2976
  %v3145 = vadd.f32 %v2889, %v2978
  %v3146 = vadd.f32 %v2890, %v2980
  %v3147 = vadd.f32 %v2891, %v2982
  %v3148 = vadd.f32 %v2892, %v2984
  %v3149 = vadd.f32 %v2893, %v2986
  %v3150 = vadd.f32 %v2894, %v2988
  %v3151 = vadd.f32 %v2895, %v2990
  %v3152 = vadd.f32 %v2896, %v2992
  %v3153 = vadd.f32 %v2865, %v2994
  %v3154 = vadd.f32 %v2866, %v2996
  %v3155 = vadd.f32 %v2897, %v2998
  %v3156 = vadd.f32 %v2898, %v3000
  %v3157 = vadd.f32 %v2899, %v3002
  %v3158 = vadd.f32 %v2900, %v3004
  %v3159 = vadd.f32 %v2901, %v3006
  %v3160 = vadd.f32 %v2902, %v3008
  %v3161 = vadd.f32 %v2903, %v3010
  %v3162 = vadd.f32 %v2904, %v3012
  %v3163 = vadd.f32 %v2905, %v3014
  %v3164 = vadd.f32 %v2906, %v3016
  %v3165 = vadd.f32 %v2907, %v3018
  %v3166 = vadd.f32 %v2908, %v3020
  %v3167 = vadd.f32 %v2909, %v3022
  %v3168 = vadd.f32 %v2910, %v3024
  %v3169 = vadd.f32 %v2911, %v3026
  %v3170 = vadd.f32 %v2912, %v3028
  %v3171 = vadd.f32 %v2913, %v3030
  %v3172 = vadd.f32 %v2914, %v3032
  %v3173 = vadd.f32 %v2915, %v3034
  %v3174 = vadd.f32 %v2916, %v3036
  %v3175 = vadd.f32 %v2917, %v3038
  %v3176 = vadd.f32 %v2918, %v3040
  %v3177 = vadd.f32 %v2919, %v3042
  %v3178 = vadd.f32 %v2920, %v3044
  %v3179 = vadd.f32 %v2921, %v3046
  %v3180 = vadd.f32 %v2922, %v3048
  %v3181 = vadd.f32 %v2923, %v3050
  %v3182 = vadd.f32 %v2924, %v3052
  %v3183 = vadd.f32 %v2925, %v3054
  %v3184 = vadd.f32 %v2926, %v3056
  %v3249 = vrot.slane %v1871, 1
  %v3250 = vrot.slane %v1374, 1
  %v3251 = vsel %vm2119, %v3249, %v3250
  %v3252 = vrot.slane %v1966, 1
  %v3253 = vsel %vm2119, %v3250, %v3252
  %v3254 = vrot.slane %v1873, 1
  %v3255 = vrot.slane %v1381, 1
  %v3256 = vsel %vm2119, %v3254, %v3255
  %v3257 = vrot.slane %v1968, 1
  %v3258 = vsel %vm2119, %v3255, %v3257
  %v3259 = vrot.slane %v1876, 1
  %v3260 = vrot.slane %v1390, 1
  %v3261 = vsel %vm2119, %v3259, %v3260
  %v3262 = vrot.slane %v1971, 1
  %v3263 = vsel %vm2119, %v3260, %v3262
  %v3264 = vrot.slane %v1879, 1
  %v3265 = vrot.slane %v1399, 1
  %v3266 = vsel %vm2119, %v3264, %v3265
  %v3267 = vrot.slane %v1974, 1
  %v3268 = vsel %vm2119, %v3265, %v3267
  %v3269 = vrot.slane %v1882, 1
  %v3270 = vrot.slane %v1408, 1
  %v3271 = vsel %vm2119, %v3269, %v3270
  %v3272 = vrot.slane %v1977, 1
  %v3273 = vsel %vm2119, %v3270, %v3272
  %v3274 = vrot.slane %v1885, 1
  %v3275 = vrot.slane %v1417, 1
  %v3276 = vsel %vm2119, %v3274, %v3275
  %v3277 = vrot.slane %v1980, 1
  %v3278 = vsel %vm2119, %v3275, %v3277
  %v3279 = vrot.slane %v1888, 1
  %v3280 = vrot.slane %v1426, 1
  %v3281 = vsel %vm2119, %v3279, %v3280
  %v3282 = vrot.slane %v1983, 1
  %v3283 = vsel %vm2119, %v3280, %v3282
  %v3284 = vrot.slane %v1891, 1
  %v3285 = vrot.slane %v1435, 1
  %v3286 = vsel %vm2119, %v3284, %v3285
  %v3287 = vrot.slane %v1986, 1
  %v3288 = vsel %vm2119, %v3285, %v3287
  %v3289 = vrot.slane %v1894, 1
  %v3290 = vrot.slane %v1444, 1
  %v3291 = vsel %vm2119, %v3289, %v3290
  %v3292 = vrot.slane %v1989, 1
  %v3293 = vsel %vm2119, %v3290, %v3292
  %v3294 = vrot.slane %v1897, 1
  %v3295 = vrot.slane %v1453, 1
  %v3296 = vsel %vm2119, %v3294, %v3295
  %v3297 = vrot.slane %v1992, 1
  %v3298 = vsel %vm2119, %v3295, %v3297
  %v3299 = vrot.slane %v1900, 1
  %v3300 = vrot.slane %v1462, 1
  %v3301 = vsel %vm2119, %v3299, %v3300
  %v3302 = vrot.slane %v1995, 1
  %v3303 = vsel %vm2119, %v3300, %v3302
  %v3304 = vrot.slane %v1903, 1
  %v3305 = vrot.slane %v1471, 1
  %v3306 = vsel %vm2119, %v3304, %v3305
  %v3307 = vrot.slane %v1998, 1
  %v3308 = vsel %vm2119, %v3305, %v3307
  %v3309 = vrot.slane %v1906, 1
  %v3310 = vrot.slane %v1480, 1
  %v3311 = vsel %vm2119, %v3309, %v3310
  %v3312 = vrot.slane %v2001, 1
  %v3313 = vsel %vm2119, %v3310, %v3312
  %v3314 = vrot.slane %v1909, 1
  %v3315 = vrot.slane %v1489, 1
  %v3316 = vsel %vm2119, %v3314, %v3315
  %v3317 = vrot.slane %v2004, 1
  %v3318 = vsel %vm2119, %v3315, %v3317
  %v3319 = vrot.slane %v1912, 1
  %v3320 = vrot.slane %v1498, 1
  %v3321 = vsel %vm2119, %v3319, %v3320
  %v3322 = vrot.slane %v2007, 1
  %v3323 = vsel %vm2119, %v3320, %v3322
  %v3324 = vrot.slane %v1915, 1
  %v3325 = vrot.slane %v1507, 1
  %v3326 = vsel %vm2119, %v3324, %v3325
  %v3327 = vrot.slane %v2009, 1
  %v3328 = vsel %vm2119, %v3325, %v3327
  %v3329 = vrot.slane %v1918, 1
  %v3330 = vrot.slane %v1515, 1
  %v3331 = vsel %vm2119, %v3329, %v3330
  %v3332 = vrot.slane %v2012, 1
  %v3333 = vsel %vm2119, %v3330, %v3332
  %v3334 = vrot.slane %v1920, 1
  %v3335 = vrot.slane %v1522, 1
  %v3336 = vsel %vm2119, %v3334, %v3335
  %v3337 = vrot.slane %v2014, 1
  %v3338 = vsel %vm2119, %v3335, %v3337
  %v3339 = vrot.slane %v1923, 1
  %v3340 = vrot.slane %v1531, 1
  %v3341 = vsel %vm2119, %v3339, %v3340
  %v3342 = vrot.slane %v2017, 1
  %v3343 = vsel %vm2119, %v3340, %v3342
  %v3344 = vrot.slane %v1926, 1
  %v3345 = vrot.slane %v1540, 1
  %v3346 = vsel %vm2119, %v3344, %v3345
  %v3347 = vrot.slane %v2020, 1
  %v3348 = vsel %vm2119, %v3345, %v3347
  %v3349 = vrot.slane %v1929, 1
  %v3350 = vrot.slane %v1549, 1
  %v3351 = vsel %vm2119, %v3349, %v3350
  %v3352 = vrot.slane %v2023, 1
  %v3353 = vsel %vm2119, %v3350, %v3352
  %v3354 = vrot.slane %v1932, 1
  %v3355 = vrot.slane %v1558, 1
  %v3356 = vsel %vm2119, %v3354, %v3355
  %v3357 = vrot.slane %v2026, 1
  %v3358 = vsel %vm2119, %v3355, %v3357
  %v3359 = vrot.slane %v1935, 1
  %v3360 = vrot.slane %v1567, 1
  %v3361 = vsel %vm2119, %v3359, %v3360
  %v3362 = vrot.slane %v2029, 1
  %v3363 = vsel %vm2119, %v3360, %v3362
  %v3364 = vrot.slane %v1938, 1
  %v3365 = vrot.slane %v1576, 1
  %v3366 = vsel %vm2119, %v3364, %v3365
  %v3367 = vrot.slane %v2032, 1
  %v3368 = vsel %vm2119, %v3365, %v3367
  %v3369 = vrot.slane %v1941, 1
  %v3370 = vrot.slane %v1585, 1
  %v3371 = vsel %vm2119, %v3369, %v3370
  %v3372 = vrot.slane %v2035, 1
  %v3373 = vsel %vm2119, %v3370, %v3372
  %v3374 = vrot.slane %v1944, 1
  %v3375 = vrot.slane %v1594, 1
  %v3376 = vsel %vm2119, %v3374, %v3375
  %v3377 = vrot.slane %v2038, 1
  %v3378 = vsel %vm2119, %v3375, %v3377
  %v3379 = vrot.slane %v1947, 1
  %v3380 = vrot.slane %v1603, 1
  %v3381 = vsel %vm2119, %v3379, %v3380
  %v3382 = vrot.slane %v2041, 1
  %v3383 = vsel %vm2119, %v3380, %v3382
  %v3384 = vrot.slane %v1950, 1
  %v3385 = vrot.slane %v1612, 1
  %v3386 = vsel %vm2119, %v3384, %v3385
  %v3387 = vrot.slane %v2044, 1
  %v3388 = vsel %vm2119, %v3385, %v3387
  %v3389 = vrot.slane %v1953, 1
  %v3390 = vrot.slane %v1621, 1
  %v3391 = vsel %vm2119, %v3389, %v3390
  %v3392 = vrot.slane %v2047, 1
  %v3393 = vsel %vm2119, %v3390, %v3392
  %v3394 = vrot.slane %v1956, 1
  %v3395 = vrot.slane %v1630, 1
  %v3396 = vsel %vm2119, %v3394, %v3395
  %v3397 = vrot.slane %v2050, 1
  %v3398 = vsel %vm2119, %v3395, %v3397
  %v3399 = vrot.slane %v1959, 1
  %v3400 = vrot.slane %v1639, 1
  %v3401 = vsel %vm2119, %v3399, %v3400
  %v3402 = vrot.slane %v2053, 1
  %v3403 = vsel %vm2119, %v3400, %v3402
  %v3404 = vrot.slane %v1962, 1
  %v3405 = vrot.slane %v1648, 1
  %v3406 = vsel %vm2119, %v3404, %v3405
  %v3407 = vrot.slane %v2055, 1
  %v3408 = vsel %vm2119, %v3405, %v3407
  %v3473 = vadd.f32 %v3121, %v3251
  %v3474 = vadd.f32 %v3122, %v3253
  %v3475 = vadd.f32 %v3123, %v3256
  %v3476 = vadd.f32 %v3124, %v3258
  %v3477 = vadd.f32 %v3125, %v3261
  %v3478 = vadd.f32 %v3126, %v3263
  %v3479 = vadd.f32 %v3127, %v3266
  %v3480 = vadd.f32 %v3128, %v3268
  %v3481 = vadd.f32 %v3129, %v3271
  %v3482 = vadd.f32 %v3130, %v3273
  %v3483 = vadd.f32 %v3131, %v3276
  %v3484 = vadd.f32 %v3132, %v3278
  %v3485 = vadd.f32 %v3133, %v3281
  %v3486 = vadd.f32 %v3134, %v3283
  %v3487 = vadd.f32 %v3135, %v3286
  %v3488 = vadd.f32 %v3136, %v3288
  %v3489 = vadd.f32 %v3137, %v3291
  %v3490 = vadd.f32 %v3138, %v3293
  %v3491 = vadd.f32 %v3139, %v3296
  %v3492 = vadd.f32 %v3140, %v3298
  %v3493 = vadd.f32 %v3141, %v3301
  %v3494 = vadd.f32 %v3142, %v3303
  %v3495 = vadd.f32 %v3143, %v3306
  %v3496 = vadd.f32 %v3144, %v3308
  %v3497 = vadd.f32 %v3145, %v3311
  %v3498 = vadd.f32 %v3146, %v3313
  %v3499 = vadd.f32 %v3147, %v3316
  %v3500 = vadd.f32 %v3148, %v3318
  %v3501 = vadd.f32 %v3149, %v3321
  %v3502 = vadd.f32 %v3150, %v3323
  %v3503 = vadd.f32 %v3151, %v3326
  %v3504 = vadd.f32 %v3152, %v3328
  %v3505 = vadd.f32 %v3153, %v3331
  %v3506 = vadd.f32 %v3154, %v3333
  %v3507 = vadd.f32 %v3155, %v3336
  %v3508 = vadd.f32 %v3156, %v3338
  %v3509 = vadd.f32 %v3157, %v3341
  %v3510 = vadd.f32 %v3158, %v3343
  %v3511 = vadd.f32 %v3159, %v3346
  %v3512 = vadd.f32 %v3160, %v3348
  %v3513 = vadd.f32 %v3161, %v3351
  %v3514 = vadd.f32 %v3162, %v3353
  %v3515 = vadd.f32 %v3163, %v3356
  %v3516 = vadd.f32 %v3164, %v3358
  %v3517 = vadd.f32 %v3165, %v3361
  %v3518 = vadd.f32 %v3166, %v3363
  %v3519 = vadd.f32 %v3167, %v3366
  %v3520 = vadd.f32 %v3168, %v3368
  %v3521 = vadd.f32 %v3169, %v3371
  %v3522 = vadd.f32 %v3170, %v3373
  %v3523 = vadd.f32 %v3171, %v3376
  %v3524 = vadd.f32 %v3172, %v3378
  %v3525 = vadd.f32 %v3173, %v3381
  %v3526 = vadd.f32 %v3174, %v3383
  %v3527 = vadd.f32 %v3175, %v3386
  %v3528 = vadd.f32 %v3176, %v3388
  %v3529 = vadd.f32 %v3177, %v3391
  %v3530 = vadd.f32 %v3178, %v3393
  %v3531 = vadd.f32 %v3179, %v3396
  %v3532 = vadd.f32 %v3180, %v3398
  %v3533 = vadd.f32 %v3181, %v3401
  %v3534 = vadd.f32 %v3182, %v3403
  %v3535 = vadd.f32 %v3183, %v3406
  %v3536 = vadd.f32 %v3184, %v3408
  %v3537 = vrot.slane %v1871, 2
  %v3538 = vrot.slane %v1374, 2
  %v3539 = vsel %vm2523, %v3537, %v3538
  %v3540 = vrot.slane %v1966, 2
  %v3541 = vsel %vm2523, %v3538, %v3540
  %v3542 = vrot.slane %v1873, 2
  %v3543 = vrot.slane %v1381, 2
  %v3544 = vsel %vm2523, %v3542, %v3543
  %v3545 = vrot.slane %v1968, 2
  %v3546 = vsel %vm2523, %v3543, %v3545
  %v3547 = vrot.slane %v1876, 2
  %v3548 = vrot.slane %v1390, 2
  %v3549 = vsel %vm2523, %v3547, %v3548
  %v3550 = vrot.slane %v1971, 2
  %v3551 = vsel %vm2523, %v3548, %v3550
  %v3552 = vrot.slane %v1879, 2
  %v3553 = vrot.slane %v1399, 2
  %v3554 = vsel %vm2523, %v3552, %v3553
  %v3555 = vrot.slane %v1974, 2
  %v3556 = vsel %vm2523, %v3553, %v3555
  %v3557 = vrot.slane %v1882, 2
  %v3558 = vrot.slane %v1408, 2
  %v3559 = vsel %vm2523, %v3557, %v3558
  %v3560 = vrot.slane %v1977, 2
  %v3561 = vsel %vm2523, %v3558, %v3560
  %v3562 = vrot.slane %v1885, 2
  %v3563 = vrot.slane %v1417, 2
  %v3564 = vsel %vm2523, %v3562, %v3563
  %v3565 = vrot.slane %v1980, 2
  %v3566 = vsel %vm2523, %v3563, %v3565
  %v3567 = vrot.slane %v1888, 2
  %v3568 = vrot.slane %v1426, 2
  %v3569 = vsel %vm2523, %v3567, %v3568
  %v3570 = vrot.slane %v1983, 2
  %v3571 = vsel %vm2523, %v3568, %v3570
  %v3572 = vrot.slane %v1891, 2
  %v3573 = vrot.slane %v1435, 2
  %v3574 = vsel %vm2523, %v3572, %v3573
  %v3575 = vrot.slane %v1986, 2
  %v3576 = vsel %vm2523, %v3573, %v3575
  %v3577 = vrot.slane %v1894, 2
  %v3578 = vrot.slane %v1444, 2
  %v3579 = vsel %vm2523, %v3577, %v3578
  %v3580 = vrot.slane %v1989, 2
  %v3581 = vsel %vm2523, %v3578, %v3580
  %v3582 = vrot.slane %v1897, 2
  %v3583 = vrot.slane %v1453, 2
  %v3584 = vsel %vm2523, %v3582, %v3583
  %v3585 = vrot.slane %v1992, 2
  %v3586 = vsel %vm2523, %v3583, %v3585
  %v3587 = vrot.slane %v1900, 2
  %v3588 = vrot.slane %v1462, 2
  %v3589 = vsel %vm2523, %v3587, %v3588
  %v3590 = vrot.slane %v1995, 2
  %v3591 = vsel %vm2523, %v3588, %v3590
  %v3592 = vrot.slane %v1903, 2
  %v3593 = vrot.slane %v1471, 2
  %v3594 = vsel %vm2523, %v3592, %v3593
  %v3595 = vrot.slane %v1998, 2
  %v3596 = vsel %vm2523, %v3593, %v3595
  %v3597 = vrot.slane %v1906, 2
  %v3598 = vrot.slane %v1480, 2
  %v3599 = vsel %vm2523, %v3597, %v3598
  %v3600 = vrot.slane %v2001, 2
  %v3601 = vsel %vm2523, %v3598, %v3600
  %v3602 = vrot.slane %v1909, 2
  %v3603 = vrot.slane %v1489, 2
  %v3604 = vsel %vm2523, %v3602, %v3603
  %v3605 = vrot.slane %v2004, 2
  %v3606 = vsel %vm2523, %v3603, %v3605
  %v3607 = vrot.slane %v1912, 2
  %v3608 = vrot.slane %v1498, 2
  %v3609 = vsel %vm2523, %v3607, %v3608
  %v3610 = vrot.slane %v2007, 2
  %v3611 = vsel %vm2523, %v3608, %v3610
  %v3612 = vrot.slane %v1915, 2
  %v3613 = vrot.slane %v1507, 2
  %v3614 = vsel %vm2523, %v3612, %v3613
  %v3615 = vrot.slane %v2009, 2
  %v3616 = vsel %vm2523, %v3613, %v3615
  %v3617 = vrot.slane %v1918, 2
  %v3618 = vrot.slane %v1515, 2
  %v3619 = vsel %vm2523, %v3617, %v3618
  %v3620 = vrot.slane %v2012, 2
  %v3621 = vsel %vm2523, %v3618, %v3620
  %v3622 = vrot.slane %v1920, 2
  %v3623 = vrot.slane %v1522, 2
  %v3624 = vsel %vm2523, %v3622, %v3623
  %v3625 = vrot.slane %v2014, 2
  %v3626 = vsel %vm2523, %v3623, %v3625
  %v3627 = vrot.slane %v1923, 2
  %v3628 = vrot.slane %v1531, 2
  %v3629 = vsel %vm2523, %v3627, %v3628
  %v3630 = vrot.slane %v2017, 2
  %v3631 = vsel %vm2523, %v3628, %v3630
  %v3632 = vrot.slane %v1926, 2
  %v3633 = vrot.slane %v1540, 2
  %v3634 = vsel %vm2523, %v3632, %v3633
  %v3635 = vrot.slane %v2020, 2
  %v3636 = vsel %vm2523, %v3633, %v3635
  %v3637 = vrot.slane %v1929, 2
  %v3638 = vrot.slane %v1549, 2
  %v3639 = vsel %vm2523, %v3637, %v3638
  %v3640 = vrot.slane %v2023, 2
  %v3641 = vsel %vm2523, %v3638, %v3640
  %v3642 = vrot.slane %v1932, 2
  %v3643 = vrot.slane %v1558, 2
  %v3644 = vsel %vm2523, %v3642, %v3643
  %v3645 = vrot.slane %v2026, 2
  %v3646 = vsel %vm2523, %v3643, %v3645
  %v3647 = vrot.slane %v1935, 2
  %v3648 = vrot.slane %v1567, 2
  %v3649 = vsel %vm2523, %v3647, %v3648
  %v3650 = vrot.slane %v2029, 2
  %v3651 = vsel %vm2523, %v3648, %v3650
  %v3652 = vrot.slane %v1938, 2
  %v3653 = vrot.slane %v1576, 2
  %v3654 = vsel %vm2523, %v3652, %v3653
  %v3655 = vrot.slane %v2032, 2
  %v3656 = vsel %vm2523, %v3653, %v3655
  %v3657 = vrot.slane %v1941, 2
  %v3658 = vrot.slane %v1585, 2
  %v3659 = vsel %vm2523, %v3657, %v3658
  %v3660 = vrot.slane %v2035, 2
  %v3661 = vsel %vm2523, %v3658, %v3660
  %v3662 = vrot.slane %v1944, 2
  %v3663 = vrot.slane %v1594, 2
  %v3664 = vsel %vm2523, %v3662, %v3663
  %v3665 = vrot.slane %v2038, 2
  %v3666 = vsel %vm2523, %v3663, %v3665
  %v3667 = vrot.slane %v1947, 2
  %v3668 = vrot.slane %v1603, 2
  %v3669 = vsel %vm2523, %v3667, %v3668
  %v3670 = vrot.slane %v2041, 2
  %v3671 = vsel %vm2523, %v3668, %v3670
  %v3672 = vrot.slane %v1950, 2
  %v3673 = vrot.slane %v1612, 2
  %v3674 = vsel %vm2523, %v3672, %v3673
  %v3675 = vrot.slane %v2044, 2
  %v3676 = vsel %vm2523, %v3673, %v3675
  %v3677 = vrot.slane %v1953, 2
  %v3678 = vrot.slane %v1621, 2
  %v3679 = vsel %vm2523, %v3677, %v3678
  %v3680 = vrot.slane %v2047, 2
  %v3681 = vsel %vm2523, %v3678, %v3680
  %v3682 = vrot.slane %v1956, 2
  %v3683 = vrot.slane %v1630, 2
  %v3684 = vsel %vm2523, %v3682, %v3683
  %v3685 = vrot.slane %v2050, 2
  %v3686 = vsel %vm2523, %v3683, %v3685
  %v3687 = vrot.slane %v1959, 2
  %v3688 = vrot.slane %v1639, 2
  %v3689 = vsel %vm2523, %v3687, %v3688
  %v3690 = vrot.slane %v2053, 2
  %v3691 = vsel %vm2523, %v3688, %v3690
  %v3692 = vrot.slane %v1962, 2
  %v3693 = vrot.slane %v1648, 2
  %v3694 = vsel %vm2523, %v3692, %v3693
  %v3695 = vrot.slane %v2055, 2
  %v3696 = vsel %vm2523, %v3693, %v3695
  %3697 = vrot.lane.b32.xlu0 %v3539, 96
  %v3698 = vpop.permute.xlu0 %3697
  %3699 = vrot.lane.b32.xlu0 %v3541, 96
  %v3700 = vpop.permute.xlu0 %3699
  %3701 = vrot.lane.b32.xlu0 %v3544, 96
  %v3702 = vpop.permute.xlu0 %3701
  %3703 = vrot.lane.b32.xlu0 %v3546, 96
  %v3704 = vpop.permute.xlu0 %3703
  %3705 = vrot.lane.b32.xlu0 %v3549, 96
  %v3706 = vpop.permute.xlu0 %3705
  %3707 = vrot.lane.b32.xlu0 %v3551, 96
  %v3708 = vpop.permute.xlu0 %3707
  %3709 = vrot.lane.b32.xlu0 %v3554, 96
  %v3710 = vpop.permute.xlu0 %3709
  %3711 = vrot.lane.b32.xlu0 %v3556, 96
  %v3712 = vpop.permute.xlu0 %3711
  %3713 = vrot.lane.b32.xlu0 %v3559, 96
  %v3714 = vpop.permute.xlu0 %3713
  %3715 = vrot.lane.b32.xlu0 %v3561, 96
  %v3716 = vpop.permute.xlu0 %3715
  %3717 = vrot.lane.b32.xlu0 %v3564, 96
  %v3718 = vpop.permute.xlu0 %3717
  %3719 = vrot.lane.b32.xlu0 %v3566, 96
  %v3720 = vpop.permute.xlu0 %3719
  %3721 = vrot.lane.b32.xlu0 %v3569, 96
  %v3722 = vpop.permute.xlu0 %3721
  %3723 = vrot.lane.b32.xlu0 %v3571, 96
  %v3724 = vpop.permute.xlu0 %3723
  %3725 = vrot.lane.b32.xlu0 %v3574, 96
  %v3726 = vpop.permute.xlu0 %3725
  %3727 = vrot.lane.b32.xlu0 %v3576, 96
  %v3728 = vpop.permute.xlu0 %3727
  %3729 = vrot.lane.b32.xlu0 %v3579, 96
  %v3730 = vpop.permute.xlu0 %3729
  %3731 = vrot.lane.b32.xlu0 %v3581, 96
  %v3732 = vpop.permute.xlu0 %3731
  %3733 = vrot.lane.b32.xlu0 %v3584, 96
  %v3734 = vpop.permute.xlu0 %3733
  %3735 = vrot.lane.b32.xlu0 %v3586, 96
  %v3736 = vpop.permute.xlu0 %3735
  %3737 = vrot.lane.b32.xlu0 %v3589, 96
  %v3738 = vpop.permute.xlu0 %3737
  %3739 = vrot.lane.b32.xlu0 %v3591, 96
  %v3740 = vpop.permute.xlu0 %3739
  %3741 = vrot.lane.b32.xlu0 %v3594, 96
  %v3742 = vpop.permute.xlu0 %3741
  %3743 = vrot.lane.b32.xlu0 %v3596, 96
  %v3744 = vpop.permute.xlu0 %3743
  %3745 = vrot.lane.b32.xlu0 %v3599, 96
  %v3746 = vpop.permute.xlu0 %3745
  %3747 = vrot.lane.b32.xlu0 %v3601, 96
  %v3748 = vpop.permute.xlu0 %3747
  %3749 = vrot.lane.b32.xlu0 %v3604, 96
  %v3750 = vpop.permute.xlu0 %3749
  %3751 = vrot.lane.b32.xlu0 %v3606, 96
  %v3752 = vpop.permute.xlu0 %3751
  %3753 = vrot.lane.b32.xlu0 %v3609, 96
  %v3754 = vpop.permute.xlu0 %3753
  %3755 = vrot.lane.b32.xlu0 %v3611, 96
  %v3756 = vpop.permute.xlu0 %3755
  %3757 = vrot.lane.b32.xlu0 %v3614, 96
  %v3758 = vpop.permute.xlu0 %3757
  %3759 = vrot.lane.b32.xlu0 %v3616, 96
  %v3760 = vpop.permute.xlu0 %3759
  %3761 = vrot.lane.b32.xlu0 %v3619, 96
  %v3762 = vpop.permute.xlu0 %3761
  %3763 = vrot.lane.b32.xlu0 %v3621, 96
  %v3764 = vpop.permute.xlu0 %3763
  %3765 = vrot.lane.b32.xlu0 %v3624, 96
  %v3766 = vpop.permute.xlu0 %3765
  %3767 = vrot.lane.b32.xlu0 %v3626, 96
  %v3768 = vpop.permute.xlu0 %3767
  %3769 = vrot.lane.b32.xlu0 %v3629, 96
  %v3770 = vpop.permute.xlu0 %3769
  %3771 = vrot.lane.b32.xlu0 %v3631, 96
  %v3772 = vpop.permute.xlu0 %3771
  %3773 = vrot.lane.b32.xlu0 %v3634, 96
  %v3774 = vpop.permute.xlu0 %3773
  %3775 = vrot.lane.b32.xlu0 %v3636, 96
  %v3776 = vpop.permute.xlu0 %3775
  %3777 = vrot.lane.b32.xlu0 %v3639, 96
  %v3778 = vpop.permute.xlu0 %3777
  %3779 = vrot.lane.b32.xlu0 %v3641, 96
  %v3780 = vpop.permute.xlu0 %3779
  %3781 = vrot.lane.b32.xlu0 %v3644, 96
  %v3782 = vpop.permute.xlu0 %3781
  %3783 = vrot.lane.b32.xlu0 %v3646, 96
  %v3784 = vpop.permute.xlu0 %3783
  %3785 = vrot.lane.b32.xlu0 %v3649, 96
  %v3786 = vpop.permute.xlu0 %3785
  %3787 = vrot.lane.b32.xlu0 %v3651, 96
  %v3788 = vpop.permute.xlu0 %3787
  %3789 = vrot.lane.b32.xlu0 %v3654, 96
  %v3790 = vpop.permute.xlu0 %3789
  %3791 = vrot.lane.b32.xlu0 %v3656, 96
  %v3792 = vpop.permute.xlu0 %3791
  %3793 = vrot.lane.b32.xlu0 %v3659, 96
  %v3794 = vpop.permute.xlu0 %3793
  %3795 = vrot.lane.b32.xlu0 %v3661, 96
  %v3796 = vpop.permute.xlu0 %3795
  %3797 = vrot.lane.b32.xlu0 %v3664, 96
  %v3798 = vpop.permute.xlu0 %3797
  %3799 = vrot.lane.b32.xlu0 %v3666, 96
  %v3800 = vpop.permute.xlu0 %3799
  %3801 = vrot.lane.b32.xlu0 %v3669, 96
  %v3802 = vpop.permute.xlu0 %3801
  %3803 = vrot.lane.b32.xlu0 %v3671, 96
  %v3804 = vpop.permute.xlu0 %3803
  %3805 = vrot.lane.b32.xlu0 %v3674, 96
  %v3806 = vpop.permute.xlu0 %3805
  %3807 = vrot.lane.b32.xlu0 %v3676, 96
  %v3808 = vpop.permute.xlu0 %3807
  %3809 = vrot.lane.b32.xlu0 %v3679, 96
  %v3810 = vpop.permute.xlu0 %3809
  %3811 = vrot.lane.b32.xlu0 %v3681, 96
  %v3812 = vpop.permute.xlu0 %3811
  %3813 = vrot.lane.b32.xlu0 %v3684, 96
  %v3814 = vpop.permute.xlu0 %3813
  %3815 = vrot.lane.b32.xlu0 %v3686, 96
  %v3816 = vpop.permute.xlu0 %3815
  %3817 = vrot.lane.b32.xlu0 %v3689, 96
  %v3818 = vpop.permute.xlu0 %3817
  %3819 = vrot.lane.b32.xlu0 %v3691, 96
  %v3820 = vpop.permute.xlu0 %3819
  %3821 = vrot.lane.b32.xlu0 %v3694, 96
  %v3822 = vpop.permute.xlu0 %3821
  %3823 = vrot.lane.b32.xlu0 %v3696, 96
  %v3824 = vpop.permute.xlu0 %3823
  %v3889 = vadd.f32 %v3473, %v3698
  %v3890 = vadd.f32 %v3474, %v3700
  %v3891 = vadd.f32 %v3475, %v3702
  %v3892 = vadd.f32 %v3476, %v3704
  %v3893 = vadd.f32 %v3477, %v3706
  %v3894 = vadd.f32 %v3478, %v3708
  %v3895 = vadd.f32 %v3479, %v3710
  %v3896 = vadd.f32 %v3480, %v3712
  %v3897 = vadd.f32 %v3481, %v3714
  %v3898 = vadd.f32 %v3482, %v3716
  %v3899 = vadd.f32 %v3483, %v3718
  %v3900 = vadd.f32 %v3484, %v3720
  %v3901 = vadd.f32 %v3485, %v3722
  %v3902 = vadd.f32 %v3486, %v3724
  %v3903 = vadd.f32 %v3487, %v3726
  %v3904 = vadd.f32 %v3488, %v3728
  %v3905 = vadd.f32 %v3489, %v3730
  %v3906 = vadd.f32 %v3490, %v3732
  %v3907 = vadd.f32 %v3491, %v3734
  %v3908 = vadd.f32 %v3492, %v3736
  %v3909 = vadd.f32 %v3493, %v3738
  %v3910 = vadd.f32 %v3494, %v3740
  %v3911 = vadd.f32 %v3495, %v3742
  %v3912 = vadd.f32 %v3496, %v3744
  %v3913 = vadd.f32 %v3497, %v3746
  %v3914 = vadd.f32 %v3498, %v3748
  %v3915 = vadd.f32 %v3499, %v3750
  %v3916 = vadd.f32 %v3500, %v3752
  %v3917 = vadd.f32 %v3501, %v3754
  %v3918 = vadd.f32 %v3502, %v3756
  %v3919 = vadd.f32 %v3503, %v3758
  %v3920 = vadd.f32 %v3504, %v3760
  %v3921 = vadd.f32 %v3505, %v3762
  %v3922 = vadd.f32 %v3506, %v3764
  %v3923 = vadd.f32 %v3507, %v3766
  %v3924 = vadd.f32 %v3508, %v3768
  %v3925 = vadd.f32 %v3509, %v3770
  %v3926 = vadd.f32 %v3510, %v3772
  %v3927 = vadd.f32 %v3511, %v3774
  %v3928 = vadd.f32 %v3512, %v3776
  %v3929 = vadd.f32 %v3513, %v3778
  %v3930 = vadd.f32 %v3514, %v3780
  %v3931 = vadd.f32 %v3515, %v3782
  %v3932 = vadd.f32 %v3516, %v3784
  %v3933 = vadd.f32 %v3517, %v3786
  %v3934 = vadd.f32 %v3518, %v3788
  %v3935 = vadd.f32 %v3519, %v3790
  %v3936 = vadd.f32 %v3520, %v3792
  %v3937 = vadd.f32 %v3521, %v3794
  %v3938 = vadd.f32 %v3522, %v3796
  %v3939 = vadd.f32 %v3523, %v3798
  %v3940 = vadd.f32 %v3524, %v3800
  %v3941 = vadd.f32 %v3525, %v3802
  %v3942 = vadd.f32 %v3526, %v3804
  %v3943 = vadd.f32 %v3527, %v3806
  %v3944 = vadd.f32 %v3528, %v3808
  %v3945 = vadd.f32 %v3529, %v3810
  %v3946 = vadd.f32 %v3530, %v3812
  %v3947 = vadd.f32 %v3531, %v3814
  %v3948 = vadd.f32 %v3532, %v3816
  %v3949 = vadd.f32 %v3533, %v3818
  %v3950 = vadd.f32 %v3534, %v3820
  %v3951 = vadd.f32 %v3535, %v3822
  %v3952 = vadd.f32 %v3536, %v3824
  %3953 = vrot.lane.b32.xlu0 %v1873, 64
  %v3954 = vpop.permute.xlu0 %3953
  %3955 = vrot.lane.b32.xlu0 %v1381, 64
  %v3956 = vpop.permute.xlu0 %3955
  %3957 = vrot.lane.b32.xlu0 %v1876, 64
  %v3958 = vpop.permute.xlu0 %3957
  %3959 = vrot.lane.b32.xlu0 %v1390, 64
  %v3960 = vpop.permute.xlu0 %3959
  %3961 = vrot.lane.b32.xlu0 %v1879, 64
  %v3962 = vpop.permute.xlu0 %3961
  %3963 = vrot.lane.b32.xlu0 %v1399, 64
  %v3964 = vpop.permute.xlu0 %3963
  %3965 = vrot.lane.b32.xlu0 %v1882, 64
  %v3966 = vpop.permute.xlu0 %3965
  %3967 = vrot.lane.b32.xlu0 %v1408, 64
  %v3968 = vpop.permute.xlu0 %3967
  %3969 = vrot.lane.b32.xlu0 %v1885, 64
  %v3970 = vpop.permute.xlu0 %3969
  %3971 = vrot.lane.b32.xlu0 %v1417, 64
  %v3972 = vpop.permute.xlu0 %3971
  %3973 = vrot.lane.b32.xlu0 %v1888, 64
  %v3974 = vpop.permute.xlu0 %3973
  %3975 = vrot.lane.b32.xlu0 %v1426, 64
  %v3976 = vpop.permute.xlu0 %3975
  %3977 = vrot.lane.b32.xlu0 %v1891, 64
  %v3978 = vpop.permute.xlu0 %3977
  %3979 = vrot.lane.b32.xlu0 %v1435, 64
  %v3980 = vpop.permute.xlu0 %3979
  %3981 = vrot.lane.b32.xlu0 %v1894, 64
  %v3982 = vpop.permute.xlu0 %3981
  %3983 = vrot.lane.b32.xlu0 %v1444, 64
  %v3984 = vpop.permute.xlu0 %3983
  %3985 = vrot.lane.b32.xlu0 %v1897, 64
  %v3986 = vpop.permute.xlu0 %3985
  %3987 = vrot.lane.b32.xlu0 %v1453, 64
  %v3988 = vpop.permute.xlu0 %3987
  %3989 = vrot.lane.b32.xlu0 %v1900, 64
  %v3990 = vpop.permute.xlu0 %3989
  %3991 = vrot.lane.b32.xlu0 %v1462, 64
  %v3992 = vpop.permute.xlu0 %3991
  %3993 = vrot.lane.b32.xlu0 %v1903, 64
  %v3994 = vpop.permute.xlu0 %3993
  %3995 = vrot.lane.b32.xlu0 %v1471, 64
  %v3996 = vpop.permute.xlu0 %3995
  %3997 = vrot.lane.b32.xlu0 %v1906, 64
  %v3998 = vpop.permute.xlu0 %3997
  %3999 = vrot.lane.b32.xlu0 %v1480, 64
  %v4000 = vpop.permute.xlu0 %3999
  %4001 = vrot.lane.b32.xlu0 %v1909, 64
  %v4002 = vpop.permute.xlu0 %4001
  %4003 = vrot.lane.b32.xlu0 %v1489, 64
  %v4004 = vpop.permute.xlu0 %4003
  %4005 = vrot.lane.b32.xlu0 %v1912, 64
  %v4006 = vpop.permute.xlu0 %4005
  %4007 = vrot.lane.b32.xlu0 %v1498, 64
  %v4008 = vpop.permute.xlu0 %4007
  %4009 = vrot.lane.b32.xlu0 %v1915, 64
  %v4010 = vpop.permute.xlu0 %4009
  %4011 = vrot.lane.b32.xlu0 %v1507, 64
  %v4012 = vpop.permute.xlu0 %4011
  %4013 = vrot.lane.b32.xlu0 %v1869, 64
  %v4014 = vpop.permute.xlu0 %4013
  %4015 = vrot.lane.b32.xlu0 %v1368, 64
  %v4016 = vpop.permute.xlu0 %4015
  %4017 = vrot.lane.b32.xlu0 %v1920, 64
  %v4018 = vpop.permute.xlu0 %4017
  %4019 = vrot.lane.b32.xlu0 %v1522, 64
  %v4020 = vpop.permute.xlu0 %4019
  %4021 = vrot.lane.b32.xlu0 %v1923, 64
  %v4022 = vpop.permute.xlu0 %4021
  %4023 = vrot.lane.b32.xlu0 %v1531, 64
  %v4024 = vpop.permute.xlu0 %4023
  %4025 = vrot.lane.b32.xlu0 %v1926, 64
  %v4026 = vpop.permute.xlu0 %4025
  %4027 = vrot.lane.b32.xlu0 %v1540, 64
  %v4028 = vpop.permute.xlu0 %4027
  %4029 = vrot.lane.b32.xlu0 %v1929, 64
  %v4030 = vpop.permute.xlu0 %4029
  %4031 = vrot.lane.b32.xlu0 %v1549, 64
  %v4032 = vpop.permute.xlu0 %4031
  %4033 = vrot.lane.b32.xlu0 %v1932, 64
  %v4034 = vpop.permute.xlu0 %4033
  %4035 = vrot.lane.b32.xlu0 %v1558, 64
  %v4036 = vpop.permute.xlu0 %4035
  %4037 = vrot.lane.b32.xlu0 %v1935, 64
  %v4038 = vpop.permute.xlu0 %4037
  %4039 = vrot.lane.b32.xlu0 %v1567, 64
  %v4040 = vpop.permute.xlu0 %4039
  %4041 = vrot.lane.b32.xlu0 %v1938, 64
  %v4042 = vpop.permute.xlu0 %4041
  %4043 = vrot.lane.b32.xlu0 %v1576, 64
  %v4044 = vpop.permute.xlu0 %4043
  %4045 = vrot.lane.b32.xlu0 %v1941, 64
  %v4046 = vpop.permute.xlu0 %4045
  %4047 = vrot.lane.b32.xlu0 %v1585, 64
  %v4048 = vpop.permute.xlu0 %4047
  %4049 = vrot.lane.b32.xlu0 %v1944, 64
  %v4050 = vpop.permute.xlu0 %4049
  %4051 = vrot.lane.b32.xlu0 %v1594, 64
  %v4052 = vpop.permute.xlu0 %4051
  %4053 = vrot.lane.b32.xlu0 %v1947, 64
  %v4054 = vpop.permute.xlu0 %4053
  %4055 = vrot.lane.b32.xlu0 %v1603, 64
  %v4056 = vpop.permute.xlu0 %4055
  %4057 = vrot.lane.b32.xlu0 %v1950, 64
  %v4058 = vpop.permute.xlu0 %4057
  %4059 = vrot.lane.b32.xlu0 %v1612, 64
  %v4060 = vpop.permute.xlu0 %4059
  %4061 = vrot.lane.b32.xlu0 %v1953, 64
  %v4062 = vpop.permute.xlu0 %4061
  %4063 = vrot.lane.b32.xlu0 %v1621, 64
  %v4064 = vpop.permute.xlu0 %4063
  %4065 = vrot.lane.b32.xlu0 %v1956, 64
  %v4066 = vpop.permute.xlu0 %4065
  %4067 = vrot.lane.b32.xlu0 %v1630, 64
  %v4068 = vpop.permute.xlu0 %4067
  %4069 = vrot.lane.b32.xlu0 %v1959, 64
  %v4070 = vpop.permute.xlu0 %4069
  %4071 = vrot.lane.b32.xlu0 %v1639, 64
  %v4072 = vpop.permute.xlu0 %4071
  %4073 = vrot.lane.b32.xlu0 %v1962, 64
  %v4074 = vpop.permute.xlu0 %4073
  %4075 = vrot.lane.b32.xlu0 %v1648, 64
  %v4076 = vpop.permute.xlu0 %4075
  %v4139 = vadd.f32 %v3889, %v3954
  %v4140 = vadd.f32 %v3890, %v3956
  %v4141 = vadd.f32 %v3891, %v3958
  %v4142 = vadd.f32 %v3892, %v3960
  %v4143 = vadd.f32 %v3893, %v3962
  %v4144 = vadd.f32 %v3894, %v3964
  %v4145 = vadd.f32 %v3895, %v3966
  %v4146 = vadd.f32 %v3896, %v3968
  %v4147 = vadd.f32 %v3897, %v3970
  %v4148 = vadd.f32 %v3898, %v3972
  %v4149 = vadd.f32 %v3899, %v3974
  %v4150 = vadd.f32 %v3900, %v3976
  %v4151 = vadd.f32 %v3901, %v3978
  %v4152 = vadd.f32 %v3902, %v3980
  %v4153 = vadd.f32 %v3903, %v3982
  %v4154 = vadd.f32 %v3904, %v3984
  %v4155 = vadd.f32 %v3905, %v3986
  %v4156 = vadd.f32 %v3906, %v3988
  %v4157 = vadd.f32 %v3907, %v3990
  %v4158 = vadd.f32 %v3908, %v3992
  %v4159 = vadd.f32 %v3909, %v3994
  %v4160 = vadd.f32 %v3910, %v3996
  %v4161 = vadd.f32 %v3911, %v3998
  %v4162 = vadd.f32 %v3912, %v4000
  %v4163 = vadd.f32 %v3913, %v4002
  %v4164 = vadd.f32 %v3914, %v4004
  %v4165 = vadd.f32 %v3915, %v4006
  %v4166 = vadd.f32 %v3916, %v4008
  %v4167 = vadd.f32 %v3917, %v4010
  %v4168 = vadd.f32 %v3918, %v4012
  %v4169 = vadd.f32 %v3919, %v4014
  %v4170 = vadd.f32 %v3920, %v4016
  %v4171 = vadd.f32 %v3921, %v4018
  %v4172 = vadd.f32 %v3922, %v4020
  %v4173 = vadd.f32 %v3923, %v4022
  %v4174 = vadd.f32 %v3924, %v4024
  %v4175 = vadd.f32 %v3925, %v4026
  %v4176 = vadd.f32 %v3926, %v4028
  %v4177 = vadd.f32 %v3927, %v4030
  %v4178 = vadd.f32 %v3928, %v4032
  %v4179 = vadd.f32 %v3929, %v4034
  %v4180 = vadd.f32 %v3930, %v4036
  %v4181 = vadd.f32 %v3931, %v4038
  %v4182 = vadd.f32 %v3932, %v4040
  %v4183 = vadd.f32 %v3933, %v4042
  %v4184 = vadd.f32 %v3934, %v4044
  %v4185 = vadd.f32 %v3935, %v4046
  %v4186 = vadd.f32 %v3936, %v4048
  %v4187 = vadd.f32 %v3937, %v4050
  %v4188 = vadd.f32 %v3938, %v4052
  %v4189 = vadd.f32 %v3939, %v4054
  %v4190 = vadd.f32 %v3940, %v4056
  %v4191 = vadd.f32 %v3941, %v4058
  %v4192 = vadd.f32 %v3942, %v4060
  %v4193 = vadd.f32 %v3943, %v4062
  %v4194 = vadd.f32 %v3944, %v4064
  %v4195 = vadd.f32 %v3945, %v4066
  %v4196 = vadd.f32 %v3946, %v4068
  %v4197 = vadd.f32 %v3947, %v4070
  %v4198 = vadd.f32 %v3948, %v4072
  %v4199 = vadd.f32 %v3949, %v4074
  %v4200 = vadd.f32 %v3950, %v4076
  %v4201 = vadd.f32 %v3951, %v4014
  %v4202 = vadd.f32 %v3952, %v4016
  %4203 = vrot.lane.b32.xlu0 %v3256, 32
  %v4204 = vpop.permute.xlu0 %4203
  %4205 = vrot.lane.b32.xlu0 %v3258, 32
  %v4206 = vpop.permute.xlu0 %4205
  %4207 = vrot.lane.b32.xlu0 %v3261, 32
  %v4208 = vpop.permute.xlu0 %4207
  %4209 = vrot.lane.b32.xlu0 %v3263, 32
  %v4210 = vpop.permute.xlu0 %4209
  %4211 = vrot.lane.b32.xlu0 %v3266, 32
  %v4212 = vpop.permute.xlu0 %4211
  %4213 = vrot.lane.b32.xlu0 %v3268, 32
  %v4214 = vpop.permute.xlu0 %4213
  %4215 = vrot.lane.b32.xlu0 %v3271, 32
  %v4216 = vpop.permute.xlu0 %4215
  %4217 = vrot.lane.b32.xlu0 %v3273, 32
  %v4218 = vpop.permute.xlu0 %4217
  %4219 = vrot.lane.b32.xlu0 %v3276, 32
  %v4220 = vpop.permute.xlu0 %4219
  %4221 = vrot.lane.b32.xlu0 %v3278, 32
  %v4222 = vpop.permute.xlu0 %4221
  %4223 = vrot.lane.b32.xlu0 %v3281, 32
  %v4224 = vpop.permute.xlu0 %4223
  %4225 = vrot.lane.b32.xlu0 %v3283, 32
  %v4226 = vpop.permute.xlu0 %4225
  %4227 = vrot.lane.b32.xlu0 %v3286, 32
  %v4228 = vpop.permute.xlu0 %4227
  %4229 = vrot.lane.b32.xlu0 %v3288, 32
  %v4230 = vpop.permute.xlu0 %4229
  %4231 = vrot.lane.b32.xlu0 %v3291, 32
  %v4232 = vpop.permute.xlu0 %4231
  %4233 = vrot.lane.b32.xlu0 %v3293, 32
  %v4234 = vpop.permute.xlu0 %4233
  %4235 = vrot.lane.b32.xlu0 %v3296, 32
  %v4236 = vpop.permute.xlu0 %4235
  %4237 = vrot.lane.b32.xlu0 %v3298, 32
  %v4238 = vpop.permute.xlu0 %4237
  %4239 = vrot.lane.b32.xlu0 %v3301, 32
  %v4240 = vpop.permute.xlu0 %4239
  %4241 = vrot.lane.b32.xlu0 %v3303, 32
  %v4242 = vpop.permute.xlu0 %4241
  %4243 = vrot.lane.b32.xlu0 %v3306, 32
  %v4244 = vpop.permute.xlu0 %4243
  %4245 = vrot.lane.b32.xlu0 %v3308, 32
  %v4246 = vpop.permute.xlu0 %4245
  %4247 = vrot.lane.b32.xlu0 %v3311, 32
  %v4248 = vpop.permute.xlu0 %4247
  %4249 = vrot.lane.b32.xlu0 %v3313, 32
  %v4250 = vpop.permute.xlu0 %4249
  %4251 = vrot.lane.b32.xlu0 %v3316, 32
  %v4252 = vpop.permute.xlu0 %4251
  %4253 = vrot.lane.b32.xlu0 %v3318, 32
  %v4254 = vpop.permute.xlu0 %4253
  %4255 = vrot.lane.b32.xlu0 %v3321, 32
  %v4256 = vpop.permute.xlu0 %4255
  %4257 = vrot.lane.b32.xlu0 %v3323, 32
  %v4258 = vpop.permute.xlu0 %4257
  %4259 = vrot.lane.b32.xlu0 %v3326, 32
  %v4260 = vpop.permute.xlu0 %4259
  %4261 = vrot.lane.b32.xlu0 %v3328, 32
  %v4262 = vpop.permute.xlu0 %4261
  %4263 = vrot.lane.b32.xlu0 %v2122, 32
  %v4264 = vpop.permute.xlu0 %4263
  %4265 = vrot.lane.b32.xlu0 %v2124, 32
  %v4266 = vpop.permute.xlu0 %4265
  %4267 = vrot.lane.b32.xlu0 %v3336, 32
  %v4268 = vpop.permute.xlu0 %4267
  %4269 = vrot.lane.b32.xlu0 %v3338, 32
  %v4270 = vpop.permute.xlu0 %4269
  %4271 = vrot.lane.b32.xlu0 %v3341, 32
  %v4272 = vpop.permute.xlu0 %4271
  %4273 = vrot.lane.b32.xlu0 %v3343, 32
  %v4274 = vpop.permute.xlu0 %4273
  %4275 = vrot.lane.b32.xlu0 %v3346, 32
  %v4276 = vpop.permute.xlu0 %4275
  %4277 = vrot.lane.b32.xlu0 %v3348, 32
  %v4278 = vpop.permute.xlu0 %4277
  %4279 = vrot.lane.b32.xlu0 %v3351, 32
  %v4280 = vpop.permute.xlu0 %4279
  %4281 = vrot.lane.b32.xlu0 %v3353, 32
  %v4282 = vpop.permute.xlu0 %4281
  %4283 = vrot.lane.b32.xlu0 %v3356, 32
  %v4284 = vpop.permute.xlu0 %4283
  %4285 = vrot.lane.b32.xlu0 %v3358, 32
  %v4286 = vpop.permute.xlu0 %4285
  %4287 = vrot.lane.b32.xlu0 %v3361, 32
  %v4288 = vpop.permute.xlu0 %4287
  %4289 = vrot.lane.b32.xlu0 %v3363, 32
  %v4290 = vpop.permute.xlu0 %4289
  %4291 = vrot.lane.b32.xlu0 %v3366, 32
  %v4292 = vpop.permute.xlu0 %4291
  %4293 = vrot.lane.b32.xlu0 %v3368, 32
  %v4294 = vpop.permute.xlu0 %4293
  %4295 = vrot.lane.b32.xlu0 %v3371, 32
  %v4296 = vpop.permute.xlu0 %4295
  %4297 = vrot.lane.b32.xlu0 %v3373, 32
  %v4298 = vpop.permute.xlu0 %4297
  %4299 = vrot.lane.b32.xlu0 %v3376, 32
  %v4300 = vpop.permute.xlu0 %4299
  %4301 = vrot.lane.b32.xlu0 %v3378, 32
  %v4302 = vpop.permute.xlu0 %4301
  %4303 = vrot.lane.b32.xlu0 %v3381, 32
  %v4304 = vpop.permute.xlu0 %4303
  %4305 = vrot.lane.b32.xlu0 %v3383, 32
  %v4306 = vpop.permute.xlu0 %4305
  %4307 = vrot.lane.b32.xlu0 %v3386, 32
  %v4308 = vpop.permute.xlu0 %4307
  %4309 = vrot.lane.b32.xlu0 %v3388, 32
  %v4310 = vpop.permute.xlu0 %4309
  %4311 = vrot.lane.b32.xlu0 %v3391, 32
  %v4312 = vpop.permute.xlu0 %4311
  %4313 = vrot.lane.b32.xlu0 %v3393, 32
  %v4314 = vpop.permute.xlu0 %4313
  %4315 = vrot.lane.b32.xlu0 %v3396, 32
  %v4316 = vpop.permute.xlu0 %4315
  %4317 = vrot.lane.b32.xlu0 %v3398, 32
  %v4318 = vpop.permute.xlu0 %4317
  %4319 = vrot.lane.b32.xlu0 %v3401, 32
  %v4320 = vpop.permute.xlu0 %4319
  %4321 = vrot.lane.b32.xlu0 %v3403, 32
  %v4322 = vpop.permute.xlu0 %4321
  %4323 = vrot.lane.b32.xlu0 %v3406, 32
  %v4324 = vpop.permute.xlu0 %4323
  %4325 = vrot.lane.b32.xlu0 %v3408, 32
  %v4326 = vpop.permute.xlu0 %4325
  %v4389 = vadd.f32 %v4139, %v4204
  %v4390 = vadd.f32 %v4140, %v4206
  %v4391 = vadd.f32 %v4141, %v4208
  %v4392 = vadd.f32 %v4142, %v4210
  %v4393 = vadd.f32 %v4143, %v4212
  %v4394 = vadd.f32 %v4144, %v4214
  %v4395 = vadd.f32 %v4145, %v4216
  %v4396 = vadd.f32 %v4146, %v4218
  %v4397 = vadd.f32 %v4147, %v4220
  %v4398 = vadd.f32 %v4148, %v4222
  %v4399 = vadd.f32 %v4149, %v4224
  %v4400 = vadd.f32 %v4150, %v4226
  %v4401 = vadd.f32 %v4151, %v4228
  %v4402 = vadd.f32 %v4152, %v4230
  %v4403 = vadd.f32 %v4153, %v4232
  %v4404 = vadd.f32 %v4154, %v4234
  %v4405 = vadd.f32 %v4155, %v4236
  %v4406 = vadd.f32 %v4156, %v4238
  %v4407 = vadd.f32 %v4157, %v4240
  %v4408 = vadd.f32 %v4158, %v4242
  %v4409 = vadd.f32 %v4159, %v4244
  %v4410 = vadd.f32 %v4160, %v4246
  %v4411 = vadd.f32 %v4161, %v4248
  %v4412 = vadd.f32 %v4162, %v4250
  %v4413 = vadd.f32 %v4163, %v4252
  %v4414 = vadd.f32 %v4164, %v4254
  %v4415 = vadd.f32 %v4165, %v4256
  %v4416 = vadd.f32 %v4166, %v4258
  %v4417 = vadd.f32 %v4167, %v4260
  %v4418 = vadd.f32 %v4168, %v4262
  %v4419 = vadd.f32 %v4169, %v4264
  %v4420 = vadd.f32 %v4170, %v4266
  %v4421 = vadd.f32 %v4171, %v4268
  %v4422 = vadd.f32 %v4172, %v4270
  %v4423 = vadd.f32 %v4173, %v4272
  %v4424 = vadd.f32 %v4174, %v4274
  %v4425 = vadd.f32 %v4175, %v4276
  %v4426 = vadd.f32 %v4176, %v4278
  %v4427 = vadd.f32 %v4177, %v4280
  %v4428 = vadd.f32 %v4178, %v4282
  %v4429 = vadd.f32 %v4179, %v4284
  %v4430 = vadd.f32 %v4180, %v4286
  %v4431 = vadd.f32 %v4181, %v4288
  %v4432 = vadd.f32 %v4182, %v4290
  %v4433 = vadd.f32 %v4183, %v4292
  %v4434 = vadd.f32 %v4184, %v4294
  %v4435 = vadd.f32 %v4185, %v4296
  %v4436 = vadd.f32 %v4186, %v4298
  %v4437 = vadd.f32 %v4187, %v4300
  %v4438 = vadd.f32 %v4188, %v4302
  %v4439 = vadd.f32 %v4189, %v4304
  %v4440 = vadd.f32 %v4190, %v4306
  %v4441 = vadd.f32 %v4191, %v4308
  %v4442 = vadd.f32 %v4192, %v4310
  %v4443 = vadd.f32 %v4193, %v4312
  %v4444 = vadd.f32 %v4194, %v4314
  %v4445 = vadd.f32 %v4195, %v4316
  %v4446 = vadd.f32 %v4196, %v4318
  %v4447 = vadd.f32 %v4197, %v4320
  %v4448 = vadd.f32 %v4198, %v4322
  %v4449 = vadd.f32 %v4199, %v4324
  %v4450 = vadd.f32 %v4200, %v4326
  %v4451 = vadd.f32 %v4201, %v4264
  %v4452 = vadd.f32 %v4202, %v4266
  %v4513 = vrot.slane %v1874, 2
  %v4514 = vrot.slane %v1383, 2
  %v4515 = vsel %vm2523, %v4513, %v4514
  %v4516 = vrot.slane %v1969, 2
  %v4517 = vsel %vm2523, %v4514, %v4516
  %v4518 = vrot.slane %v1877, 2
  %v4519 = vrot.slane %v1392, 2
  %v4520 = vsel %vm2523, %v4518, %v4519
  %v4521 = vrot.slane %v1972, 2
  %v4522 = vsel %vm2523, %v4519, %v4521
  %v4523 = vrot.slane %v1880, 2
  %v4524 = vrot.slane %v1401, 2
  %v4525 = vsel %vm2523, %v4523, %v4524
  %v4526 = vrot.slane %v1975, 2
  %v4527 = vsel %vm2523, %v4524, %v4526
  %v4528 = vrot.slane %v1883, 2
  %v4529 = vrot.slane %v1410, 2
  %v4530 = vsel %vm2523, %v4528, %v4529
  %v4531 = vrot.slane %v1978, 2
  %v4532 = vsel %vm2523, %v4529, %v4531
  %v4533 = vrot.slane %v1886, 2
  %v4534 = vrot.slane %v1419, 2
  %v4535 = vsel %vm2523, %v4533, %v4534
  %v4536 = vrot.slane %v1981, 2
  %v4537 = vsel %vm2523, %v4534, %v4536
  %v4538 = vrot.slane %v1889, 2
  %v4539 = vrot.slane %v1428, 2
  %v4540 = vsel %vm2523, %v4538, %v4539
  %v4541 = vrot.slane %v1984, 2
  %v4542 = vsel %vm2523, %v4539, %v4541
  %v4543 = vrot.slane %v1892, 2
  %v4544 = vrot.slane %v1437, 2
  %v4545 = vsel %vm2523, %v4543, %v4544
  %v4546 = vrot.slane %v1987, 2
  %v4547 = vsel %vm2523, %v4544, %v4546
  %v4548 = vrot.slane %v1895, 2
  %v4549 = vrot.slane %v1446, 2
  %v4550 = vsel %vm2523, %v4548, %v4549
  %v4551 = vrot.slane %v1990, 2
  %v4552 = vsel %vm2523, %v4549, %v4551
  %v4553 = vrot.slane %v1898, 2
  %v4554 = vrot.slane %v1455, 2
  %v4555 = vsel %vm2523, %v4553, %v4554
  %v4556 = vrot.slane %v1993, 2
  %v4557 = vsel %vm2523, %v4554, %v4556
  %v4558 = vrot.slane %v1901, 2
  %v4559 = vrot.slane %v1464, 2
  %v4560 = vsel %vm2523, %v4558, %v4559
  %v4561 = vrot.slane %v1996, 2
  %v4562 = vsel %vm2523, %v4559, %v4561
  %v4563 = vrot.slane %v1904, 2
  %v4564 = vrot.slane %v1473, 2
  %v4565 = vsel %vm2523, %v4563, %v4564
  %v4566 = vrot.slane %v1999, 2
  %v4567 = vsel %vm2523, %v4564, %v4566
  %v4568 = vrot.slane %v1907, 2
  %v4569 = vrot.slane %v1482, 2
  %v4570 = vsel %vm2523, %v4568, %v4569
  %v4571 = vrot.slane %v2002, 2
  %v4572 = vsel %vm2523, %v4569, %v4571
  %v4573 = vrot.slane %v1910, 2
  %v4574 = vrot.slane %v1491, 2
  %v4575 = vsel %vm2523, %v4573, %v4574
  %v4576 = vrot.slane %v2005, 2
  %v4577 = vsel %vm2523, %v4574, %v4576
  %v4578 = vrot.slane %v1913, 2
  %v4579 = vrot.slane %v1500, 2
  %v4580 = vsel %vm2523, %v4578, %v4579
  %v4581 = vrot.slane %v2008, 2
  %v4582 = vsel %vm2523, %v4579, %v4581
  %v4583 = vrot.slane %v1916, 2
  %v4584 = vrot.slane %v1509, 2
  %v4585 = vsel %vm2523, %v4583, %v4584
  %v4586 = vrot.slane %v2010, 2
  %v4587 = vsel %vm2523, %v4584, %v4586
  %v4588 = vrot.slane %v1921, 2
  %v4589 = vrot.slane %v1524, 2
  %v4590 = vsel %vm2523, %v4588, %v4589
  %v4591 = vrot.slane %v2015, 2
  %v4592 = vsel %vm2523, %v4589, %v4591
  %v4593 = vrot.slane %v1924, 2
  %v4594 = vrot.slane %v1533, 2
  %v4595 = vsel %vm2523, %v4593, %v4594
  %v4596 = vrot.slane %v2018, 2
  %v4597 = vsel %vm2523, %v4594, %v4596
  %v4598 = vrot.slane %v1927, 2
  %v4599 = vrot.slane %v1542, 2
  %v4600 = vsel %vm2523, %v4598, %v4599
  %v4601 = vrot.slane %v2021, 2
  %v4602 = vsel %vm2523, %v4599, %v4601
  %v4603 = vrot.slane %v1930, 2
  %v4604 = vrot.slane %v1551, 2
  %v4605 = vsel %vm2523, %v4603, %v4604
  %v4606 = vrot.slane %v2024, 2
  %v4607 = vsel %vm2523, %v4604, %v4606
  %v4608 = vrot.slane %v1933, 2
  %v4609 = vrot.slane %v1560, 2
  %v4610 = vsel %vm2523, %v4608, %v4609
  %v4611 = vrot.slane %v2027, 2
  %v4612 = vsel %vm2523, %v4609, %v4611
  %v4613 = vrot.slane %v1936, 2
  %v4614 = vrot.slane %v1569, 2
  %v4615 = vsel %vm2523, %v4613, %v4614
  %v4616 = vrot.slane %v2030, 2
  %v4617 = vsel %vm2523, %v4614, %v4616
  %v4618 = vrot.slane %v1939, 2
  %v4619 = vrot.slane %v1578, 2
  %v4620 = vsel %vm2523, %v4618, %v4619
  %v4621 = vrot.slane %v2033, 2
  %v4622 = vsel %vm2523, %v4619, %v4621
  %v4623 = vrot.slane %v1942, 2
  %v4624 = vrot.slane %v1587, 2
  %v4625 = vsel %vm2523, %v4623, %v4624
  %v4626 = vrot.slane %v2036, 2
  %v4627 = vsel %vm2523, %v4624, %v4626
  %v4628 = vrot.slane %v1945, 2
  %v4629 = vrot.slane %v1596, 2
  %v4630 = vsel %vm2523, %v4628, %v4629
  %v4631 = vrot.slane %v2039, 2
  %v4632 = vsel %vm2523, %v4629, %v4631
  %v4633 = vrot.slane %v1948, 2
  %v4634 = vrot.slane %v1605, 2
  %v4635 = vsel %vm2523, %v4633, %v4634
  %v4636 = vrot.slane %v2042, 2
  %v4637 = vsel %vm2523, %v4634, %v4636
  %v4638 = vrot.slane %v1951, 2
  %v4639 = vrot.slane %v1614, 2
  %v4640 = vsel %vm2523, %v4638, %v4639
  %v4641 = vrot.slane %v2045, 2
  %v4642 = vsel %vm2523, %v4639, %v4641
  %v4643 = vrot.slane %v1954, 2
  %v4644 = vrot.slane %v1623, 2
  %v4645 = vsel %vm2523, %v4643, %v4644
  %v4646 = vrot.slane %v2048, 2
  %v4647 = vsel %vm2523, %v4644, %v4646
  %v4648 = vrot.slane %v1957, 2
  %v4649 = vrot.slane %v1632, 2
  %v4650 = vsel %vm2523, %v4648, %v4649
  %v4651 = vrot.slane %v2051, 2
  %v4652 = vsel %vm2523, %v4649, %v4651
  %v4653 = vrot.slane %v1960, 2
  %v4654 = vrot.slane %v1641, 2
  %v4655 = vsel %vm2523, %v4653, %v4654
  %v4656 = vrot.slane %v2054, 2
  %v4657 = vsel %vm2523, %v4654, %v4656
  %v4658 = vrot.slane %v1963, 2
  %v4659 = vrot.slane %v1650, 2
  %v4660 = vsel %vm2523, %v4658, %v4659
  %v4661 = vrot.slane %v2056, 2
  %v4662 = vsel %vm2523, %v4659, %v4661
  %v4725 = vadd.f32 %v4389, %v4515
  %v4726 = vadd.f32 %v4390, %v4517
  %v4727 = vadd.f32 %v4391, %v4520
  %v4728 = vadd.f32 %v4392, %v4522
  %v4729 = vadd.f32 %v4393, %v4525
  %v4730 = vadd.f32 %v4394, %v4527
  %v4731 = vadd.f32 %v4395, %v4530
  %v4732 = vadd.f32 %v4396, %v4532
  %v4733 = vadd.f32 %v4397, %v4535
  %v4734 = vadd.f32 %v4398, %v4537
  %v4735 = vadd.f32 %v4399, %v4540
  %v4736 = vadd.f32 %v4400, %v4542
  %v4737 = vadd.f32 %v4401, %v4545
  %v4738 = vadd.f32 %v4402, %v4547
  %v4739 = vadd.f32 %v4403, %v4550
  %v4740 = vadd.f32 %v4404, %v4552
  %v4741 = vadd.f32 %v4405, %v4555
  %v4742 = vadd.f32 %v4406, %v4557
  %v4743 = vadd.f32 %v4407, %v4560
  %v4744 = vadd.f32 %v4408, %v4562
  %v4745 = vadd.f32 %v4409, %v4565
  %v4746 = vadd.f32 %v4410, %v4567
  %v4747 = vadd.f32 %v4411, %v4570
  %v4748 = vadd.f32 %v4412, %v4572
  %v4749 = vadd.f32 %v4413, %v4575
  %v4750 = vadd.f32 %v4414, %v4577
  %v4751 = vadd.f32 %v4415, %v4580
  %v4752 = vadd.f32 %v4416, %v4582
  %v4753 = vadd.f32 %v4417, %v4585
  %v4754 = vadd.f32 %v4418, %v4587
  %v4755 = vadd.f32 %v4419, %v2526
  %v4756 = vadd.f32 %v4420, %v2528
  %v4757 = vadd.f32 %v4421, %v4590
  %v4758 = vadd.f32 %v4422, %v4592
  %v4759 = vadd.f32 %v4423, %v4595
  %v4760 = vadd.f32 %v4424, %v4597
  %v4761 = vadd.f32 %v4425, %v4600
  %v4762 = vadd.f32 %v4426, %v4602
  %v4763 = vadd.f32 %v4427, %v4605
  %v4764 = vadd.f32 %v4428, %v4607
  %v4765 = vadd.f32 %v4429, %v4610
  %v4766 = vadd.f32 %v4430, %v4612
  %v4767 = vadd.f32 %v4431, %v4615
  %v4768 = vadd.f32 %v4432, %v4617
  %v4769 = vadd.f32 %v4433, %v4620
  %v4770 = vadd.f32 %v4434, %v4622
  %v4771 = vadd.f32 %v4435, %v4625
  %v4772 = vadd.f32 %v4436, %v4627
  %v4773 = vadd.f32 %v4437, %v4630
  %v4774 = vadd.f32 %v4438, %v4632
  %v4775 = vadd.f32 %v4439, %v4635
  %v4776 = vadd.f32 %v4440, %v4637
  %v4777 = vadd.f32 %v4441, %v4640
  %v4778 = vadd.f32 %v4442, %v4642
  %v4779 = vadd.f32 %v4443, %v4645
  %v4780 = vadd.f32 %v4444, %v4647
  %v4781 = vadd.f32 %v4445, %v4650
  %v4782 = vadd.f32 %v4446, %v4652
  %v4783 = vadd.f32 %v4447, %v4655
  %v4784 = vadd.f32 %v4448, %v4657
  %v4785 = vadd.f32 %v4449, %v4660
  %v4786 = vadd.f32 %v4450, %v4662
  %v4787 = vadd.f32 %v4451, %v2526
  %v4788 = vadd.f32 %v4452, %v2528
  %vm4789 = vcmask 261120
  %v4790 = vsel %vm4789, %v4725, 0.0
  %v4791 = vsel %vm4789, %v4726, 0.0
  %v4792 = vadd.f32 %v4790, %v4791
  %v4793 = vsel %vm4789, %v4727, 0.0
  %v4794 = vadd.f32 %v4792, %v4793
  %v4795 = vsel %vm4789, %v4728, 0.0
  %v4796 = vadd.f32 %v4794, %v4795
  %v4797 = vsel %vm4789, %v4729, 0.0
  %v4798 = vadd.f32 %v4796, %v4797
  %v4799 = vsel %vm4789, %v4730, 0.0
  %v4800 = vadd.f32 %v4798, %v4799
  %v4801 = vsel %vm4789, %v4731, 0.0
  %v4802 = vadd.f32 %v4800, %v4801
  %v4803 = vsel %vm4789, %v4732, 0.0
  %v4804 = vadd.f32 %v4802, %v4803
  %v4805 = vsel %vm4789, %v4733, 0.0
  %v4806 = vadd.f32 %v4804, %v4805
  %v4807 = vsel %vm4789, %v4734, 0.0
  %v4808 = vadd.f32 %v4806, %v4807
  %v4809 = vsel %vm4789, %v4735, 0.0
  %v4810 = vadd.f32 %v4808, %v4809
  %v4811 = vsel %vm4789, %v4736, 0.0
  %v4812 = vadd.f32 %v4810, %v4811
  %v4813 = vsel %vm4789, %v4737, 0.0
  %v4814 = vadd.f32 %v4812, %v4813
  %v4815 = vsel %vm4789, %v4738, 0.0
  %v4816 = vadd.f32 %v4814, %v4815
  %v4817 = vsel %vm4789, %v4739, 0.0
  %v4818 = vadd.f32 %v4816, %v4817
  %v4819 = vsel %vm4789, %v4740, 0.0
  %v4820 = vadd.f32 %v4818, %v4819
  %v4821 = vsel %vm4789, %v4741, 0.0
  %v4822 = vadd.f32 %v4820, %v4821
  %v4823 = vsel %vm4789, %v4742, 0.0
  %v4824 = vadd.f32 %v4822, %v4823
  %v4825 = vsel %vm4789, %v4743, 0.0
  %v4826 = vadd.f32 %v4824, %v4825
  %v4827 = vsel %vm4789, %v4744, 0.0
  %v4828 = vadd.f32 %v4826, %v4827
  %v4829 = vsel %vm4789, %v4745, 0.0
  %v4830 = vadd.f32 %v4828, %v4829
  %v4831 = vsel %vm4789, %v4746, 0.0
  %v4832 = vadd.f32 %v4830, %v4831
  %v4833 = vsel %vm4789, %v4747, 0.0
  %v4834 = vadd.f32 %v4832, %v4833
  %v4835 = vsel %vm4789, %v4748, 0.0
  %v4836 = vadd.f32 %v4834, %v4835
  %v4837 = vsel %vm4789, %v4749, 0.0
  %v4838 = vadd.f32 %v4836, %v4837
  %v4839 = vsel %vm4789, %v4750, 0.0
  %v4840 = vadd.f32 %v4838, %v4839
  %v4841 = vsel %vm4789, %v4751, 0.0
  %v4842 = vadd.f32 %v4840, %v4841
  %v4843 = vsel %vm4789, %v4752, 0.0
  %v4844 = vadd.f32 %v4842, %v4843
  %v4845 = vsel %vm4789, %v4753, 0.0
  %v4846 = vadd.f32 %v4844, %v4845
  %v4847 = vsel %vm4789, %v4754, 0.0
  %v4848 = vadd.f32 %v4846, %v4847
  %v4849 = vsel %vm4789, %v4755, 0.0
  %v4850 = vadd.f32 %v4848, %v4849
  %v4851 = vsel %vm4789, %v4756, 0.0
  %v4852 = vadd.f32 %v4850, %v4851
  %v4853 = vsel %vm4789, %v4757, 0.0
  %v4854 = vadd.f32 %v4852, %v4853
  %v4855 = vsel %vm4789, %v4758, 0.0
  %v4856 = vadd.f32 %v4854, %v4855
  %v4857 = vsel %vm4789, %v4759, 0.0
  %v4858 = vadd.f32 %v4856, %v4857
  %v4859 = vsel %vm4789, %v4760, 0.0
  %v4860 = vadd.f32 %v4858, %v4859
  %v4861 = vsel %vm4789, %v4761, 0.0
  %v4862 = vadd.f32 %v4860, %v4861
  %v4863 = vsel %vm4789, %v4762, 0.0
  %v4864 = vadd.f32 %v4862, %v4863
  %v4865 = vsel %vm4789, %v4763, 0.0
  %v4866 = vadd.f32 %v4864, %v4865
  %v4867 = vsel %vm4789, %v4764, 0.0
  %v4868 = vadd.f32 %v4866, %v4867
  %v4869 = vsel %vm4789, %v4765, 0.0
  %v4870 = vadd.f32 %v4868, %v4869
  %v4871 = vsel %vm4789, %v4766, 0.0
  %v4872 = vadd.f32 %v4870, %v4871
  %v4873 = vsel %vm4789, %v4767, 0.0
  %v4874 = vadd.f32 %v4872, %v4873
  %v4875 = vsel %vm4789, %v4768, 0.0
  %v4876 = vadd.f32 %v4874, %v4875
  %v4877 = vsel %vm4789, %v4769, 0.0
  %v4878 = vadd.f32 %v4876, %v4877
  %v4879 = vsel %vm4789, %v4770, 0.0
  %v4880 = vadd.f32 %v4878, %v4879
  %v4881 = vsel %vm4789, %v4771, 0.0
  %v4882 = vadd.f32 %v4880, %v4881
  %v4883 = vsel %vm4789, %v4772, 0.0
  %v4884 = vadd.f32 %v4882, %v4883
  %v4885 = vsel %vm4789, %v4773, 0.0
  %v4886 = vadd.f32 %v4884, %v4885
  %v4887 = vsel %vm4789, %v4774, 0.0
  %v4888 = vadd.f32 %v4886, %v4887
  %v4889 = vsel %vm4789, %v4775, 0.0
  %v4890 = vadd.f32 %v4888, %v4889
  %v4891 = vsel %vm4789, %v4776, 0.0
  %v4892 = vadd.f32 %v4890, %v4891
  %v4893 = vsel %vm4789, %v4777, 0.0
  %v4894 = vadd.f32 %v4892, %v4893
  %v4895 = vsel %vm4789, %v4778, 0.0
  %v4896 = vadd.f32 %v4894, %v4895
  %v4897 = vsel %vm4789, %v4779, 0.0
  %v4898 = vadd.f32 %v4896, %v4897
  %v4899 = vsel %vm4789, %v4780, 0.0
  %v4900 = vadd.f32 %v4898, %v4899
  %v4901 = vsel %vm4789, %v4781, 0.0
  %v4902 = vadd.f32 %v4900, %v4901
  %v4903 = vsel %vm4789, %v4782, 0.0
  %v4904 = vadd.f32 %v4902, %v4903
  %v4905 = vsel %vm4789, %v4783, 0.0
  %v4906 = vadd.f32 %v4904, %v4905
  %v4907 = vsel %vm4789, %v4784, 0.0
  %v4908 = vadd.f32 %v4906, %v4907
  %v4909 = vsel %vm4789, %v4785, 0.0
  %v4910 = vadd.f32 %v4908, %v4909
  %v4911 = vsel %vm4789, %v4786, 0.0
  %v4912 = vadd.f32 %v4910, %v4911
  %v4913 = vsel %vm4789, %v4787, 0.0
  %v4914 = vadd.f32 %v4912, %v4913
  %v4915 = vsel %vm4789, %v4788, 0.0
  %v4916 = vadd.f32 %v4914, %v4915
  %v4917 = vrot.slane %v4916, 4
  %v4918 = vadd.f32 %v4916, %v4917
  %v4919 = vrot.slane %v4918, 2
  %v4920 = vadd.f32 %v4918, %v4919
  %v4921 = vrot.slane %v4920, 1
  %v4922 = vadd.f32 %v4920, %v4921
  %v4923 = vrcp.pop 512.0
  %v4924 = vmul.f32 %v4922, %v4923
  %v4925 = vsub.f32 %v4725, %v4924
  %v4926 = vsub.f32 %v4726, %v4924
  %v4927 = vsub.f32 %v4727, %v4924
  %v4928 = vsub.f32 %v4728, %v4924
  %v4929 = vsub.f32 %v4729, %v4924
  %v4930 = vsub.f32 %v4730, %v4924
  %v4931 = vsub.f32 %v4731, %v4924
  %v4932 = vsub.f32 %v4732, %v4924
  %v4933 = vsub.f32 %v4733, %v4924
  %v4934 = vsub.f32 %v4734, %v4924
  %v4935 = vsub.f32 %v4735, %v4924
  %v4936 = vsub.f32 %v4736, %v4924
  %v4937 = vsub.f32 %v4737, %v4924
  %v4938 = vsub.f32 %v4738, %v4924
  %v4939 = vsub.f32 %v4739, %v4924
  %v4940 = vsub.f32 %v4740, %v4924
  %v4941 = vsub.f32 %v4741, %v4924
  %v4942 = vsub.f32 %v4742, %v4924
  %v4943 = vsub.f32 %v4743, %v4924
  %v4944 = vsub.f32 %v4744, %v4924
  %v4945 = vsub.f32 %v4745, %v4924
  %v4946 = vsub.f32 %v4746, %v4924
  %v4947 = vsub.f32 %v4747, %v4924
  %v4948 = vsub.f32 %v4748, %v4924
  %v4949 = vsub.f32 %v4749, %v4924
  %v4950 = vsub.f32 %v4750, %v4924
  %v4951 = vsub.f32 %v4751, %v4924
  %v4952 = vsub.f32 %v4752, %v4924
  %v4953 = vsub.f32 %v4753, %v4924
  %v4954 = vsub.f32 %v4754, %v4924
  %v4955 = vsub.f32 %v4755, %v4924
  %v4956 = vsub.f32 %v4756, %v4924
  %v4957 = vsub.f32 %v4757, %v4924
  %v4958 = vsub.f32 %v4758, %v4924
  %v4959 = vsub.f32 %v4759, %v4924
  %v4960 = vsub.f32 %v4760, %v4924
  %v4961 = vsub.f32 %v4761, %v4924
  %v4962 = vsub.f32 %v4762, %v4924
  %v4963 = vsub.f32 %v4763, %v4924
  %v4964 = vsub.f32 %v4764, %v4924
  %v4965 = vsub.f32 %v4765, %v4924
  %v4966 = vsub.f32 %v4766, %v4924
  %v4967 = vsub.f32 %v4767, %v4924
  %v4968 = vsub.f32 %v4768, %v4924
  %v4969 = vsub.f32 %v4769, %v4924
  %v4970 = vsub.f32 %v4770, %v4924
  %v4971 = vsub.f32 %v4771, %v4924
  %v4972 = vsub.f32 %v4772, %v4924
  %v4973 = vsub.f32 %v4773, %v4924
  %v4974 = vsub.f32 %v4774, %v4924
  %v4975 = vsub.f32 %v4775, %v4924
  %v4976 = vsub.f32 %v4776, %v4924
  %v4977 = vsub.f32 %v4777, %v4924
  %v4978 = vsub.f32 %v4778, %v4924
  %v4979 = vsub.f32 %v4779, %v4924
  %v4980 = vsub.f32 %v4780, %v4924
  %v4981 = vsub.f32 %v4781, %v4924
  %v4982 = vsub.f32 %v4782, %v4924
  %v4983 = vsub.f32 %v4783, %v4924
  %v4984 = vsub.f32 %v4784, %v4924
  %v4985 = vsub.f32 %v4785, %v4924
  %v4986 = vsub.f32 %v4786, %v4924
  %v4987 = vsub.f32 %v4787, %v4924
  %v4988 = vsub.f32 %v4788, %v4924
  %v4989 = vmul.f32 %v4925, %v4925
  %v4990 = vmul.f32 %v4926, %v4926
  %v4991 = vmul.f32 %v4927, %v4927
  %v4992 = vmul.f32 %v4928, %v4928
  %v4993 = vmul.f32 %v4929, %v4929
  %v4994 = vmul.f32 %v4930, %v4930
  %v4995 = vmul.f32 %v4931, %v4931
  %v4996 = vmul.f32 %v4932, %v4932
  %v4997 = vmul.f32 %v4933, %v4933
  %v4998 = vmul.f32 %v4934, %v4934
  %v4999 = vmul.f32 %v4935, %v4935
  %v5000 = vmul.f32 %v4936, %v4936
  %v5001 = vmul.f32 %v4937, %v4937
  %v5002 = vmul.f32 %v4938, %v4938
  %v5003 = vmul.f32 %v4939, %v4939
  %v5004 = vmul.f32 %v4940, %v4940
  %v5005 = vmul.f32 %v4941, %v4941
  %v5006 = vmul.f32 %v4942, %v4942
  %v5007 = vmul.f32 %v4943, %v4943
  %v5008 = vmul.f32 %v4944, %v4944
  %v5009 = vmul.f32 %v4945, %v4945
  %v5010 = vmul.f32 %v4946, %v4946
  %v5011 = vmul.f32 %v4947, %v4947
  %v5012 = vmul.f32 %v4948, %v4948
  %v5013 = vmul.f32 %v4949, %v4949
  %v5014 = vmul.f32 %v4950, %v4950
  %v5015 = vmul.f32 %v4951, %v4951
  %v5016 = vmul.f32 %v4952, %v4952
  %v5017 = vmul.f32 %v4953, %v4953
  %v5018 = vmul.f32 %v4954, %v4954
  %v5019 = vmul.f32 %v4955, %v4955
  %v5020 = vmul.f32 %v4956, %v4956
  %v5021 = vmul.f32 %v4957, %v4957
  %v5022 = vmul.f32 %v4958, %v4958
  %v5023 = vmul.f32 %v4959, %v4959
  %v5024 = vmul.f32 %v4960, %v4960
  %v5025 = vmul.f32 %v4961, %v4961
  %v5026 = vmul.f32 %v4962, %v4962
  %v5027 = vmul.f32 %v4963, %v4963
  %v5028 = vmul.f32 %v4964, %v4964
  %v5029 = vmul.f32 %v4965, %v4965
  %v5030 = vmul.f32 %v4966, %v4966
  %v5031 = vmul.f32 %v4967, %v4967
  %v5032 = vmul.f32 %v4968, %v4968
  %v5033 = vmul.f32 %v4969, %v4969
  %v5034 = vmul.f32 %v4970, %v4970
  %v5035 = vmul.f32 %v4971, %v4971
  %v5036 = vmul.f32 %v4972, %v4972
  %v5037 = vmul.f32 %v4973, %v4973
  %v5038 = vmul.f32 %v4974, %v4974
  %v5039 = vmul.f32 %v4975, %v4975
  %v5040 = vmul.f32 %v4976, %v4976
  %v5041 = vmul.f32 %v4977, %v4977
  %v5042 = vmul.f32 %v4978, %v4978
  %v5043 = vmul.f32 %v4979, %v4979
  %v5044 = vmul.f32 %v4980, %v4980
  %v5045 = vmul.f32 %v4981, %v4981
  %v5046 = vmul.f32 %v4982, %v4982
  %v5047 = vmul.f32 %v4983, %v4983
  %v5048 = vmul.f32 %v4984, %v4984
  %v5049 = vmul.f32 %v4985, %v4985
  %v5050 = vmul.f32 %v4986, %v4986
  %v5051 = vmul.f32 %v4987, %v4987
  %v5052 = vmul.f32 %v4988, %v4988
  %v5053 = vsel %vm4789, %v4989, 0.0
  %v5054 = vsel %vm4789, %v4990, 0.0
  %v5055 = vadd.f32 %v5053, %v5054
  %v5056 = vsel %vm4789, %v4991, 0.0
  %v5057 = vadd.f32 %v5055, %v5056
  %v5058 = vsel %vm4789, %v4992, 0.0
  %v5059 = vadd.f32 %v5057, %v5058
  %v5060 = vsel %vm4789, %v4993, 0.0
  %v5061 = vadd.f32 %v5059, %v5060
  %v5062 = vsel %vm4789, %v4994, 0.0
  %v5063 = vadd.f32 %v5061, %v5062
  %v5064 = vsel %vm4789, %v4995, 0.0
  %v5065 = vadd.f32 %v5063, %v5064
  %v5066 = vsel %vm4789, %v4996, 0.0
  %v5067 = vadd.f32 %v5065, %v5066
  %v5068 = vsel %vm4789, %v4997, 0.0
  %v5069 = vadd.f32 %v5067, %v5068
  %v5070 = vsel %vm4789, %v4998, 0.0
  %v5071 = vadd.f32 %v5069, %v5070
  %v5072 = vsel %vm4789, %v4999, 0.0
  %v5073 = vadd.f32 %v5071, %v5072
  %v5074 = vsel %vm4789, %v5000, 0.0
  %v5075 = vadd.f32 %v5073, %v5074
  %v5076 = vsel %vm4789, %v5001, 0.0
  %v5077 = vadd.f32 %v5075, %v5076
  %v5078 = vsel %vm4789, %v5002, 0.0
  %v5079 = vadd.f32 %v5077, %v5078
  %v5080 = vsel %vm4789, %v5003, 0.0
  %v5081 = vadd.f32 %v5079, %v5080
  %v5082 = vsel %vm4789, %v5004, 0.0
  %v5083 = vadd.f32 %v5081, %v5082
  %v5084 = vsel %vm4789, %v5005, 0.0
  %v5085 = vadd.f32 %v5083, %v5084
  %v5086 = vsel %vm4789, %v5006, 0.0
  %v5087 = vadd.f32 %v5085, %v5086
  %v5088 = vsel %vm4789, %v5007, 0.0
  %v5089 = vadd.f32 %v5087, %v5088
  %v5090 = vsel %vm4789, %v5008, 0.0
  %v5091 = vadd.f32 %v5089, %v5090
  %v5092 = vsel %vm4789, %v5009, 0.0
  %v5093 = vadd.f32 %v5091, %v5092
  %v5094 = vsel %vm4789, %v5010, 0.0
  %v5095 = vadd.f32 %v5093, %v5094
  %v5096 = vsel %vm4789, %v5011, 0.0
  %v5097 = vadd.f32 %v5095, %v5096
  %v5098 = vsel %vm4789, %v5012, 0.0
  %v5099 = vadd.f32 %v5097, %v5098
  %v5100 = vsel %vm4789, %v5013, 0.0
  %v5101 = vadd.f32 %v5099, %v5100
  %v5102 = vsel %vm4789, %v5014, 0.0
  %v5103 = vadd.f32 %v5101, %v5102
  %v5104 = vsel %vm4789, %v5015, 0.0
  %v5105 = vadd.f32 %v5103, %v5104
  %v5106 = vsel %vm4789, %v5016, 0.0
  %v5107 = vadd.f32 %v5105, %v5106
  %v5108 = vsel %vm4789, %v5017, 0.0
  %v5109 = vadd.f32 %v5107, %v5108
  %v5110 = vsel %vm4789, %v5018, 0.0
  %v5111 = vadd.f32 %v5109, %v5110
  %v5112 = vsel %vm4789, %v5019, 0.0
  %v5113 = vadd.f32 %v5111, %v5112
  %v5114 = vsel %vm4789, %v5020, 0.0
  %v5115 = vadd.f32 %v5113, %v5114
  %v5116 = vsel %vm4789, %v5021, 0.0
  %v5117 = vadd.f32 %v5115, %v5116
  %v5118 = vsel %vm4789, %v5022, 0.0
  %v5119 = vadd.f32 %v5117, %v5118
  %v5120 = vsel %vm4789, %v5023, 0.0
  %v5121 = vadd.f32 %v5119, %v5120
  %v5122 = vsel %vm4789, %v5024, 0.0
  %v5123 = vadd.f32 %v5121, %v5122
  %v5124 = vsel %vm4789, %v5025, 0.0
  %v5125 = vadd.f32 %v5123, %v5124
  %v5126 = vsel %vm4789, %v5026, 0.0
  %v5127 = vadd.f32 %v5125, %v5126
  %v5128 = vsel %vm4789, %v5027, 0.0
  %v5129 = vadd.f32 %v5127, %v5128
  %v5130 = vsel %vm4789, %v5028, 0.0
  %v5131 = vadd.f32 %v5129, %v5130
  %v5132 = vsel %vm4789, %v5029, 0.0
  %v5133 = vadd.f32 %v5131, %v5132
  %v5134 = vsel %vm4789, %v5030, 0.0
  %v5135 = vadd.f32 %v5133, %v5134
  %v5136 = vsel %vm4789, %v5031, 0.0
  %v5137 = vadd.f32 %v5135, %v5136
  %v5138 = vsel %vm4789, %v5032, 0.0
  %v5139 = vadd.f32 %v5137, %v5138
  %v5140 = vsel %vm4789, %v5033, 0.0
  %v5141 = vadd.f32 %v5139, %v5140
  %v5142 = vsel %vm4789, %v5034, 0.0
  %v5143 = vadd.f32 %v5141, %v5142
  %v5144 = vsel %vm4789, %v5035, 0.0
  %v5145 = vadd.f32 %v5143, %v5144
  %v5146 = vsel %vm4789, %v5036, 0.0
  %v5147 = vadd.f32 %v5145, %v5146
  %v5148 = vsel %vm4789, %v5037, 0.0
  %v5149 = vadd.f32 %v5147, %v5148
  %v5150 = vsel %vm4789, %v5038, 0.0
  %v5151 = vadd.f32 %v5149, %v5150
  %v5152 = vsel %vm4789, %v5039, 0.0
  %v5153 = vadd.f32 %v5151, %v5152
  %v5154 = vsel %vm4789, %v5040, 0.0
  %v5155 = vadd.f32 %v5153, %v5154
  %v5156 = vsel %vm4789, %v5041, 0.0
  %v5157 = vadd.f32 %v5155, %v5156
  %v5158 = vsel %vm4789, %v5042, 0.0
  %v5159 = vadd.f32 %v5157, %v5158
  %v5160 = vsel %vm4789, %v5043, 0.0
  %v5161 = vadd.f32 %v5159, %v5160
  %v5162 = vsel %vm4789, %v5044, 0.0
  %v5163 = vadd.f32 %v5161, %v5162
  %v5164 = vsel %vm4789, %v5045, 0.0
  %v5165 = vadd.f32 %v5163, %v5164
  %v5166 = vsel %vm4789, %v5046, 0.0
  %v5167 = vadd.f32 %v5165, %v5166
  %v5168 = vsel %vm4789, %v5047, 0.0
  %v5169 = vadd.f32 %v5167, %v5168
  %v5170 = vsel %vm4789, %v5048, 0.0
  %v5171 = vadd.f32 %v5169, %v5170
  %v5172 = vsel %vm4789, %v5049, 0.0
  %v5173 = vadd.f32 %v5171, %v5172
  %v5174 = vsel %vm4789, %v5050, 0.0
  %v5175 = vadd.f32 %v5173, %v5174
  %v5176 = vsel %vm4789, %v5051, 0.0
  %v5177 = vadd.f32 %v5175, %v5176
  %v5178 = vsel %vm4789, %v5052, 0.0
  %v5179 = vadd.f32 %v5177, %v5178
  %v5180 = vrot.slane %v5179, 4
  %v5181 = vadd.f32 %v5179, %v5180
  %v5182 = vrot.slane %v5181, 2
  %v5183 = vadd.f32 %v5181, %v5182
  %v5184 = vrot.slane %v5183, 1
  %v5185 = vadd.f32 %v5183, %v5184
  %v5186 = vmul.f32 %v5185, %v4923
  %v5187 = vld [vmem:[%s2] sm:$0x1]
  %v5188 = vadd.f32 %v5186, 1e-05
  %v5189 = vrsqrt.pop %v5188
  %v5190 = vmul.f32 %v5187, %v5189
  %v5192 = vlaneseq
  %v5193 = vshrl.u32 %v5192, 7
  %v5194 = vsub.s32 0, %v5193
  %v5195 = vrot.slane %v5190, %v5194
  %v5197 = vmul.f32 %v4925, %v5195
  %v5198 = vmul.f32 %v4926, %v5195
  %v5199 = vmul.f32 %v4927, %v5195
  %v5200 = vmul.f32 %v4928, %v5195
  %v5201 = vmul.f32 %v4929, %v5195
  %v5202 = vmul.f32 %v4930, %v5195
  %v5203 = vmul.f32 %v4931, %v5195
  %v5204 = vmul.f32 %v4932, %v5195
  %v5205 = vmul.f32 %v4933, %v5195
  %v5206 = vmul.f32 %v4934, %v5195
  %v5207 = vmul.f32 %v4935, %v5195
  %v5208 = vmul.f32 %v4936, %v5195
  %v5209 = vmul.f32 %v4937, %v5195
  %v5210 = vmul.f32 %v4938, %v5195
  %v5211 = vmul.f32 %v4939, %v5195
  %v5212 = vmul.f32 %v4940, %v5195
  %v5213 = vmul.f32 %v4941, %v5195
  %v5214 = vmul.f32 %v4942, %v5195
  %v5215 = vmul.f32 %v4943, %v5195
  %v5216 = vmul.f32 %v4944, %v5195
  %v5217 = vmul.f32 %v4945, %v5195
  %v5218 = vmul.f32 %v4946, %v5195
  %v5219 = vmul.f32 %v4947, %v5195
  %v5220 = vmul.f32 %v4948, %v5195
  %v5221 = vmul.f32 %v4949, %v5195
  %v5222 = vmul.f32 %v4950, %v5195
  %v5223 = vmul.f32 %v4951, %v5195
  %v5224 = vmul.f32 %v4952, %v5195
  %v5225 = vmul.f32 %v4953, %v5195
  %v5226 = vmul.f32 %v4954, %v5195
  %v5227 = vmul.f32 %v4955, %v5195
  %v5228 = vmul.f32 %v4956, %v5195
  %v5229 = vmul.f32 %v4957, %v5195
  %v5230 = vmul.f32 %v4958, %v5195
  %v5231 = vmul.f32 %v4959, %v5195
  %v5232 = vmul.f32 %v4960, %v5195
  %v5233 = vmul.f32 %v4961, %v5195
  %v5234 = vmul.f32 %v4962, %v5195
  %v5235 = vmul.f32 %v4963, %v5195
  %v5236 = vmul.f32 %v4964, %v5195
  %v5237 = vmul.f32 %v4965, %v5195
  %v5238 = vmul.f32 %v4966, %v5195
  %v5239 = vmul.f32 %v4967, %v5195
  %v5240 = vmul.f32 %v4968, %v5195
  %v5241 = vmul.f32 %v4969, %v5195
  %v5242 = vmul.f32 %v4970, %v5195
  %v5243 = vmul.f32 %v4971, %v5195
  %v5244 = vmul.f32 %v4972, %v5195
  %v5245 = vmul.f32 %v4973, %v5195
  %v5246 = vmul.f32 %v4974, %v5195
  %v5247 = vmul.f32 %v4975, %v5195
  %v5248 = vmul.f32 %v4976, %v5195
  %v5249 = vmul.f32 %v4977, %v5195
  %v5250 = vmul.f32 %v4978, %v5195
  %v5251 = vmul.f32 %v4979, %v5195
  %v5252 = vmul.f32 %v4980, %v5195
  %v5253 = vmul.f32 %v4981, %v5195
  %v5254 = vmul.f32 %v4982, %v5195
  %v5255 = vmul.f32 %v4983, %v5195
  %v5256 = vmul.f32 %v4984, %v5195
  %v5257 = vmul.f32 %v4985, %v5195
  %v5258 = vmul.f32 %v4986, %v5195
  %v5259 = vmul.f32 %v4987, %v5195
  %v5260 = vmul.f32 %v4988, %v5195
  %v5261 = vld [vmem:[%s3] sm:$0x1]
  %v5263 = vlaneseq
  %v5264 = vshrl.u32 %v5263, 7
  %v5265 = vsub.s32 0, %v5264
  %v5266 = vrot.slane %v5261, %v5265
  %v5268 = vadd.f32 %v5197, %v5266
  %v5269 = vadd.f32 %v5198, %v5266
  %v5270 = vadd.f32 %v5199, %v5266
  %v5271 = vadd.f32 %v5200, %v5266
  %v5272 = vadd.f32 %v5201, %v5266
  %v5273 = vadd.f32 %v5202, %v5266
  %v5274 = vadd.f32 %v5203, %v5266
  %v5275 = vadd.f32 %v5204, %v5266
  %v5276 = vadd.f32 %v5205, %v5266
  %v5277 = vadd.f32 %v5206, %v5266
  %v5278 = vadd.f32 %v5207, %v5266
  %v5279 = vadd.f32 %v5208, %v5266
  %v5280 = vadd.f32 %v5209, %v5266
  %v5281 = vadd.f32 %v5210, %v5266
  %v5282 = vadd.f32 %v5211, %v5266
  %v5283 = vadd.f32 %v5212, %v5266
  %v5284 = vadd.f32 %v5213, %v5266
  %v5285 = vadd.f32 %v5214, %v5266
  %v5286 = vadd.f32 %v5215, %v5266
  %v5287 = vadd.f32 %v5216, %v5266
  %v5288 = vadd.f32 %v5217, %v5266
  %v5289 = vadd.f32 %v5218, %v5266
  %v5290 = vadd.f32 %v5219, %v5266
  %v5291 = vadd.f32 %v5220, %v5266
  %v5292 = vadd.f32 %v5221, %v5266
  %v5293 = vadd.f32 %v5222, %v5266
  %v5294 = vadd.f32 %v5223, %v5266
  %v5295 = vadd.f32 %v5224, %v5266
  %v5296 = vadd.f32 %v5225, %v5266
  %v5297 = vadd.f32 %v5226, %v5266
  %v5298 = vadd.f32 %v5227, %v5266
  %v5299 = vadd.f32 %v5228, %v5266
  %v5300 = vadd.f32 %v5229, %v5266
  %v5301 = vadd.f32 %v5230, %v5266
  %v5302 = vadd.f32 %v5231, %v5266
  %v5303 = vadd.f32 %v5232, %v5266
  %v5304 = vadd.f32 %v5233, %v5266
  %v5305 = vadd.f32 %v5234, %v5266
  %v5306 = vadd.f32 %v5235, %v5266
  %v5307 = vadd.f32 %v5236, %v5266
  %v5308 = vadd.f32 %v5237, %v5266
  %v5309 = vadd.f32 %v5238, %v5266
  %v5310 = vadd.f32 %v5239, %v5266
  %v5311 = vadd.f32 %v5240, %v5266
  %v5312 = vadd.f32 %v5241, %v5266
  %v5313 = vadd.f32 %v5242, %v5266
  %v5314 = vadd.f32 %v5243, %v5266
  %v5315 = vadd.f32 %v5244, %v5266
  %v5316 = vadd.f32 %v5245, %v5266
  %v5317 = vadd.f32 %v5246, %v5266
  %v5318 = vadd.f32 %v5247, %v5266
  %v5319 = vadd.f32 %v5248, %v5266
  %v5320 = vadd.f32 %v5249, %v5266
  %v5321 = vadd.f32 %v5250, %v5266
  %v5322 = vadd.f32 %v5251, %v5266
  %v5323 = vadd.f32 %v5252, %v5266
  %v5324 = vadd.f32 %v5253, %v5266
  %v5325 = vadd.f32 %v5254, %v5266
  %v5326 = vadd.f32 %v5255, %v5266
  %v5327 = vadd.f32 %v5256, %v5266
  %v5328 = vadd.f32 %v5257, %v5266
  %v5329 = vadd.f32 %v5258, %v5266
  %v5330 = vadd.f32 %v5259, %v5266
  %v5331 = vadd.f32 %v5260, %v5266
  %vm5332 = vcmp.ge.f32.partialorder %v5268, 0.0
  %vm5333 = vcmp.ge.f32.partialorder %v5269, 0.0
  %vm5334 = vcmp.ge.f32.partialorder %v5270, 0.0
  %vm5335 = vcmp.ge.f32.partialorder %v5271, 0.0
  %vm5336 = vcmp.ge.f32.partialorder %v5272, 0.0
  %vm5337 = vcmp.ge.f32.partialorder %v5273, 0.0
  %vm5338 = vcmp.ge.f32.partialorder %v5274, 0.0
  %vm5339 = vcmp.ge.f32.partialorder %v5275, 0.0
  %vm5340 = vcmp.ge.f32.partialorder %v5276, 0.0
  %vm5341 = vcmp.ge.f32.partialorder %v5277, 0.0
  %vm5342 = vcmp.ge.f32.partialorder %v5278, 0.0
  %vm5343 = vcmp.ge.f32.partialorder %v5279, 0.0
  %vm5344 = vcmp.ge.f32.partialorder %v5280, 0.0
  %vm5345 = vcmp.ge.f32.partialorder %v5281, 0.0
  %vm5346 = vcmp.ge.f32.partialorder %v5282, 0.0
  %vm5347 = vcmp.ge.f32.partialorder %v5283, 0.0
  %vm5348 = vcmp.ge.f32.partialorder %v5284, 0.0
  %vm5349 = vcmp.ge.f32.partialorder %v5285, 0.0
  %vm5350 = vcmp.ge.f32.partialorder %v5286, 0.0
  %vm5351 = vcmp.ge.f32.partialorder %v5287, 0.0
  %vm5352 = vcmp.ge.f32.partialorder %v5288, 0.0
  %vm5353 = vcmp.ge.f32.partialorder %v5289, 0.0
  %vm5354 = vcmp.ge.f32.partialorder %v5290, 0.0
  %vm5355 = vcmp.ge.f32.partialorder %v5291, 0.0
  %vm5356 = vcmp.ge.f32.partialorder %v5292, 0.0
  %vm5357 = vcmp.ge.f32.partialorder %v5293, 0.0
  %vm5358 = vcmp.ge.f32.partialorder %v5294, 0.0
  %vm5359 = vcmp.ge.f32.partialorder %v5295, 0.0
  %vm5360 = vcmp.ge.f32.partialorder %v5296, 0.0
  %vm5361 = vcmp.ge.f32.partialorder %v5297, 0.0
  %vm5362 = vcmp.ge.f32.partialorder %v5298, 0.0
  %vm5363 = vcmp.ge.f32.partialorder %v5299, 0.0
  %vm5364 = vcmp.ge.f32.partialorder %v5300, 0.0
  %vm5365 = vcmp.ge.f32.partialorder %v5301, 0.0
  %vm5366 = vcmp.ge.f32.partialorder %v5302, 0.0
  %vm5367 = vcmp.ge.f32.partialorder %v5303, 0.0
  %vm5368 = vcmp.ge.f32.partialorder %v5304, 0.0
  %vm5369 = vcmp.ge.f32.partialorder %v5305, 0.0
  %vm5370 = vcmp.ge.f32.partialorder %v5306, 0.0
  %vm5371 = vcmp.ge.f32.partialorder %v5307, 0.0
  %vm5372 = vcmp.ge.f32.partialorder %v5308, 0.0
  %vm5373 = vcmp.ge.f32.partialorder %v5309, 0.0
  %vm5374 = vcmp.ge.f32.partialorder %v5310, 0.0
  %vm5375 = vcmp.ge.f32.partialorder %v5311, 0.0
  %vm5376 = vcmp.ge.f32.partialorder %v5312, 0.0
  %vm5377 = vcmp.ge.f32.partialorder %v5313, 0.0
  %vm5378 = vcmp.ge.f32.partialorder %v5314, 0.0
  %vm5379 = vcmp.ge.f32.partialorder %v5315, 0.0
  %vm5380 = vcmp.ge.f32.partialorder %v5316, 0.0
  %vm5381 = vcmp.ge.f32.partialorder %v5317, 0.0
  %vm5382 = vcmp.ge.f32.partialorder %v5318, 0.0
  %vm5383 = vcmp.ge.f32.partialorder %v5319, 0.0
  %vm5384 = vcmp.ge.f32.partialorder %v5320, 0.0
  %vm5385 = vcmp.ge.f32.partialorder %v5321, 0.0
  %vm5386 = vcmp.ge.f32.partialorder %v5322, 0.0
  %vm5387 = vcmp.ge.f32.partialorder %v5323, 0.0
  %vm5388 = vcmp.ge.f32.partialorder %v5324, 0.0
  %vm5389 = vcmp.ge.f32.partialorder %v5325, 0.0
  %vm5390 = vcmp.ge.f32.partialorder %v5326, 0.0
  %vm5391 = vcmp.ge.f32.partialorder %v5327, 0.0
  %vm5392 = vcmp.ge.f32.partialorder %v5328, 0.0
  %vm5393 = vcmp.ge.f32.partialorder %v5329, 0.0
  %vm5394 = vcmp.ge.f32.partialorder %v5330, 0.0
  %vm5395 = vcmp.ge.f32.partialorder %v5331, 0.0
  %v5396 = vmul.f32 %v5268, 0.2
  %v5397 = vmul.f32 %v5269, 0.2
  %v5398 = vmul.f32 %v5270, 0.2
  %v5399 = vmul.f32 %v5271, 0.2
  %v5400 = vmul.f32 %v5272, 0.2
  %v5401 = vmul.f32 %v5273, 0.2
  %v5402 = vmul.f32 %v5274, 0.2
  %v5403 = vmul.f32 %v5275, 0.2
  %v5404 = vmul.f32 %v5276, 0.2
  %v5405 = vmul.f32 %v5277, 0.2
  %v5406 = vmul.f32 %v5278, 0.2
  %v5407 = vmul.f32 %v5279, 0.2
  %v5408 = vmul.f32 %v5280, 0.2
  %v5409 = vmul.f32 %v5281, 0.2
  %v5410 = vmul.f32 %v5282, 0.2
  %v5411 = vmul.f32 %v5283, 0.2
  %v5412 = vmul.f32 %v5284, 0.2
  %v5413 = vmul.f32 %v5285, 0.2
  %v5414 = vmul.f32 %v5286, 0.2
  %v5415 = vmul.f32 %v5287, 0.2
  %v5416 = vmul.f32 %v5288, 0.2
  %v5417 = vmul.f32 %v5289, 0.2
  %v5418 = vmul.f32 %v5290, 0.2
  %v5419 = vmul.f32 %v5291, 0.2
  %v5420 = vmul.f32 %v5292, 0.2
  %v5421 = vmul.f32 %v5293, 0.2
  %v5422 = vmul.f32 %v5294, 0.2
  %v5423 = vmul.f32 %v5295, 0.2
  %v5424 = vmul.f32 %v5296, 0.2
  %v5425 = vmul.f32 %v5297, 0.2
  %v5426 = vmul.f32 %v5298, 0.2
  %v5427 = vmul.f32 %v5299, 0.2
  %v5428 = vmul.f32 %v5300, 0.2
  %v5429 = vmul.f32 %v5301, 0.2
  %v5430 = vmul.f32 %v5302, 0.2
  %v5431 = vmul.f32 %v5303, 0.2
  %v5432 = vmul.f32 %v5304, 0.2
  %v5433 = vmul.f32 %v5305, 0.2
  %v5434 = vmul.f32 %v5306, 0.2
  %v5435 = vmul.f32 %v5307, 0.2
  %v5436 = vmul.f32 %v5308, 0.2
  %v5437 = vmul.f32 %v5309, 0.2
  %v5438 = vmul.f32 %v5310, 0.2
  %v5439 = vmul.f32 %v5311, 0.2
  %v5440 = vmul.f32 %v5312, 0.2
  %v5441 = vmul.f32 %v5313, 0.2
  %v5442 = vmul.f32 %v5314, 0.2
  %v5443 = vmul.f32 %v5315, 0.2
  %v5444 = vmul.f32 %v5316, 0.2
  %v5445 = vmul.f32 %v5317, 0.2
  %v5446 = vmul.f32 %v5318, 0.2
  %v5447 = vmul.f32 %v5319, 0.2
  %v5448 = vmul.f32 %v5320, 0.2
  %v5449 = vmul.f32 %v5321, 0.2
  %v5450 = vmul.f32 %v5322, 0.2
  %v5451 = vmul.f32 %v5323, 0.2
  %v5452 = vmul.f32 %v5324, 0.2
  %v5453 = vmul.f32 %v5325, 0.2
  %v5454 = vmul.f32 %v5326, 0.2
  %v5455 = vmul.f32 %v5327, 0.2
  %v5456 = vmul.f32 %v5328, 0.2
  %v5457 = vmul.f32 %v5329, 0.2
  %v5458 = vmul.f32 %v5330, 0.2
  %v5459 = vmul.f32 %v5331, 0.2
  %v5460 = vsel %vm5332, %v5268, %v5396
  %v5461 = vsel %vm5333, %v5269, %v5397
  %v5462 = vsel %vm5334, %v5270, %v5398
  %v5463 = vsel %vm5335, %v5271, %v5399
  %v5464 = vsel %vm5336, %v5272, %v5400
  %v5465 = vsel %vm5337, %v5273, %v5401
  %v5466 = vsel %vm5338, %v5274, %v5402
  %v5467 = vsel %vm5339, %v5275, %v5403
  %v5468 = vsel %vm5340, %v5276, %v5404
  %v5469 = vsel %vm5341, %v5277, %v5405
  %v5470 = vsel %vm5342, %v5278, %v5406
  %v5471 = vsel %vm5343, %v5279, %v5407
  %v5472 = vsel %vm5344, %v5280, %v5408
  %v5473 = vsel %vm5345, %v5281, %v5409
  %v5474 = vsel %vm5346, %v5282, %v5410
  %v5475 = vsel %vm5347, %v5283, %v5411
  %v5476 = vsel %vm5348, %v5284, %v5412
  %v5477 = vsel %vm5349, %v5285, %v5413
  %v5478 = vsel %vm5350, %v5286, %v5414
  %v5479 = vsel %vm5351, %v5287, %v5415
  %v5480 = vsel %vm5352, %v5288, %v5416
  %v5481 = vsel %vm5353, %v5289, %v5417
  %v5482 = vsel %vm5354, %v5290, %v5418
  %v5483 = vsel %vm5355, %v5291, %v5419
  %v5484 = vsel %vm5356, %v5292, %v5420
  %v5485 = vsel %vm5357, %v5293, %v5421
  %v5486 = vsel %vm5358, %v5294, %v5422
  %v5487 = vsel %vm5359, %v5295, %v5423
  %v5488 = vsel %vm5360, %v5296, %v5424
  %v5489 = vsel %vm5361, %v5297, %v5425
  %v5490 = vsel %vm5362, %v5298, %v5426
  %v5491 = vsel %vm5363, %v5299, %v5427
  %v5492 = vsel %vm5364, %v5300, %v5428
  %v5493 = vsel %vm5365, %v5301, %v5429
  %v5494 = vsel %vm5366, %v5302, %v5430
  %v5495 = vsel %vm5367, %v5303, %v5431
  %v5496 = vsel %vm5368, %v5304, %v5432
  %v5497 = vsel %vm5369, %v5305, %v5433
  %v5498 = vsel %vm5370, %v5306, %v5434
  %v5499 = vsel %vm5371, %v5307, %v5435
  %v5500 = vsel %vm5372, %v5308, %v5436
  %v5501 = vsel %vm5373, %v5309, %v5437
  %v5502 = vsel %vm5374, %v5310, %v5438
  %v5503 = vsel %vm5375, %v5311, %v5439
  %v5504 = vsel %vm5376, %v5312, %v5440
  %v5505 = vsel %vm5377, %v5313, %v5441
  %v5506 = vsel %vm5378, %v5314, %v5442
  %v5507 = vsel %vm5379, %v5315, %v5443
  %v5508 = vsel %vm5380, %v5316, %v5444
  %v5509 = vsel %vm5381, %v5317, %v5445
  %v5510 = vsel %vm5382, %v5318, %v5446
  %v5511 = vsel %vm5383, %v5319, %v5447
  %v5512 = vsel %vm5384, %v5320, %v5448
  %v5513 = vsel %vm5385, %v5321, %v5449
  %v5514 = vsel %vm5386, %v5322, %v5450
  %v5515 = vsel %vm5387, %v5323, %v5451
  %v5516 = vsel %vm5388, %v5324, %v5452
  %v5517 = vsel %vm5389, %v5325, %v5453
  %v5518 = vsel %vm5390, %v5326, %v5454
  %v5519 = vsel %vm5391, %v5327, %v5455
  %v5520 = vsel %vm5392, %v5328, %v5456
  %v5521 = vsel %vm5393, %v5329, %v5457
  %v5522 = vsel %vm5394, %v5330, %v5458
  %v5523 = vsel %vm5395, %v5331, %v5459
  %v5588 = vrot.slane %v5460, 7
  %v5589 = vrot.slane %v5461, 7
  %v5590 = vsel %vm1366, %v5588, %v5589
  %v5591 = vrot.slane %v5462, 7
  %v5592 = vrot.slane %v5463, 7
  %v5593 = vsel %vm1366, %v5591, %v5592
  %v5594 = vrot.slane %v5464, 7
  %v5595 = vrot.slane %v5465, 7
  %v5596 = vsel %vm1366, %v5594, %v5595
  %v5597 = vrot.slane %v5466, 7
  %v5598 = vrot.slane %v5467, 7
  %v5599 = vsel %vm1366, %v5597, %v5598
  %v5600 = vrot.slane %v5468, 7
  %v5601 = vrot.slane %v5469, 7
  %v5602 = vsel %vm1366, %v5600, %v5601
  %v5603 = vrot.slane %v5470, 7
  %v5604 = vrot.slane %v5471, 7
  %v5605 = vsel %vm1366, %v5603, %v5604
  %v5606 = vrot.slane %v5472, 7
  %v5607 = vrot.slane %v5473, 7
  %v5608 = vsel %vm1366, %v5606, %v5607
  %v5609 = vrot.slane %v5474, 7
  %v5610 = vrot.slane %v5475, 7
  %v5611 = vsel %vm1366, %v5609, %v5610
  %v5612 = vrot.slane %v5476, 7
  %v5613 = vrot.slane %v5477, 7
  %v5614 = vsel %vm1366, %v5612, %v5613
  %v5615 = vrot.slane %v5478, 7
  %v5616 = vrot.slane %v5479, 7
  %v5617 = vsel %vm1366, %v5615, %v5616
  %v5618 = vrot.slane %v5480, 7
  %v5619 = vrot.slane %v5481, 7
  %v5620 = vsel %vm1366, %v5618, %v5619
  %v5621 = vrot.slane %v5482, 7
  %v5622 = vrot.slane %v5483, 7
  %v5623 = vsel %vm1366, %v5621, %v5622
  %v5624 = vrot.slane %v5484, 7
  %v5625 = vrot.slane %v5485, 7
  %v5626 = vsel %vm1366, %v5624, %v5625
  %v5627 = vrot.slane %v5486, 7
  %v5628 = vrot.slane %v5487, 7
  %v5629 = vsel %vm1366, %v5627, %v5628
  %v5630 = vrot.slane %v5488, 7
  %v5631 = vrot.slane %v5489, 7
  %v5632 = vsel %vm1366, %v5630, %v5631
  %v5633 = vrot.slane %v5490, 7
  %v5634 = vrot.slane %v5491, 7
  %v5635 = vsel %vm1366, %v5633, %v5634
  %v5636 = vrot.slane %v5492, 7
  %v5637 = vrot.slane %v5493, 7
  %v5638 = vsel %vm1366, %v5636, %v5637
  %v5639 = vrot.slane %v5494, 7
  %v5640 = vrot.slane %v5495, 7
  %v5641 = vsel %vm1366, %v5639, %v5640
  %v5642 = vrot.slane %v5496, 7
  %v5643 = vrot.slane %v5497, 7
  %v5644 = vsel %vm1366, %v5642, %v5643
  %v5645 = vrot.slane %v5498, 7
  %v5646 = vrot.slane %v5499, 7
  %v5647 = vsel %vm1366, %v5645, %v5646
  %v5648 = vrot.slane %v5500, 7
  %v5649 = vrot.slane %v5501, 7
  %v5650 = vsel %vm1366, %v5648, %v5649
  %v5651 = vrot.slane %v5502, 7
  %v5652 = vrot.slane %v5503, 7
  %v5653 = vsel %vm1366, %v5651, %v5652
  %v5654 = vrot.slane %v5504, 7
  %v5655 = vrot.slane %v5505, 7
  %v5656 = vsel %vm1366, %v5654, %v5655
  %v5657 = vrot.slane %v5506, 7
  %v5658 = vrot.slane %v5507, 7
  %v5659 = vsel %vm1366, %v5657, %v5658
  %v5660 = vrot.slane %v5508, 7
  %v5661 = vrot.slane %v5509, 7
  %v5662 = vsel %vm1366, %v5660, %v5661
  %v5663 = vrot.slane %v5510, 7
  %v5664 = vrot.slane %v5511, 7
  %v5665 = vsel %vm1366, %v5663, %v5664
  %v5666 = vrot.slane %v5512, 7
  %v5667 = vrot.slane %v5513, 7
  %v5668 = vsel %vm1366, %v5666, %v5667
  %v5669 = vrot.slane %v5514, 7
  %v5670 = vrot.slane %v5515, 7
  %v5671 = vsel %vm1366, %v5669, %v5670
  %v5672 = vrot.slane %v5516, 7
  %v5673 = vrot.slane %v5517, 7
  %v5674 = vsel %vm1366, %v5672, %v5673
  %v5675 = vrot.slane %v5518, 7
  %v5676 = vrot.slane %v5519, 7
  %v5677 = vsel %vm1366, %v5675, %v5676
  %v5678 = vrot.slane %v5520, 7
  %v5679 = vrot.slane %v5521, 7
  %v5680 = vsel %vm1366, %v5678, %v5679
  %v5681 = vrot.slane %v5522, 7
  %v5682 = vrot.slane %v5523, 7
  %v5683 = vsel %vm1366, %v5681, %v5682
  %v5778 = vsel %vm1366, 0.0, %v5588
  %v5779 = vsel %vm1366, 0.0, %v5591
  %v5780 = vsel %vm1366, 0.0, %v5594
  %v5781 = vsel %vm1366, 0.0, %v5597
  %v5782 = vsel %vm1366, 0.0, %v5600
  %v5783 = vsel %vm1366, 0.0, %v5603
  %v5784 = vsel %vm1366, 0.0, %v5606
  %v5785 = vsel %vm1366, 0.0, %v5609
  %v5786 = vsel %vm1366, 0.0, %v5612
  %v5787 = vsel %vm1366, 0.0, %v5615
  %v5788 = vsel %vm1366, 0.0, %v5618
  %v5789 = vsel %vm1366, 0.0, %v5621
  %v5790 = vsel %vm1366, 0.0, %v5624
  %v5791 = vsel %vm1366, 0.0, %v5627
  %v5792 = vsel %vm1366, 0.0, %v5630
  %v5793 = vsel %vm1366, 0.0, %v5633
  %v5794 = vsel %vm1366, 0.0, %v5636
  %v5795 = vsel %vm1366, 0.0, %v5639
  %v5796 = vsel %vm1366, 0.0, %v5642
  %v5797 = vsel %vm1366, 0.0, %v5645
  %v5798 = vsel %vm1366, 0.0, %v5648
  %v5799 = vsel %vm1366, 0.0, %v5651
  %v5800 = vsel %vm1366, 0.0, %v5654
  %v5801 = vsel %vm1366, 0.0, %v5657
  %v5802 = vsel %vm1366, 0.0, %v5660
  %v5803 = vsel %vm1366, 0.0, %v5663
  %v5804 = vsel %vm1366, 0.0, %v5666
  %v5805 = vsel %vm1366, 0.0, %v5669
  %v5806 = vsel %vm1366, 0.0, %v5672
  %v5807 = vsel %vm1366, 0.0, %v5675
  %v5808 = vsel %vm1366, 0.0, %v5678
  %v5809 = vsel %vm1366, 0.0, %v5681
  %v5810 = vsel %vm1366, %v5589, 0.0
  %v5811 = vsel %vm1366, %v5592, 0.0
  %v5812 = vsel %vm1366, %v5595, 0.0
  %v5813 = vsel %vm1366, %v5598, 0.0
  %v5814 = vsel %vm1366, %v5601, 0.0
  %v5815 = vsel %vm1366, %v5604, 0.0
  %v5816 = vsel %vm1366, %v5607, 0.0
  %v5817 = vsel %vm1366, %v5610, 0.0
  %v5818 = vsel %vm1366, %v5613, 0.0
  %v5819 = vsel %vm1366, %v5616, 0.0
  %v5820 = vsel %vm1366, %v5619, 0.0
  %v5821 = vsel %vm1366, %v5622, 0.0
  %v5822 = vsel %vm1366, %v5625, 0.0
  %v5823 = vsel %vm1366, %v5628, 0.0
  %v5824 = vsel %vm1366, %v5631, 0.0
  %v5825 = vsel %vm1366, %v5634, 0.0
  %v5826 = vsel %vm1366, %v5637, 0.0
  %v5827 = vsel %vm1366, %v5640, 0.0
  %v5828 = vsel %vm1366, %v5643, 0.0
  %v5829 = vsel %vm1366, %v5646, 0.0
  %v5830 = vsel %vm1366, %v5649, 0.0
  %v5831 = vsel %vm1366, %v5652, 0.0
  %v5832 = vsel %vm1366, %v5655, 0.0
  %v5833 = vsel %vm1366, %v5658, 0.0
  %v5834 = vsel %vm1366, %v5661, 0.0
  %v5835 = vsel %vm1366, %v5664, 0.0
  %v5836 = vsel %vm1366, %v5667, 0.0
  %v5837 = vsel %vm1366, %v5670, 0.0
  %v5838 = vsel %vm1366, %v5673, 0.0
  %v5839 = vsel %vm1366, %v5676, 0.0
  %v5840 = vsel %vm1366, %v5679, 0.0
  %v5841 = vsel %vm1366, %v5682, 0.0
  %5842 = vst.msk [vmem:[#allocation2] sm:$0xff] %vm4789, %v1869
  %5843 = vst.msk [vmem:[#allocation2 + $0x18] sm:$0xff] %vm4789, %v1368
  %5844 = vst.msk [vmem:[#allocation2 + $0x30] sm:$0xff] %vm4789, %v5778
  %5845 = vst.msk [vmem:[#allocation2 + $0x48] sm:$0xff] %vm4789, %v5590
  %5846 = vst.msk [vmem:[#allocation2 + $0x60] sm:$0xff] %vm4789, %v5779
  %5847 = vst.msk [vmem:[#allocation2 + $0x78] sm:$0xff] %vm4789, %v5593
  %5848 = vst.msk [vmem:[#allocation2 + $0x90] sm:$0xff] %vm4789, %v5780
  %5849 = vst.msk [vmem:[#allocation2 + $0xa8] sm:$0xff] %vm4789, %v5596
  %5850 = vst.msk [vmem:[#allocation2 + $0xc0] sm:$0xff] %vm4789, %v5781
  %5851 = vst.msk [vmem:[#allocation2 + $0xd8] sm:$0xff] %vm4789, %v5599
  %5852 = vst.msk [vmem:[#allocation2 + $0xf0] sm:$0xff] %vm4789, %v5782
  %5853 = vst.msk [vmem:[#allocation2 + $0x108] sm:$0xff] %vm4789, %v5602
  %5854 = vst.msk [vmem:[#allocation2 + $0x120] sm:$0xff] %vm4789, %v5783
  %5855 = vst.msk [vmem:[#allocation2 + $0x138] sm:$0xff] %vm4789, %v5605
  %5856 = vst.msk [vmem:[#allocation2 + $0x150] sm:$0xff] %vm4789, %v5784
  %5857 = vst.msk [vmem:[#allocation2 + $0x168] sm:$0xff] %vm4789, %v5608
  %5858 = vst.msk [vmem:[#allocation2 + $0x180] sm:$0xff] %vm4789, %v5785
  %5859 = vst.msk [vmem:[#allocation2 + $0x198] sm:$0xff] %vm4789, %v5611
  %5860 = vst.msk [vmem:[#allocation2 + $0x1b0] sm:$0xff] %vm4789, %v5786
  %5861 = vst.msk [vmem:[#allocation2 + $0x1c8] sm:$0xff] %vm4789, %v5614
  %5862 = vst.msk [vmem:[#allocation2 + $0x1e0] sm:$0xff] %vm4789, %v5787
  %5863 = vst.msk [vmem:[#allocation2 + $0x1f8] sm:$0xff] %vm4789, %v5617
  %5864 = vst.msk [vmem:[#allocation2 + $0x210] sm:$0xff] %vm4789, %v5788
  %5865 = vst.msk [vmem:[#allocation2 + $0x228] sm:$0xff] %vm4789, %v5620
  %5866 = vst.msk [vmem:[#allocation2 + $0x240] sm:$0xff] %vm4789, %v5789
  %5867 = vst.msk [vmem:[#allocation2 + $0x258] sm:$0xff] %vm4789, %v5623
  %5868 = vst.msk [vmem:[#allocation2 + $0x270] sm:$0xff] %vm4789, %v5790
  %5869 = vst.msk [vmem:[#allocation2 + $0x288] sm:$0xff] %vm4789, %v5626
  %5870 = vst.msk [vmem:[#allocation2 + $0x2a0] sm:$0xff] %vm4789, %v5791
  %5871 = vst.msk [vmem:[#allocation2 + $0x2b8] sm:$0xff] %vm4789, %v5629
  %5872 = vst.msk [vmem:[#allocation2 + $0x2d0] sm:$0xff] %vm4789, %v5792
  %5873 = vst.msk [vmem:[#allocation2 + $0x2e8] sm:$0xff] %vm4789, %v5632
  %5874 = vst.msk [vmem:[#allocation2 + $0x300] sm:$0xff] %vm4789, %v1869
  %5875 = vst.msk [vmem:[#allocation2 + $0x318] sm:$0xff] %vm4789, %v1368
  %5876 = vst.msk [vmem:[#allocation2 + $0x330] sm:$0xff] %vm4789, %v5794
  %5877 = vst.msk [vmem:[#allocation2 + $0x348] sm:$0xff] %vm4789, %v5638
  %5878 = vst.msk [vmem:[#allocation2 + $0x360] sm:$0xff] %vm4789, %v5795
  %5879 = vst.msk [vmem:[#allocation2 + $0x378] sm:$0xff] %vm4789, %v5641
  %5880 = vst.msk [vmem:[#allocation2 + $0x390] sm:$0xff] %vm4789, %v5796
  %5881 = vst.msk [vmem:[#allocation2 + $0x3a8] sm:$0xff] %vm4789, %v5644
  %5882 = vst.msk [vmem:[#allocation2 + $0x3c0] sm:$0xff] %vm4789, %v5797
  %5883 = vst.msk [vmem:[#allocation2 + $0x3d8] sm:$0xff] %vm4789, %v5647
  %5884 = vst.msk [vmem:[#allocation2 + $0x3f0] sm:$0xff] %vm4789, %v5798
  %5885 = vst.msk [vmem:[#allocation2 + $0x408] sm:$0xff] %vm4789, %v5650
  %5886 = vst.msk [vmem:[#allocation2 + $0x420] sm:$0xff] %vm4789, %v5799
  %5887 = vst.msk [vmem:[#allocation2 + $0x438] sm:$0xff] %vm4789, %v5653
  %5888 = vst.msk [vmem:[#allocation2 + $0x450] sm:$0xff] %vm4789, %v5800
  %5889 = vst.msk [vmem:[#allocation2 + $0x468] sm:$0xff] %vm4789, %v5656
  %5890 = vst.msk [vmem:[#allocation2 + $0x480] sm:$0xff] %vm4789, %v5801
  %5891 = vst.msk [vmem:[#allocation2 + $0x498] sm:$0xff] %vm4789, %v5659
  %5892 = vst.msk [vmem:[#allocation2 + $0x4b0] sm:$0xff] %vm4789, %v5802
  %5893 = vst.msk [vmem:[#allocation2 + $0x4c8] sm:$0xff] %vm4789, %v5662
  %5894 = vst.msk [vmem:[#allocation2 + $0x4e0] sm:$0xff] %vm4789, %v5803
  %5895 = vst.msk [vmem:[#allocation2 + $0x4f8] sm:$0xff] %vm4789, %v5665
  %5896 = vst.msk [vmem:[#allocation2 + $0x510] sm:$0xff] %vm4789, %v5804
  %5897 = vst.msk [vmem:[#allocation2 + $0x528] sm:$0xff] %vm4789, %v5668
  %5898 = vst.msk [vmem:[#allocation2 + $0x540] sm:$0xff] %vm4789, %v5805
  %5899 = vst.msk [vmem:[#allocation2 + $0x558] sm:$0xff] %vm4789, %v5671
  %5900 = vst.msk [vmem:[#allocation2 + $0x570] sm:$0xff] %vm4789, %v5806
  %5901 = vst.msk [vmem:[#allocation2 + $0x588] sm:$0xff] %vm4789, %v5674
  %5902 = vst.msk [vmem:[#allocation2 + $0x5a0] sm:$0xff] %vm4789, %v5807
  %5903 = vst.msk [vmem:[#allocation2 + $0x5b8] sm:$0xff] %vm4789, %v5677
  %5904 = vst.msk [vmem:[#allocation2 + $0x5d0] sm:$0xff] %vm4789, %v5808
  %5905 = vst.msk [vmem:[#allocation2 + $0x5e8] sm:$0xff] %vm4789, %v5680
  %v5966 = vrot.slane %v5778, 1
  %v5967 = vrot.slane %v5590, 1
  %v5968 = vsel %vm2119, %v5966, %v5967
  %v5969 = vrot.slane %v5810, 1
  %v5970 = vsel %vm2119, %v5967, %v5969
  %v5971 = vrot.slane %v5779, 1
  %v5972 = vrot.slane %v5593, 1
  %v5973 = vsel %vm2119, %v5971, %v5972
  %v5974 = vrot.slane %v5811, 1
  %v5975 = vsel %vm2119, %v5972, %v5974
  %v5976 = vrot.slane %v5780, 1
  %v5977 = vrot.slane %v5596, 1
  %v5978 = vsel %vm2119, %v5976, %v5977
  %v5979 = vrot.slane %v5812, 1
  %v5980 = vsel %vm2119, %v5977, %v5979
  %v5981 = vrot.slane %v5781, 1
  %v5982 = vrot.slane %v5599, 1
  %v5983 = vsel %vm2119, %v5981, %v5982
  %v5984 = vrot.slane %v5813, 1
  %v5985 = vsel %vm2119, %v5982, %v5984
  %v5986 = vrot.slane %v5782, 1
  %v5987 = vrot.slane %v5602, 1
  %v5988 = vsel %vm2119, %v5986, %v5987
  %v5989 = vrot.slane %v5814, 1
  %v5990 = vsel %vm2119, %v5987, %v5989
  %v5991 = vrot.slane %v5783, 1
  %v5992 = vrot.slane %v5605, 1
  %v5993 = vsel %vm2119, %v5991, %v5992
  %v5994 = vrot.slane %v5815, 1
  %v5995 = vsel %vm2119, %v5992, %v5994
  %v5996 = vrot.slane %v5784, 1
  %v5997 = vrot.slane %v5608, 1
  %v5998 = vsel %vm2119, %v5996, %v5997
  %v5999 = vrot.slane %v5816, 1
  %v6000 = vsel %vm2119, %v5997, %v5999
  %v6001 = vrot.slane %v5785, 1
  %v6002 = vrot.slane %v5611, 1
  %v6003 = vsel %vm2119, %v6001, %v6002
  %v6004 = vrot.slane %v5817, 1
  %v6005 = vsel %vm2119, %v6002, %v6004
  %v6006 = vrot.slane %v5786, 1
  %v6007 = vrot.slane %v5614, 1
  %v6008 = vsel %vm2119, %v6006, %v6007
  %v6009 = vrot.slane %v5818, 1
  %v6010 = vsel %vm2119, %v6007, %v6009
  %v6011 = vrot.slane %v5787, 1
  %v6012 = vrot.slane %v5617, 1
  %v6013 = vsel %vm2119, %v6011, %v6012
  %v6014 = vrot.slane %v5819, 1
  %v6015 = vsel %vm2119, %v6012, %v6014
  %v6016 = vrot.slane %v5788, 1
  %v6017 = vrot.slane %v5620, 1
  %v6018 = vsel %vm2119, %v6016, %v6017
  %v6019 = vrot.slane %v5820, 1
  %v6020 = vsel %vm2119, %v6017, %v6019
  %v6021 = vrot.slane %v5789, 1
  %v6022 = vrot.slane %v5623, 1
  %v6023 = vsel %vm2119, %v6021, %v6022
  %v6024 = vrot.slane %v5821, 1
  %v6025 = vsel %vm2119, %v6022, %v6024
  %v6026 = vrot.slane %v5790, 1
  %v6027 = vrot.slane %v5626, 1
  %v6028 = vsel %vm2119, %v6026, %v6027
  %v6029 = vrot.slane %v5822, 1
  %v6030 = vsel %vm2119, %v6027, %v6029
  %v6031 = vrot.slane %v5791, 1
  %v6032 = vrot.slane %v5629, 1
  %v6033 = vsel %vm2119, %v6031, %v6032
  %v6034 = vrot.slane %v5823, 1
  %v6035 = vsel %vm2119, %v6032, %v6034
  %v6036 = vrot.slane %v5792, 1
  %v6037 = vrot.slane %v5632, 1
  %v6038 = vsel %vm2119, %v6036, %v6037
  %v6039 = vrot.slane %v5824, 1
  %v6040 = vsel %vm2119, %v6037, %v6039
  %v6041 = vrot.slane %v5794, 1
  %v6042 = vrot.slane %v5638, 1
  %v6043 = vsel %vm2119, %v6041, %v6042
  %v6044 = vrot.slane %v5826, 1
  %v6045 = vsel %vm2119, %v6042, %v6044
  %v6046 = vrot.slane %v5795, 1
  %v6047 = vrot.slane %v5641, 1
  %v6048 = vsel %vm2119, %v6046, %v6047
  %v6049 = vrot.slane %v5827, 1
  %v6050 = vsel %vm2119, %v6047, %v6049
  %v6051 = vrot.slane %v5796, 1
  %v6052 = vrot.slane %v5644, 1
  %v6053 = vsel %vm2119, %v6051, %v6052
  %v6054 = vrot.slane %v5828, 1
  %v6055 = vsel %vm2119, %v6052, %v6054
  %v6056 = vrot.slane %v5797, 1
  %v6057 = vrot.slane %v5647, 1
  %v6058 = vsel %vm2119, %v6056, %v6057
  %v6059 = vrot.slane %v5829, 1
  %v6060 = vsel %vm2119, %v6057, %v6059
  %v6061 = vrot.slane %v5798, 1
  %v6062 = vrot.slane %v5650, 1
  %v6063 = vsel %vm2119, %v6061, %v6062
  %v6064 = vrot.slane %v5830, 1
  %v6065 = vsel %vm2119, %v6062, %v6064
  %v6066 = vrot.slane %v5799, 1
  %v6067 = vrot.slane %v5653, 1
  %v6068 = vsel %vm2119, %v6066, %v6067
  %v6069 = vrot.slane %v5831, 1
  %v6070 = vsel %vm2119, %v6067, %v6069
  %v6071 = vrot.slane %v5800, 1
  %v6072 = vrot.slane %v5656, 1
  %v6073 = vsel %vm2119, %v6071, %v6072
  %v6074 = vrot.slane %v5832, 1
  %v6075 = vsel %vm2119, %v6072, %v6074
  %v6076 = vrot.slane %v5801, 1
  %v6077 = vrot.slane %v5659, 1
  %v6078 = vsel %vm2119, %v6076, %v6077
  %v6079 = vrot.slane %v5833, 1
  %v6080 = vsel %vm2119, %v6077, %v6079
  %v6081 = vrot.slane %v5802, 1
  %v6082 = vrot.slane %v5662, 1
  %v6083 = vsel %vm2119, %v6081, %v6082
  %v6084 = vrot.slane %v5834, 1
  %v6085 = vsel %vm2119, %v6082, %v6084
  %v6086 = vrot.slane %v5803, 1
  %v6087 = vrot.slane %v5665, 1
  %v6088 = vsel %vm2119, %v6086, %v6087
  %v6089 = vrot.slane %v5835, 1
  %v6090 = vsel %vm2119, %v6087, %v6089
  %v6091 = vrot.slane %v5804, 1
  %v6092 = vrot.slane %v5668, 1
  %v6093 = vsel %vm2119, %v6091, %v6092
  %v6094 = vrot.slane %v5836, 1
  %v6095 = vsel %vm2119, %v6092, %v6094
  %v6096 = vrot.slane %v5805, 1
  %v6097 = vrot.slane %v5671, 1
  %v6098 = vsel %vm2119, %v6096, %v6097
  %v6099 = vrot.slane %v5837, 1
  %v6100 = vsel %vm2119, %v6097, %v6099
  %v6101 = vrot.slane %v5806, 1
  %v6102 = vrot.slane %v5674, 1
  %v6103 = vsel %vm2119, %v6101, %v6102
  %v6104 = vrot.slane %v5838, 1
  %v6105 = vsel %vm2119, %v6102, %v6104
  %v6106 = vrot.slane %v5807, 1
  %v6107 = vrot.slane %v5677, 1
  %v6108 = vsel %vm2119, %v6106, %v6107
  %v6109 = vrot.slane %v5839, 1
  %v6110 = vsel %vm2119, %v6107, %v6109
  %v6111 = vrot.slane %v5808, 1
  %v6112 = vrot.slane %v5680, 1
  %v6113 = vsel %vm2119, %v6111, %v6112
  %v6114 = vrot.slane %v5840, 1
  %v6115 = vsel %vm2119, %v6112, %v6114
  %6116 = vrot.lane.b32.xlu0 %v5968, 32
  %v6117 = vpop.permute.xlu0 %6116
  %6118 = vrot.lane.b32.xlu0 %v5970, 32
  %v6119 = vpop.permute.xlu0 %6118
  %6120 = vrot.lane.b32.xlu0 %v5973, 32
  %v6121 = vpop.permute.xlu0 %6120
  %6122 = vrot.lane.b32.xlu0 %v5975, 32
  %v6123 = vpop.permute.xlu0 %6122
  %6124 = vrot.lane.b32.xlu0 %v5978, 32
  %v6125 = vpop.permute.xlu0 %6124
  %6126 = vrot.lane.b32.xlu0 %v5980, 32
  %v6127 = vpop.permute.xlu0 %6126
  %6128 = vrot.lane.b32.xlu0 %v5983, 32
  %v6129 = vpop.permute.xlu0 %6128
  %6130 = vrot.lane.b32.xlu0 %v5985, 32
  %v6131 = vpop.permute.xlu0 %6130
  %6132 = vrot.lane.b32.xlu0 %v5988, 32
  %v6133 = vpop.permute.xlu0 %6132
  %6134 = vrot.lane.b32.xlu0 %v5990, 32
  %v6135 = vpop.permute.xlu0 %6134
  %6136 = vrot.lane.b32.xlu0 %v5993, 32
  %v6137 = vpop.permute.xlu0 %6136
  %6138 = vrot.lane.b32.xlu0 %v5995, 32
  %v6139 = vpop.permute.xlu0 %6138
  %6140 = vrot.lane.b32.xlu0 %v5998, 32
  %v6141 = vpop.permute.xlu0 %6140
  %6142 = vrot.lane.b32.xlu0 %v6000, 32
  %v6143 = vpop.permute.xlu0 %6142
  %6144 = vrot.lane.b32.xlu0 %v6003, 32
  %v6145 = vpop.permute.xlu0 %6144
  %6146 = vrot.lane.b32.xlu0 %v6005, 32
  %v6147 = vpop.permute.xlu0 %6146
  %6148 = vrot.lane.b32.xlu0 %v6008, 32
  %v6149 = vpop.permute.xlu0 %6148
  %6150 = vrot.lane.b32.xlu0 %v6010, 32
  %v6151 = vpop.permute.xlu0 %6150
  %6152 = vrot.lane.b32.xlu0 %v6013, 32
  %v6153 = vpop.permute.xlu0 %6152
  %6154 = vrot.lane.b32.xlu0 %v6015, 32
  %v6155 = vpop.permute.xlu0 %6154
  %6156 = vrot.lane.b32.xlu0 %v6018, 32
  %v6157 = vpop.permute.xlu0 %6156
  %6158 = vrot.lane.b32.xlu0 %v6020, 32
  %v6159 = vpop.permute.xlu0 %6158
  %6160 = vrot.lane.b32.xlu0 %v6023, 32
  %v6161 = vpop.permute.xlu0 %6160
  %6162 = vrot.lane.b32.xlu0 %v6025, 32
  %v6163 = vpop.permute.xlu0 %6162
  %6164 = vrot.lane.b32.xlu0 %v6028, 32
  %v6165 = vpop.permute.xlu0 %6164
  %6166 = vrot.lane.b32.xlu0 %v6030, 32
  %v6167 = vpop.permute.xlu0 %6166
  %6168 = vrot.lane.b32.xlu0 %v6033, 32
  %v6169 = vpop.permute.xlu0 %6168
  %6170 = vrot.lane.b32.xlu0 %v6035, 32
  %v6171 = vpop.permute.xlu0 %6170
  %6172 = vrot.lane.b32.xlu0 %v6038, 32
  %v6173 = vpop.permute.xlu0 %6172
  %6174 = vrot.lane.b32.xlu0 %v6040, 32
  %v6175 = vpop.permute.xlu0 %6174
  %6176 = vrot.lane.b32.xlu0 %v6043, 32
  %v6177 = vpop.permute.xlu0 %6176
  %6178 = vrot.lane.b32.xlu0 %v6045, 32
  %v6179 = vpop.permute.xlu0 %6178
  %6180 = vrot.lane.b32.xlu0 %v6048, 32
  %v6181 = vpop.permute.xlu0 %6180
  %6182 = vrot.lane.b32.xlu0 %v6050, 32
  %v6183 = vpop.permute.xlu0 %6182
  %6184 = vrot.lane.b32.xlu0 %v6053, 32
  %v6185 = vpop.permute.xlu0 %6184
  %6186 = vrot.lane.b32.xlu0 %v6055, 32
  %v6187 = vpop.permute.xlu0 %6186
  %6188 = vrot.lane.b32.xlu0 %v6058, 32
  %v6189 = vpop.permute.xlu0 %6188
  %6190 = vrot.lane.b32.xlu0 %v6060, 32
  %v6191 = vpop.permute.xlu0 %6190
  %6192 = vrot.lane.b32.xlu0 %v6063, 32
  %v6193 = vpop.permute.xlu0 %6192
  %6194 = vrot.lane.b32.xlu0 %v6065, 32
  %v6195 = vpop.permute.xlu0 %6194
  %6196 = vrot.lane.b32.xlu0 %v6068, 32
  %v6197 = vpop.permute.xlu0 %6196
  %6198 = vrot.lane.b32.xlu0 %v6070, 32
  %v6199 = vpop.permute.xlu0 %6198
  %6200 = vrot.lane.b32.xlu0 %v6073, 32
  %v6201 = vpop.permute.xlu0 %6200
  %6202 = vrot.lane.b32.xlu0 %v6075, 32
  %v6203 = vpop.permute.xlu0 %6202
  %6204 = vrot.lane.b32.xlu0 %v6078, 32
  %v6205 = vpop.permute.xlu0 %6204
  %6206 = vrot.lane.b32.xlu0 %v6080, 32
  %v6207 = vpop.permute.xlu0 %6206
  %6208 = vrot.lane.b32.xlu0 %v6083, 32
  %v6209 = vpop.permute.xlu0 %6208
  %6210 = vrot.lane.b32.xlu0 %v6085, 32
  %v6211 = vpop.permute.xlu0 %6210
  %6212 = vrot.lane.b32.xlu0 %v6088, 32
  %v6213 = vpop.permute.xlu0 %6212
  %6214 = vrot.lane.b32.xlu0 %v6090, 32
  %v6215 = vpop.permute.xlu0 %6214
  %6216 = vrot.lane.b32.xlu0 %v6093, 32
  %v6217 = vpop.permute.xlu0 %6216
  %6218 = vrot.lane.b32.xlu0 %v6095, 32
  %v6219 = vpop.permute.xlu0 %6218
  %6220 = vrot.lane.b32.xlu0 %v6098, 32
  %v6221 = vpop.permute.xlu0 %6220
  %6222 = vrot.lane.b32.xlu0 %v6100, 32
  %v6223 = vpop.permute.xlu0 %6222
  %6224 = vrot.lane.b32.xlu0 %v6103, 32
  %v6225 = vpop.permute.xlu0 %6224
  %6226 = vrot.lane.b32.xlu0 %v6105, 32
  %v6227 = vpop.permute.xlu0 %6226
  %6228 = vrot.lane.b32.xlu0 %v6108, 32
  %v6229 = vpop.permute.xlu0 %6228
  %6230 = vrot.lane.b32.xlu0 %v6110, 32
  %v6231 = vpop.permute.xlu0 %6230
  %6232 = vrot.lane.b32.xlu0 %v6113, 32
  %v6233 = vpop.permute.xlu0 %6232
  %6234 = vrot.lane.b32.xlu0 %v6115, 32
  %v6235 = vpop.permute.xlu0 %6234
  %vm6296 = vcmask 523520
  %6297 = vst.msk [vmem:[#allocation2] sm:$0xff] %vm6296, %v4264
  %6298 = vst.msk [vmem:[#allocation2 + $0x18] sm:$0xff] %vm6296, %v4266
  %6299 = vst.msk [vmem:[#allocation2 + $0x30] sm:$0xff] %vm6296, %v6117
  %6300 = vst.msk [vmem:[#allocation2 + $0x48] sm:$0xff] %vm6296, %v6119
  %6301 = vst.msk [vmem:[#allocation2 + $0x60] sm:$0xff] %vm6296, %v6121
  %6302 = vst.msk [vmem:[#allocation2 + $0x78] sm:$0xff] %vm6296, %v6123
  %6303 = vst.msk [vmem:[#allocation2 + $0x90] sm:$0xff] %vm6296, %v6125
  %6304 = vst.msk [vmem:[#allocation2 + $0xa8] sm:$0xff] %vm6296, %v6127
  %6305 = vst.msk [vmem:[#allocation2 + $0xc0] sm:$0xff] %vm6296, %v6129
  %6306 = vst.msk [vmem:[#allocation2 + $0xd8] sm:$0xff] %vm6296, %v6131
  %6307 = vst.msk [vmem:[#allocation2 + $0xf0] sm:$0xff] %vm6296, %v6133
  %6308 = vst.msk [vmem:[#allocation2 + $0x108] sm:$0xff] %vm6296, %v6135
  %6309 = vst.msk [vmem:[#allocation2 + $0x120] sm:$0xff] %vm6296, %v6137
  %6310 = vst.msk [vmem:[#allocation2 + $0x138] sm:$0xff] %vm6296, %v6139
  %6311 = vst.msk [vmem:[#allocation2 + $0x150] sm:$0xff] %vm6296, %v6141
  %6312 = vst.msk [vmem:[#allocation2 + $0x168] sm:$0xff] %vm6296, %v6143
  %6313 = vst.msk [vmem:[#allocation2 + $0x180] sm:$0xff] %vm6296, %v6145
  %6314 = vst.msk [vmem:[#allocation2 + $0x198] sm:$0xff] %vm6296, %v6147
  %6315 = vst.msk [vmem:[#allocation2 + $0x1b0] sm:$0xff] %vm6296, %v6149
  %6316 = vst.msk [vmem:[#allocation2 + $0x1c8] sm:$0xff] %vm6296, %v6151
  %6317 = vst.msk [vmem:[#allocation2 + $0x1e0] sm:$0xff] %vm6296, %v6153
  %6318 = vst.msk [vmem:[#allocation2 + $0x1f8] sm:$0xff] %vm6296, %v6155
  %6319 = vst.msk [vmem:[#allocation2 + $0x210] sm:$0xff] %vm6296, %v6157
  %6320 = vst.msk [vmem:[#allocation2 + $0x228] sm:$0xff] %vm6296, %v6159
  %6321 = vst.msk [vmem:[#allocation2 + $0x240] sm:$0xff] %vm6296, %v6161
  %6322 = vst.msk [vmem:[#allocation2 + $0x258] sm:$0xff] %vm6296, %v6163
  %6323 = vst.msk [vmem:[#allocation2 + $0x270] sm:$0xff] %vm6296, %v6165
  %6324 = vst.msk [vmem:[#allocation2 + $0x288] sm:$0xff] %vm6296, %v6167
  %6325 = vst.msk [vmem:[#allocation2 + $0x2a0] sm:$0xff] %vm6296, %v6169
  %6326 = vst.msk [vmem:[#allocation2 + $0x2b8] sm:$0xff] %vm6296, %v6171
  %6327 = vst.msk [vmem:[#allocation2 + $0x2d0] sm:$0xff] %vm6296, %v6173
  %6328 = vst.msk [vmem:[#allocation2 + $0x2e8] sm:$0xff] %vm6296, %v6175
  %6329 = vst.msk [vmem:[#allocation2 + $0x300] sm:$0xff] %vm6296, %v4264
  %6330 = vst.msk [vmem:[#allocation2 + $0x318] sm:$0xff] %vm6296, %v4266
  %6331 = vst.msk [vmem:[#allocation2 + $0x330] sm:$0xff] %vm6296, %v6177
  %6332 = vst.msk [vmem:[#allocation2 + $0x348] sm:$0xff] %vm6296, %v6179
  %6333 = vst.msk [vmem:[#allocation2 + $0x360] sm:$0xff] %vm6296, %v6181
  %6334 = vst.msk [vmem:[#allocation2 + $0x378] sm:$0xff] %vm6296, %v6183
  %6335 = vst.msk [vmem:[#allocation2 + $0x390] sm:$0xff] %vm6296, %v6185
  %6336 = vst.msk [vmem:[#allocation2 + $0x3a8] sm:$0xff] %vm6296, %v6187
  %6337 = vst.msk [vmem:[#allocation2 + $0x3c0] sm:$0xff] %vm6296, %v6189
  %6338 = vst.msk [vmem:[#allocation2 + $0x3d8] sm:$0xff] %vm6296, %v6191
  %6339 = vst.msk [vmem:[#allocation2 + $0x3f0] sm:$0xff] %vm6296, %v6193
  %6340 = vst.msk [vmem:[#allocation2 + $0x408] sm:$0xff] %vm6296, %v6195
  %6341 = vst.msk [vmem:[#allocation2 + $0x420] sm:$0xff] %vm6296, %v6197
  %6342 = vst.msk [vmem:[#allocation2 + $0x438] sm:$0xff] %vm6296, %v6199
  %6343 = vst.msk [vmem:[#allocation2 + $0x450] sm:$0xff] %vm6296, %v6201
  %6344 = vst.msk [vmem:[#allocation2 + $0x468] sm:$0xff] %vm6296, %v6203
  %6345 = vst.msk [vmem:[#allocation2 + $0x480] sm:$0xff] %vm6296, %v6205
  %6346 = vst.msk [vmem:[#allocation2 + $0x498] sm:$0xff] %vm6296, %v6207
  %6347 = vst.msk [vmem:[#allocation2 + $0x4b0] sm:$0xff] %vm6296, %v6209
  %6348 = vst.msk [vmem:[#allocation2 + $0x4c8] sm:$0xff] %vm6296, %v6211
  %6349 = vst.msk [vmem:[#allocation2 + $0x4e0] sm:$0xff] %vm6296, %v6213
  %6350 = vst.msk [vmem:[#allocation2 + $0x4f8] sm:$0xff] %vm6296, %v6215
  %6351 = vst.msk [vmem:[#allocation2 + $0x510] sm:$0xff] %vm6296, %v6217
  %6352 = vst.msk [vmem:[#allocation2 + $0x528] sm:$0xff] %vm6296, %v6219
  %6353 = vst.msk [vmem:[#allocation2 + $0x540] sm:$0xff] %vm6296, %v6221
  %6354 = vst.msk [vmem:[#allocation2 + $0x558] sm:$0xff] %vm6296, %v6223
  %6355 = vst.msk [vmem:[#allocation2 + $0x570] sm:$0xff] %vm6296, %v6225
  %6356 = vst.msk [vmem:[#allocation2 + $0x588] sm:$0xff] %vm6296, %v6227
  %6357 = vst.msk [vmem:[#allocation2 + $0x5a0] sm:$0xff] %vm6296, %v6229
  %6358 = vst.msk [vmem:[#allocation2 + $0x5b8] sm:$0xff] %vm6296, %v6231
  %6359 = vst.msk [vmem:[#allocation2 + $0x5d0] sm:$0xff] %vm6296, %v6233
  %6360 = vst.msk [vmem:[#allocation2 + $0x5e8] sm:$0xff] %vm6296, %v6235
  %v6361 = vrot.slane %v5778, 2
  %v6362 = vrot.slane %v5590, 2
  %v6363 = vsel %vm2523, %v6361, %v6362
  %v6364 = vrot.slane %v5810, 2
  %v6365 = vsel %vm2523, %v6362, %v6364
  %v6366 = vrot.slane %v5779, 2
  %v6367 = vrot.slane %v5593, 2
  %v6368 = vsel %vm2523, %v6366, %v6367
  %v6369 = vrot.slane %v5811, 2
  %v6370 = vsel %vm2523, %v6367, %v6369
  %v6371 = vrot.slane %v5780, 2
  %v6372 = vrot.slane %v5596, 2
  %v6373 = vsel %vm2523, %v6371, %v6372
  %v6374 = vrot.slane %v5812, 2
  %v6375 = vsel %vm2523, %v6372, %v6374
  %v6376 = vrot.slane %v5781, 2
  %v6377 = vrot.slane %v5599, 2
  %v6378 = vsel %vm2523, %v6376, %v6377
  %v6379 = vrot.slane %v5813, 2
  %v6380 = vsel %vm2523, %v6377, %v6379
  %v6381 = vrot.slane %v5782, 2
  %v6382 = vrot.slane %v5602, 2
  %v6383 = vsel %vm2523, %v6381, %v6382
  %v6384 = vrot.slane %v5814, 2
  %v6385 = vsel %vm2523, %v6382, %v6384
  %v6386 = vrot.slane %v5783, 2
  %v6387 = vrot.slane %v5605, 2
  %v6388 = vsel %vm2523, %v6386, %v6387
  %v6389 = vrot.slane %v5815, 2
  %v6390 = vsel %vm2523, %v6387, %v6389
  %v6391 = vrot.slane %v5784, 2
  %v6392 = vrot.slane %v5608, 2
  %v6393 = vsel %vm2523, %v6391, %v6392
  %v6394 = vrot.slane %v5816, 2
  %v6395 = vsel %vm2523, %v6392, %v6394
  %v6396 = vrot.slane %v5785, 2
  %v6397 = vrot.slane %v5611, 2
  %v6398 = vsel %vm2523, %v6396, %v6397
  %v6399 = vrot.slane %v5817, 2
  %v6400 = vsel %vm2523, %v6397, %v6399
  %v6401 = vrot.slane %v5786, 2
  %v6402 = vrot.slane %v5614, 2
  %v6403 = vsel %vm2523, %v6401, %v6402
  %v6404 = vrot.slane %v5818, 2
  %v6405 = vsel %vm2523, %v6402, %v6404
  %v6406 = vrot.slane %v5787, 2
  %v6407 = vrot.slane %v5617, 2
  %v6408 = vsel %vm2523, %v6406, %v6407
  %v6409 = vrot.slane %v5819, 2
  %v6410 = vsel %vm2523, %v6407, %v6409
  %v6411 = vrot.slane %v5788, 2
  %v6412 = vrot.slane %v5620, 2
  %v6413 = vsel %vm2523, %v6411, %v6412
  %v6414 = vrot.slane %v5820, 2
  %v6415 = vsel %vm2523, %v6412, %v6414
  %v6416 = vrot.slane %v5789, 2
  %v6417 = vrot.slane %v5623, 2
  %v6418 = vsel %vm2523, %v6416, %v6417
  %v6419 = vrot.slane %v5821, 2
  %v6420 = vsel %vm2523, %v6417, %v6419
  %v6421 = vrot.slane %v5790, 2
  %v6422 = vrot.slane %v5626, 2
  %v6423 = vsel %vm2523, %v6421, %v6422
  %v6424 = vrot.slane %v5822, 2
  %v6425 = vsel %vm2523, %v6422, %v6424
  %v6426 = vrot.slane %v5791, 2
  %v6427 = vrot.slane %v5629, 2
  %v6428 = vsel %vm2523, %v6426, %v6427
  %v6429 = vrot.slane %v5823, 2
  %v6430 = vsel %vm2523, %v6427, %v6429
  %v6431 = vrot.slane %v5792, 2
  %v6432 = vrot.slane %v5632, 2
  %v6433 = vsel %vm2523, %v6431, %v6432
  %v6434 = vrot.slane %v5824, 2
  %v6435 = vsel %vm2523, %v6432, %v6434
  %v6436 = vrot.slane %v5794, 2
  %v6437 = vrot.slane %v5638, 2
  %v6438 = vsel %vm2523, %v6436, %v6437
  %v6439 = vrot.slane %v5826, 2
  %v6440 = vsel %vm2523, %v6437, %v6439
  %v6441 = vrot.slane %v5795, 2
  %v6442 = vrot.slane %v5641, 2
  %v6443 = vsel %vm2523, %v6441, %v6442
  %v6444 = vrot.slane %v5827, 2
  %v6445 = vsel %vm2523, %v6442, %v6444
  %v6446 = vrot.slane %v5796, 2
  %v6447 = vrot.slane %v5644, 2
  %v6448 = vsel %vm2523, %v6446, %v6447
  %v6449 = vrot.slane %v5828, 2
  %v6450 = vsel %vm2523, %v6447, %v6449
  %v6451 = vrot.slane %v5797, 2
  %v6452 = vrot.slane %v5647, 2
  %v6453 = vsel %vm2523, %v6451, %v6452
  %v6454 = vrot.slane %v5829, 2
  %v6455 = vsel %vm2523, %v6452, %v6454
  %v6456 = vrot.slane %v5798, 2
  %v6457 = vrot.slane %v5650, 2
  %v6458 = vsel %vm2523, %v6456, %v6457
  %v6459 = vrot.slane %v5830, 2
  %v6460 = vsel %vm2523, %v6457, %v6459
  %v6461 = vrot.slane %v5799, 2
  %v6462 = vrot.slane %v5653, 2
  %v6463 = vsel %vm2523, %v6461, %v6462
  %v6464 = vrot.slane %v5831, 2
  %v6465 = vsel %vm2523, %v6462, %v6464
  %v6466 = vrot.slane %v5800, 2
  %v6467 = vrot.slane %v5656, 2
  %v6468 = vsel %vm2523, %v6466, %v6467
  %v6469 = vrot.slane %v5832, 2
  %v6470 = vsel %vm2523, %v6467, %v6469
  %v6471 = vrot.slane %v5801, 2
  %v6472 = vrot.slane %v5659, 2
  %v6473 = vsel %vm2523, %v6471, %v6472
  %v6474 = vrot.slane %v5833, 2
  %v6475 = vsel %vm2523, %v6472, %v6474
  %v6476 = vrot.slane %v5802, 2
  %v6477 = vrot.slane %v5662, 2
  %v6478 = vsel %vm2523, %v6476, %v6477
  %v6479 = vrot.slane %v5834, 2
  %v6480 = vsel %vm2523, %v6477, %v6479
  %v6481 = vrot.slane %v5803, 2
  %v6482 = vrot.slane %v5665, 2
  %v6483 = vsel %vm2523, %v6481, %v6482
  %v6484 = vrot.slane %v5835, 2
  %v6485 = vsel %vm2523, %v6482, %v6484
  %v6486 = vrot.slane %v5804, 2
  %v6487 = vrot.slane %v5668, 2
  %v6488 = vsel %vm2523, %v6486, %v6487
  %v6489 = vrot.slane %v5836, 2
  %v6490 = vsel %vm2523, %v6487, %v6489
  %v6491 = vrot.slane %v5805, 2
  %v6492 = vrot.slane %v5671, 2
  %v6493 = vsel %vm2523, %v6491, %v6492
  %v6494 = vrot.slane %v5837, 2
  %v6495 = vsel %vm2523, %v6492, %v6494
  %v6496 = vrot.slane %v5806, 2
  %v6497 = vrot.slane %v5674, 2
  %v6498 = vsel %vm2523, %v6496, %v6497
  %v6499 = vrot.slane %v5838, 2
  %v6500 = vsel %vm2523, %v6497, %v6499
  %v6501 = vrot.slane %v5807, 2
  %v6502 = vrot.slane %v5677, 2
  %v6503 = vsel %vm2523, %v6501, %v6502
  %v6504 = vrot.slane %v5839, 2
  %v6505 = vsel %vm2523, %v6502, %v6504
  %v6506 = vrot.slane %v5808, 2
  %v6507 = vrot.slane %v5680, 2
  %v6508 = vsel %vm2523, %v6506, %v6507
  %v6509 = vrot.slane %v5840, 2
  %v6510 = vsel %vm2523, %v6507, %v6509
  %6511 = vrot.lane.b32.xlu0 %v6363, 64
  %v6512 = vpop.permute.xlu0 %6511
  %6513 = vrot.lane.b32.xlu0 %v6365, 64
  %v6514 = vpop.permute.xlu0 %6513
  %6515 = vrot.lane.b32.xlu0 %v6368, 64
  %v6516 = vpop.permute.xlu0 %6515
  %6517 = vrot.lane.b32.xlu0 %v6370, 64
  %v6518 = vpop.permute.xlu0 %6517
  %6519 = vrot.lane.b32.xlu0 %v6373, 64
  %v6520 = vpop.permute.xlu0 %6519
  %6521 = vrot.lane.b32.xlu0 %v6375, 64
  %v6522 = vpop.permute.xlu0 %6521
  %6523 = vrot.lane.b32.xlu0 %v6378, 64
  %v6524 = vpop.permute.xlu0 %6523
  %6525 = vrot.lane.b32.xlu0 %v6380, 64
  %v6526 = vpop.permute.xlu0 %6525
  %6527 = vrot.lane.b32.xlu0 %v6383, 64
  %v6528 = vpop.permute.xlu0 %6527
  %6529 = vrot.lane.b32.xlu0 %v6385, 64
  %v6530 = vpop.permute.xlu0 %6529
  %6531 = vrot.lane.b32.xlu0 %v6388, 64
  %v6532 = vpop.permute.xlu0 %6531
  %6533 = vrot.lane.b32.xlu0 %v6390, 64
  %v6534 = vpop.permute.xlu0 %6533
  %6535 = vrot.lane.b32.xlu0 %v6393, 64
  %v6536 = vpop.permute.xlu0 %6535
  %6537 = vrot.lane.b32.xlu0 %v6395, 64
  %v6538 = vpop.permute.xlu0 %6537
  %6539 = vrot.lane.b32.xlu0 %v6398, 64
  %v6540 = vpop.permute.xlu0 %6539
  %6541 = vrot.lane.b32.xlu0 %v6400, 64
  %v6542 = vpop.permute.xlu0 %6541
  %6543 = vrot.lane.b32.xlu0 %v6403, 64
  %v6544 = vpop.permute.xlu0 %6543
  %6545 = vrot.lane.b32.xlu0 %v6405, 64
  %v6546 = vpop.permute.xlu0 %6545
  %6547 = vrot.lane.b32.xlu0 %v6408, 64
  %v6548 = vpop.permute.xlu0 %6547
  %6549 = vrot.lane.b32.xlu0 %v6410, 64
  %v6550 = vpop.permute.xlu0 %6549
  %6551 = vrot.lane.b32.xlu0 %v6413, 64
  %v6552 = vpop.permute.xlu0 %6551
  %6553 = vrot.lane.b32.xlu0 %v6415, 64
  %v6554 = vpop.permute.xlu0 %6553
  %6555 = vrot.lane.b32.xlu0 %v6418, 64
  %v6556 = vpop.permute.xlu0 %6555
  %6557 = vrot.lane.b32.xlu0 %v6420, 64
  %v6558 = vpop.permute.xlu0 %6557
  %6559 = vrot.lane.b32.xlu0 %v6423, 64
  %v6560 = vpop.permute.xlu0 %6559
  %6561 = vrot.lane.b32.xlu0 %v6425, 64
  %v6562 = vpop.permute.xlu0 %6561
  %6563 = vrot.lane.b32.xlu0 %v6428, 64
  %v6564 = vpop.permute.xlu0 %6563
  %6565 = vrot.lane.b32.xlu0 %v6430, 64
  %v6566 = vpop.permute.xlu0 %6565
  %6567 = vrot.lane.b32.xlu0 %v6433, 64
  %v6568 = vpop.permute.xlu0 %6567
  %6569 = vrot.lane.b32.xlu0 %v6435, 64
  %v6570 = vpop.permute.xlu0 %6569
  %6571 = vrot.lane.b32.xlu0 %v6438, 64
  %v6572 = vpop.permute.xlu0 %6571
  %6573 = vrot.lane.b32.xlu0 %v6440, 64
  %v6574 = vpop.permute.xlu0 %6573
  %6575 = vrot.lane.b32.xlu0 %v6443, 64
  %v6576 = vpop.permute.xlu0 %6575
  %6577 = vrot.lane.b32.xlu0 %v6445, 64
  %v6578 = vpop.permute.xlu0 %6577
  %6579 = vrot.lane.b32.xlu0 %v6448, 64
  %v6580 = vpop.permute.xlu0 %6579
  %6581 = vrot.lane.b32.xlu0 %v6450, 64
  %v6582 = vpop.permute.xlu0 %6581
  %6583 = vrot.lane.b32.xlu0 %v6453, 64
  %v6584 = vpop.permute.xlu0 %6583
  %6585 = vrot.lane.b32.xlu0 %v6455, 64
  %v6586 = vpop.permute.xlu0 %6585
  %6587 = vrot.lane.b32.xlu0 %v6458, 64
  %v6588 = vpop.permute.xlu0 %6587
  %6589 = vrot.lane.b32.xlu0 %v6460, 64
  %v6590 = vpop.permute.xlu0 %6589
  %6591 = vrot.lane.b32.xlu0 %v6463, 64
  %v6592 = vpop.permute.xlu0 %6591
  %6593 = vrot.lane.b32.xlu0 %v6465, 64
  %v6594 = vpop.permute.xlu0 %6593
  %6595 = vrot.lane.b32.xlu0 %v6468, 64
  %v6596 = vpop.permute.xlu0 %6595
  %6597 = vrot.lane.b32.xlu0 %v6470, 64
  %v6598 = vpop.permute.xlu0 %6597
  %6599 = vrot.lane.b32.xlu0 %v6473, 64
  %v6600 = vpop.permute.xlu0 %6599
  %6601 = vrot.lane.b32.xlu0 %v6475, 64
  %v6602 = vpop.permute.xlu0 %6601
  %6603 = vrot.lane.b32.xlu0 %v6478, 64
  %v6604 = vpop.permute.xlu0 %6603
  %6605 = vrot.lane.b32.xlu0 %v6480, 64
  %v6606 = vpop.permute.xlu0 %6605
  %6607 = vrot.lane.b32.xlu0 %v6483, 64
  %v6608 = vpop.permute.xlu0 %6607
  %6609 = vrot.lane.b32.xlu0 %v6485, 64
  %v6610 = vpop.permute.xlu0 %6609
  %6611 = vrot.lane.b32.xlu0 %v6488, 64
  %v6612 = vpop.permute.xlu0 %6611
  %6613 = vrot.lane.b32.xlu0 %v6490, 64
  %v6614 = vpop.permute.xlu0 %6613
  %6615 = vrot.lane.b32.xlu0 %v6493, 64
  %v6616 = vpop.permute.xlu0 %6615
  %6617 = vrot.lane.b32.xlu0 %v6495, 64
  %v6618 = vpop.permute.xlu0 %6617
  %6619 = vrot.lane.b32.xlu0 %v6498, 64
  %v6620 = vpop.permute.xlu0 %6619
  %6621 = vrot.lane.b32.xlu0 %v6500, 64
  %v6622 = vpop.permute.xlu0 %6621
  %6623 = vrot.lane.b32.xlu0 %v6503, 64
  %v6624 = vpop.permute.xlu0 %6623
  %6625 = vrot.lane.b32.xlu0 %v6505, 64
  %v6626 = vpop.permute.xlu0 %6625
  %6627 = vrot.lane.b32.xlu0 %v6508, 64
  %v6628 = vpop.permute.xlu0 %6627
  %6629 = vrot.lane.b32.xlu0 %v6510, 64
  %v6630 = vpop.permute.xlu0 %6629
  %vm6691 = vcmask 785920
  %6692 = vst.msk [vmem:[#allocation2] sm:$0xff] %vm6691, %v2680
  %6693 = vst.msk [vmem:[#allocation2 + $0x18] sm:$0xff] %vm6691, %v2682
  %6694 = vst.msk [vmem:[#allocation2 + $0x30] sm:$0xff] %vm6691, %v6512
  %6695 = vst.msk [vmem:[#allocation2 + $0x48] sm:$0xff] %vm6691, %v6514
  %6696 = vst.msk [vmem:[#allocation2 + $0x60] sm:$0xff] %vm6691, %v6516
  %6697 = vst.msk [vmem:[#allocation2 + $0x78] sm:$0xff] %vm6691, %v6518
  %6698 = vst.msk [vmem:[#allocation2 + $0x90] sm:$0xff] %vm6691, %v6520
  %6699 = vst.msk [vmem:[#allocation2 + $0xa8] sm:$0xff] %vm6691, %v6522
  %6700 = vst.msk [vmem:[#allocation2 + $0xc0] sm:$0xff] %vm6691, %v6524
  %6701 = vst.msk [vmem:[#allocation2 + $0xd8] sm:$0xff] %vm6691, %v6526
  %6702 = vst.msk [vmem:[#allocation2 + $0xf0] sm:$0xff] %vm6691, %v6528
  %6703 = vst.msk [vmem:[#allocation2 + $0x108] sm:$0xff] %vm6691, %v6530
  %6704 = vst.msk [vmem:[#allocation2 + $0x120] sm:$0xff] %vm6691, %v6532
  %6705 = vst.msk [vmem:[#allocation2 + $0x138] sm:$0xff] %vm6691, %v6534
  %6706 = vst.msk [vmem:[#allocation2 + $0x150] sm:$0xff] %vm6691, %v6536
  %6707 = vst.msk [vmem:[#allocation2 + $0x168] sm:$0xff] %vm6691, %v6538
  %6708 = vst.msk [vmem:[#allocation2 + $0x180] sm:$0xff] %vm6691, %v6540
  %6709 = vst.msk [vmem:[#allocation2 + $0x198] sm:$0xff] %vm6691, %v6542
  %6710 = vst.msk [vmem:[#allocation2 + $0x1b0] sm:$0xff] %vm6691, %v6544
  %6711 = vst.msk [vmem:[#allocation2 + $0x1c8] sm:$0xff] %vm6691, %v6546
  %6712 = vst.msk [vmem:[#allocation2 + $0x1e0] sm:$0xff] %vm6691, %v6548
  %6713 = vst.msk [vmem:[#allocation2 + $0x1f8] sm:$0xff] %vm6691, %v6550
  %6714 = vst.msk [vmem:[#allocation2 + $0x210] sm:$0xff] %vm6691, %v6552
  %6715 = vst.msk [vmem:[#allocation2 + $0x228] sm:$0xff] %vm6691, %v6554
  %6716 = vst.msk [vmem:[#allocation2 + $0x240] sm:$0xff] %vm6691, %v6556
  %6717 = vst.msk [vmem:[#allocation2 + $0x258] sm:$0xff] %vm6691, %v6558
  %6718 = vst.msk [vmem:[#allocation2 + $0x270] sm:$0xff] %vm6691, %v6560
  %6719 = vst.msk [vmem:[#allocation2 + $0x288] sm:$0xff] %vm6691, %v6562
  %6720 = vst.msk [vmem:[#allocation2 + $0x2a0] sm:$0xff] %vm6691, %v6564
  %6721 = vst.msk [vmem:[#allocation2 + $0x2b8] sm:$0xff] %vm6691, %v6566
  %6722 = vst.msk [vmem:[#allocation2 + $0x2d0] sm:$0xff] %vm6691, %v6568
  %6723 = vst.msk [vmem:[#allocation2 + $0x2e8] sm:$0xff] %vm6691, %v6570
  %6724 = vst.msk [vmem:[#allocation2 + $0x300] sm:$0xff] %vm6691, %v2680
  %6725 = vst.msk [vmem:[#allocation2 + $0x318] sm:$0xff] %vm6691, %v2682
  %6726 = vst.msk [vmem:[#allocation2 + $0x330] sm:$0xff] %vm6691, %v6572
  %6727 = vst.msk [vmem:[#allocation2 + $0x348] sm:$0xff] %vm6691, %v6574
  %6728 = vst.msk [vmem:[#allocation2 + $0x360] sm:$0xff] %vm6691, %v6576
  %6729 = vst.msk [vmem:[#allocation2 + $0x378] sm:$0xff] %vm6691, %v6578
  %6730 = vst.msk [vmem:[#allocation2 + $0x390] sm:$0xff] %vm6691, %v6580
  %6731 = vst.msk [vmem:[#allocation2 + $0x3a8] sm:$0xff] %vm6691, %v6582
  %6732 = vst.msk [vmem:[#allocation2 + $0x3c0] sm:$0xff] %vm6691, %v6584
  %6733 = vst.msk [vmem:[#allocation2 + $0x3d8] sm:$0xff] %vm6691, %v6586
  %6734 = vst.msk [vmem:[#allocation2 + $0x3f0] sm:$0xff] %vm6691, %v6588
  %6735 = vst.msk [vmem:[#allocation2 + $0x408] sm:$0xff] %vm6691, %v6590
  %6736 = vst.msk [vmem:[#allocation2 + $0x420] sm:$0xff] %vm6691, %v6592
  %6737 = vst.msk [vmem:[#allocation2 + $0x438] sm:$0xff] %vm6691, %v6594
  %6738 = vst.msk [vmem:[#allocation2 + $0x450] sm:$0xff] %vm6691, %v6596
  %6739 = vst.msk [vmem:[#allocation2 + $0x468] sm:$0xff] %vm6691, %v6598
  %6740 = vst.msk [vmem:[#allocation2 + $0x480] sm:$0xff] %vm6691, %v6600
  %6741 = vst.msk [vmem:[#allocation2 + $0x498] sm:$0xff] %vm6691, %v6602
  %6742 = vst.msk [vmem:[#allocation2 + $0x4b0] sm:$0xff] %vm6691, %v6604
  %6743 = vst.msk [vmem:[#allocation2 + $0x4c8] sm:$0xff] %vm6691, %v6606
  %6744 = vst.msk [vmem:[#allocation2 + $0x4e0] sm:$0xff] %vm6691, %v6608
  %6745 = vst.msk [vmem:[#allocation2 + $0x4f8] sm:$0xff] %vm6691, %v6610
  %6746 = vst.msk [vmem:[#allocation2 + $0x510] sm:$0xff] %vm6691, %v6612
  %6747 = vst.msk [vmem:[#allocation2 + $0x528] sm:$0xff] %vm6691, %v6614
  %6748 = vst.msk [vmem:[#allocation2 + $0x540] sm:$0xff] %vm6691, %v6616
  %6749 = vst.msk [vmem:[#allocation2 + $0x558] sm:$0xff] %vm6691, %v6618
  %6750 = vst.msk [vmem:[#allocation2 + $0x570] sm:$0xff] %vm6691, %v6620
  %6751 = vst.msk [vmem:[#allocation2 + $0x588] sm:$0xff] %vm6691, %v6622
  %6752 = vst.msk [vmem:[#allocation2 + $0x5a0] sm:$0xff] %vm6691, %v6624
  %6753 = vst.msk [vmem:[#allocation2 + $0x5b8] sm:$0xff] %vm6691, %v6626
  %6754 = vst.msk [vmem:[#allocation2 + $0x5d0] sm:$0xff] %vm6691, %v6628
  %6755 = vst.msk [vmem:[#allocation2 + $0x5e8] sm:$0xff] %vm6691, %v6630
  %6758 = vrot.lane.b32.xlu0 %v5778, 96
  %v6759 = vpop.permute.xlu0 %6758
  %6760 = vrot.lane.b32.xlu0 %v5590, 96
  %v6761 = vpop.permute.xlu0 %6760
  %6762 = vrot.lane.b32.xlu0 %v5779, 96
  %v6763 = vpop.permute.xlu0 %6762
  %6764 = vrot.lane.b32.xlu0 %v5593, 96
  %v6765 = vpop.permute.xlu0 %6764
  %6766 = vrot.lane.b32.xlu0 %v5780, 96
  %v6767 = vpop.permute.xlu0 %6766
  %6768 = vrot.lane.b32.xlu0 %v5596, 96
  %v6769 = vpop.permute.xlu0 %6768
  %6770 = vrot.lane.b32.xlu0 %v5781, 96
  %v6771 = vpop.permute.xlu0 %6770
  %6772 = vrot.lane.b32.xlu0 %v5599, 96
  %v6773 = vpop.permute.xlu0 %6772
  %6774 = vrot.lane.b32.xlu0 %v5782, 96
  %v6775 = vpop.permute.xlu0 %6774
  %6776 = vrot.lane.b32.xlu0 %v5602, 96
  %v6777 = vpop.permute.xlu0 %6776
  %6778 = vrot.lane.b32.xlu0 %v5783, 96
  %v6779 = vpop.permute.xlu0 %6778
  %6780 = vrot.lane.b32.xlu0 %v5605, 96
  %v6781 = vpop.permute.xlu0 %6780
  %6782 = vrot.lane.b32.xlu0 %v5784, 96
  %v6783 = vpop.permute.xlu0 %6782
  %6784 = vrot.lane.b32.xlu0 %v5608, 96
  %v6785 = vpop.permute.xlu0 %6784
  %6786 = vrot.lane.b32.xlu0 %v5785, 96
  %v6787 = vpop.permute.xlu0 %6786
  %6788 = vrot.lane.b32.xlu0 %v5611, 96
  %v6789 = vpop.permute.xlu0 %6788
  %6790 = vrot.lane.b32.xlu0 %v5786, 96
  %v6791 = vpop.permute.xlu0 %6790
  %6792 = vrot.lane.b32.xlu0 %v5614, 96
  %v6793 = vpop.permute.xlu0 %6792
  %6794 = vrot.lane.b32.xlu0 %v5787, 96
  %v6795 = vpop.permute.xlu0 %6794
  %6796 = vrot.lane.b32.xlu0 %v5617, 96
  %v6797 = vpop.permute.xlu0 %6796
  %6798 = vrot.lane.b32.xlu0 %v5788, 96
  %v6799 = vpop.permute.xlu0 %6798
  %6800 = vrot.lane.b32.xlu0 %v5620, 96
  %v6801 = vpop.permute.xlu0 %6800
  %6802 = vrot.lane.b32.xlu0 %v5789, 96
  %v6803 = vpop.permute.xlu0 %6802
  %6804 = vrot.lane.b32.xlu0 %v5623, 96
  %v6805 = vpop.permute.xlu0 %6804
  %6806 = vrot.lane.b32.xlu0 %v5790, 96
  %v6807 = vpop.permute.xlu0 %6806
  %6808 = vrot.lane.b32.xlu0 %v5626, 96
  %v6809 = vpop.permute.xlu0 %6808
  %6810 = vrot.lane.b32.xlu0 %v5791, 96
  %v6811 = vpop.permute.xlu0 %6810
  %6812 = vrot.lane.b32.xlu0 %v5629, 96
  %v6813 = vpop.permute.xlu0 %6812
  %6814 = vrot.lane.b32.xlu0 %v5792, 96
  %v6815 = vpop.permute.xlu0 %6814
  %6816 = vrot.lane.b32.xlu0 %v5632, 96
  %v6817 = vpop.permute.xlu0 %6816
  %6818 = vrot.lane.b32.xlu0 %v5793, 96
  %v6819 = vpop.permute.xlu0 %6818
  %6820 = vrot.lane.b32.xlu0 %v5635, 96
  %v6821 = vpop.permute.xlu0 %6820
  %6822 = vrot.lane.b32.xlu0 %v5794, 96
  %v6823 = vpop.permute.xlu0 %6822
  %6824 = vrot.lane.b32.xlu0 %v5638, 96
  %v6825 = vpop.permute.xlu0 %6824
  %6826 = vrot.lane.b32.xlu0 %v5795, 96
  %v6827 = vpop.permute.xlu0 %6826
  %6828 = vrot.lane.b32.xlu0 %v5641, 96
  %v6829 = vpop.permute.xlu0 %6828
  %6830 = vrot.lane.b32.xlu0 %v5796, 96
  %v6831 = vpop.permute.xlu0 %6830
  %6832 = vrot.lane.b32.xlu0 %v5644, 96
  %v6833 = vpop.permute.xlu0 %6832
  %6834 = vrot.lane.b32.xlu0 %v5797, 96
  %v6835 = vpop.permute.xlu0 %6834
  %6836 = vrot.lane.b32.xlu0 %v5647, 96
  %v6837 = vpop.permute.xlu0 %6836
  %6838 = vrot.lane.b32.xlu0 %v5798, 96
  %v6839 = vpop.permute.xlu0 %6838
  %6840 = vrot.lane.b32.xlu0 %v5650, 96
  %v6841 = vpop.permute.xlu0 %6840
  %6842 = vrot.lane.b32.xlu0 %v5799, 96
  %v6843 = vpop.permute.xlu0 %6842
  %6844 = vrot.lane.b32.xlu0 %v5653, 96
  %v6845 = vpop.permute.xlu0 %6844
  %6846 = vrot.lane.b32.xlu0 %v5800, 96
  %v6847 = vpop.permute.xlu0 %6846
  %6848 = vrot.lane.b32.xlu0 %v5656, 96
  %v6849 = vpop.permute.xlu0 %6848
  %6850 = vrot.lane.b32.xlu0 %v5801, 96
  %v6851 = vpop.permute.xlu0 %6850
  %6852 = vrot.lane.b32.xlu0 %v5659, 96
  %v6853 = vpop.permute.xlu0 %6852
  %6854 = vrot.lane.b32.xlu0 %v5802, 96
  %v6855 = vpop.permute.xlu0 %6854
  %6856 = vrot.lane.b32.xlu0 %v5662, 96
  %v6857 = vpop.permute.xlu0 %6856
  %6858 = vrot.lane.b32.xlu0 %v5803, 96
  %v6859 = vpop.permute.xlu0 %6858
  %6860 = vrot.lane.b32.xlu0 %v5665, 96
  %v6861 = vpop.permute.xlu0 %6860
  %6862 = vrot.lane.b32.xlu0 %v5804, 96
  %v6863 = vpop.permute.xlu0 %6862
  %6864 = vrot.lane.b32.xlu0 %v5668, 96
  %v6865 = vpop.permute.xlu0 %6864
  %6866 = vrot.lane.b32.xlu0 %v5805, 96
  %v6867 = vpop.permute.xlu0 %6866
  %6868 = vrot.lane.b32.xlu0 %v5671, 96
  %v6869 = vpop.permute.xlu0 %6868
  %6870 = vrot.lane.b32.xlu0 %v5806, 96
  %v6871 = vpop.permute.xlu0 %6870
  %6872 = vrot.lane.b32.xlu0 %v5674, 96
  %v6873 = vpop.permute.xlu0 %6872
  %6874 = vrot.lane.b32.xlu0 %v5807, 96
  %v6875 = vpop.permute.xlu0 %6874
  %6876 = vrot.lane.b32.xlu0 %v5677, 96
  %v6877 = vpop.permute.xlu0 %6876
  %6878 = vrot.lane.b32.xlu0 %v5808, 96
  %v6879 = vpop.permute.xlu0 %6878
  %6880 = vrot.lane.b32.xlu0 %v5680, 96
  %v6881 = vpop.permute.xlu0 %6880
  %6882 = vrot.lane.b32.xlu0 %v5809, 96
  %v6883 = vpop.permute.xlu0 %6882
  %6884 = vrot.lane.b32.xlu0 %v5683, 96
  %v6885 = vpop.permute.xlu0 %6884
  %vm6950 = vcmask 1048320
  %6951 = vst.msk [vmem:[#allocation2] sm:$0xff] %vm6950, %v6759
  %6952 = vst.msk [vmem:[#allocation2 + $0x18] sm:$0xff] %vm6950, %v6761
  %6953 = vst.msk [vmem:[#allocation2 + $0x30] sm:$0xff] %vm6950, %v6763
  %6954 = vst.msk [vmem:[#allocation2 + $0x48] sm:$0xff] %vm6950, %v6765
  %6955 = vst.msk [vmem:[#allocation2 + $0x60] sm:$0xff] %vm6950, %v6767
  %6956 = vst.msk [vmem:[#allocation2 + $0x78] sm:$0xff] %vm6950, %v6769
  %6957 = vst.msk [vmem:[#allocation2 + $0x90] sm:$0xff] %vm6950, %v6771
  %6958 = vst.msk [vmem:[#allocation2 + $0xa8] sm:$0xff] %vm6950, %v6773
  %6959 = vst.msk [vmem:[#allocation2 + $0xc0] sm:$0xff] %vm6950, %v6775
  %6960 = vst.msk [vmem:[#allocation2 + $0xd8] sm:$0xff] %vm6950, %v6777
  %6961 = vst.msk [vmem:[#allocation2 + $0xf0] sm:$0xff] %vm6950, %v6779
  %6962 = vst.msk [vmem:[#allocation2 + $0x108] sm:$0xff] %vm6950, %v6781
  %6963 = vst.msk [vmem:[#allocation2 + $0x120] sm:$0xff] %vm6950, %v6783
  %6964 = vst.msk [vmem:[#allocation2 + $0x138] sm:$0xff] %vm6950, %v6785
  %6965 = vst.msk [vmem:[#allocation2 + $0x150] sm:$0xff] %vm6950, %v6787
  %6966 = vst.msk [vmem:[#allocation2 + $0x168] sm:$0xff] %vm6950, %v6789
  %6967 = vst.msk [vmem:[#allocation2 + $0x180] sm:$0xff] %vm6950, %v6791
  %6968 = vst.msk [vmem:[#allocation2 + $0x198] sm:$0xff] %vm6950, %v6793
  %6969 = vst.msk [vmem:[#allocation2 + $0x1b0] sm:$0xff] %vm6950, %v6795
  %6970 = vst.msk [vmem:[#allocation2 + $0x1c8] sm:$0xff] %vm6950, %v6797
  %6971 = vst.msk [vmem:[#allocation2 + $0x1e0] sm:$0xff] %vm6950, %v6799
  %6972 = vst.msk [vmem:[#allocation2 + $0x1f8] sm:$0xff] %vm6950, %v6801
  %6973 = vst.msk [vmem:[#allocation2 + $0x210] sm:$0xff] %vm6950, %v6803
  %6974 = vst.msk [vmem:[#allocation2 + $0x228] sm:$0xff] %vm6950, %v6805
  %6975 = vst.msk [vmem:[#allocation2 + $0x240] sm:$0xff] %vm6950, %v6807
  %6976 = vst.msk [vmem:[#allocation2 + $0x258] sm:$0xff] %vm6950, %v6809
  %6977 = vst.msk [vmem:[#allocation2 + $0x270] sm:$0xff] %vm6950, %v6811
  %6978 = vst.msk [vmem:[#allocation2 + $0x288] sm:$0xff] %vm6950, %v6813
  %6979 = vst.msk [vmem:[#allocation2 + $0x2a0] sm:$0xff] %vm6950, %v6815
  %6980 = vst.msk [vmem:[#allocation2 + $0x2b8] sm:$0xff] %vm6950, %v6817
  %6981 = vst.msk [vmem:[#allocation2 + $0x2d0] sm:$0xff] %vm6950, %v6819
  %6982 = vst.msk [vmem:[#allocation2 + $0x2e8] sm:$0xff] %vm6950, %v6821
  %6983 = vst.msk [vmem:[#allocation2 + $0x300] sm:$0xff] %vm6950, %v6823
  %6984 = vst.msk [vmem:[#allocation2 + $0x318] sm:$0xff] %vm6950, %v6825
  %6985 = vst.msk [vmem:[#allocation2 + $0x330] sm:$0xff] %vm6950, %v6827
  %6986 = vst.msk [vmem:[#allocation2 + $0x348] sm:$0xff] %vm6950, %v6829
  %6987 = vst.msk [vmem:[#allocation2 + $0x360] sm:$0xff] %vm6950, %v6831
  %6988 = vst.msk [vmem:[#allocation2 + $0x378] sm:$0xff] %vm6950, %v6833
  %6989 = vst.msk [vmem:[#allocation2 + $0x390] sm:$0xff] %vm6950, %v6835
  %6990 = vst.msk [vmem:[#allocation2 + $0x3a8] sm:$0xff] %vm6950, %v6837
  %6991 = vst.msk [vmem:[#allocation2 + $0x3c0] sm:$0xff] %vm6950, %v6839
  %6992 = vst.msk [vmem:[#allocation2 + $0x3d8] sm:$0xff] %vm6950, %v6841
  %6993 = vst.msk [vmem:[#allocation2 + $0x3f0] sm:$0xff] %vm6950, %v6843
  %6994 = vst.msk [vmem:[#allocation2 + $0x408] sm:$0xff] %vm6950, %v6845
  %6995 = vst.msk [vmem:[#allocation2 + $0x420] sm:$0xff] %vm6950, %v6847
  %6996 = vst.msk [vmem:[#allocation2 + $0x438] sm:$0xff] %vm6950, %v6849
  %6997 = vst.msk [vmem:[#allocation2 + $0x450] sm:$0xff] %vm6950, %v6851
  %6998 = vst.msk [vmem:[#allocation2 + $0x468] sm:$0xff] %vm6950, %v6853
  %6999 = vst.msk [vmem:[#allocation2 + $0x480] sm:$0xff] %vm6950, %v6855
  %7000 = vst.msk [vmem:[#allocation2 + $0x498] sm:$0xff] %vm6950, %v6857
  %7001 = vst.msk [vmem:[#allocation2 + $0x4b0] sm:$0xff] %vm6950, %v6859
  %7002 = vst.msk [vmem:[#allocation2 + $0x4c8] sm:$0xff] %vm6950, %v6861
  %7003 = vst.msk [vmem:[#allocation2 + $0x4e0] sm:$0xff] %vm6950, %v6863
  %7004 = vst.msk [vmem:[#allocation2 + $0x4f8] sm:$0xff] %vm6950, %v6865
  %7005 = vst.msk [vmem:[#allocation2 + $0x510] sm:$0xff] %vm6950, %v6867
  %7006 = vst.msk [vmem:[#allocation2 + $0x528] sm:$0xff] %vm6950, %v6869
  %7007 = vst.msk [vmem:[#allocation2 + $0x540] sm:$0xff] %vm6950, %v6871
  %7008 = vst.msk [vmem:[#allocation2 + $0x558] sm:$0xff] %vm6950, %v6873
  %7009 = vst.msk [vmem:[#allocation2 + $0x570] sm:$0xff] %vm6950, %v6875
  %7010 = vst.msk [vmem:[#allocation2 + $0x588] sm:$0xff] %vm6950, %v6877
  %7011 = vst.msk [vmem:[#allocation2 + $0x5a0] sm:$0xff] %vm6950, %v6879
  %7012 = vst.msk [vmem:[#allocation2 + $0x5b8] sm:$0xff] %vm6950, %v6881
  %7013 = vst.msk [vmem:[#allocation2 + $0x5d0] sm:$0xff] %vm6950, %v6883
  %7014 = vst.msk [vmem:[#allocation2 + $0x5e8] sm:$0xff] %vm6950, %v6885
  %v7017 = vrot.slane %v5793, 1
  %v7018 = vrot.slane %v5635, 1
  %v7019 = vsel %vm2119, %v7017, %v7018
  %v7020 = vrot.slane %v5825, 1
  %v7021 = vsel %vm2119, %v7018, %v7020
  %v7022 = vrot.slane %v5809, 1
  %v7023 = vrot.slane %v5683, 1
  %v7024 = vsel %vm2119, %v7022, %v7023
  %v7025 = vrot.slane %v5841, 1
  %v7026 = vsel %vm2119, %v7023, %v7025
  %7091 = vst.msk [vmem:[#allocation2 + $0x8] sm:$0xff] %vm4789, %v5968
  %7092 = vst.msk [vmem:[#allocation2 + $0x20] sm:$0xff] %vm4789, %v5970
  %7093 = vst.msk [vmem:[#allocation2 + $0x38] sm:$0xff] %vm4789, %v5973
  %7094 = vst.msk [vmem:[#allocation2 + $0x50] sm:$0xff] %vm4789, %v5975
  %7095 = vst.msk [vmem:[#allocation2 + $0x68] sm:$0xff] %vm4789, %v5978
  %7096 = vst.msk [vmem:[#allocation2 + $0x80] sm:$0xff] %vm4789, %v5980
  %7097 = vst.msk [vmem:[#allocation2 + $0x98] sm:$0xff] %vm4789, %v5983
  %7098 = vst.msk [vmem:[#allocation2 + $0xb0] sm:$0xff] %vm4789, %v5985
  %7099 = vst.msk [vmem:[#allocation2 + $0xc8] sm:$0xff] %vm4789, %v5988
  %7100 = vst.msk [vmem:[#allocation2 + $0xe0] sm:$0xff] %vm4789, %v5990
  %7101 = vst.msk [vmem:[#allocation2 + $0xf8] sm:$0xff] %vm4789, %v5993
  %7102 = vst.msk [vmem:[#allocation2 + $0x110] sm:$0xff] %vm4789, %v5995
  %7103 = vst.msk [vmem:[#allocation2 + $0x128] sm:$0xff] %vm4789, %v5998
  %7104 = vst.msk [vmem:[#allocation2 + $0x140] sm:$0xff] %vm4789, %v6000
  %7105 = vst.msk [vmem:[#allocation2 + $0x158] sm:$0xff] %vm4789, %v6003
  %7106 = vst.msk [vmem:[#allocation2 + $0x170] sm:$0xff] %vm4789, %v6005
  %7107 = vst.msk [vmem:[#allocation2 + $0x188] sm:$0xff] %vm4789, %v6008
  %7108 = vst.msk [vmem:[#allocation2 + $0x1a0] sm:$0xff] %vm4789, %v6010
  %7109 = vst.msk [vmem:[#allocation2 + $0x1b8] sm:$0xff] %vm4789, %v6013
  %7110 = vst.msk [vmem:[#allocation2 + $0x1d0] sm:$0xff] %vm4789, %v6015
  %7111 = vst.msk [vmem:[#allocation2 + $0x1e8] sm:$0xff] %vm4789, %v6018
  %7112 = vst.msk [vmem:[#allocation2 + $0x200] sm:$0xff] %vm4789, %v6020
  %7113 = vst.msk [vmem:[#allocation2 + $0x218] sm:$0xff] %vm4789, %v6023
  %7114 = vst.msk [vmem:[#allocation2 + $0x230] sm:$0xff] %vm4789, %v6025
  %7115 = vst.msk [vmem:[#allocation2 + $0x248] sm:$0xff] %vm4789, %v6028
  %7116 = vst.msk [vmem:[#allocation2 + $0x260] sm:$0xff] %vm4789, %v6030
  %7117 = vst.msk [vmem:[#allocation2 + $0x278] sm:$0xff] %vm4789, %v6033
  %7118 = vst.msk [vmem:[#allocation2 + $0x290] sm:$0xff] %vm4789, %v6035
  %7119 = vst.msk [vmem:[#allocation2 + $0x2a8] sm:$0xff] %vm4789, %v6038
  %7120 = vst.msk [vmem:[#allocation2 + $0x2c0] sm:$0xff] %vm4789, %v6040
  %7121 = vst.msk [vmem:[#allocation2 + $0x2d8] sm:$0xff] %vm4789, %v7019
  %7122 = vst.msk [vmem:[#allocation2 + $0x2f0] sm:$0xff] %vm4789, %v7021
  %7123 = vst.msk [vmem:[#allocation2 + $0x308] sm:$0xff] %vm4789, %v6043
  %7124 = vst.msk [vmem:[#allocation2 + $0x320] sm:$0xff] %vm4789, %v6045
  %7125 = vst.msk [vmem:[#allocation2 + $0x338] sm:$0xff] %vm4789, %v6048
  %7126 = vst.msk [vmem:[#allocation2 + $0x350] sm:$0xff] %vm4789, %v6050
  %7127 = vst.msk [vmem:[#allocation2 + $0x368] sm:$0xff] %vm4789, %v6053
  %7128 = vst.msk [vmem:[#allocation2 + $0x380] sm:$0xff] %vm4789, %v6055
  %7129 = vst.msk [vmem:[#allocation2 + $0x398] sm:$0xff] %vm4789, %v6058
  %7130 = vst.msk [vmem:[#allocation2 + $0x3b0] sm:$0xff] %vm4789, %v6060
  %7131 = vst.msk [vmem:[#allocation2 + $0x3c8] sm:$0xff] %vm4789, %v6063
  %7132 = vst.msk [vmem:[#allocation2 + $0x3e0] sm:$0xff] %vm4789, %v6065
  %7133 = vst.msk [vmem:[#allocation2 + $0x3f8] sm:$0xff] %vm4789, %v6068
  %7134 = vst.msk [vmem:[#allocation2 + $0x410] sm:$0xff] %vm4789, %v6070
  %7135 = vst.msk [vmem:[#allocation2 + $0x428] sm:$0xff] %vm4789, %v6073
  %7136 = vst.msk [vmem:[#allocation2 + $0x440] sm:$0xff] %vm4789, %v6075
  %7137 = vst.msk [vmem:[#allocation2 + $0x458] sm:$0xff] %vm4789, %v6078
  %7138 = vst.msk [vmem:[#allocation2 + $0x470] sm:$0xff] %vm4789, %v6080
  %7139 = vst.msk [vmem:[#allocation2 + $0x488] sm:$0xff] %vm4789, %v6083
  %7140 = vst.msk [vmem:[#allocation2 + $0x4a0] sm:$0xff] %vm4789, %v6085
  %7141 = vst.msk [vmem:[#allocation2 + $0x4b8] sm:$0xff] %vm4789, %v6088
  %7142 = vst.msk [vmem:[#allocation2 + $0x4d0] sm:$0xff] %vm4789, %v6090
  %7143 = vst.msk [vmem:[#allocation2 + $0x4e8] sm:$0xff] %vm4789, %v6093
  %7144 = vst.msk [vmem:[#allocation2 + $0x500] sm:$0xff] %vm4789, %v6095
  %7145 = vst.msk [vmem:[#allocation2 + $0x518] sm:$0xff] %vm4789, %v6098
  %7146 = vst.msk [vmem:[#allocation2 + $0x530] sm:$0xff] %vm4789, %v6100
  %7147 = vst.msk [vmem:[#allocation2 + $0x548] sm:$0xff] %vm4789, %v6103
  %7148 = vst.msk [vmem:[#allocation2 + $0x560] sm:$0xff] %vm4789, %v6105
  %7149 = vst.msk [vmem:[#allocation2 + $0x578] sm:$0xff] %vm4789, %v6108
  %7150 = vst.msk [vmem:[#allocation2 + $0x590] sm:$0xff] %vm4789, %v6110
  %7151 = vst.msk [vmem:[#allocation2 + $0x5a8] sm:$0xff] %vm4789, %v6113
  %7152 = vst.msk [vmem:[#allocation2 + $0x5c0] sm:$0xff] %vm4789, %v6115
  %7153 = vst.msk [vmem:[#allocation2 + $0x5d8] sm:$0xff] %vm4789, %v7024
  %7154 = vst.msk [vmem:[#allocation2 + $0x5f0] sm:$0xff] %vm4789, %v7026
  %v7155 = vrot.slane %v5793, 2
  %v7156 = vrot.slane %v5635, 2
  %v7157 = vsel %vm2523, %v7155, %v7156
  %v7158 = vrot.slane %v5825, 2
  %v7159 = vsel %vm2523, %v7156, %v7158
  %v7160 = vrot.slane %v5809, 2
  %v7161 = vrot.slane %v5683, 2
  %v7162 = vsel %vm2523, %v7160, %v7161
  %v7163 = vrot.slane %v5841, 2
  %v7164 = vsel %vm2523, %v7161, %v7163
  %7165 = vrot.lane.b32.xlu0 %v6363, 32
  %v7166 = vpop.permute.xlu0 %7165
  %7167 = vrot.lane.b32.xlu0 %v6365, 32
  %v7168 = vpop.permute.xlu0 %7167
  %7169 = vrot.lane.b32.xlu0 %v6368, 32
  %v7170 = vpop.permute.xlu0 %7169
  %7171 = vrot.lane.b32.xlu0 %v6370, 32
  %v7172 = vpop.permute.xlu0 %7171
  %7173 = vrot.lane.b32.xlu0 %v6373, 32
  %v7174 = vpop.permute.xlu0 %7173
  %7175 = vrot.lane.b32.xlu0 %v6375, 32
  %v7176 = vpop.permute.xlu0 %7175
  %7177 = vrot.lane.b32.xlu0 %v6378, 32
  %v7178 = vpop.permute.xlu0 %7177
  %7179 = vrot.lane.b32.xlu0 %v6380, 32
  %v7180 = vpop.permute.xlu0 %7179
  %7181 = vrot.lane.b32.xlu0 %v6383, 32
  %v7182 = vpop.permute.xlu0 %7181
  %7183 = vrot.lane.b32.xlu0 %v6385, 32
  %v7184 = vpop.permute.xlu0 %7183
  %7185 = vrot.lane.b32.xlu0 %v6388, 32
  %v7186 = vpop.permute.xlu0 %7185
  %7187 = vrot.lane.b32.xlu0 %v6390, 32
  %v7188 = vpop.permute.xlu0 %7187
  %7189 = vrot.lane.b32.xlu0 %v6393, 32
  %v7190 = vpop.permute.xlu0 %7189
  %7191 = vrot.lane.b32.xlu0 %v6395, 32
  %v7192 = vpop.permute.xlu0 %7191
  %7193 = vrot.lane.b32.xlu0 %v6398, 32
  %v7194 = vpop.permute.xlu0 %7193
  %7195 = vrot.lane.b32.xlu0 %v6400, 32
  %v7196 = vpop.permute.xlu0 %7195
  %7197 = vrot.lane.b32.xlu0 %v6403, 32
  %v7198 = vpop.permute.xlu0 %7197
  %7199 = vrot.lane.b32.xlu0 %v6405, 32
  %v7200 = vpop.permute.xlu0 %7199
  %7201 = vrot.lane.b32.xlu0 %v6408, 32
  %v7202 = vpop.permute.xlu0 %7201
  %7203 = vrot.lane.b32.xlu0 %v6410, 32
  %v7204 = vpop.permute.xlu0 %7203
  %7205 = vrot.lane.b32.xlu0 %v6413, 32
  %v7206 = vpop.permute.xlu0 %7205
  %7207 = vrot.lane.b32.xlu0 %v6415, 32
  %v7208 = vpop.permute.xlu0 %7207
  %7209 = vrot.lane.b32.xlu0 %v6418, 32
  %v7210 = vpop.permute.xlu0 %7209
  %7211 = vrot.lane.b32.xlu0 %v6420, 32
  %v7212 = vpop.permute.xlu0 %7211
  %7213 = vrot.lane.b32.xlu0 %v6423, 32
  %v7214 = vpop.permute.xlu0 %7213
  %7215 = vrot.lane.b32.xlu0 %v6425, 32
  %v7216 = vpop.permute.xlu0 %7215
  %7217 = vrot.lane.b32.xlu0 %v6428, 32
  %v7218 = vpop.permute.xlu0 %7217
  %7219 = vrot.lane.b32.xlu0 %v6430, 32
  %v7220 = vpop.permute.xlu0 %7219
  %7221 = vrot.lane.b32.xlu0 %v6433, 32
  %v7222 = vpop.permute.xlu0 %7221
  %7223 = vrot.lane.b32.xlu0 %v6435, 32
  %v7224 = vpop.permute.xlu0 %7223
  %7225 = vrot.lane.b32.xlu0 %v7157, 32
  %v7226 = vpop.permute.xlu0 %7225
  %7227 = vrot.lane.b32.xlu0 %v7159, 32
  %v7228 = vpop.permute.xlu0 %7227
  %7229 = vrot.lane.b32.xlu0 %v6438, 32
  %v7230 = vpop.permute.xlu0 %7229
  %7231 = vrot.lane.b32.xlu0 %v6440, 32
  %v7232 = vpop.permute.xlu0 %7231
  %7233 = vrot.lane.b32.xlu0 %v6443, 32
  %v7234 = vpop.permute.xlu0 %7233
  %7235 = vrot.lane.b32.xlu0 %v6445, 32
  %v7236 = vpop.permute.xlu0 %7235
  %7237 = vrot.lane.b32.xlu0 %v6448, 32
  %v7238 = vpop.permute.xlu0 %7237
  %7239 = vrot.lane.b32.xlu0 %v6450, 32
  %v7240 = vpop.permute.xlu0 %7239
  %7241 = vrot.lane.b32.xlu0 %v6453, 32
  %v7242 = vpop.permute.xlu0 %7241
  %7243 = vrot.lane.b32.xlu0 %v6455, 32
  %v7244 = vpop.permute.xlu0 %7243
  %7245 = vrot.lane.b32.xlu0 %v6458, 32
  %v7246 = vpop.permute.xlu0 %7245
  %7247 = vrot.lane.b32.xlu0 %v6460, 32
  %v7248 = vpop.permute.xlu0 %7247
  %7249 = vrot.lane.b32.xlu0 %v6463, 32
  %v7250 = vpop.permute.xlu0 %7249
  %7251 = vrot.lane.b32.xlu0 %v6465, 32
  %v7252 = vpop.permute.xlu0 %7251
  %7253 = vrot.lane.b32.xlu0 %v6468, 32
  %v7254 = vpop.permute.xlu0 %7253
  %7255 = vrot.lane.b32.xlu0 %v6470, 32
  %v7256 = vpop.permute.xlu0 %7255
  %7257 = vrot.lane.b32.xlu0 %v6473, 32
  %v7258 = vpop.permute.xlu0 %7257
  %7259 = vrot.lane.b32.xlu0 %v6475, 32
  %v7260 = vpop.permute.xlu0 %7259
  %7261 = vrot.lane.b32.xlu0 %v6478, 32
  %v7262 = vpop.permute.xlu0 %7261
  %7263 = vrot.lane.b32.xlu0 %v6480, 32
  %v7264 = vpop.permute.xlu0 %7263
  %7265 = vrot.lane.b32.xlu0 %v6483, 32
  %v7266 = vpop.permute.xlu0 %7265
  %7267 = vrot.lane.b32.xlu0 %v6485, 32
  %v7268 = vpop.permute.xlu0 %7267
  %7269 = vrot.lane.b32.xlu0 %v6488, 32
  %v7270 = vpop.permute.xlu0 %7269
  %7271 = vrot.lane.b32.xlu0 %v6490, 32
  %v7272 = vpop.permute.xlu0 %7271
  %7273 = vrot.lane.b32.xlu0 %v6493, 32
  %v7274 = vpop.permute.xlu0 %7273
  %7275 = vrot.lane.b32.xlu0 %v6495, 32
  %v7276 = vpop.permute.xlu0 %7275
  %7277 = vrot.lane.b32.xlu0 %v6498, 32
  %v7278 = vpop.permute.xlu0 %7277
  %7279 = vrot.lane.b32.xlu0 %v6500, 32
  %v7280 = vpop.permute.xlu0 %7279
  %7281 = vrot.lane.b32.xlu0 %v6503, 32
  %v7282 = vpop.permute.xlu0 %7281
  %7283 = vrot.lane.b32.xlu0 %v6505, 32
  %v7284 = vpop.permute.xlu0 %7283
  %7285 = vrot.lane.b32.xlu0 %v6508, 32
  %v7286 = vpop.permute.xlu0 %7285
  %7287 = vrot.lane.b32.xlu0 %v6510, 32
  %v7288 = vpop.permute.xlu0 %7287
  %7289 = vrot.lane.b32.xlu0 %v7162, 32
  %v7290 = vpop.permute.xlu0 %7289
  %7291 = vrot.lane.b32.xlu0 %v7164, 32
  %v7292 = vpop.permute.xlu0 %7291
  %7357 = vst.msk [vmem:[#allocation2 + $0x8] sm:$0xff] %vm6296, %v7166
  %7358 = vst.msk [vmem:[#allocation2 + $0x20] sm:$0xff] %vm6296, %v7168
  %7359 = vst.msk [vmem:[#allocation2 + $0x38] sm:$0xff] %vm6296, %v7170
  %7360 = vst.msk [vmem:[#allocation2 + $0x50] sm:$0xff] %vm6296, %v7172
  %7361 = vst.msk [vmem:[#allocation2 + $0x68] sm:$0xff] %vm6296, %v7174
  %7362 = vst.msk [vmem:[#allocation2 + $0x80] sm:$0xff] %vm6296, %v7176
  %7363 = vst.msk [vmem:[#allocation2 + $0x98] sm:$0xff] %vm6296, %v7178
  %7364 = vst.msk [vmem:[#allocation2 + $0xb0] sm:$0xff] %vm6296, %v7180
  %7365 = vst.msk [vmem:[#allocation2 + $0xc8] sm:$0xff] %vm6296, %v7182
  %7366 = vst.msk [vmem:[#allocation2 + $0xe0] sm:$0xff] %vm6296, %v7184
  %7367 = vst.msk [vmem:[#allocation2 + $0xf8] sm:$0xff] %vm6296, %v7186
  %7368 = vst.msk [vmem:[#allocation2 + $0x110] sm:$0xff] %vm6296, %v7188
  %7369 = vst.msk [vmem:[#allocation2 + $0x128] sm:$0xff] %vm6296, %v7190
  %7370 = vst.msk [vmem:[#allocation2 + $0x140] sm:$0xff] %vm6296, %v7192
  %7371 = vst.msk [vmem:[#allocation2 + $0x158] sm:$0xff] %vm6296, %v7194
  %7372 = vst.msk [vmem:[#allocation2 + $0x170] sm:$0xff] %vm6296, %v7196
  %7373 = vst.msk [vmem:[#allocation2 + $0x188] sm:$0xff] %vm6296, %v7198
  %7374 = vst.msk [vmem:[#allocation2 + $0x1a0] sm:$0xff] %vm6296, %v7200
  %7375 = vst.msk [vmem:[#allocation2 + $0x1b8] sm:$0xff] %vm6296, %v7202
  %7376 = vst.msk [vmem:[#allocation2 + $0x1d0] sm:$0xff] %vm6296, %v7204
  %7377 = vst.msk [vmem:[#allocation2 + $0x1e8] sm:$0xff] %vm6296, %v7206
  %7378 = vst.msk [vmem:[#allocation2 + $0x200] sm:$0xff] %vm6296, %v7208
  %7379 = vst.msk [vmem:[#allocation2 + $0x218] sm:$0xff] %vm6296, %v7210
  %7380 = vst.msk [vmem:[#allocation2 + $0x230] sm:$0xff] %vm6296, %v7212
  %7381 = vst.msk [vmem:[#allocation2 + $0x248] sm:$0xff] %vm6296, %v7214
  %7382 = vst.msk [vmem:[#allocation2 + $0x260] sm:$0xff] %vm6296, %v7216
  %7383 = vst.msk [vmem:[#allocation2 + $0x278] sm:$0xff] %vm6296, %v7218
  %7384 = vst.msk [vmem:[#allocation2 + $0x290] sm:$0xff] %vm6296, %v7220
  %7385 = vst.msk [vmem:[#allocation2 + $0x2a8] sm:$0xff] %vm6296, %v7222
  %7386 = vst.msk [vmem:[#allocation2 + $0x2c0] sm:$0xff] %vm6296, %v7224
  %7387 = vst.msk [vmem:[#allocation2 + $0x2d8] sm:$0xff] %vm6296, %v7226
  %7388 = vst.msk [vmem:[#allocation2 + $0x2f0] sm:$0xff] %vm6296, %v7228
  %7389 = vst.msk [vmem:[#allocation2 + $0x308] sm:$0xff] %vm6296, %v7230
  %7390 = vst.msk [vmem:[#allocation2 + $0x320] sm:$0xff] %vm6296, %v7232
  %7391 = vst.msk [vmem:[#allocation2 + $0x338] sm:$0xff] %vm6296, %v7234
  %7392 = vst.msk [vmem:[#allocation2 + $0x350] sm:$0xff] %vm6296, %v7236
  %7393 = vst.msk [vmem:[#allocation2 + $0x368] sm:$0xff] %vm6296, %v7238
  %7394 = vst.msk [vmem:[#allocation2 + $0x380] sm:$0xff] %vm6296, %v7240
  %7395 = vst.msk [vmem:[#allocation2 + $0x398] sm:$0xff] %vm6296, %v7242
  %7396 = vst.msk [vmem:[#allocation2 + $0x3b0] sm:$0xff] %vm6296, %v7244
  %7397 = vst.msk [vmem:[#allocation2 + $0x3c8] sm:$0xff] %vm6296, %v7246
  %7398 = vst.msk [vmem:[#allocation2 + $0x3e0] sm:$0xff] %vm6296, %v7248
  %7399 = vst.msk [vmem:[#allocation2 + $0x3f8] sm:$0xff] %vm6296, %v7250
  %7400 = vst.msk [vmem:[#allocation2 + $0x410] sm:$0xff] %vm6296, %v7252
  %7401 = vst.msk [vmem:[#allocation2 + $0x428] sm:$0xff] %vm6296, %v7254
  %7402 = vst.msk [vmem:[#allocation2 + $0x440] sm:$0xff] %vm6296, %v7256
  %7403 = vst.msk [vmem:[#allocation2 + $0x458] sm:$0xff] %vm6296, %v7258
  %7404 = vst.msk [vmem:[#allocation2 + $0x470] sm:$0xff] %vm6296, %v7260
  %7405 = vst.msk [vmem:[#allocation2 + $0x488] sm:$0xff] %vm6296, %v7262
  %7406 = vst.msk [vmem:[#allocation2 + $0x4a0] sm:$0xff] %vm6296, %v7264
  %7407 = vst.msk [vmem:[#allocation2 + $0x4b8] sm:$0xff] %vm6296, %v7266
  %7408 = vst.msk [vmem:[#allocation2 + $0x4d0] sm:$0xff] %vm6296, %v7268
  %7409 = vst.msk [vmem:[#allocation2 + $0x4e8] sm:$0xff] %vm6296, %v7270
  %7410 = vst.msk [vmem:[#allocation2 + $0x500] sm:$0xff] %vm6296, %v7272
  %7411 = vst.msk [vmem:[#allocation2 + $0x518] sm:$0xff] %vm6296, %v7274
  %7412 = vst.msk [vmem:[#allocation2 + $0x530] sm:$0xff] %vm6296, %v7276
  %7413 = vst.msk [vmem:[#allocation2 + $0x548] sm:$0xff] %vm6296, %v7278
  %7414 = vst.msk [vmem:[#allocation2 + $0x560] sm:$0xff] %vm6296, %v7280
  %7415 = vst.msk [vmem:[#allocation2 + $0x578] sm:$0xff] %vm6296, %v7282
  %7416 = vst.msk [vmem:[#allocation2 + $0x590] sm:$0xff] %vm6296, %v7284
  %7417 = vst.msk [vmem:[#allocation2 + $0x5a8] sm:$0xff] %vm6296, %v7286
  %7418 = vst.msk [vmem:[#allocation2 + $0x5c0] sm:$0xff] %vm6296, %v7288
  %7419 = vst.msk [vmem:[#allocation2 + $0x5d8] sm:$0xff] %vm6296, %v7290
  %7420 = vst.msk [vmem:[#allocation2 + $0x5f0] sm:$0xff] %vm6296, %v7292
  %7421 = vrot.lane.b32.xlu0 %v5779, 64
  %v7422 = vpop.permute.xlu0 %7421
  %7423 = vrot.lane.b32.xlu0 %v5593, 64
  %v7424 = vpop.permute.xlu0 %7423
  %7425 = vrot.lane.b32.xlu0 %v5780, 64
  %v7426 = vpop.permute.xlu0 %7425
  %7427 = vrot.lane.b32.xlu0 %v5596, 64
  %v7428 = vpop.permute.xlu0 %7427
  %7429 = vrot.lane.b32.xlu0 %v5781, 64
  %v7430 = vpop.permute.xlu0 %7429
  %7431 = vrot.lane.b32.xlu0 %v5599, 64
  %v7432 = vpop.permute.xlu0 %7431
  %7433 = vrot.lane.b32.xlu0 %v5782, 64
  %v7434 = vpop.permute.xlu0 %7433
  %7435 = vrot.lane.b32.xlu0 %v5602, 64
  %v7436 = vpop.permute.xlu0 %7435
  %7437 = vrot.lane.b32.xlu0 %v5783, 64
  %v7438 = vpop.permute.xlu0 %7437
  %7439 = vrot.lane.b32.xlu0 %v5605, 64
  %v7440 = vpop.permute.xlu0 %7439
  %7441 = vrot.lane.b32.xlu0 %v5784, 64
  %v7442 = vpop.permute.xlu0 %7441
  %7443 = vrot.lane.b32.xlu0 %v5608, 64
  %v7444 = vpop.permute.xlu0 %7443
  %7445 = vrot.lane.b32.xlu0 %v5785, 64
  %v7446 = vpop.permute.xlu0 %7445
  %7447 = vrot.lane.b32.xlu0 %v5611, 64
  %v7448 = vpop.permute.xlu0 %7447
  %7449 = vrot.lane.b32.xlu0 %v5786, 64
  %v7450 = vpop.permute.xlu0 %7449
  %7451 = vrot.lane.b32.xlu0 %v5614, 64
  %v7452 = vpop.permute.xlu0 %7451
  %7453 = vrot.lane.b32.xlu0 %v5787, 64
  %v7454 = vpop.permute.xlu0 %7453
  %7455 = vrot.lane.b32.xlu0 %v5617, 64
  %v7456 = vpop.permute.xlu0 %7455
  %7457 = vrot.lane.b32.xlu0 %v5788, 64
  %v7458 = vpop.permute.xlu0 %7457
  %7459 = vrot.lane.b32.xlu0 %v5620, 64
  %v7460 = vpop.permute.xlu0 %7459
  %7461 = vrot.lane.b32.xlu0 %v5789, 64
  %v7462 = vpop.permute.xlu0 %7461
  %7463 = vrot.lane.b32.xlu0 %v5623, 64
  %v7464 = vpop.permute.xlu0 %7463
  %7465 = vrot.lane.b32.xlu0 %v5790, 64
  %v7466 = vpop.permute.xlu0 %7465
  %7467 = vrot.lane.b32.xlu0 %v5626, 64
  %v7468 = vpop.permute.xlu0 %7467
  %7469 = vrot.lane.b32.xlu0 %v5791, 64
  %v7470 = vpop.permute.xlu0 %7469
  %7471 = vrot.lane.b32.xlu0 %v5629, 64
  %v7472 = vpop.permute.xlu0 %7471
  %7473 = vrot.lane.b32.xlu0 %v5792, 64
  %v7474 = vpop.permute.xlu0 %7473
  %7475 = vrot.lane.b32.xlu0 %v5632, 64
  %v7476 = vpop.permute.xlu0 %7475
  %7477 = vrot.lane.b32.xlu0 %v5793, 64
  %v7478 = vpop.permute.xlu0 %7477
  %7479 = vrot.lane.b32.xlu0 %v5635, 64
  %v7480 = vpop.permute.xlu0 %7479
  %7481 = vrot.lane.b32.xlu0 %v5795, 64
  %v7482 = vpop.permute.xlu0 %7481
  %7483 = vrot.lane.b32.xlu0 %v5641, 64
  %v7484 = vpop.permute.xlu0 %7483
  %7485 = vrot.lane.b32.xlu0 %v5796, 64
  %v7486 = vpop.permute.xlu0 %7485
  %7487 = vrot.lane.b32.xlu0 %v5644, 64
  %v7488 = vpop.permute.xlu0 %7487
  %7489 = vrot.lane.b32.xlu0 %v5797, 64
  %v7490 = vpop.permute.xlu0 %7489
  %7491 = vrot.lane.b32.xlu0 %v5647, 64
  %v7492 = vpop.permute.xlu0 %7491
  %7493 = vrot.lane.b32.xlu0 %v5798, 64
  %v7494 = vpop.permute.xlu0 %7493
  %7495 = vrot.lane.b32.xlu0 %v5650, 64
  %v7496 = vpop.permute.xlu0 %7495
  %7497 = vrot.lane.b32.xlu0 %v5799, 64
  %v7498 = vpop.permute.xlu0 %7497
  %7499 = vrot.lane.b32.xlu0 %v5653, 64
  %v7500 = vpop.permute.xlu0 %7499
  %7501 = vrot.lane.b32.xlu0 %v5800, 64
  %v7502 = vpop.permute.xlu0 %7501
  %7503 = vrot.lane.b32.xlu0 %v5656, 64
  %v7504 = vpop.permute.xlu0 %7503
  %7505 = vrot.lane.b32.xlu0 %v5801, 64
  %v7506 = vpop.permute.xlu0 %7505
  %7507 = vrot.lane.b32.xlu0 %v5659, 64
  %v7508 = vpop.permute.xlu0 %7507
  %7509 = vrot.lane.b32.xlu0 %v5802, 64
  %v7510 = vpop.permute.xlu0 %7509
  %7511 = vrot.lane.b32.xlu0 %v5662, 64
  %v7512 = vpop.permute.xlu0 %7511
  %7513 = vrot.lane.b32.xlu0 %v5803, 64
  %v7514 = vpop.permute.xlu0 %7513
  %7515 = vrot.lane.b32.xlu0 %v5665, 64
  %v7516 = vpop.permute.xlu0 %7515
  %7517 = vrot.lane.b32.xlu0 %v5804, 64
  %v7518 = vpop.permute.xlu0 %7517
  %7519 = vrot.lane.b32.xlu0 %v5668, 64
  %v7520 = vpop.permute.xlu0 %7519
  %7521 = vrot.lane.b32.xlu0 %v5805, 64
  %v7522 = vpop.permute.xlu0 %7521
  %7523 = vrot.lane.b32.xlu0 %v5671, 64
  %v7524 = vpop.permute.xlu0 %7523
  %7525 = vrot.lane.b32.xlu0 %v5806, 64
  %v7526 = vpop.permute.xlu0 %7525
  %7527 = vrot.lane.b32.xlu0 %v5674, 64
  %v7528 = vpop.permute.xlu0 %7527
  %7529 = vrot.lane.b32.xlu0 %v5807, 64
  %v7530 = vpop.permute.xlu0 %7529
  %7531 = vrot.lane.b32.xlu0 %v5677, 64
  %v7532 = vpop.permute.xlu0 %7531
  %7533 = vrot.lane.b32.xlu0 %v5808, 64
  %v7534 = vpop.permute.xlu0 %7533
  %7535 = vrot.lane.b32.xlu0 %v5680, 64
  %v7536 = vpop.permute.xlu0 %7535
  %7537 = vrot.lane.b32.xlu0 %v5809, 64
  %v7538 = vpop.permute.xlu0 %7537
  %7539 = vrot.lane.b32.xlu0 %v5683, 64
  %v7540 = vpop.permute.xlu0 %7539
  %7601 = vst.msk [vmem:[#allocation2 + $0x8] sm:$0xff] %vm6691, %v7422
  %7602 = vst.msk [vmem:[#allocation2 + $0x20] sm:$0xff] %vm6691, %v7424
  %7603 = vst.msk [vmem:[#allocation2 + $0x38] sm:$0xff] %vm6691, %v7426
  %7604 = vst.msk [vmem:[#allocation2 + $0x50] sm:$0xff] %vm6691, %v7428
  %7605 = vst.msk [vmem:[#allocation2 + $0x68] sm:$0xff] %vm6691, %v7430
  %7606 = vst.msk [vmem:[#allocation2 + $0x80] sm:$0xff] %vm6691, %v7432
  %7607 = vst.msk [vmem:[#allocation2 + $0x98] sm:$0xff] %vm6691, %v7434
  %7608 = vst.msk [vmem:[#allocation2 + $0xb0] sm:$0xff] %vm6691, %v7436
  %7609 = vst.msk [vmem:[#allocation2 + $0xc8] sm:$0xff] %vm6691, %v7438
  %7610 = vst.msk [vmem:[#allocation2 + $0xe0] sm:$0xff] %vm6691, %v7440
  %7611 = vst.msk [vmem:[#allocation2 + $0xf8] sm:$0xff] %vm6691, %v7442
  %7612 = vst.msk [vmem:[#allocation2 + $0x110] sm:$0xff] %vm6691, %v7444
  %7613 = vst.msk [vmem:[#allocation2 + $0x128] sm:$0xff] %vm6691, %v7446
  %7614 = vst.msk [vmem:[#allocation2 + $0x140] sm:$0xff] %vm6691, %v7448
  %7615 = vst.msk [vmem:[#allocation2 + $0x158] sm:$0xff] %vm6691, %v7450
  %7616 = vst.msk [vmem:[#allocation2 + $0x170] sm:$0xff] %vm6691, %v7452
  %7617 = vst.msk [vmem:[#allocation2 + $0x188] sm:$0xff] %vm6691, %v7454
  %7618 = vst.msk [vmem:[#allocation2 + $0x1a0] sm:$0xff] %vm6691, %v7456
  %7619 = vst.msk [vmem:[#allocation2 + $0x1b8] sm:$0xff] %vm6691, %v7458
  %7620 = vst.msk [vmem:[#allocation2 + $0x1d0] sm:$0xff] %vm6691, %v7460
  %7621 = vst.msk [vmem:[#allocation2 + $0x1e8] sm:$0xff] %vm6691, %v7462
  %7622 = vst.msk [vmem:[#allocation2 + $0x200] sm:$0xff] %vm6691, %v7464
  %7623 = vst.msk [vmem:[#allocation2 + $0x218] sm:$0xff] %vm6691, %v7466
  %7624 = vst.msk [vmem:[#allocation2 + $0x230] sm:$0xff] %vm6691, %v7468
  %7625 = vst.msk [vmem:[#allocation2 + $0x248] sm:$0xff] %vm6691, %v7470
  %7626 = vst.msk [vmem:[#allocation2 + $0x260] sm:$0xff] %vm6691, %v7472
  %7627 = vst.msk [vmem:[#allocation2 + $0x278] sm:$0xff] %vm6691, %v7474
  %7628 = vst.msk [vmem:[#allocation2 + $0x290] sm:$0xff] %vm6691, %v7476
  %7629 = vst.msk [vmem:[#allocation2 + $0x2a8] sm:$0xff] %vm6691, %v7478
  %7630 = vst.msk [vmem:[#allocation2 + $0x2c0] sm:$0xff] %vm6691, %v7480
  %7631 = vst.msk [vmem:[#allocation2 + $0x2d8] sm:$0xff] %vm6691, %v4014
  %7632 = vst.msk [vmem:[#allocation2 + $0x2f0] sm:$0xff] %vm6691, %v4016
  %7633 = vst.msk [vmem:[#allocation2 + $0x308] sm:$0xff] %vm6691, %v7482
  %7634 = vst.msk [vmem:[#allocation2 + $0x320] sm:$0xff] %vm6691, %v7484
  %7635 = vst.msk [vmem:[#allocation2 + $0x338] sm:$0xff] %vm6691, %v7486
  %7636 = vst.msk [vmem:[#allocation2 + $0x350] sm:$0xff] %vm6691, %v7488
  %7637 = vst.msk [vmem:[#allocation2 + $0x368] sm:$0xff] %vm6691, %v7490
  %7638 = vst.msk [vmem:[#allocation2 + $0x380] sm:$0xff] %vm6691, %v7492
  %7639 = vst.msk [vmem:[#allocation2 + $0x398] sm:$0xff] %vm6691, %v7494
  %7640 = vst.msk [vmem:[#allocation2 + $0x3b0] sm:$0xff] %vm6691, %v7496
  %7641 = vst.msk [vmem:[#allocation2 + $0x3c8] sm:$0xff] %vm6691, %v7498
  %7642 = vst.msk [vmem:[#allocation2 + $0x3e0] sm:$0xff] %vm6691, %v7500
  %7643 = vst.msk [vmem:[#allocation2 + $0x3f8] sm:$0xff] %vm6691, %v7502
  %7644 = vst.msk [vmem:[#allocation2 + $0x410] sm:$0xff] %vm6691, %v7504
  %7645 = vst.msk [vmem:[#allocation2 + $0x428] sm:$0xff] %vm6691, %v7506
  %7646 = vst.msk [vmem:[#allocation2 + $0x440] sm:$0xff] %vm6691, %v7508
  %7647 = vst.msk [vmem:[#allocation2 + $0x458] sm:$0xff] %vm6691, %v7510
  %7648 = vst.msk [vmem:[#allocation2 + $0x470] sm:$0xff] %vm6691, %v7512
  %7649 = vst.msk [vmem:[#allocation2 + $0x488] sm:$0xff] %vm6691, %v7514
  %7650 = vst.msk [vmem:[#allocation2 + $0x4a0] sm:$0xff] %vm6691, %v7516
  %7651 = vst.msk [vmem:[#allocation2 + $0x4b8] sm:$0xff] %vm6691, %v7518
  %7652 = vst.msk [vmem:[#allocation2 + $0x4d0] sm:$0xff] %vm6691, %v7520
  %7653 = vst.msk [vmem:[#allocation2 + $0x4e8] sm:$0xff] %vm6691, %v7522
  %7654 = vst.msk [vmem:[#allocation2 + $0x500] sm:$0xff] %vm6691, %v7524
  %7655 = vst.msk [vmem:[#allocation2 + $0x518] sm:$0xff] %vm6691, %v7526
  %7656 = vst.msk [vmem:[#allocation2 + $0x530] sm:$0xff] %vm6691, %v7528
  %7657 = vst.msk [vmem:[#allocation2 + $0x548] sm:$0xff] %vm6691, %v7530
  %7658 = vst.msk [vmem:[#allocation2 + $0x560] sm:$0xff] %vm6691, %v7532
  %7659 = vst.msk [vmem:[#allocation2 + $0x578] sm:$0xff] %vm6691, %v7534
  %7660 = vst.msk [vmem:[#allocation2 + $0x590] sm:$0xff] %vm6691, %v7536
  %7661 = vst.msk [vmem:[#allocation2 + $0x5a8] sm:$0xff] %vm6691, %v7538
  %7662 = vst.msk [vmem:[#allocation2 + $0x5c0] sm:$0xff] %vm6691, %v7540
  %7663 = vst.msk [vmem:[#allocation2 + $0x5d8] sm:$0xff] %vm6691, %v4014
  %7664 = vst.msk [vmem:[#allocation2 + $0x5f0] sm:$0xff] %vm6691, %v4016
  %7665 = vrot.lane.b32.xlu0 %v5973, 96
  %v7666 = vpop.permute.xlu0 %7665
  %7667 = vrot.lane.b32.xlu0 %v5975, 96
  %v7668 = vpop.permute.xlu0 %7667
  %7669 = vrot.lane.b32.xlu0 %v5978, 96
  %v7670 = vpop.permute.xlu0 %7669
  %7671 = vrot.lane.b32.xlu0 %v5980, 96
  %v7672 = vpop.permute.xlu0 %7671
  %7673 = vrot.lane.b32.xlu0 %v5983, 96
  %v7674 = vpop.permute.xlu0 %7673
  %7675 = vrot.lane.b32.xlu0 %v5985, 96
  %v7676 = vpop.permute.xlu0 %7675
  %7677 = vrot.lane.b32.xlu0 %v5988, 96
  %v7678 = vpop.permute.xlu0 %7677
  %7679 = vrot.lane.b32.xlu0 %v5990, 96
  %v7680 = vpop.permute.xlu0 %7679
  %7681 = vrot.lane.b32.xlu0 %v5993, 96
  %v7682 = vpop.permute.xlu0 %7681
  %7683 = vrot.lane.b32.xlu0 %v5995, 96
  %v7684 = vpop.permute.xlu0 %7683
  %7685 = vrot.lane.b32.xlu0 %v5998, 96
  %v7686 = vpop.permute.xlu0 %7685
  %7687 = vrot.lane.b32.xlu0 %v6000, 96
  %v7688 = vpop.permute.xlu0 %7687
  %7689 = vrot.lane.b32.xlu0 %v6003, 96
  %v7690 = vpop.permute.xlu0 %7689
  %7691 = vrot.lane.b32.xlu0 %v6005, 96
  %v7692 = vpop.permute.xlu0 %7691
  %7693 = vrot.lane.b32.xlu0 %v6008, 96
  %v7694 = vpop.permute.xlu0 %7693
  %7695 = vrot.lane.b32.xlu0 %v6010, 96
  %v7696 = vpop.permute.xlu0 %7695
  %7697 = vrot.lane.b32.xlu0 %v6013, 96
  %v7698 = vpop.permute.xlu0 %7697
  %7699 = vrot.lane.b32.xlu0 %v6015, 96
  %v7700 = vpop.permute.xlu0 %7699
  %7701 = vrot.lane.b32.xlu0 %v6018, 96
  %v7702 = vpop.permute.xlu0 %7701
  %7703 = vrot.lane.b32.xlu0 %v6020, 96
  %v7704 = vpop.permute.xlu0 %7703
  %7705 = vrot.lane.b32.xlu0 %v6023, 96
  %v7706 = vpop.permute.xlu0 %7705
  %7707 = vrot.lane.b32.xlu0 %v6025, 96
  %v7708 = vpop.permute.xlu0 %7707
  %7709 = vrot.lane.b32.xlu0 %v6028, 96
  %v7710 = vpop.permute.xlu0 %7709
  %7711 = vrot.lane.b32.xlu0 %v6030, 96
  %v7712 = vpop.permute.xlu0 %7711
  %7713 = vrot.lane.b32.xlu0 %v6033, 96
  %v7714 = vpop.permute.xlu0 %7713
  %7715 = vrot.lane.b32.xlu0 %v6035, 96
  %v7716 = vpop.permute.xlu0 %7715
  %7717 = vrot.lane.b32.xlu0 %v6038, 96
  %v7718 = vpop.permute.xlu0 %7717
  %7719 = vrot.lane.b32.xlu0 %v6040, 96
  %v7720 = vpop.permute.xlu0 %7719
  %7721 = vrot.lane.b32.xlu0 %v7019, 96
  %v7722 = vpop.permute.xlu0 %7721
  %7723 = vrot.lane.b32.xlu0 %v7021, 96
  %v7724 = vpop.permute.xlu0 %7723
  %7725 = vrot.lane.b32.xlu0 %v6048, 96
  %v7726 = vpop.permute.xlu0 %7725
  %7727 = vrot.lane.b32.xlu0 %v6050, 96
  %v7728 = vpop.permute.xlu0 %7727
  %7729 = vrot.lane.b32.xlu0 %v6053, 96
  %v7730 = vpop.permute.xlu0 %7729
  %7731 = vrot.lane.b32.xlu0 %v6055, 96
  %v7732 = vpop.permute.xlu0 %7731
  %7733 = vrot.lane.b32.xlu0 %v6058, 96
  %v7734 = vpop.permute.xlu0 %7733
  %7735 = vrot.lane.b32.xlu0 %v6060, 96
  %v7736 = vpop.permute.xlu0 %7735
  %7737 = vrot.lane.b32.xlu0 %v6063, 96
  %v7738 = vpop.permute.xlu0 %7737
  %7739 = vrot.lane.b32.xlu0 %v6065, 96
  %v7740 = vpop.permute.xlu0 %7739
  %7741 = vrot.lane.b32.xlu0 %v6068, 96
  %v7742 = vpop.permute.xlu0 %7741
  %7743 = vrot.lane.b32.xlu0 %v6070, 96
  %v7744 = vpop.permute.xlu0 %7743
  %7745 = vrot.lane.b32.xlu0 %v6073, 96
  %v7746 = vpop.permute.xlu0 %7745
  %7747 = vrot.lane.b32.xlu0 %v6075, 96
  %v7748 = vpop.permute.xlu0 %7747
  %7749 = vrot.lane.b32.xlu0 %v6078, 96
  %v7750 = vpop.permute.xlu0 %7749
  %7751 = vrot.lane.b32.xlu0 %v6080, 96
  %v7752 = vpop.permute.xlu0 %7751
  %7753 = vrot.lane.b32.xlu0 %v6083, 96
  %v7754 = vpop.permute.xlu0 %7753
  %7755 = vrot.lane.b32.xlu0 %v6085, 96
  %v7756 = vpop.permute.xlu0 %7755
  %7757 = vrot.lane.b32.xlu0 %v6088, 96
  %v7758 = vpop.permute.xlu0 %7757
  %7759 = vrot.lane.b32.xlu0 %v6090, 96
  %v7760 = vpop.permute.xlu0 %7759
  %7761 = vrot.lane.b32.xlu0 %v6093, 96
  %v7762 = vpop.permute.xlu0 %7761
  %7763 = vrot.lane.b32.xlu0 %v6095, 96
  %v7764 = vpop.permute.xlu0 %7763
  %7765 = vrot.lane.b32.xlu0 %v6098, 96
  %v7766 = vpop.permute.xlu0 %7765
  %7767 = vrot.lane.b32.xlu0 %v6100, 96
  %v7768 = vpop.permute.xlu0 %7767
  %7769 = vrot.lane.b32.xlu0 %v6103, 96
  %v7770 = vpop.permute.xlu0 %7769
  %7771 = vrot.lane.b32.xlu0 %v6105, 96
  %v7772 = vpop.permute.xlu0 %7771
  %7773 = vrot.lane.b32.xlu0 %v6108, 96
  %v7774 = vpop.permute.xlu0 %7773
  %7775 = vrot.lane.b32.xlu0 %v6110, 96
  %v7776 = vpop.permute.xlu0 %7775
  %7777 = vrot.lane.b32.xlu0 %v6113, 96
  %v7778 = vpop.permute.xlu0 %7777
  %7779 = vrot.lane.b32.xlu0 %v6115, 96
  %v7780 = vpop.permute.xlu0 %7779
  %7781 = vrot.lane.b32.xlu0 %v7024, 96
  %v7782 = vpop.permute.xlu0 %7781
  %7783 = vrot.lane.b32.xlu0 %v7026, 96
  %v7784 = vpop.permute.xlu0 %7783
  %7845 = vst.msk [vmem:[#allocation2 + $0x8] sm:$0xff] %vm6950, %v7666
  %7846 = vst.msk [vmem:[#allocation2 + $0x20] sm:$0xff] %vm6950, %v7668
  %7847 = vst.msk [vmem:[#allocation2 + $0x38] sm:$0xff] %vm6950, %v7670
  %7848 = vst.msk [vmem:[#allocation2 + $0x50] sm:$0xff] %vm6950, %v7672
  %7849 = vst.msk [vmem:[#allocation2 + $0x68] sm:$0xff] %vm6950, %v7674
  %7850 = vst.msk [vmem:[#allocation2 + $0x80] sm:$0xff] %vm6950, %v7676
  %7851 = vst.msk [vmem:[#allocation2 + $0x98] sm:$0xff] %vm6950, %v7678
  %7852 = vst.msk [vmem:[#allocation2 + $0xb0] sm:$0xff] %vm6950, %v7680
  %7853 = vst.msk [vmem:[#allocation2 + $0xc8] sm:$0xff] %vm6950, %v7682
  %7854 = vst.msk [vmem:[#allocation2 + $0xe0] sm:$0xff] %vm6950, %v7684
  %7855 = vst.msk [vmem:[#allocation2 + $0xf8] sm:$0xff] %vm6950, %v7686
  %7856 = vst.msk [vmem:[#allocation2 + $0x110] sm:$0xff] %vm6950, %v7688
  %7857 = vst.msk [vmem:[#allocation2 + $0x128] sm:$0xff] %vm6950, %v7690
  %7858 = vst.msk [vmem:[#allocation2 + $0x140] sm:$0xff] %vm6950, %v7692
  %7859 = vst.msk [vmem:[#allocation2 + $0x158] sm:$0xff] %vm6950, %v7694
  %7860 = vst.msk [vmem:[#allocation2 + $0x170] sm:$0xff] %vm6950, %v7696
  %7861 = vst.msk [vmem:[#allocation2 + $0x188] sm:$0xff] %vm6950, %v7698
  %7862 = vst.msk [vmem:[#allocation2 + $0x1a0] sm:$0xff] %vm6950, %v7700
  %7863 = vst.msk [vmem:[#allocation2 + $0x1b8] sm:$0xff] %vm6950, %v7702
  %7864 = vst.msk [vmem:[#allocation2 + $0x1d0] sm:$0xff] %vm6950, %v7704
  %7865 = vst.msk [vmem:[#allocation2 + $0x1e8] sm:$0xff] %vm6950, %v7706
  %7866 = vst.msk [vmem:[#allocation2 + $0x200] sm:$0xff] %vm6950, %v7708
  %7867 = vst.msk [vmem:[#allocation2 + $0x218] sm:$0xff] %vm6950, %v7710
  %7868 = vst.msk [vmem:[#allocation2 + $0x230] sm:$0xff] %vm6950, %v7712
  %7869 = vst.msk [vmem:[#allocation2 + $0x248] sm:$0xff] %vm6950, %v7714
  %7870 = vst.msk [vmem:[#allocation2 + $0x260] sm:$0xff] %vm6950, %v7716
  %7871 = vst.msk [vmem:[#allocation2 + $0x278] sm:$0xff] %vm6950, %v7718
  %7872 = vst.msk [vmem:[#allocation2 + $0x290] sm:$0xff] %vm6950, %v7720
  %7873 = vst.msk [vmem:[#allocation2 + $0x2a8] sm:$0xff] %vm6950, %v7722
  %7874 = vst.msk [vmem:[#allocation2 + $0x2c0] sm:$0xff] %vm6950, %v7724
  %7875 = vst.msk [vmem:[#allocation2 + $0x2d8] sm:$0xff] %vm6950, %v2276
  %7876 = vst.msk [vmem:[#allocation2 + $0x2f0] sm:$0xff] %vm6950, %v2278
  %7877 = vst.msk [vmem:[#allocation2 + $0x308] sm:$0xff] %vm6950, %v7726
  %7878 = vst.msk [vmem:[#allocation2 + $0x320] sm:$0xff] %vm6950, %v7728
  %7879 = vst.msk [vmem:[#allocation2 + $0x338] sm:$0xff] %vm6950, %v7730
  %7880 = vst.msk [vmem:[#allocation2 + $0x350] sm:$0xff] %vm6950, %v7732
  %7881 = vst.msk [vmem:[#allocation2 + $0x368] sm:$0xff] %vm6950, %v7734
  %7882 = vst.msk [vmem:[#allocation2 + $0x380] sm:$0xff] %vm6950, %v7736
  %7883 = vst.msk [vmem:[#allocation2 + $0x398] sm:$0xff] %vm6950, %v7738
  %7884 = vst.msk [vmem:[#allocation2 + $0x3b0] sm:$0xff] %vm6950, %v7740
  %7885 = vst.msk [vmem:[#allocation2 + $0x3c8] sm:$0xff] %vm6950, %v7742
  %7886 = vst.msk [vmem:[#allocation2 + $0x3e0] sm:$0xff] %vm6950, %v7744
  %7887 = vst.msk [vmem:[#allocation2 + $0x3f8] sm:$0xff] %vm6950, %v7746
  %7888 = vst.msk [vmem:[#allocation2 + $0x410] sm:$0xff] %vm6950, %v7748
  %7889 = vst.msk [vmem:[#allocation2 + $0x428] sm:$0xff] %vm6950, %v7750
  %7890 = vst.msk [vmem:[#allocation2 + $0x440] sm:$0xff] %vm6950, %v7752
  %7891 = vst.msk [vmem:[#allocation2 + $0x458] sm:$0xff] %vm6950, %v7754
  %7892 = vst.msk [vmem:[#allocation2 + $0x470] sm:$0xff] %vm6950, %v7756
  %7893 = vst.msk [vmem:[#allocation2 + $0x488] sm:$0xff] %vm6950, %v7758
  %7894 = vst.msk [vmem:[#allocation2 + $0x4a0] sm:$0xff] %vm6950, %v7760
  %7895 = vst.msk [vmem:[#allocation2 + $0x4b8] sm:$0xff] %vm6950, %v7762
  %7896 = vst.msk [vmem:[#allocation2 + $0x4d0] sm:$0xff] %vm6950, %v7764
  %7897 = vst.msk [vmem:[#allocation2 + $0x4e8] sm:$0xff] %vm6950, %v7766
  %7898 = vst.msk [vmem:[#allocation2 + $0x500] sm:$0xff] %vm6950, %v7768
  %7899 = vst.msk [vmem:[#allocation2 + $0x518] sm:$0xff] %vm6950, %v7770
  %7900 = vst.msk [vmem:[#allocation2 + $0x530] sm:$0xff] %vm6950, %v7772
  %7901 = vst.msk [vmem:[#allocation2 + $0x548] sm:$0xff] %vm6950, %v7774
  %7902 = vst.msk [vmem:[#allocation2 + $0x560] sm:$0xff] %vm6950, %v7776
  %7903 = vst.msk [vmem:[#allocation2 + $0x578] sm:$0xff] %vm6950, %v7778
  %7904 = vst.msk [vmem:[#allocation2 + $0x590] sm:$0xff] %vm6950, %v7780
  %7905 = vst.msk [vmem:[#allocation2 + $0x5a8] sm:$0xff] %vm6950, %v7782
  %7906 = vst.msk [vmem:[#allocation2 + $0x5c0] sm:$0xff] %vm6950, %v7784
  %7907 = vst.msk [vmem:[#allocation2 + $0x5d8] sm:$0xff] %vm6950, %v2276
  %7908 = vst.msk [vmem:[#allocation2 + $0x5f0] sm:$0xff] %vm6950, %v2278
  %7969 = vst.msk [vmem:[#allocation2 + $0x10] sm:$0xff] %vm4789, %v6368
  %7970 = vst.msk [vmem:[#allocation2 + $0x28] sm:$0xff] %vm4789, %v6370
  %7971 = vst.msk [vmem:[#allocation2 + $0x40] sm:$0xff] %vm4789, %v6373
  %7972 = vst.msk [vmem:[#allocation2 + $0x58] sm:$0xff] %vm4789, %v6375
  %7973 = vst.msk [vmem:[#allocation2 + $0x70] sm:$0xff] %vm4789, %v6378
  %7974 = vst.msk [vmem:[#allocation2 + $0x88] sm:$0xff] %vm4789, %v6380
  %7975 = vst.msk [vmem:[#allocation2 + $0xa0] sm:$0xff] %vm4789, %v6383
  %7976 = vst.msk [vmem:[#allocation2 + $0xb8] sm:$0xff] %vm4789, %v6385
  %7977 = vst.msk [vmem:[#allocation2 + $0xd0] sm:$0xff] %vm4789, %v6388
  %7978 = vst.msk [vmem:[#allocation2 + $0xe8] sm:$0xff] %vm4789, %v6390
  %7979 = vst.msk [vmem:[#allocation2 + $0x100] sm:$0xff] %vm4789, %v6393
  %7980 = vst.msk [vmem:[#allocation2 + $0x118] sm:$0xff] %vm4789, %v6395
  %7981 = vst.msk [vmem:[#allocation2 + $0x130] sm:$0xff] %vm4789, %v6398
  %7982 = vst.msk [vmem:[#allocation2 + $0x148] sm:$0xff] %vm4789, %v6400
  %7983 = vst.msk [vmem:[#allocation2 + $0x160] sm:$0xff] %vm4789, %v6403
  %7984 = vst.msk [vmem:[#allocation2 + $0x178] sm:$0xff] %vm4789, %v6405
  %7985 = vst.msk [vmem:[#allocation2 + $0x190] sm:$0xff] %vm4789, %v6408
  %7986 = vst.msk [vmem:[#allocation2 + $0x1a8] sm:$0xff] %vm4789, %v6410
  %7987 = vst.msk [vmem:[#allocation2 + $0x1c0] sm:$0xff] %vm4789, %v6413
  %7988 = vst.msk [vmem:[#allocation2 + $0x1d8] sm:$0xff] %vm4789, %v6415
  %7989 = vst.msk [vmem:[#allocation2 + $0x1f0] sm:$0xff] %vm4789, %v6418
  %7990 = vst.msk [vmem:[#allocation2 + $0x208] sm:$0xff] %vm4789, %v6420
  %7991 = vst.msk [vmem:[#allocation2 + $0x220] sm:$0xff] %vm4789, %v6423
  %7992 = vst.msk [vmem:[#allocation2 + $0x238] sm:$0xff] %vm4789, %v6425
  %7993 = vst.msk [vmem:[#allocation2 + $0x250] sm:$0xff] %vm4789, %v6428
  %7994 = vst.msk [vmem:[#allocation2 + $0x268] sm:$0xff] %vm4789, %v6430
  %7995 = vst.msk [vmem:[#allocation2 + $0x280] sm:$0xff] %vm4789, %v6433
  %7996 = vst.msk [vmem:[#allocation2 + $0x298] sm:$0xff] %vm4789, %v6435
  %7997 = vst.msk [vmem:[#allocation2 + $0x2b0] sm:$0xff] %vm4789, %v7157
  %7998 = vst.msk [vmem:[#allocation2 + $0x2c8] sm:$0xff] %vm4789, %v7159
  %7999 = vst.msk [vmem:[#allocation2 + $0x2e0] sm:$0xff] %vm4789, %v2526
  %8000 = vst.msk [vmem:[#allocation2 + $0x2f8] sm:$0xff] %vm4789, %v2528
  %8001 = vst.msk [vmem:[#allocation2 + $0x310] sm:$0xff] %vm4789, %v6443
  %8002 = vst.msk [vmem:[#allocation2 + $0x328] sm:$0xff] %vm4789, %v6445
  %8003 = vst.msk [vmem:[#allocation2 + $0x340] sm:$0xff] %vm4789, %v6448
  %8004 = vst.msk [vmem:[#allocation2 + $0x358] sm:$0xff] %vm4789, %v6450
  %8005 = vst.msk [vmem:[#allocation2 + $0x370] sm:$0xff] %vm4789, %v6453
  %8006 = vst.msk [vmem:[#allocation2 + $0x388] sm:$0xff] %vm4789, %v6455
  %8007 = vst.msk [vmem:[#allocation2 + $0x3a0] sm:$0xff] %vm4789, %v6458
  %8008 = vst.msk [vmem:[#allocation2 + $0x3b8] sm:$0xff] %vm4789, %v6460
  %8009 = vst.msk [vmem:[#allocation2 + $0x3d0] sm:$0xff] %vm4789, %v6463
  %8010 = vst.msk [vmem:[#allocation2 + $0x3e8] sm:$0xff] %vm4789, %v6465
  %8011 = vst.msk [vmem:[#allocation2 + $0x400] sm:$0xff] %vm4789, %v6468
  %8012 = vst.msk [vmem:[#allocation2 + $0x418] sm:$0xff] %vm4789, %v6470
  %8013 = vst.msk [vmem:[#allocation2 + $0x430] sm:$0xff] %vm4789, %v6473
  %8014 = vst.msk [vmem:[#allocation2 + $0x448] sm:$0xff] %vm4789, %v6475
  %8015 = vst.msk [vmem:[#allocation2 + $0x460] sm:$0xff] %vm4789, %v6478
  %8016 = vst.msk [vmem:[#allocation2 + $0x478] sm:$0xff] %vm4789, %v6480
  %8017 = vst.msk [vmem:[#allocation2 + $0x490] sm:$0xff] %vm4789, %v6483
  %8018 = vst.msk [vmem:[#allocation2 + $0x4a8] sm:$0xff] %vm4789, %v6485
  %8019 = vst.msk [vmem:[#allocation2 + $0x4c0] sm:$0xff] %vm4789, %v6488
  %8020 = vst.msk [vmem:[#allocation2 + $0x4d8] sm:$0xff] %vm4789, %v6490
  %8021 = vst.msk [vmem:[#allocation2 + $0x4f0] sm:$0xff] %vm4789, %v6493
  %8022 = vst.msk [vmem:[#allocation2 + $0x508] sm:$0xff] %vm4789, %v6495
  %8023 = vst.msk [vmem:[#allocation2 + $0x520] sm:$0xff] %vm4789, %v6498
  %8024 = vst.msk [vmem:[#allocation2 + $0x538] sm:$0xff] %vm4789, %v6500
  %8025 = vst.msk [vmem:[#allocation2 + $0x550] sm:$0xff] %vm4789, %v6503
  %8026 = vst.msk [vmem:[#allocation2 + $0x568] sm:$0xff] %vm4789, %v6505
  %8027 = vst.msk [vmem:[#allocation2 + $0x580] sm:$0xff] %vm4789, %v6508
  %8028 = vst.msk [vmem:[#allocation2 + $0x598] sm:$0xff] %vm4789, %v6510
  %8029 = vst.msk [vmem:[#allocation2 + $0x5b0] sm:$0xff] %vm4789, %v7162
  %8030 = vst.msk [vmem:[#allocation2 + $0x5c8] sm:$0xff] %vm4789, %v7164
  %8031 = vst.msk [vmem:[#allocation2 + $0x5e0] sm:$0xff] %vm4789, %v2526
  %8032 = vst.msk [vmem:[#allocation2 + $0x5f8] sm:$0xff] %vm4789, %v2528
  %v8033 = vld [vmem:[#allocation2] sm:$0xff]
  %v8034 = vld [vmem:[#allocation2 + $0x8] sm:$0xff]
  %v8035 = vld [vmem:[#allocation2 + $0x10] sm:$0xff]
  %v8036 = vld [vmem:[#allocation2 + $0x18] sm:$0xff]
  %v8037 = vld [vmem:[#allocation2 + $0x20] sm:$0xff]
  %v8038 = vld [vmem:[#allocation2 + $0x28] sm:$0xff]
  %v8039 = vld [vmem:[#allocation2 + $0x30] sm:$0xff]
  %v8040 = vld [vmem:[#allocation2 + $0x38] sm:$0xff]
  %v8041 = vld [vmem:[#allocation2 + $0x40] sm:$0xff]
  %v8042 = vld [vmem:[#allocation2 + $0x48] sm:$0xff]
  %v8043 = vld [vmem:[#allocation2 + $0x50] sm:$0xff]
  %v8044 = vld [vmem:[#allocation2 + $0x58] sm:$0xff]
  %v8045 = vld [vmem:[#allocation2 + $0x60] sm:$0xff]
  %v8046 = vld [vmem:[#allocation2 + $0x68] sm:$0xff]
  %v8047 = vld [vmem:[#allocation2 + $0x70] sm:$0xff]
  %v8048 = vld [vmem:[#allocation2 + $0x78] sm:$0xff]
  %v8049 = vld [vmem:[#allocation2 + $0x80] sm:$0xff]
  %v8050 = vld [vmem:[#allocation2 + $0x88] sm:$0xff]
  %v8051 = vld [vmem:[#allocation2 + $0x90] sm:$0xff]
  %v8052 = vld [vmem:[#allocation2 + $0x98] sm:$0xff]
  %v8053 = vld [vmem:[#allocation2 + $0xa0] sm:$0xff]
  %v8054 = vld [vmem:[#allocation2 + $0xa8] sm:$0xff]
  %v8055 = vld [vmem:[#allocation2 + $0xb0] sm:$0xff]
  %v8056 = vld [vmem:[#allocation2 + $0xb8] sm:$0xff]
  %v8057 = vld [vmem:[#allocation2 + $0xc0] sm:$0xff]
  %v8058 = vld [vmem:[#allocation2 + $0xc8] sm:$0xff]
  %v8059 = vld [vmem:[#allocation2 + $0xd0] sm:$0xff]
  %v8060 = vld [vmem:[#allocation2 + $0xd8] sm:$0xff]
  %v8061 = vld [vmem:[#allocation2 + $0xe0] sm:$0xff]
  %v8062 = vld [vmem:[#allocation2 + $0xe8] sm:$0xff]
  %v8063 = vld [vmem:[#allocation2 + $0xf0] sm:$0xff]
  %v8064 = vld [vmem:[#allocation2 + $0xf8] sm:$0xff]
  %v8065 = vld [vmem:[#allocation2 + $0x100] sm:$0xff]
  %v8066 = vld [vmem:[#allocation2 + $0x108] sm:$0xff]
  %v8067 = vld [vmem:[#allocation2 + $0x110] sm:$0xff]
  %v8068 = vld [vmem:[#allocation2 + $0x118] sm:$0xff]
  %v8069 = vld [vmem:[#allocation2 + $0x120] sm:$0xff]
  %v8070 = vld [vmem:[#allocation2 + $0x128] sm:$0xff]
  %v8071 = vld [vmem:[#allocation2 + $0x130] sm:$0xff]
  %v8072 = vld [vmem:[#allocation2 + $0x138] sm:$0xff]
  %v8073 = vld [vmem:[#allocation2 + $0x140] sm:$0xff]
  %v8074 = vld [vmem:[#allocation2 + $0x148] sm:$0xff]
  %v8075 = vld [vmem:[#allocation2 + $0x150] sm:$0xff]
  %v8076 = vld [vmem:[#allocation2 + $0x158] sm:$0xff]
  %v8077 = vld [vmem:[#allocation2 + $0x160] sm:$0xff]
  %v8078 = vld [vmem:[#allocation2 + $0x168] sm:$0xff]
  %v8079 = vld [vmem:[#allocation2 + $0x170] sm:$0xff]
  %v8080 = vld [vmem:[#allocation2 + $0x178] sm:$0xff]
  %v8081 = vld [vmem:[#allocation2 + $0x180] sm:$0xff]
  %v8082 = vld [vmem:[#allocation2 + $0x188] sm:$0xff]
  %v8083 = vld [vmem:[#allocation2 + $0x190] sm:$0xff]
  %v8084 = vld [vmem:[#allocation2 + $0x198] sm:$0xff]
  %v8085 = vld [vmem:[#allocation2 + $0x1a0] sm:$0xff]
  %v8086 = vld [vmem:[#allocation2 + $0x1a8] sm:$0xff]
  %v8087 = vld [vmem:[#allocation2 + $0x1b0] sm:$0xff]
  %v8088 = vld [vmem:[#allocation2 + $0x1b8] sm:$0xff]
  %v8089 = vld [vmem:[#allocation2 + $0x1c0] sm:$0xff]
  %v8090 = vld [vmem:[#allocation2 + $0x1c8] sm:$0xff]
  %v8091 = vld [vmem:[#allocation2 + $0x1d0] sm:$0xff]
  %v8092 = vld [vmem:[#allocation2 + $0x1d8] sm:$0xff]
  %v8093 = vld [vmem:[#allocation2 + $0x1e0] sm:$0xff]
  %v8094 = vld [vmem:[#allocation2 + $0x1e8] sm:$0xff]
  %v8095 = vld [vmem:[#allocation2 + $0x1f0] sm:$0xff]
  %v8096 = vld [vmem:[#allocation2 + $0x1f8] sm:$0xff]
  %v8097 = vld [vmem:[#allocation2 + $0x200] sm:$0xff]
  %v8098 = vld [vmem:[#allocation2 + $0x208] sm:$0xff]
  %v8099 = vld [vmem:[#allocation2 + $0x210] sm:$0xff]
  %v8100 = vld [vmem:[#allocation2 + $0x218] sm:$0xff]
  %v8101 = vld [vmem:[#allocation2 + $0x220] sm:$0xff]
  %v8102 = vld [vmem:[#allocation2 + $0x228] sm:$0xff]
  %v8103 = vld [vmem:[#allocation2 + $0x230] sm:$0xff]
  %v8104 = vld [vmem:[#allocation2 + $0x238] sm:$0xff]
  %v8105 = vld [vmem:[#allocation2 + $0x240] sm:$0xff]
  %v8106 = vld [vmem:[#allocation2 + $0x248] sm:$0xff]
  %v8107 = vld [vmem:[#allocation2 + $0x250] sm:$0xff]
  %v8108 = vld [vmem:[#allocation2 + $0x258] sm:$0xff]
  %v8109 = vld [vmem:[#allocation2 + $0x260] sm:$0xff]
  %v8110 = vld [vmem:[#allocation2 + $0x268] sm:$0xff]
  %v8111 = vld [vmem:[#allocation2 + $0x270] sm:$0xff]
  %v8112 = vld [vmem:[#allocation2 + $0x278] sm:$0xff]
  %v8113 = vld [vmem:[#allocation2 + $0x280] sm:$0xff]
  %v8114 = vld [vmem:[#allocation2 + $0x288] sm:$0xff]
  %v8115 = vld [vmem:[#allocation2 + $0x290] sm:$0xff]
  %v8116 = vld [vmem:[#allocation2 + $0x298] sm:$0xff]
  %v8117 = vld [vmem:[#allocation2 + $0x2a0] sm:$0xff]
  %v8118 = vld [vmem:[#allocation2 + $0x2a8] sm:$0xff]
  %v8119 = vld [vmem:[#allocation2 + $0x2b0] sm:$0xff]
  %v8120 = vld [vmem:[#allocation2 + $0x2b8] sm:$0xff]
  %v8121 = vld [vmem:[#allocation2 + $0x2c0] sm:$0xff]
  %v8122 = vld [vmem:[#allocation2 + $0x2c8] sm:$0xff]
  %v8123 = vld [vmem:[#allocation2 + $0x2d0] sm:$0xff]
  %v8124 = vld [vmem:[#allocation2 + $0x2d8] sm:$0xff]
  %v8125 = vld [vmem:[#allocation2 + $0x2e0] sm:$0xff]
  %v8126 = vld [vmem:[#allocation2 + $0x2e8] sm:$0xff]
  %v8127 = vld [vmem:[#allocation2 + $0x2f0] sm:$0xff]
  %v8128 = vld [vmem:[#allocation2 + $0x2f8] sm:$0xff]
  %v8129 = vld [vmem:[#allocation2 + $0x300] sm:$0xff]
  %v8130 = vld [vmem:[#allocation2 + $0x308] sm:$0xff]
  %v8131 = vld [vmem:[#allocation2 + $0x310] sm:$0xff]
  %v8132 = vld [vmem:[#allocation2 + $0x318] sm:$0xff]
  %v8133 = vld [vmem:[#allocation2 + $0x320] sm:$0xff]
  %v8134 = vld [vmem:[#allocation2 + $0x328] sm:$0xff]
  %v8135 = vld [vmem:[#allocation2 + $0x330] sm:$0xff]
  %v8136 = vld [vmem:[#allocation2 + $0x338] sm:$0xff]
  %v8137 = vld [vmem:[#allocation2 + $0x340] sm:$0xff]
  %v8138 = vld [vmem:[#allocation2 + $0x348] sm:$0xff]
  %v8139 = vld [vmem:[#allocation2 + $0x350] sm:$0xff]
  %v8140 = vld [vmem:[#allocation2 + $0x358] sm:$0xff]
  %v8141 = vld [vmem:[#allocation2 + $0x360] sm:$0xff]
  %v8142 = vld [vmem:[#allocation2 + $0x368] sm:$0xff]
  %v8143 = vld [vmem:[#allocation2 + $0x370] sm:$0xff]
  %v8144 = vld [vmem:[#allocation2 + $0x378] sm:$0xff]
  %v8145 = vld [vmem:[#allocation2 + $0x380] sm:$0xff]
  %v8146 = vld [vmem:[#allocation2 + $0x388] sm:$0xff]
  %v8147 = vld [vmem:[#allocation2 + $0x390] sm:$0xff]
  %v8148 = vld [vmem:[#allocation2 + $0x398] sm:$0xff]
  %v8149 = vld [vmem:[#allocation2 + $0x3a0] sm:$0xff]
  %v8150 = vld [vmem:[#allocation2 + $0x3a8] sm:$0xff]
  %v8151 = vld [vmem:[#allocation2 + $0x3b0] sm:$0xff]
  %v8152 = vld [vmem:[#allocation2 + $0x3b8] sm:$0xff]
  %v8153 = vld [vmem:[#allocation2 + $0x3c0] sm:$0xff]
  %v8154 = vld [vmem:[#allocation2 + $0x3c8] sm:$0xff]
  %v8155 = vld [vmem:[#allocation2 + $0x3d0] sm:$0xff]
  %v8156 = vld [vmem:[#allocation2 + $0x3d8] sm:$0xff]
  %v8157 = vld [vmem:[#allocation2 + $0x3e0] sm:$0xff]
  %v8158 = vld [vmem:[#allocation2 + $0x3e8] sm:$0xff]
  %v8159 = vld [vmem:[#allocation2 + $0x3f0] sm:$0xff]
  %v8160 = vld [vmem:[#allocation2 + $0x3f8] sm:$0xff]
  %v8161 = vld [vmem:[#allocation2 + $0x400] sm:$0xff]
  %v8162 = vld [vmem:[#allocation2 + $0x408] sm:$0xff]
  %v8163 = vld [vmem:[#allocation2 + $0x410] sm:$0xff]
  %v8164 = vld [vmem:[#allocation2 + $0x418] sm:$0xff]
  %v8165 = vld [vmem:[#allocation2 + $0x420] sm:$0xff]
  %v8166 = vld [vmem:[#allocation2 + $0x428] sm:$0xff]
  %v8167 = vld [vmem:[#allocation2 + $0x430] sm:$0xff]
  %v8168 = vld [vmem:[#allocation2 + $0x438] sm:$0xff]
  %v8169 = vld [vmem:[#allocation2 + $0x440] sm:$0xff]
  %v8170 = vld [vmem:[#allocation2 + $0x448] sm:$0xff]
  %v8171 = vld [vmem:[#allocation2 + $0x450] sm:$0xff]
  %v8172 = vld [vmem:[#allocation2 + $0x458] sm:$0xff]
  %v8173 = vld [vmem:[#allocation2 + $0x460] sm:$0xff]
  %v8174 = vld [vmem:[#allocation2 + $0x468] sm:$0xff]
  %v8175 = vld [vmem:[#allocation2 + $0x470] sm:$0xff]
  %v8176 = vld [vmem:[#allocation2 + $0x478] sm:$0xff]
  %v8177 = vld [vmem:[#allocation2 + $0x480] sm:$0xff]
  %v8178 = vld [vmem:[#allocation2 + $0x488] sm:$0xff]
  %v8179 = vld [vmem:[#allocation2 + $0x490] sm:$0xff]
  %v8180 = vld [vmem:[#allocation2 + $0x498] sm:$0xff]
  %v8181 = vld [vmem:[#allocation2 + $0x4a0] sm:$0xff]
  %v8182 = vld [vmem:[#allocation2 + $0x4a8] sm:$0xff]
  %v8183 = vld [vmem:[#allocation2 + $0x4b0] sm:$0xff]
  %v8184 = vld [vmem:[#allocation2 + $0x4b8] sm:$0xff]
  %v8185 = vld [vmem:[#allocation2 + $0x4c0] sm:$0xff]
  %v8186 = vld [vmem:[#allocation2 + $0x4c8] sm:$0xff]
  %v8187 = vld [vmem:[#allocation2 + $0x4d0] sm:$0xff]
  %v8188 = vld [vmem:[#allocation2 + $0x4d8] sm:$0xff]
  %v8189 = vld [vmem:[#allocation2 + $0x4e0] sm:$0xff]
  %v8190 = vld [vmem:[#allocation2 + $0x4e8] sm:$0xff]
  %v8191 = vld [vmem:[#allocation2 + $0x4f0] sm:$0xff]
  %v8192 = vld [vmem:[#allocation2 + $0x4f8] sm:$0xff]
  %v8193 = vld [vmem:[#allocation2 + $0x500] sm:$0xff]
  %v8194 = vld [vmem:[#allocation2 + $0x508] sm:$0xff]
  %v8195 = vld [vmem:[#allocation2 + $0x510] sm:$0xff]
  %v8196 = vld [vmem:[#allocation2 + $0x518] sm:$0xff]
  %v8197 = vld [vmem:[#allocation2 + $0x520] sm:$0xff]
  %v8198 = vld [vmem:[#allocation2 + $0x528] sm:$0xff]
  %v8199 = vld [vmem:[#allocation2 + $0x530] sm:$0xff]
  %v8200 = vld [vmem:[#allocation2 + $0x538] sm:$0xff]
  %v8201 = vld [vmem:[#allocation2 + $0x540] sm:$0xff]
  %v8202 = vld [vmem:[#allocation2 + $0x548] sm:$0xff]
  %v8203 = vld [vmem:[#allocation2 + $0x550] sm:$0xff]
  %v8204 = vld [vmem:[#allocation2 + $0x558] sm:$0xff]
  %v8205 = vld [vmem:[#allocation2 + $0x560] sm:$0xff]
  %v8206 = vld [vmem:[#allocation2 + $0x568] sm:$0xff]
  %v8207 = vld [vmem:[#allocation2 + $0x570] sm:$0xff]
  %v8208 = vld [vmem:[#allocation2 + $0x578] sm:$0xff]
  %v8209 = vld [vmem:[#allocation2 + $0x580] sm:$0xff]
  %v8210 = vld [vmem:[#allocation2 + $0x588] sm:$0xff]
  %v8211 = vld [vmem:[#allocation2 + $0x590] sm:$0xff]
  %v8212 = vld [vmem:[#allocation2 + $0x598] sm:$0xff]
  %v8213 = vld [vmem:[#allocation2 + $0x5a0] sm:$0xff]
  %v8214 = vld [vmem:[#allocation2 + $0x5a8] sm:$0xff]
  %v8215 = vld [vmem:[#allocation2 + $0x5b0] sm:$0xff]
  %v8216 = vld [vmem:[#allocation2 + $0x5b8] sm:$0xff]
  %v8217 = vld [vmem:[#allocation2 + $0x5c0] sm:$0xff]
  %v8218 = vld [vmem:[#allocation2 + $0x5c8] sm:$0xff]
  %v8219 = vld [vmem:[#allocation2 + $0x5d0] sm:$0xff]
  %v8220 = vld [vmem:[#allocation2 + $0x5d8] sm:$0xff]
  %v8221 = vld [vmem:[#allocation2 + $0x5e0] sm:$0xff]
  %v8222 = vld [vmem:[#allocation2 + $0x5e8] sm:$0xff]
  %v8223 = vld [vmem:[#allocation2 + $0x5f0] sm:$0xff]
  %v8224 = vld [vmem:[#allocation2 + $0x5f8] sm:$0xff]
  %v8225 = vpack.c.bf16 %v8036, %v8033
  %v8226 = vpack.c.bf16 %v8037, %v8034
  %v8227 = vpack.c.bf16 %v8038, %v8035
  %v8228 = vpack.c.bf16 %v8042, %v8039
  %v8229 = vpack.c.bf16 %v8043, %v8040
  %v8230 = vpack.c.bf16 %v8044, %v8041
  %v8231 = vpack.c.bf16 %v8048, %v8045
  %v8232 = vpack.c.bf16 %v8049, %v8046
  %v8233 = vpack.c.bf16 %v8050, %v8047
  %v8234 = vpack.c.bf16 %v8054, %v8051
  %v8235 = vpack.c.bf16 %v8055, %v8052
  %v8236 = vpack.c.bf16 %v8056, %v8053
  %v8237 = vpack.c.bf16 %v8060, %v8057
  %v8238 = vpack.c.bf16 %v8061, %v8058
  %v8239 = vpack.c.bf16 %v8062, %v8059
  %v8240 = vpack.c.bf16 %v8066, %v8063
  %v8241 = vpack.c.bf16 %v8067, %v8064
  %v8242 = vpack.c.bf16 %v8068, %v8065
  %v8243 = vpack.c.bf16 %v8072, %v8069
  %v8244 = vpack.c.bf16 %v8073, %v8070
  %v8245 = vpack.c.bf16 %v8074, %v8071
  %v8246 = vpack.c.bf16 %v8078, %v8075
  %v8247 = vpack.c.bf16 %v8079, %v8076
  %v8248 = vpack.c.bf16 %v8080, %v8077
  %v8249 = vpack.c.bf16 %v8084, %v8081
  %v8250 = vpack.c.bf16 %v8085, %v8082
  %v8251 = vpack.c.bf16 %v8086, %v8083
  %v8252 = vpack.c.bf16 %v8090, %v8087
  %v8253 = vpack.c.bf16 %v8091, %v8088
  %v8254 = vpack.c.bf16 %v8092, %v8089
  %v8255 = vpack.c.bf16 %v8096, %v8093
  %v8256 = vpack.c.bf16 %v8097, %v8094
  %v8257 = vpack.c.bf16 %v8098, %v8095
  %v8258 = vpack.c.bf16 %v8102, %v8099
  %v8259 = vpack.c.bf16 %v8103, %v8100
  %v8260 = vpack.c.bf16 %v8104, %v8101
  %v8261 = vpack.c.bf16 %v8108, %v8105
  %v8262 = vpack.c.bf16 %v8109, %v8106
  %v8263 = vpack.c.bf16 %v8110, %v8107
  %v8264 = vpack.c.bf16 %v8114, %v8111
  %v8265 = vpack.c.bf16 %v8115, %v8112
  %v8266 = vpack.c.bf16 %v8116, %v8113
  %v8267 = vpack.c.bf16 %v8120, %v8117
  %v8268 = vpack.c.bf16 %v8121, %v8118
  %v8269 = vpack.c.bf16 %v8122, %v8119
  %v8270 = vpack.c.bf16 %v8126, %v8123
  %v8271 = vpack.c.bf16 %v8127, %v8124
  %v8272 = vpack.c.bf16 %v8128, %v8125
  %v8273 = vpack.c.bf16 %v8132, %v8129
  %v8274 = vpack.c.bf16 %v8133, %v8130
  %v8275 = vpack.c.bf16 %v8134, %v8131
  %v8276 = vpack.c.bf16 %v8138, %v8135
  %v8277 = vpack.c.bf16 %v8139, %v8136
  %v8278 = vpack.c.bf16 %v8140, %v8137
  %v8279 = vpack.c.bf16 %v8144, %v8141
  %v8280 = vpack.c.bf16 %v8145, %v8142
  %v8281 = vpack.c.bf16 %v8146, %v8143
  %v8282 = vpack.c.bf16 %v8150, %v8147
  %v8283 = vpack.c.bf16 %v8151, %v8148
  %v8284 = vpack.c.bf16 %v8152, %v8149
  %v8285 = vpack.c.bf16 %v8156, %v8153
  %v8286 = vpack.c.bf16 %v8157, %v8154
  %v8287 = vpack.c.bf16 %v8158, %v8155
  %v8288 = vpack.c.bf16 %v8162, %v8159
  %v8289 = vpack.c.bf16 %v8163, %v8160
  %v8290 = vpack.c.bf16 %v8164, %v8161
  %v8291 = vpack.c.bf16 %v8168, %v8165
  %v8292 = vpack.c.bf16 %v8169, %v8166
  %v8293 = vpack.c.bf16 %v8170, %v8167
  %v8294 = vpack.c.bf16 %v8174, %v8171
  %v8295 = vpack.c.bf16 %v8175, %v8172
  %v8296 = vpack.c.bf16 %v8176, %v8173
  %v8297 = vpack.c.bf16 %v8180, %v8177
  %v8298 = vpack.c.bf16 %v8181, %v8178
  %v8299 = vpack.c.bf16 %v8182, %v8179
  %v8300 = vpack.c.bf16 %v8186, %v8183
  %v8301 = vpack.c.bf16 %v8187, %v8184
  %v8302 = vpack.c.bf16 %v8188, %v8185
  %v8303 = vpack.c.bf16 %v8192, %v8189
  %v8304 = vpack.c.bf16 %v8193, %v8190
  %v8305 = vpack.c.bf16 %v8194, %v8191
  %v8306 = vpack.c.bf16 %v8198, %v8195
  %v8307 = vpack.c.bf16 %v8199, %v8196
  %v8308 = vpack.c.bf16 %v8200, %v8197
  %v8309 = vpack.c.bf16 %v8204, %v8201
  %v8310 = vpack.c.bf16 %v8205, %v8202
  %v8311 = vpack.c.bf16 %v8206, %v8203
  %v8312 = vpack.c.bf16 %v8210, %v8207
  %v8313 = vpack.c.bf16 %v8211, %v8208
  %v8314 = vpack.c.bf16 %v8212, %v8209
  %v8315 = vpack.c.bf16 %v8216, %v8213
  %v8316 = vpack.c.bf16 %v8217, %v8214
  %v8317 = vpack.c.bf16 %v8218, %v8215
  %v8318 = vpack.c.bf16 %v8222, %v8219
  %v8319 = vpack.c.bf16 %v8223, %v8220
  %v8320 = vpack.c.bf16 %v8224, %v8221
  %v8321 = vld [vmem:[%s4] sm:$0xff]
  %v8322 = vld [vmem:[%s4 + $0x8] sm:$0xff]
  %v8323 = vld [vmem:[%s4 + $0x10] sm:$0xff]
  %v8324 = vld [vmem:[%s4 + $0x18] sm:$0xff]
  %v8325 = vld [vmem:[%s4 + $0x20] sm:$0xff]
  %v8326 = vld [vmem:[%s4 + $0x28] sm:$0xff]
  %v8327 = vld [vmem:[%s4 + $0x30] sm:$0xff]
  %v8328 = vld [vmem:[%s4 + $0x38] sm:$0xff]
  %v8329 = vld [vmem:[%s4 + $0x40] sm:$0xff]
  %v8330 = vld [vmem:[%s4 + $0x48] sm:$0xff]
  %v8331 = vld [vmem:[%s4 + $0x50] sm:$0xff]
  %v8332 = vld [vmem:[%s4 + $0x58] sm:$0xff]
  %v8333 = vld [vmem:[%s4 + $0x60] sm:$0xff]
  %v8334 = vld [vmem:[%s4 + $0x68] sm:$0xff]
  %v8335 = vld [vmem:[%s4 + $0x70] sm:$0xff]
  %v8336 = vld [vmem:[%s4 + $0x78] sm:$0xff]
  %v8337 = vld [vmem:[%s4 + $0x80] sm:$0xff]
  %v8338 = vld [vmem:[%s4 + $0x88] sm:$0xff]
  %v8339 = vld [vmem:[%s4 + $0x90] sm:$0xff]
  %v8340 = vld [vmem:[%s4 + $0x98] sm:$0xff]
  %v8341 = vld [vmem:[%s4 + $0xa0] sm:$0xff]
  %v8342 = vld [vmem:[%s4 + $0xa8] sm:$0xff]
  %v8343 = vld [vmem:[%s4 + $0xb0] sm:$0xff]
  %v8344 = vld [vmem:[%s4 + $0xb8] sm:$0xff]
  %v8345 = vld [vmem:[%s4 + $0xc0] sm:$0xff]
  %v8346 = vld [vmem:[%s4 + $0xc8] sm:$0xff]
  %v8347 = vld [vmem:[%s4 + $0xd0] sm:$0xff]
  %v8348 = vld [vmem:[%s4 + $0xd8] sm:$0xff]
  %v8349 = vld [vmem:[%s4 + $0xe0] sm:$0xff]
  %v8350 = vld [vmem:[%s4 + $0xe8] sm:$0xff]
  %v8351 = vld [vmem:[%s4 + $0xf0] sm:$0xff]
  %v8352 = vld [vmem:[%s4 + $0xf8] sm:$0xff]
  %v8353 = vld [vmem:[%s4 + $0x100] sm:$0xff]
  %v8354 = vld [vmem:[%s4 + $0x108] sm:$0xff]
  %v8355 = vld [vmem:[%s4 + $0x110] sm:$0xff]
  %v8356 = vld [vmem:[%s4 + $0x118] sm:$0xff]
  %v8393 = vunpack.c.l.b16 %v8321
  %v8394 = vunpack.c.h.b16 %v8321
  %v8395 = vunpack.c.l.b16 %v8322
  %v8396 = vunpack.c.h.b16 %v8322
  %v8397 = vunpack.c.l.b16 %v8323
  %v8398 = vunpack.c.h.b16 %v8323
  %v8399 = vunpack.c.l.b16 %v8324
  %v8400 = vunpack.c.h.b16 %v8324
  %v8401 = vunpack.c.l.b16 %v8325
  %v8402 = vunpack.c.h.b16 %v8325
  %v8403 = vunpack.c.l.b16 %v8326
  %v8404 = vunpack.c.h.b16 %v8326
  %v8405 = vunpack.c.l.b16 %v8327
  %v8406 = vunpack.c.h.b16 %v8327
  %v8407 = vunpack.c.l.b16 %v8328
  %v8408 = vunpack.c.h.b16 %v8328
  %v8409 = vunpack.c.l.b16 %v8329
  %v8410 = vunpack.c.h.b16 %v8329
  %v8411 = vunpack.c.l.b16 %v8330
  %v8412 = vunpack.c.h.b16 %v8330
  %v8413 = vunpack.c.l.b16 %v8331
  %v8414 = vunpack.c.h.b16 %v8331
  %v8415 = vunpack.c.l.b16 %v8332
  %v8416 = vunpack.c.h.b16 %v8332
  %v8417 = vunpack.c.l.b16 %v8333
  %v8418 = vunpack.c.h.b16 %v8333
  %v8419 = vunpack.c.l.b16 %v8334
  %v8420 = vunpack.c.h.b16 %v8334
  %v8421 = vunpack.c.l.b16 %v8335
  %v8422 = vunpack.c.h.b16 %v8335
  %v8423 = vunpack.c.l.b16 %v8336
  %v8424 = vunpack.c.h.b16 %v8336
  %v8425 = vunpack.c.l.b16 %v8337
  %v8426 = vunpack.c.h.b16 %v8337
  %v8427 = vunpack.c.l.b16 %v8338
  %v8428 = vunpack.c.h.b16 %v8338
  %v8429 = vunpack.c.l.b16 %v8339
  %v8430 = vunpack.c.h.b16 %v8339
  %v8431 = vunpack.c.l.b16 %v8340
  %v8432 = vunpack.c.h.b16 %v8340
  %v8433 = vunpack.c.l.b16 %v8341
  %v8434 = vunpack.c.h.b16 %v8341
  %v8435 = vunpack.c.l.b16 %v8342
  %v8436 = vunpack.c.h.b16 %v8342
  %v8437 = vunpack.c.l.b16 %v8343
  %v8438 = vunpack.c.h.b16 %v8343
  %v8439 = vunpack.c.l.b16 %v8344
  %v8440 = vunpack.c.h.b16 %v8344
  %v8441 = vunpack.c.l.b16 %v8345
  %v8442 = vunpack.c.h.b16 %v8345
  %v8443 = vunpack.c.l.b16 %v8346
  %v8444 = vunpack.c.h.b16 %v8346
  %v8445 = vunpack.c.l.b16 %v8347
  %v8446 = vunpack.c.h.b16 %v8347
  %v8447 = vunpack.c.l.b16 %v8348
  %v8448 = vunpack.c.h.b16 %v8348
  %v8449 = vunpack.c.l.b16 %v8349
  %v8450 = vunpack.c.h.b16 %v8349
  %v8451 = vunpack.c.l.b16 %v8350
  %v8452 = vunpack.c.h.b16 %v8350
  %v8453 = vunpack.c.l.b16 %v8351
  %v8454 = vunpack.c.h.b16 %v8351
  %v8455 = vunpack.c.l.b16 %v8352
  %v8456 = vunpack.c.h.b16 %v8352
  %v8457 = vunpack.c.l.b16 %v8353
  %v8458 = vunpack.c.h.b16 %v8353
  %v8459 = vunpack.c.l.b16 %v8354
  %v8460 = vunpack.c.h.b16 %v8354
  %v8461 = vunpack.c.l.b16 %v8355
  %v8462 = vunpack.c.h.b16 %v8355
  %v8463 = vunpack.c.l.b16 %v8356
  %v8464 = vunpack.c.h.b16 %v8356
  %v8465 = vpack.c.b16 %v8395, %v8393
  %v8466 = vpack.c.b16 %v8396, %v8394
  %v8467 = vpack.c.b16 %v8399, %v8397
  %v8468 = vpack.c.b16 %v8400, %v8398
  %v8469 = vpack.c.b16 %v8403, %v8401
  %v8470 = vpack.c.b16 %v8404, %v8402
  %v8471 = vpack.c.b16 %v8407, %v8405
  %v8472 = vpack.c.b16 %v8408, %v8406
  %v8473 = vpack.c.b16 %v8411, %v8409
  %v8474 = vpack.c.b16 %v8412, %v8410
  %v8475 = vpack.c.b16 %v8415, %v8413
  %v8476 = vpack.c.b16 %v8416, %v8414
  %v8477 = vpack.c.b16 %v8419, %v8417
  %v8478 = vpack.c.b16 %v8420, %v8418
  %v8479 = vpack.c.b16 %v8423, %v8421
  %v8480 = vpack.c.b16 %v8424, %v8422
  %v8481 = vpack.c.b16 %v8427, %v8425
  %v8482 = vpack.c.b16 %v8428, %v8426
  %v8483 = vpack.c.b16 %v8431, %v8429
  %v8484 = vpack.c.b16 %v8432, %v8430
  %v8485 = vpack.c.b16 %v8435, %v8433
  %v8486 = vpack.c.b16 %v8436, %v8434
  %v8487 = vpack.c.b16 %v8439, %v8437
  %v8488 = vpack.c.b16 %v8440, %v8438
  %v8489 = vpack.c.b16 %v8443, %v8441
  %v8490 = vpack.c.b16 %v8444, %v8442
  %v8491 = vpack.c.b16 %v8447, %v8445
  %v8492 = vpack.c.b16 %v8448, %v8446
  %v8493 = vpack.c.b16 %v8451, %v8449
  %v8494 = vpack.c.b16 %v8452, %v8450
  %v8495 = vpack.c.b16 %v8455, %v8453
  %v8496 = vpack.c.b16 %v8456, %v8454
  %v8497 = vpack.c.b16 %v8459, %v8457
  %v8498 = vpack.c.b16 %v8460, %v8458
  %v8499 = vpack.c.b16 %v8463, %v8461
  %v8500 = vpack.c.b16 %v8464, %v8462
  %v8538 = vsel %vm4789, %v8227, 0
  %v8541 = vsel %vm4789, %v8230, 0
  %v8544 = vsel %vm4789, %v8233, 0
  %v8547 = vsel %vm4789, %v8236, 0
  %v8550 = vsel %vm4789, %v8239, 0
  %v8553 = vsel %vm4789, %v8242, 0
  %v8556 = vsel %vm4789, %v8245, 0
  %v8559 = vsel %vm4789, %v8248, 0
  %v8562 = vsel %vm4789, %v8251, 0
  %v8565 = vsel %vm4789, %v8254, 0
  %v8568 = vsel %vm4789, %v8257, 0
  %v8571 = vsel %vm4789, %v8260, 0
  %v8574 = vsel %vm4789, %v8263, 0
  %v8577 = vsel %vm4789, %v8266, 0
  %v8580 = vsel %vm4789, %v8269, 0
  %v8583 = vsel %vm4789, %v8272, 0
  %v8586 = vsel %vm4789, %v8275, 0
  %v8589 = vsel %vm4789, %v8278, 0
  %v8592 = vsel %vm4789, %v8281, 0
  %v8595 = vsel %vm4789, %v8284, 0
  %v8598 = vsel %vm4789, %v8287, 0
  %v8601 = vsel %vm4789, %v8290, 0
  %v8604 = vsel %vm4789, %v8293, 0
  %v8607 = vsel %vm4789, %v8296, 0
  %v8610 = vsel %vm4789, %v8299, 0
  %v8613 = vsel %vm4789, %v8302, 0
  %v8616 = vsel %vm4789, %v8305, 0
  %v8619 = vsel %vm4789, %v8308, 0
  %v8622 = vsel %vm4789, %v8311, 0
  %v8625 = vsel %vm4789, %v8314, 0
  %v8628 = vsel %vm4789, %v8317, 0
  %v8631 = vsel %vm4789, %v8320, 0
  %8633 = vmatprep.subr.bf16.mxu0 %v8480
  %8634 = vmatpush1.bf16.msra.mxu0 %v8479
  %8635 = vmatprep.subr.bf16.mxu0 %v8478
  %8636 = vmatpush1.bf16.msra.mxu0 %v8477
  %8637 = vmatprep.subr.bf16.mxu0 %v8476
  %8638 = vmatpush1.bf16.msra.mxu0 %v8475
  %8639 = vmatprep.subr.bf16.mxu0 %v8474
  %8640 = vmatpush1.bf16.msra.mxu0 %v8473
  %8641 = vmatprep.subr.bf16.mxu0 %v8472
  %8642 = vmatpush1.bf16.msra.mxu0 %v8471
  %8643 = vmatprep.subr.bf16.mxu0 %v8470
  %8644 = vmatpush1.bf16.msra.mxu0 %v8469
  %8645 = vmatprep.subr.bf16.mxu0 %v8468
  %8646 = vmatpush1.bf16.msra.mxu0 %v8467
  %8647 = vmatprep.subr.bf16.mxu0 %v8466
  %8648 = vmatpush1.bf16.msra.mxu0 %v8465
  %8649 = vmatprep.subr.bf16.mxu0 %v8496
  %8650 = vmatpush2.bf16.msra.mxu0 %v8495
  %8651 = vmatprep.subr.bf16.mxu0 %v8494
  %8652 = vmatpush2.bf16.msra.mxu0 %v8493
  %8653 = vmatprep.subr.bf16.mxu0 %v8492
  %8654 = vmatpush2.bf16.msra.mxu0 %v8491
  %8655 = vmatprep.subr.bf16.mxu0 %v8490
  %8656 = vmatpush2.bf16.msra.mxu0 %v8489
  %8657 = vmatprep.subr.bf16.mxu0 %v8488
  %8658 = vmatpush2.bf16.msra.mxu0 %v8487
  %8659 = vmatprep.subr.bf16.mxu0 %v8486
  %8660 = vmatpush2.bf16.msra.mxu0 %v8485
  %8661 = vmatprep.subr.bf16.mxu0 %v8484
  %8662 = vmatpush2.bf16.msra.mxu0 %v8483
  %8663 = vmatprep.subr.bf16.mxu0 %v8482
  %8664 = vmatpush2.bf16.msra.mxu0 %v8481
  %8665 = vmatprep.mubr.bf16.mxu0 %v8226
  %8666 = vmatmul.mubr.bf16.gmra.mxu0 %v8225
  %v8667 = vpop.f32.mrf.mxu0
  %v8668 = vadd.f32 0.0, %v8667
  %v8669 = vpop.f32.mrf.mxu0
  %v8670 = vadd.f32 0.0, %v8669
  %v8671 = vpop.f32.mrf.mxu0
  %v8672 = vadd.f32 0.0, %v8671
  %v8673 = vpop.f32.mrf.mxu0
  %v8674 = vadd.f32 0.0, %v8673
  %8675 = vmatprep.mubr.bf16.mxu0 %v8229
  %8676 = vmatmul.mubr.bf16.gmra.mxu0 %v8228
  %v8677 = vpop.f32.mrf.mxu0
  %v8678 = vadd.f32 0.0, %v8677
  %v8679 = vpop.f32.mrf.mxu0
  %v8680 = vadd.f32 0.0, %v8679
  %v8681 = vpop.f32.mrf.mxu0
  %v8682 = vadd.f32 0.0, %v8681
  %v8683 = vpop.f32.mrf.mxu0
  %v8684 = vadd.f32 0.0, %v8683
  %8685 = vmatprep.mubr.bf16.mxu0 %v8232
  %8686 = vmatmul.mubr.bf16.gmra.mxu0 %v8231
  %v8687 = vpop.f32.mrf.mxu0
  %v8688 = vadd.f32 0.0, %v8687
  %v8689 = vpop.f32.mrf.mxu0
  %v8690 = vadd.f32 0.0, %v8689
  %v8691 = vpop.f32.mrf.mxu0
  %v8692 = vadd.f32 0.0, %v8691
  %v8693 = vpop.f32.mrf.mxu0
  %v8694 = vadd.f32 0.0, %v8693
  %8695 = vmatprep.mubr.bf16.mxu0 %v8235
  %8696 = vmatmul.mubr.bf16.gmra.mxu0 %v8234
  %v8697 = vpop.f32.mrf.mxu0
  %v8698 = vadd.f32 0.0, %v8697
  %v8699 = vpop.f32.mrf.mxu0
  %v8700 = vadd.f32 0.0, %v8699
  %v8701 = vpop.f32.mrf.mxu0
  %v8702 = vadd.f32 0.0, %v8701
  %v8703 = vpop.f32.mrf.mxu0
  %v8704 = vadd.f32 0.0, %v8703
  %8705 = vmatprep.mubr.bf16.mxu0 %v8238
  %8706 = vmatmul.mubr.bf16.gmra.mxu0 %v8237
  %v8707 = vpop.f32.mrf.mxu0
  %v8708 = vadd.f32 0.0, %v8707
  %v8709 = vpop.f32.mrf.mxu0
  %v8710 = vadd.f32 0.0, %v8709
  %v8711 = vpop.f32.mrf.mxu0
  %v8712 = vadd.f32 0.0, %v8711
  %v8713 = vpop.f32.mrf.mxu0
  %v8714 = vadd.f32 0.0, %v8713
  %8715 = vmatprep.mubr.bf16.mxu0 %v8241
  %8716 = vmatmul.mubr.bf16.gmra.mxu0 %v8240
  %v8717 = vpop.f32.mrf.mxu0
  %v8718 = vadd.f32 0.0, %v8717
  %v8719 = vpop.f32.mrf.mxu0
  %v8720 = vadd.f32 0.0, %v8719
  %v8721 = vpop.f32.mrf.mxu0
  %v8722 = vadd.f32 0.0, %v8721
  %v8723 = vpop.f32.mrf.mxu0
  %v8724 = vadd.f32 0.0, %v8723
  %8725 = vmatprep.mubr.bf16.mxu0 %v8244
  %8726 = vmatmul.mubr.bf16.gmra.mxu0 %v8243
  %v8727 = vpop.f32.mrf.mxu0
  %v8728 = vadd.f32 0.0, %v8727
  %v8729 = vpop.f32.mrf.mxu0
  %v8730 = vadd.f32 0.0, %v8729
  %v8731 = vpop.f32.mrf.mxu0
  %v8732 = vadd.f32 0.0, %v8731
  %v8733 = vpop.f32.mrf.mxu0
  %v8734 = vadd.f32 0.0, %v8733
  %8735 = vmatprep.mubr.bf16.mxu0 %v8247
  %8736 = vmatmul.mubr.bf16.gmra.mxu0 %v8246
  %v8737 = vpop.f32.mrf.mxu0
  %v8738 = vadd.f32 0.0, %v8737
  %v8739 = vpop.f32.mrf.mxu0
  %v8740 = vadd.f32 0.0, %v8739
  %v8741 = vpop.f32.mrf.mxu0
  %v8742 = vadd.f32 0.0, %v8741
  %v8743 = vpop.f32.mrf.mxu0
  %v8744 = vadd.f32 0.0, %v8743
  %8745 = vmatprep.mubr.bf16.mxu0 %v8250
  %8746 = vmatmul.mubr.bf16.gmra.mxu0 %v8249
  %v8747 = vpop.f32.mrf.mxu0
  %v8748 = vadd.f32 0.0, %v8747
  %v8749 = vpop.f32.mrf.mxu0
  %v8750 = vadd.f32 0.0, %v8749
  %v8751 = vpop.f32.mrf.mxu0
  %v8752 = vadd.f32 0.0, %v8751
  %v8753 = vpop.f32.mrf.mxu0
  %v8754 = vadd.f32 0.0, %v8753
  %8755 = vmatprep.mubr.bf16.mxu0 %v8253
  %8756 = vmatmul.mubr.bf16.gmra.mxu0 %v8252
  %v8757 = vpop.f32.mrf.mxu0
  %v8758 = vadd.f32 0.0, %v8757
  %v8759 = vpop.f32.mrf.mxu0
  %v8760 = vadd.f32 0.0, %v8759
  %v8761 = vpop.f32.mrf.mxu0
  %v8762 = vadd.f32 0.0, %v8761
  %v8763 = vpop.f32.mrf.mxu0
  %v8764 = vadd.f32 0.0, %v8763
  %8765 = vmatprep.mubr.bf16.mxu0 %v8256
  %8766 = vmatmul.mubr.bf16.gmra.mxu0 %v8255
  %v8767 = vpop.f32.mrf.mxu0
  %v8768 = vadd.f32 0.0, %v8767
  %v8769 = vpop.f32.mrf.mxu0
  %v8770 = vadd.f32 0.0, %v8769
  %v8771 = vpop.f32.mrf.mxu0
  %v8772 = vadd.f32 0.0, %v8771
  %v8773 = vpop.f32.mrf.mxu0
  %v8774 = vadd.f32 0.0, %v8773
  %8775 = vmatprep.mubr.bf16.mxu0 %v8259
  %8776 = vmatmul.mubr.bf16.gmra.mxu0 %v8258
  %v8777 = vpop.f32.mrf.mxu0
  %v8778 = vadd.f32 0.0, %v8777
  %v8779 = vpop.f32.mrf.mxu0
  %v8780 = vadd.f32 0.0, %v8779
  %v8781 = vpop.f32.mrf.mxu0
  %v8782 = vadd.f32 0.0, %v8781
  %v8783 = vpop.f32.mrf.mxu0
  %v8784 = vadd.f32 0.0, %v8783
  %8785 = vmatprep.mubr.bf16.mxu0 %v8262
  %8786 = vmatmul.mubr.bf16.gmra.mxu0 %v8261
  %v8787 = vpop.f32.mrf.mxu0
  %v8788 = vadd.f32 0.0, %v8787
  %v8789 = vpop.f32.mrf.mxu0
  %v8790 = vadd.f32 0.0, %v8789
  %v8791 = vpop.f32.mrf.mxu0
  %v8792 = vadd.f32 0.0, %v8791
  %v8793 = vpop.f32.mrf.mxu0
  %v8794 = vadd.f32 0.0, %v8793
  %8795 = vmatprep.mubr.bf16.mxu0 %v8265
  %8796 = vmatmul.mubr.bf16.gmra.mxu0 %v8264
  %v8797 = vpop.f32.mrf.mxu0
  %v8798 = vadd.f32 0.0, %v8797
  %v8799 = vpop.f32.mrf.mxu0
  %v8800 = vadd.f32 0.0, %v8799
  %v8801 = vpop.f32.mrf.mxu0
  %v8802 = vadd.f32 0.0, %v8801
  %v8803 = vpop.f32.mrf.mxu0
  %v8804 = vadd.f32 0.0, %v8803
  %8805 = vmatprep.mubr.bf16.mxu0 %v8268
  %8806 = vmatmul.mubr.bf16.gmra.mxu0 %v8267
  %v8807 = vpop.f32.mrf.mxu0
  %v8808 = vadd.f32 0.0, %v8807
  %v8809 = vpop.f32.mrf.mxu0
  %v8810 = vadd.f32 0.0, %v8809
  %v8811 = vpop.f32.mrf.mxu0
  %v8812 = vadd.f32 0.0, %v8811
  %v8813 = vpop.f32.mrf.mxu0
  %v8814 = vadd.f32 0.0, %v8813
  %8815 = vmatprep.mubr.bf16.mxu0 %v8271
  %8816 = vmatmul.mubr.bf16.gmra.mxu0 %v8270
  %v8817 = vpop.f32.mrf.mxu0
  %v8818 = vadd.f32 0.0, %v8817
  %v8819 = vpop.f32.mrf.mxu0
  %v8820 = vadd.f32 0.0, %v8819
  %v8821 = vpop.f32.mrf.mxu0
  %v8822 = vadd.f32 0.0, %v8821
  %v8823 = vpop.f32.mrf.mxu0
  %v8824 = vadd.f32 0.0, %v8823
  %8825 = vmatprep.mubr.bf16.mxu0 %v8274
  %8826 = vmatmul.mubr.bf16.gmra.mxu0 %v8273
  %v8827 = vpop.f32.mrf.mxu0
  %v8828 = vadd.f32 0.0, %v8827
  %v8829 = vpop.f32.mrf.mxu0
  %v8830 = vadd.f32 0.0, %v8829
  %v8831 = vpop.f32.mrf.mxu0
  %v8832 = vadd.f32 0.0, %v8831
  %v8833 = vpop.f32.mrf.mxu0
  %v8834 = vadd.f32 0.0, %v8833
  %8835 = vmatprep.mubr.bf16.mxu0 %v8277
  %8836 = vmatmul.mubr.bf16.gmra.mxu0 %v8276
  %v8837 = vpop.f32.mrf.mxu0
  %v8838 = vadd.f32 0.0, %v8837
  %v8839 = vpop.f32.mrf.mxu0
  %v8840 = vadd.f32 0.0, %v8839
  %v8841 = vpop.f32.mrf.mxu0
  %v8842 = vadd.f32 0.0, %v8841
  %v8843 = vpop.f32.mrf.mxu0
  %v8844 = vadd.f32 0.0, %v8843
  %8845 = vmatprep.mubr.bf16.mxu0 %v8280
  %8846 = vmatmul.mubr.bf16.gmra.mxu0 %v8279
  %v8847 = vpop.f32.mrf.mxu0
  %v8848 = vadd.f32 0.0, %v8847
  %v8849 = vpop.f32.mrf.mxu0
  %v8850 = vadd.f32 0.0, %v8849
  %v8851 = vpop.f32.mrf.mxu0
  %v8852 = vadd.f32 0.0, %v8851
  %v8853 = vpop.f32.mrf.mxu0
  %v8854 = vadd.f32 0.0, %v8853
  %8855 = vmatprep.mubr.bf16.mxu0 %v8283
  %8856 = vmatmul.mubr.bf16.gmra.mxu0 %v8282
  %v8857 = vpop.f32.mrf.mxu0
  %v8858 = vadd.f32 0.0, %v8857
  %v8859 = vpop.f32.mrf.mxu0
  %v8860 = vadd.f32 0.0, %v8859
  %v8861 = vpop.f32.mrf.mxu0
  %v8862 = vadd.f32 0.0, %v8861
  %v8863 = vpop.f32.mrf.mxu0
  %v8864 = vadd.f32 0.0, %v8863
  %8865 = vmatprep.mubr.bf16.mxu0 %v8286
  %8866 = vmatmul.mubr.bf16.gmra.mxu0 %v8285
  %v8867 = vpop.f32.mrf.mxu0
  %v8868 = vadd.f32 0.0, %v8867
  %v8869 = vpop.f32.mrf.mxu0
  %v8870 = vadd.f32 0.0, %v8869
  %v8871 = vpop.f32.mrf.mxu0
  %v8872 = vadd.f32 0.0, %v8871
  %v8873 = vpop.f32.mrf.mxu0
  %v8874 = vadd.f32 0.0, %v8873
  %8875 = vmatprep.mubr.bf16.mxu0 %v8289
  %8876 = vmatmul.mubr.bf16.gmra.mxu0 %v8288
  %v8877 = vpop.f32.mrf.mxu0
  %v8878 = vadd.f32 0.0, %v8877
  %v8879 = vpop.f32.mrf.mxu0
  %v8880 = vadd.f32 0.0, %v8879
  %v8881 = vpop.f32.mrf.mxu0
  %v8882 = vadd.f32 0.0, %v8881
  %v8883 = vpop.f32.mrf.mxu0
  %v8884 = vadd.f32 0.0, %v8883
  %8885 = vmatprep.mubr.bf16.mxu0 %v8292
  %8886 = vmatmul.mubr.bf16.gmra.mxu0 %v8291
  %v8887 = vpop.f32.mrf.mxu0
  %v8888 = vadd.f32 0.0, %v8887
  %v8889 = vpop.f32.mrf.mxu0
  %v8890 = vadd.f32 0.0, %v8889
  %v8891 = vpop.f32.mrf.mxu0
  %v8892 = vadd.f32 0.0, %v8891
  %v8893 = vpop.f32.mrf.mxu0
  %v8894 = vadd.f32 0.0, %v8893
  %8895 = vmatprep.mubr.bf16.mxu0 %v8295
  %8896 = vmatmul.mubr.bf16.gmra.mxu0 %v8294
  %v8897 = vpop.f32.mrf.mxu0
  %v8898 = vadd.f32 0.0, %v8897
  %v8899 = vpop.f32.mrf.mxu0
  %v8900 = vadd.f32 0.0, %v8899
  %v8901 = vpop.f32.mrf.mxu0
  %v8902 = vadd.f32 0.0, %v8901
  %v8903 = vpop.f32.mrf.mxu0
  %v8904 = vadd.f32 0.0, %v8903
  %8905 = vmatprep.mubr.bf16.mxu0 %v8298
  %8906 = vmatmul.mubr.bf16.gmra.mxu0 %v8297
  %v8907 = vpop.f32.mrf.mxu0
  %v8908 = vadd.f32 0.0, %v8907
  %v8909 = vpop.f32.mrf.mxu0
  %v8910 = vadd.f32 0.0, %v8909
  %v8911 = vpop.f32.mrf.mxu0
  %v8912 = vadd.f32 0.0, %v8911
  %v8913 = vpop.f32.mrf.mxu0
  %v8914 = vadd.f32 0.0, %v8913
  %8915 = vmatprep.mubr.bf16.mxu0 %v8301
  %8916 = vmatmul.mubr.bf16.gmra.mxu0 %v8300
  %v8917 = vpop.f32.mrf.mxu0
  %v8918 = vadd.f32 0.0, %v8917
  %v8919 = vpop.f32.mrf.mxu0
  %v8920 = vadd.f32 0.0, %v8919
  %v8921 = vpop.f32.mrf.mxu0
  %v8922 = vadd.f32 0.0, %v8921
  %v8923 = vpop.f32.mrf.mxu0
  %v8924 = vadd.f32 0.0, %v8923
  %8925 = vmatprep.mubr.bf16.mxu0 %v8304
  %8926 = vmatmul.mubr.bf16.gmra.mxu0 %v8303
  %v8927 = vpop.f32.mrf.mxu0
  %v8928 = vadd.f32 0.0, %v8927
  %v8929 = vpop.f32.mrf.mxu0
  %v8930 = vadd.f32 0.0, %v8929
  %v8931 = vpop.f32.mrf.mxu0
  %v8932 = vadd.f32 0.0, %v8931
  %v8933 = vpop.f32.mrf.mxu0
  %v8934 = vadd.f32 0.0, %v8933
  %8935 = vmatprep.mubr.bf16.mxu0 %v8307
  %8936 = vmatmul.mubr.bf16.gmra.mxu0 %v8306
  %v8937 = vpop.f32.mrf.mxu0
  %v8938 = vadd.f32 0.0, %v8937
  %v8939 = vpop.f32.mrf.mxu0
  %v8940 = vadd.f32 0.0, %v8939
  %v8941 = vpop.f32.mrf.mxu0
  %v8942 = vadd.f32 0.0, %v8941
  %v8943 = vpop.f32.mrf.mxu0
  %v8944 = vadd.f32 0.0, %v8943
  %8945 = vmatprep.mubr.bf16.mxu0 %v8310
  %8946 = vmatmul.mubr.bf16.gmra.mxu0 %v8309
  %v8947 = vpop.f32.mrf.mxu0
  %v8948 = vadd.f32 0.0, %v8947
  %v8949 = vpop.f32.mrf.mxu0
  %v8950 = vadd.f32 0.0, %v8949
  %v8951 = vpop.f32.mrf.mxu0
  %v8952 = vadd.f32 0.0, %v8951
  %v8953 = vpop.f32.mrf.mxu0
  %v8954 = vadd.f32 0.0, %v8953
  %8955 = vmatprep.mubr.bf16.mxu0 %v8313
  %8956 = vmatmul.mubr.bf16.gmra.mxu0 %v8312
  %v8957 = vpop.f32.mrf.mxu0
  %v8958 = vadd.f32 0.0, %v8957
  %v8959 = vpop.f32.mrf.mxu0
  %v8960 = vadd.f32 0.0, %v8959
  %v8961 = vpop.f32.mrf.mxu0
  %v8962 = vadd.f32 0.0, %v8961
  %v8963 = vpop.f32.mrf.mxu0
  %v8964 = vadd.f32 0.0, %v8963
  %8965 = vmatprep.mubr.bf16.mxu0 %v8316
  %8966 = vmatmul.mubr.bf16.gmra.mxu0 %v8315
  %v8967 = vpop.f32.mrf.mxu0
  %v8968 = vadd.f32 0.0, %v8967
  %v8969 = vpop.f32.mrf.mxu0
  %v8970 = vadd.f32 0.0, %v8969
  %v8971 = vpop.f32.mrf.mxu0
  %v8972 = vadd.f32 0.0, %v8971
  %v8973 = vpop.f32.mrf.mxu0
  %v8974 = vadd.f32 0.0, %v8973
  %8975 = vmatprep.mubr.bf16.mxu0 %v8319
  %8976 = vmatmul.mubr.bf16.gmra.mxu0 %v8318
  %v8977 = vpop.f32.mrf.mxu0
  %v8978 = vadd.f32 0.0, %v8977
  %v8979 = vpop.f32.mrf.mxu0
  %v8980 = vadd.f32 0.0, %v8979
  %v8981 = vpop.f32.mrf.mxu0
  %v8982 = vadd.f32 0.0, %v8981
  %v8983 = vpop.f32.mrf.mxu0
  %v8984 = vadd.f32 0.0, %v8983
  %8985 = vdwg.mxu0
  %8986 = vmatprep.subr.bf16.mxu0 0
  %8987 = vmatpush1.bf16.msra.mxu0 0
  %8988 = vmatprep.subr.bf16.mxu0 0
  %8989 = vmatpush1.bf16.msra.mxu0 0
  %8990 = vmatprep.subr.bf16.mxu0 0
  %8991 = vmatpush1.bf16.msra.mxu0 0
  %8992 = vmatprep.subr.bf16.mxu0 0
  %8993 = vmatpush1.bf16.msra.mxu0 0
  %8994 = vmatprep.subr.bf16.mxu0 0
  %8995 = vmatpush1.bf16.msra.mxu0 0
  %8996 = vmatprep.subr.bf16.mxu0 0
  %8997 = vmatpush1.bf16.msra.mxu0 0
  %8998 = vmatprep.subr.bf16.mxu0 %v8500
  %8999 = vmatpush1.bf16.msra.mxu0 %v8499
  %9000 = vmatprep.subr.bf16.mxu0 %v8498
  %9001 = vmatpush1.bf16.msra.mxu0 %v8497
  %9002 = vmatprep.subr.bf16.mxu0 0
  %9003 = vmatpush2.bf16.msra.mxu0 0
  %9004 = vmatprep.subr.bf16.mxu0 0
  %9005 = vmatpush2.bf16.msra.mxu0 0
  %9006 = vmatprep.subr.bf16.mxu0 0
  %9007 = vmatpush2.bf16.msra.mxu0 0
  %9008 = vmatprep.subr.bf16.mxu0 0
  %9009 = vmatpush2.bf16.msra.mxu0 0
  %9010 = vmatprep.subr.bf16.mxu0 0
  %9011 = vmatpush2.bf16.msra.mxu0 0
  %9012 = vmatprep.subr.bf16.mxu0 0
  %9013 = vmatpush2.bf16.msra.mxu0 0
  %9014 = vmatprep.subr.bf16.mxu0 0
  %9015 = vmatpush2.bf16.msra.mxu0 0
  %9016 = vmatprep.subr.bf16.mxu0 0
  %9017 = vmatpush2.bf16.msra.mxu0 0
  %9018 = vmatprep.mubr.bf16.mxu0 0
  %9019 = vmatmul.mubr.bf16.gmra.mxu0 %v8538
  %v9020 = vpop.f32.mrf.mxu0
  %v9021 = vadd.f32 %v8668, %v9020
  %v9022 = vpop.f32.mrf.mxu0
  %v9023 = vadd.f32 %v8670, %v9022
  %v9024 = vpop.f32.mrf.mxu0
  %v9025 = vadd.f32 %v8672, %v9024
  %v9026 = vpop.f32.mrf.mxu0
  %v9027 = vadd.f32 %v8674, %v9026
  %9028 = vmatprep.mubr.bf16.mxu0 0
  %9029 = vmatmul.mubr.bf16.gmra.mxu0 %v8541
  %v9030 = vpop.f32.mrf.mxu0
  %v9031 = vadd.f32 %v8678, %v9030
  %v9032 = vpop.f32.mrf.mxu0
  %v9033 = vadd.f32 %v8680, %v9032
  %v9034 = vpop.f32.mrf.mxu0
  %v9035 = vadd.f32 %v8682, %v9034
  %v9036 = vpop.f32.mrf.mxu0
  %v9037 = vadd.f32 %v8684, %v9036
  %9038 = vmatprep.mubr.bf16.mxu0 0
  %9039 = vmatmul.mubr.bf16.gmra.mxu0 %v8544
  %v9040 = vpop.f32.mrf.mxu0
  %v9041 = vadd.f32 %v8688, %v9040
  %v9042 = vpop.f32.mrf.mxu0
  %v9043 = vadd.f32 %v8690, %v9042
  %v9044 = vpop.f32.mrf.mxu0
  %v9045 = vadd.f32 %v8692, %v9044
  %v9046 = vpop.f32.mrf.mxu0
  %v9047 = vadd.f32 %v8694, %v9046
  %9048 = vmatprep.mubr.bf16.mxu0 0
  %9049 = vmatmul.mubr.bf16.gmra.mxu0 %v8547
  %v9050 = vpop.f32.mrf.mxu0
  %v9051 = vadd.f32 %v8698, %v9050
  %v9052 = vpop.f32.mrf.mxu0
  %v9053 = vadd.f32 %v8700, %v9052
  %v9054 = vpop.f32.mrf.mxu0
  %v9055 = vadd.f32 %v8702, %v9054
  %v9056 = vpop.f32.mrf.mxu0
  %v9057 = vadd.f32 %v8704, %v9056
  %9058 = vmatprep.mubr.bf16.mxu0 0
  %9059 = vmatmul.mubr.bf16.gmra.mxu0 %v8550
  %v9060 = vpop.f32.mrf.mxu0
  %v9061 = vadd.f32 %v8708, %v9060
  %v9062 = vpop.f32.mrf.mxu0
  %v9063 = vadd.f32 %v8710, %v9062
  %v9064 = vpop.f32.mrf.mxu0
  %v9065 = vadd.f32 %v8712, %v9064
  %v9066 = vpop.f32.mrf.mxu0
  %v9067 = vadd.f32 %v8714, %v9066
  %9068 = vmatprep.mubr.bf16.mxu0 0
  %9069 = vmatmul.mubr.bf16.gmra.mxu0 %v8553
  %v9070 = vpop.f32.mrf.mxu0
  %v9071 = vadd.f32 %v8718, %v9070
  %v9072 = vpop.f32.mrf.mxu0
  %v9073 = vadd.f32 %v8720, %v9072
  %v9074 = vpop.f32.mrf.mxu0
  %v9075 = vadd.f32 %v8722, %v9074
  %v9076 = vpop.f32.mrf.mxu0
  %v9077 = vadd.f32 %v8724, %v9076
  %9078 = vmatprep.mubr.bf16.mxu0 0
  %9079 = vmatmul.mubr.bf16.gmra.mxu0 %v8556
  %v9080 = vpop.f32.mrf.mxu0
  %v9081 = vadd.f32 %v8728, %v9080
  %v9082 = vpop.f32.mrf.mxu0
  %v9083 = vadd.f32 %v8730, %v9082
  %v9084 = vpop.f32.mrf.mxu0
  %v9085 = vadd.f32 %v8732, %v9084
  %v9086 = vpop.f32.mrf.mxu0
  %v9087 = vadd.f32 %v8734, %v9086
  %9088 = vmatprep.mubr.bf16.mxu0 0
  %9089 = vmatmul.mubr.bf16.gmra.mxu0 %v8559
  %v9090 = vpop.f32.mrf.mxu0
  %v9091 = vadd.f32 %v8738, %v9090
  %v9092 = vpop.f32.mrf.mxu0
  %v9093 = vadd.f32 %v8740, %v9092
  %v9094 = vpop.f32.mrf.mxu0
  %v9095 = vadd.f32 %v8742, %v9094
  %v9096 = vpop.f32.mrf.mxu0
  %v9097 = vadd.f32 %v8744, %v9096
  %9098 = vmatprep.mubr.bf16.mxu0 0
  %9099 = vmatmul.mubr.bf16.gmra.mxu0 %v8562
  %v9100 = vpop.f32.mrf.mxu0
  %v9101 = vadd.f32 %v8748, %v9100
  %v9102 = vpop.f32.mrf.mxu0
  %v9103 = vadd.f32 %v8750, %v9102
  %v9104 = vpop.f32.mrf.mxu0
  %v9105 = vadd.f32 %v8752, %v9104
  %v9106 = vpop.f32.mrf.mxu0
  %v9107 = vadd.f32 %v8754, %v9106
  %9108 = vmatprep.mubr.bf16.mxu0 0
  %9109 = vmatmul.mubr.bf16.gmra.mxu0 %v8565
  %v9110 = vpop.f32.mrf.mxu0
  %v9111 = vadd.f32 %v8758, %v9110
  %v9112 = vpop.f32.mrf.mxu0
  %v9113 = vadd.f32 %v8760, %v9112
  %v9114 = vpop.f32.mrf.mxu0
  %v9115 = vadd.f32 %v8762, %v9114
  %v9116 = vpop.f32.mrf.mxu0
  %v9117 = vadd.f32 %v8764, %v9116
  %9118 = vmatprep.mubr.bf16.mxu0 0
  %9119 = vmatmul.mubr.bf16.gmra.mxu0 %v8568
  %v9120 = vpop.f32.mrf.mxu0
  %v9121 = vadd.f32 %v8768, %v9120
  %v9122 = vpop.f32.mrf.mxu0
  %v9123 = vadd.f32 %v8770, %v9122
  %v9124 = vpop.f32.mrf.mxu0
  %v9125 = vadd.f32 %v8772, %v9124
  %v9126 = vpop.f32.mrf.mxu0
  %v9127 = vadd.f32 %v8774, %v9126
  %9128 = vmatprep.mubr.bf16.mxu0 0
  %9129 = vmatmul.mubr.bf16.gmra.mxu0 %v8571
  %v9130 = vpop.f32.mrf.mxu0
  %v9131 = vadd.f32 %v8778, %v9130
  %v9132 = vpop.f32.mrf.mxu0
  %v9133 = vadd.f32 %v8780, %v9132
  %v9134 = vpop.f32.mrf.mxu0
  %v9135 = vadd.f32 %v8782, %v9134
  %v9136 = vpop.f32.mrf.mxu0
  %v9137 = vadd.f32 %v8784, %v9136
  %9138 = vmatprep.mubr.bf16.mxu0 0
  %9139 = vmatmul.mubr.bf16.gmra.mxu0 %v8574
  %v9140 = vpop.f32.mrf.mxu0
  %v9141 = vadd.f32 %v8788, %v9140
  %v9142 = vpop.f32.mrf.mxu0
  %v9143 = vadd.f32 %v8790, %v9142
  %v9144 = vpop.f32.mrf.mxu0
  %v9145 = vadd.f32 %v8792, %v9144
  %v9146 = vpop.f32.mrf.mxu0
  %v9147 = vadd.f32 %v8794, %v9146
  %9148 = vmatprep.mubr.bf16.mxu0 0
  %9149 = vmatmul.mubr.bf16.gmra.mxu0 %v8577
  %v9150 = vpop.f32.mrf.mxu0
  %v9151 = vadd.f32 %v8798, %v9150
  %v9152 = vpop.f32.mrf.mxu0
  %v9153 = vadd.f32 %v8800, %v9152
  %v9154 = vpop.f32.mrf.mxu0
  %v9155 = vadd.f32 %v8802, %v9154
  %v9156 = vpop.f32.mrf.mxu0
  %v9157 = vadd.f32 %v8804, %v9156
  %9158 = vmatprep.mubr.bf16.mxu0 0
  %9159 = vmatmul.mubr.bf16.gmra.mxu0 %v8580
  %v9160 = vpop.f32.mrf.mxu0
  %v9161 = vadd.f32 %v8808, %v9160
  %v9162 = vpop.f32.mrf.mxu0
  %v9163 = vadd.f32 %v8810, %v9162
  %v9164 = vpop.f32.mrf.mxu0
  %v9165 = vadd.f32 %v8812, %v9164
  %v9166 = vpop.f32.mrf.mxu0
  %v9167 = vadd.f32 %v8814, %v9166
  %9168 = vmatprep.mubr.bf16.mxu0 0
  %9169 = vmatmul.mubr.bf16.gmra.mxu0 %v8583
  %v9170 = vpop.f32.mrf.mxu0
  %v9171 = vadd.f32 %v8818, %v9170
  %v9172 = vpop.f32.mrf.mxu0
  %v9173 = vadd.f32 %v8820, %v9172
  %v9174 = vpop.f32.mrf.mxu0
  %v9175 = vadd.f32 %v8822, %v9174
  %v9176 = vpop.f32.mrf.mxu0
  %v9177 = vadd.f32 %v8824, %v9176
  %9178 = vmatprep.mubr.bf16.mxu0 0
  %9179 = vmatmul.mubr.bf16.gmra.mxu0 %v8586
  %v9180 = vpop.f32.mrf.mxu0
  %v9181 = vadd.f32 %v8828, %v9180
  %v9182 = vpop.f32.mrf.mxu0
  %v9183 = vadd.f32 %v8830, %v9182
  %v9184 = vpop.f32.mrf.mxu0
  %v9185 = vadd.f32 %v8832, %v9184
  %v9186 = vpop.f32.mrf.mxu0
  %v9187 = vadd.f32 %v8834, %v9186
  %9188 = vmatprep.mubr.bf16.mxu0 0
  %9189 = vmatmul.mubr.bf16.gmra.mxu0 %v8589
  %v9190 = vpop.f32.mrf.mxu0
  %v9191 = vadd.f32 %v8838, %v9190
  %v9192 = vpop.f32.mrf.mxu0
  %v9193 = vadd.f32 %v8840, %v9192
  %v9194 = vpop.f32.mrf.mxu0
  %v9195 = vadd.f32 %v8842, %v9194
  %v9196 = vpop.f32.mrf.mxu0
  %v9197 = vadd.f32 %v8844, %v9196
  %9198 = vmatprep.mubr.bf16.mxu0 0
  %9199 = vmatmul.mubr.bf16.gmra.mxu0 %v8592
  %v9200 = vpop.f32.mrf.mxu0
  %v9201 = vadd.f32 %v8848, %v9200
  %v9202 = vpop.f32.mrf.mxu0
  %v9203 = vadd.f32 %v8850, %v9202
  %v9204 = vpop.f32.mrf.mxu0
  %v9205 = vadd.f32 %v8852, %v9204
  %v9206 = vpop.f32.mrf.mxu0
  %v9207 = vadd.f32 %v8854, %v9206
  %9208 = vmatprep.mubr.bf16.mxu0 0
  %9209 = vmatmul.mubr.bf16.gmra.mxu0 %v8595
  %v9210 = vpop.f32.mrf.mxu0
  %v9211 = vadd.f32 %v8858, %v9210
  %v9212 = vpop.f32.mrf.mxu0
  %v9213 = vadd.f32 %v8860, %v9212
  %v9214 = vpop.f32.mrf.mxu0
  %v9215 = vadd.f32 %v8862, %v9214
  %v9216 = vpop.f32.mrf.mxu0
  %v9217 = vadd.f32 %v8864, %v9216
  %9218 = vmatprep.mubr.bf16.mxu0 0
  %9219 = vmatmul.mubr.bf16.gmra.mxu0 %v8598
  %v9220 = vpop.f32.mrf.mxu0
  %v9221 = vadd.f32 %v8868, %v9220
  %v9222 = vpop.f32.mrf.mxu0
  %v9223 = vadd.f32 %v8870, %v9222
  %v9224 = vpop.f32.mrf.mxu0
  %v9225 = vadd.f32 %v8872, %v9224
  %v9226 = vpop.f32.mrf.mxu0
  %v9227 = vadd.f32 %v8874, %v9226
  %9228 = vmatprep.mubr.bf16.mxu0 0
  %9229 = vmatmul.mubr.bf16.gmra.mxu0 %v8601
  %v9230 = vpop.f32.mrf.mxu0
  %v9231 = vadd.f32 %v8878, %v9230
  %v9232 = vpop.f32.mrf.mxu0
  %v9233 = vadd.f32 %v8880, %v9232
  %v9234 = vpop.f32.mrf.mxu0
  %v9235 = vadd.f32 %v8882, %v9234
  %v9236 = vpop.f32.mrf.mxu0
  %v9237 = vadd.f32 %v8884, %v9236
  %9238 = vmatprep.mubr.bf16.mxu0 0
  %9239 = vmatmul.mubr.bf16.gmra.mxu0 %v8604
  %v9240 = vpop.f32.mrf.mxu0
  %v9241 = vadd.f32 %v8888, %v9240
  %v9242 = vpop.f32.mrf.mxu0
  %v9243 = vadd.f32 %v8890, %v9242
  %v9244 = vpop.f32.mrf.mxu0
  %v9245 = vadd.f32 %v8892, %v9244
  %v9246 = vpop.f32.mrf.mxu0
  %v9247 = vadd.f32 %v8894, %v9246
  %9248 = vmatprep.mubr.bf16.mxu0 0
  %9249 = vmatmul.mubr.bf16.gmra.mxu0 %v8607
  %v9250 = vpop.f32.mrf.mxu0
  %v9251 = vadd.f32 %v8898, %v9250
  %v9252 = vpop.f32.mrf.mxu0
  %v9253 = vadd.f32 %v8900, %v9252
  %v9254 = vpop.f32.mrf.mxu0
  %v9255 = vadd.f32 %v8902, %v9254
  %v9256 = vpop.f32.mrf.mxu0
  %v9257 = vadd.f32 %v8904, %v9256
  %9258 = vmatprep.mubr.bf16.mxu0 0
  %9259 = vmatmul.mubr.bf16.gmra.mxu0 %v8610
  %v9260 = vpop.f32.mrf.mxu0
  %v9261 = vadd.f32 %v8908, %v9260
  %v9262 = vpop.f32.mrf.mxu0
  %v9263 = vadd.f32 %v8910, %v9262
  %v9264 = vpop.f32.mrf.mxu0
  %v9265 = vadd.f32 %v8912, %v9264
  %v9266 = vpop.f32.mrf.mxu0
  %v9267 = vadd.f32 %v8914, %v9266
  %9268 = vmatprep.mubr.bf16.mxu0 0
  %9269 = vmatmul.mubr.bf16.gmra.mxu0 %v8613
  %v9270 = vpop.f32.mrf.mxu0
  %v9271 = vadd.f32 %v8918, %v9270
  %v9272 = vpop.f32.mrf.mxu0
  %v9273 = vadd.f32 %v8920, %v9272
  %v9274 = vpop.f32.mrf.mxu0
  %v9275 = vadd.f32 %v8922, %v9274
  %v9276 = vpop.f32.mrf.mxu0
  %v9277 = vadd.f32 %v8924, %v9276
  %9278 = vmatprep.mubr.bf16.mxu0 0
  %9279 = vmatmul.mubr.bf16.gmra.mxu0 %v8616
  %v9280 = vpop.f32.mrf.mxu0
  %v9281 = vadd.f32 %v8928, %v9280
  %v9282 = vpop.f32.mrf.mxu0
  %v9283 = vadd.f32 %v8930, %v9282
  %v9284 = vpop.f32.mrf.mxu0
  %v9285 = vadd.f32 %v8932, %v9284
  %v9286 = vpop.f32.mrf.mxu0
  %v9287 = vadd.f32 %v8934, %v9286
  %9288 = vmatprep.mubr.bf16.mxu0 0
  %9289 = vmatmul.mubr.bf16.gmra.mxu0 %v8619
  %v9290 = vpop.f32.mrf.mxu0
  %v9291 = vadd.f32 %v8938, %v9290
  %v9292 = vpop.f32.mrf.mxu0
  %v9293 = vadd.f32 %v8940, %v9292
  %v9294 = vpop.f32.mrf.mxu0
  %v9295 = vadd.f32 %v8942, %v9294
  %v9296 = vpop.f32.mrf.mxu0
  %v9297 = vadd.f32 %v8944, %v9296
  %9298 = vmatprep.mubr.bf16.mxu0 0
  %9299 = vmatmul.mubr.bf16.gmra.mxu0 %v8622
  %v9300 = vpop.f32.mrf.mxu0
  %v9301 = vadd.f32 %v8948, %v9300
  %v9302 = vpop.f32.mrf.mxu0
  %v9303 = vadd.f32 %v8950, %v9302
  %v9304 = vpop.f32.mrf.mxu0
  %v9305 = vadd.f32 %v8952, %v9304
  %v9306 = vpop.f32.mrf.mxu0
  %v9307 = vadd.f32 %v8954, %v9306
  %9308 = vmatprep.mubr.bf16.mxu0 0
  %9309 = vmatmul.mubr.bf16.gmra.mxu0 %v8625
  %v9310 = vpop.f32.mrf.mxu0
  %v9311 = vadd.f32 %v8958, %v9310
  %v9312 = vpop.f32.mrf.mxu0
  %v9313 = vadd.f32 %v8960, %v9312
  %v9314 = vpop.f32.mrf.mxu0
  %v9315 = vadd.f32 %v8962, %v9314
  %v9316 = vpop.f32.mrf.mxu0
  %v9317 = vadd.f32 %v8964, %v9316
  %9318 = vmatprep.mubr.bf16.mxu0 0
  %9319 = vmatmul.mubr.bf16.gmra.mxu0 %v8628
  %v9320 = vpop.f32.mrf.mxu0
  %v9321 = vadd.f32 %v8968, %v9320
  %v9322 = vpop.f32.mrf.mxu0
  %v9323 = vadd.f32 %v8970, %v9322
  %v9324 = vpop.f32.mrf.mxu0
  %v9325 = vadd.f32 %v8972, %v9324
  %v9326 = vpop.f32.mrf.mxu0
  %v9327 = vadd.f32 %v8974, %v9326
  %9328 = vmatprep.mubr.bf16.mxu0 0
  %9329 = vmatmul.mubr.bf16.gmra.mxu0 %v8631
  %v9330 = vpop.f32.mrf.mxu0
  %v9331 = vadd.f32 %v8978, %v9330
  %v9332 = vpop.f32.mrf.mxu0
  %v9333 = vadd.f32 %v8980, %v9332
  %v9334 = vpop.f32.mrf.mxu0
  %v9335 = vadd.f32 %v8982, %v9334
  %v9336 = vpop.f32.mrf.mxu0
  %v9337 = vadd.f32 %v8984, %v9336
  %9338 = vdwg.mxu0
  %v9339 = vadd.f32 %v9021, %v9025
  %v9340 = vadd.f32 %v9339, %v9031
  %v9341 = vadd.f32 %v9340, %v9035
  %v9342 = vadd.f32 %v9341, %v9041
  %v9343 = vadd.f32 %v9342, %v9045
  %v9344 = vadd.f32 %v9343, %v9051
  %v9345 = vadd.f32 %v9344, %v9055
  %v9346 = vadd.f32 %v9345, %v9061
  %v9347 = vadd.f32 %v9346, %v9065
  %v9348 = vadd.f32 %v9347, %v9071
  %v9349 = vadd.f32 %v9348, %v9075
  %v9350 = vadd.f32 %v9349, %v9081
  %v9351 = vadd.f32 %v9350, %v9085
  %v9352 = vadd.f32 %v9351, %v9091
  %v9353 = vadd.f32 %v9352, %v9095
  %v9354 = vadd.f32 %v9353, %v9101
  %v9355 = vadd.f32 %v9354, %v9105
  %v9356 = vadd.f32 %v9355, %v9111
  %v9357 = vadd.f32 %v9356, %v9115
  %v9358 = vadd.f32 %v9357, %v9121
  %v9359 = vadd.f32 %v9358, %v9125
  %v9360 = vadd.f32 %v9359, %v9131
  %v9361 = vadd.f32 %v9360, %v9135
  %v9362 = vadd.f32 %v9361, %v9141
  %v9363 = vadd.f32 %v9362, %v9145
  %v9364 = vadd.f32 %v9363, %v9151
  %v9365 = vadd.f32 %v9364, %v9155
  %v9366 = vadd.f32 %v9365, %v9161
  %v9367 = vadd.f32 %v9366, %v9165
  %v9368 = vadd.f32 %v9367, %v9171
  %v9369 = vadd.f32 %v9368, %v9175
  %v9370 = vadd.f32 %v9369, %v9181
  %v9371 = vadd.f32 %v9370, %v9185
  %v9372 = vadd.f32 %v9371, %v9191
  %v9373 = vadd.f32 %v9372, %v9195
  %v9374 = vadd.f32 %v9373, %v9201
  %v9375 = vadd.f32 %v9374, %v9205
  %v9376 = vadd.f32 %v9375, %v9211
  %v9377 = vadd.f32 %v9376, %v9215
  %v9378 = vadd.f32 %v9377, %v9221
  %v9379 = vadd.f32 %v9378, %v9225
  %v9380 = vadd.f32 %v9379, %v9231
  %v9381 = vadd.f32 %v9380, %v9235
  %v9382 = vadd.f32 %v9381, %v9241
  %v9383 = vadd.f32 %v9382, %v9245
  %v9384 = vadd.f32 %v9383, %v9251
  %v9385 = vadd.f32 %v9384, %v9255
  %v9386 = vadd.f32 %v9385, %v9261
  %v9387 = vadd.f32 %v9386, %v9265
  %v9388 = vadd.f32 %v9387, %v9271
  %v9389 = vadd.f32 %v9388, %v9275
  %v9390 = vadd.f32 %v9389, %v9281
  %v9391 = vadd.f32 %v9390, %v9285
  %v9392 = vadd.f32 %v9391, %v9291
  %v9393 = vadd.f32 %v9392, %v9295
  %v9394 = vadd.f32 %v9393, %v9301
  %v9395 = vadd.f32 %v9394, %v9305
  %v9396 = vadd.f32 %v9395, %v9311
  %v9397 = vadd.f32 %v9396, %v9315
  %v9398 = vadd.f32 %v9397, %v9321
  %v9399 = vadd.f32 %v9398, %v9325
  %v9400 = vadd.f32 %v9399, %v9331
  %v9401 = vadd.f32 %v9400, %v9335
  %v9402 = vrot.slane %v9401, 4
  %v9403 = vadd.f32 %v9401, %v9402
  %v9404 = vrot.slane %v9403, 2
  %v9405 = vadd.f32 %v9403, %v9404
  %v9406 = vrot.slane %v9405, 1
  %v9407 = vadd.f32 %v9405, %v9406
  %v9408 = vadd.f32 %v9023, %v9027
  %v9409 = vadd.f32 %v9408, %v9033
  %v9410 = vadd.f32 %v9409, %v9037
  %v9411 = vadd.f32 %v9410, %v9043
  %v9412 = vadd.f32 %v9411, %v9047
  %v9413 = vadd.f32 %v9412, %v9053
  %v9414 = vadd.f32 %v9413, %v9057
  %v9415 = vadd.f32 %v9414, %v9063
  %v9416 = vadd.f32 %v9415, %v9067
  %v9417 = vadd.f32 %v9416, %v9073
  %v9418 = vadd.f32 %v9417, %v9077
  %v9419 = vadd.f32 %v9418, %v9083
  %v9420 = vadd.f32 %v9419, %v9087
  %v9421 = vadd.f32 %v9420, %v9093
  %v9422 = vadd.f32 %v9421, %v9097
  %v9423 = vadd.f32 %v9422, %v9103
  %v9424 = vadd.f32 %v9423, %v9107
  %v9425 = vadd.f32 %v9424, %v9113
  %v9426 = vadd.f32 %v9425, %v9117
  %v9427 = vadd.f32 %v9426, %v9123
  %v9428 = vadd.f32 %v9427, %v9127
  %v9429 = vadd.f32 %v9428, %v9133
  %v9430 = vadd.f32 %v9429, %v9137
  %v9431 = vadd.f32 %v9430, %v9143
  %v9432 = vadd.f32 %v9431, %v9147
  %v9433 = vadd.f32 %v9432, %v9153
  %v9434 = vadd.f32 %v9433, %v9157
  %v9435 = vadd.f32 %v9434, %v9163
  %v9436 = vadd.f32 %v9435, %v9167
  %v9437 = vadd.f32 %v9436, %v9173
  %v9438 = vadd.f32 %v9437, %v9177
  %v9439 = vadd.f32 %v9438, %v9183
  %v9440 = vadd.f32 %v9439, %v9187
  %v9441 = vadd.f32 %v9440, %v9193
  %v9442 = vadd.f32 %v9441, %v9197
  %v9443 = vadd.f32 %v9442, %v9203
  %v9444 = vadd.f32 %v9443, %v9207
  %v9445 = vadd.f32 %v9444, %v9213
  %v9446 = vadd.f32 %v9445, %v9217
  %v9447 = vadd.f32 %v9446, %v9223
  %v9448 = vadd.f32 %v9447, %v9227
  %v9449 = vadd.f32 %v9448, %v9233
  %v9450 = vadd.f32 %v9449, %v9237
  %v9451 = vadd.f32 %v9450, %v9243
  %v9452 = vadd.f32 %v9451, %v9247
  %v9453 = vadd.f32 %v9452, %v9253
  %v9454 = vadd.f32 %v9453, %v9257
  %v9455 = vadd.f32 %v9454, %v9263
  %v9456 = vadd.f32 %v9455, %v9267
  %v9457 = vadd.f32 %v9456, %v9273
  %v9458 = vadd.f32 %v9457, %v9277
  %v9459 = vadd.f32 %v9458, %v9283
  %v9460 = vadd.f32 %v9459, %v9287
  %v9461 = vadd.f32 %v9460, %v9293
  %v9462 = vadd.f32 %v9461, %v9297
  %v9463 = vadd.f32 %v9462, %v9303
  %v9464 = vadd.f32 %v9463, %v9307
  %v9465 = vadd.f32 %v9464, %v9313
  %v9466 = vadd.f32 %v9465, %v9317
  %v9467 = vadd.f32 %v9466, %v9323
  %v9468 = vadd.f32 %v9467, %v9327
  %v9469 = vadd.f32 %v9468, %v9333
  %v9470 = vadd.f32 %v9469, %v9337
  %v9471 = vrot.slane %v9470, 4
  %v9472 = vadd.f32 %v9470, %v9471
  %v9473 = vrot.slane %v9472, 2
  %v9474 = vadd.f32 %v9472, %v9473
  %v9475 = vrot.slane %v9474, 1
  %v9476 = vadd.f32 %v9474, %v9475
  %v9477 = vmul.f32 %v9407, %v4923
  %v9478 = vmul.f32 %v9476, %v4923
  %v9479 = vsub.f32 %v9021, %v9477
  %v9480 = vsub.f32 %v9023, %v9478
  %v9481 = vsub.f32 %v9025, %v9477
  %v9482 = vsub.f32 %v9027, %v9478
  %v9483 = vsub.f32 %v9031, %v9477
  %v9484 = vsub.f32 %v9033, %v9478
  %v9485 = vsub.f32 %v9035, %v9477
  %v9486 = vsub.f32 %v9037, %v9478
  %v9487 = vsub.f32 %v9041, %v9477
  %v9488 = vsub.f32 %v9043, %v9478
  %v9489 = vsub.f32 %v9045, %v9477
  %v9490 = vsub.f32 %v9047, %v9478
  %v9491 = vsub.f32 %v9051, %v9477
  %v9492 = vsub.f32 %v9053, %v9478
  %v9493 = vsub.f32 %v9055, %v9477
  %v9494 = vsub.f32 %v9057, %v9478
  %v9495 = vsub.f32 %v9061, %v9477
  %v9496 = vsub.f32 %v9063, %v9478
  %v9497 = vsub.f32 %v9065, %v9477
  %v9498 = vsub.f32 %v9067, %v9478
  %v9499 = vsub.f32 %v9071, %v9477
  %v9500 = vsub.f32 %v9073, %v9478
  %v9501 = vsub.f32 %v9075, %v9477
  %v9502 = vsub.f32 %v9077, %v9478
  %v9503 = vsub.f32 %v9081, %v9477
  %v9504 = vsub.f32 %v9083, %v9478
  %v9505 = vsub.f32 %v9085, %v9477
  %v9506 = vsub.f32 %v9087, %v9478
  %v9507 = vsub.f32 %v9091, %v9477
  %v9508 = vsub.f32 %v9093, %v9478
  %v9509 = vsub.f32 %v9095, %v9477
  %v9510 = vsub.f32 %v9097, %v9478
  %v9511 = vsub.f32 %v9101, %v9477
  %v9512 = vsub.f32 %v9103, %v9478
  %v9513 = vsub.f32 %v9105, %v9477
  %v9514 = vsub.f32 %v9107, %v9478
  %v9515 = vsub.f32 %v9111, %v9477
  %v9516 = vsub.f32 %v9113, %v9478
  %v9517 = vsub.f32 %v9115, %v9477
  %v9518 = vsub.f32 %v9117, %v9478
  %v9519 = vsub.f32 %v9121, %v9477
  %v9520 = vsub.f32 %v9123, %v9478
  %v9521 = vsub.f32 %v9125, %v9477
  %v9522 = vsub.f32 %v9127, %v9478
  %v9523 = vsub.f32 %v9131, %v9477
  %v9524 = vsub.f32 %v9133, %v9478
  %v9525 = vsub.f32 %v9135, %v9477
  %v9526 = vsub.f32 %v9137, %v9478
  %v9527 = vsub.f32 %v9141, %v9477
  %v9528 = vsub.f32 %v9143, %v9478
  %v9529 = vsub.f32 %v9145, %v9477
  %v9530 = vsub.f32 %v9147, %v9478
  %v9531 = vsub.f32 %v9151, %v9477
  %v9532 = vsub.f32 %v9153, %v9478
  %v9533 = vsub.f32 %v9155, %v9477
  %v9534 = vsub.f32 %v9157, %v9478
  %v9535 = vsub.f32 %v9161, %v9477
  %v9536 = vsub.f32 %v9163, %v9478
  %v9537 = vsub.f32 %v9165, %v9477
  %v9538 = vsub.f32 %v9167, %v9478
  %v9539 = vsub.f32 %v9171, %v9477
  %v9540 = vsub.f32 %v9173, %v9478
  %v9541 = vsub.f32 %v9175, %v9477
  %v9542 = vsub.f32 %v9177, %v9478
  %v9543 = vsub.f32 %v9181, %v9477
  %v9544 = vsub.f32 %v9183, %v9478
  %v9545 = vsub.f32 %v9185, %v9477
  %v9546 = vsub.f32 %v9187, %v9478
  %v9547 = vsub.f32 %v9191, %v9477
  %v9548 = vsub.f32 %v9193, %v9478
  %v9549 = vsub.f32 %v9195, %v9477
  %v9550 = vsub.f32 %v9197, %v9478
  %v9551 = vsub.f32 %v9201, %v9477
  %v9552 = vsub.f32 %v9203, %v9478
  %v9553 = vsub.f32 %v9205, %v9477
  %v9554 = vsub.f32 %v9207, %v9478
  %v9555 = vsub.f32 %v9211, %v9477
  %v9556 = vsub.f32 %v9213, %v9478
  %v9557 = vsub.f32 %v9215, %v9477
  %v9558 = vsub.f32 %v9217, %v9478
  %v9559 = vsub.f32 %v9221, %v9477
  %v9560 = vsub.f32 %v9223, %v9478
  %v9561 = vsub.f32 %v9225, %v9477
  %v9562 = vsub.f32 %v9227, %v9478
  %v9563 = vsub.f32 %v9231, %v9477
  %v9564 = vsub.f32 %v9233, %v9478
  %v9565 = vsub.f32 %v9235, %v9477
  %v9566 = vsub.f32 %v9237, %v9478
  %v9567 = vsub.f32 %v9241, %v9477
  %v9568 = vsub.f32 %v9243, %v9478
  %v9569 = vsub.f32 %v9245, %v9477
  %v9570 = vsub.f32 %v9247, %v9478
  %v9571 = vsub.f32 %v9251, %v9477
  %v9572 = vsub.f32 %v9253, %v9478
  %v9573 = vsub.f32 %v9255, %v9477
  %v9574 = vsub.f32 %v9257, %v9478
  %v9575 = vsub.f32 %v9261, %v9477
  %v9576 = vsub.f32 %v9263, %v9478
  %v9577 = vsub.f32 %v9265, %v9477
  %v9578 = vsub.f32 %v9267, %v9478
  %v9579 = vsub.f32 %v9271, %v9477
  %v9580 = vsub.f32 %v9273, %v9478
  %v9581 = vsub.f32 %v9275, %v9477
  %v9582 = vsub.f32 %v9277, %v9478
  %v9583 = vsub.f32 %v9281, %v9477
  %v9584 = vsub.f32 %v9283, %v9478
  %v9585 = vsub.f32 %v9285, %v9477
  %v9586 = vsub.f32 %v9287, %v9478
  %v9587 = vsub.f32 %v9291, %v9477
  %v9588 = vsub.f32 %v9293, %v9478
  %v9589 = vsub.f32 %v9295, %v9477
  %v9590 = vsub.f32 %v9297, %v9478
  %v9591 = vsub.f32 %v9301, %v9477
  %v9592 = vsub.f32 %v9303, %v9478
  %v9593 = vsub.f32 %v9305, %v9477
  %v9594 = vsub.f32 %v9307, %v9478
  %v9595 = vsub.f32 %v9311, %v9477
  %v9596 = vsub.f32 %v9313, %v9478
  %v9597 = vsub.f32 %v9315, %v9477
  %v9598 = vsub.f32 %v9317, %v9478
  %v9599 = vsub.f32 %v9321, %v9477
  %v9600 = vsub.f32 %v9323, %v9478
  %v9601 = vsub.f32 %v9325, %v9477
  %v9602 = vsub.f32 %v9327, %v9478
  %v9603 = vsub.f32 %v9331, %v9477
  %v9604 = vsub.f32 %v9333, %v9478
  %v9605 = vsub.f32 %v9335, %v9477
  %v9606 = vsub.f32 %v9337, %v9478
  %v9607 = vmul.f32 %v9479, %v9479
  %v9608 = vmul.f32 %v9480, %v9480
  %v9609 = vmul.f32 %v9481, %v9481
  %v9610 = vmul.f32 %v9482, %v9482
  %v9611 = vmul.f32 %v9483, %v9483
  %v9612 = vmul.f32 %v9484, %v9484
  %v9613 = vmul.f32 %v9485, %v9485
  %v9614 = vmul.f32 %v9486, %v9486
  %v9615 = vmul.f32 %v9487, %v9487
  %v9616 = vmul.f32 %v9488, %v9488
  %v9617 = vmul.f32 %v9489, %v9489
  %v9618 = vmul.f32 %v9490, %v9490
  %v9619 = vmul.f32 %v9491, %v9491
  %v9620 = vmul.f32 %v9492, %v9492
  %v9621 = vmul.f32 %v9493, %v9493
  %v9622 = vmul.f32 %v9494, %v9494
  %v9623 = vmul.f32 %v9495, %v9495
  %v9624 = vmul.f32 %v9496, %v9496
  %v9625 = vmul.f32 %v9497, %v9497
  %v9626 = vmul.f32 %v9498, %v9498
  %v9627 = vmul.f32 %v9499, %v9499
  %v9628 = vmul.f32 %v9500, %v9500
  %v9629 = vmul.f32 %v9501, %v9501
  %v9630 = vmul.f32 %v9502, %v9502
  %v9631 = vmul.f32 %v9503, %v9503
  %v9632 = vmul.f32 %v9504, %v9504
  %v9633 = vmul.f32 %v9505, %v9505
  %v9634 = vmul.f32 %v9506, %v9506
  %v9635 = vmul.f32 %v9507, %v9507
  %v9636 = vmul.f32 %v9508, %v9508
  %v9637 = vmul.f32 %v9509, %v9509
  %v9638 = vmul.f32 %v9510, %v9510
  %v9639 = vmul.f32 %v9511, %v9511
  %v9640 = vmul.f32 %v9512, %v9512
  %v9641 = vmul.f32 %v9513, %v9513
  %v9642 = vmul.f32 %v9514, %v9514
  %v9643 = vmul.f32 %v9515, %v9515
  %v9644 = vmul.f32 %v9516, %v9516
  %v9645 = vmul.f32 %v9517, %v9517
  %v9646 = vmul.f32 %v9518, %v9518
  %v9647 = vmul.f32 %v9519, %v9519
  %v9648 = vmul.f32 %v9520, %v9520
  %v9649 = vmul.f32 %v9521, %v9521
  %v9650 = vmul.f32 %v9522, %v9522
  %v9651 = vmul.f32 %v9523, %v9523
  %v9652 = vmul.f32 %v9524, %v9524
  %v9653 = vmul.f32 %v9525, %v9525
  %v9654 = vmul.f32 %v9526, %v9526
  %v9655 = vmul.f32 %v9527, %v9527
  %v9656 = vmul.f32 %v9528, %v9528
  %v9657 = vmul.f32 %v9529, %v9529
  %v9658 = vmul.f32 %v9530, %v9530
  %v9659 = vmul.f32 %v9531, %v9531
  %v9660 = vmul.f32 %v9532, %v9532
  %v9661 = vmul.f32 %v9533, %v9533
  %v9662 = vmul.f32 %v9534, %v9534
  %v9663 = vmul.f32 %v9535, %v9535
  %v9664 = vmul.f32 %v9536, %v9536
  %v9665 = vmul.f32 %v9537, %v9537
  %v9666 = vmul.f32 %v9538, %v9538
  %v9667 = vmul.f32 %v9539, %v9539
  %v9668 = vmul.f32 %v9540, %v9540
  %v9669 = vmul.f32 %v9541, %v9541
  %v9670 = vmul.f32 %v9542, %v9542
  %v9671 = vmul.f32 %v9543, %v9543
  %v9672 = vmul.f32 %v9544, %v9544
  %v9673 = vmul.f32 %v9545, %v9545
  %v9674 = vmul.f32 %v9546, %v9546
  %v9675 = vmul.f32 %v9547, %v9547
  %v9676 = vmul.f32 %v9548, %v9548
  %v9677 = vmul.f32 %v9549, %v9549
  %v9678 = vmul.f32 %v9550, %v9550
  %v9679 = vmul.f32 %v9551, %v9551
  %v9680 = vmul.f32 %v9552, %v9552
  %v9681 = vmul.f32 %v9553, %v9553
  %v9682 = vmul.f32 %v9554, %v9554
  %v9683 = vmul.f32 %v9555, %v9555
  %v9684 = vmul.f32 %v9556, %v9556
  %v9685 = vmul.f32 %v9557, %v9557
  %v9686 = vmul.f32 %v9558, %v9558
  %v9687 = vmul.f32 %v9559, %v9559
  %v9688 = vmul.f32 %v9560, %v9560
  %v9689 = vmul.f32 %v9561, %v9561
  %v9690 = vmul.f32 %v9562, %v9562
  %v9691 = vmul.f32 %v9563, %v9563
  %v9692 = vmul.f32 %v9564, %v9564
  %v9693 = vmul.f32 %v9565, %v9565
  %v9694 = vmul.f32 %v9566, %v9566
  %v9695 = vmul.f32 %v9567, %v9567
  %v9696 = vmul.f32 %v9568, %v9568
  %v9697 = vmul.f32 %v9569, %v9569
  %v9698 = vmul.f32 %v9570, %v9570
  %v9699 = vmul.f32 %v9571, %v9571
  %v9700 = vmul.f32 %v9572, %v9572
  %v9701 = vmul.f32 %v9573, %v9573
  %v9702 = vmul.f32 %v9574, %v9574
  %v9703 = vmul.f32 %v9575, %v9575
  %v9704 = vmul.f32 %v9576, %v9576
  %v9705 = vmul.f32 %v9577, %v9577
  %v9706 = vmul.f32 %v9578, %v9578
  %v9707 = vmul.f32 %v9579, %v9579
  %v9708 = vmul.f32 %v9580, %v9580
  %v9709 = vmul.f32 %v9581, %v9581
  %v9710 = vmul.f32 %v9582, %v9582
  %v9711 = vmul.f32 %v9583, %v9583
  %v9712 = vmul.f32 %v9584, %v9584
  %v9713 = vmul.f32 %v9585, %v9585
  %v9714 = vmul.f32 %v9586, %v9586
  %v9715 = vmul.f32 %v9587, %v9587
  %v9716 = vmul.f32 %v9588, %v9588
  %v9717 = vmul.f32 %v9589, %v9589
  %v9718 = vmul.f32 %v9590, %v9590
  %v9719 = vmul.f32 %v9591, %v9591
  %v9720 = vmul.f32 %v9592, %v9592
  %v9721 = vmul.f32 %v9593, %v9593
  %v9722 = vmul.f32 %v9594, %v9594
  %v9723 = vmul.f32 %v9595, %v9595
  %v9724 = vmul.f32 %v9596, %v9596
  %v9725 = vmul.f32 %v9597, %v9597
  %v9726 = vmul.f32 %v9598, %v9598
  %v9727 = vmul.f32 %v9599, %v9599
  %v9728 = vmul.f32 %v9600, %v9600
  %v9729 = vmul.f32 %v9601, %v9601
  %v9730 = vmul.f32 %v9602, %v9602
  %v9731 = vmul.f32 %v9603, %v9603
  %v9732 = vmul.f32 %v9604, %v9604
  %v9733 = vmul.f32 %v9605, %v9605
  %v9734 = vmul.f32 %v9606, %v9606
  %v9735 = vadd.f32 %v9607, %v9609
  %v9736 = vadd.f32 %v9735, %v9611
  %v9737 = vadd.f32 %v9736, %v9613
  %v9738 = vadd.f32 %v9737, %v9615
  %v9739 = vadd.f32 %v9738, %v9617
  %v9740 = vadd.f32 %v9739, %v9619
  %v9741 = vadd.f32 %v9740, %v9621
  %v9742 = vadd.f32 %v9741, %v9623
  %v9743 = vadd.f32 %v9742, %v9625
  %v9744 = vadd.f32 %v9743, %v9627
  %v9745 = vadd.f32 %v9744, %v9629
  %v9746 = vadd.f32 %v9745, %v9631
  %v9747 = vadd.f32 %v9746, %v9633
  %v9748 = vadd.f32 %v9747, %v9635
  %v9749 = vadd.f32 %v9748, %v9637
  %v9750 = vadd.f32 %v9749, %v9639
  %v9751 = vadd.f32 %v9750, %v9641
  %v9752 = vadd.f32 %v9751, %v9643
  %v9753 = vadd.f32 %v9752, %v9645
  %v9754 = vadd.f32 %v9753, %v9647
  %v9755 = vadd.f32 %v9754, %v9649
  %v9756 = vadd.f32 %v9755, %v9651
  %v9757 = vadd.f32 %v9756, %v9653
  %v9758 = vadd.f32 %v9757, %v9655
  %v9759 = vadd.f32 %v9758, %v9657
  %v9760 = vadd.f32 %v9759, %v9659
  %v9761 = vadd.f32 %v9760, %v9661
  %v9762 = vadd.f32 %v9761, %v9663
  %v9763 = vadd.f32 %v9762, %v9665
  %v9764 = vadd.f32 %v9763, %v9667
  %v9765 = vadd.f32 %v9764, %v9669
  %v9766 = vadd.f32 %v9765, %v9671
  %v9767 = vadd.f32 %v9766, %v9673
  %v9768 = vadd.f32 %v9767, %v9675
  %v9769 = vadd.f32 %v9768, %v9677
  %v9770 = vadd.f32 %v9769, %v9679
  %v9771 = vadd.f32 %v9770, %v9681
  %v9772 = vadd.f32 %v9771, %v9683
  %v9773 = vadd.f32 %v9772, %v9685
  %v9774 = vadd.f32 %v9773, %v9687
  %v9775 = vadd.f32 %v9774, %v9689
  %v9776 = vadd.f32 %v9775, %v9691
  %v9777 = vadd.f32 %v9776, %v9693
  %v9778 = vadd.f32 %v9777, %v9695
  %v9779 = vadd.f32 %v9778, %v9697
  %v9780 = vadd.f32 %v9779, %v9699
  %v9781 = vadd.f32 %v9780, %v9701
  %v9782 = vadd.f32 %v9781, %v9703
  %v9783 = vadd.f32 %v9782, %v9705
  %v9784 = vadd.f32 %v9783, %v9707
  %v9785 = vadd.f32 %v9784, %v9709
  %v9786 = vadd.f32 %v9785, %v9711
  %v9787 = vadd.f32 %v9786, %v9713
  %v9788 = vadd.f32 %v9787, %v9715
  %v9789 = vadd.f32 %v9788, %v9717
  %v9790 = vadd.f32 %v9789, %v9719
  %v9791 = vadd.f32 %v9790, %v9721
  %v9792 = vadd.f32 %v9791, %v9723
  %v9793 = vadd.f32 %v9792, %v9725
  %v9794 = vadd.f32 %v9793, %v9727
  %v9795 = vadd.f32 %v9794, %v9729
  %v9796 = vadd.f32 %v9795, %v9731
  %v9797 = vadd.f32 %v9796, %v9733
  %v9798 = vrot.slane %v9797, 4
  %v9799 = vadd.f32 %v9797, %v9798
  %v9800 = vrot.slane %v9799, 2
  %v9801 = vadd.f32 %v9799, %v9800
  %v9802 = vrot.slane %v9801, 1
  %v9803 = vadd.f32 %v9801, %v9802
  %v9804 = vadd.f32 %v9608, %v9610
  %v9805 = vadd.f32 %v9804, %v9612
  %v9806 = vadd.f32 %v9805, %v9614
  %v9807 = vadd.f32 %v9806, %v9616
  %v9808 = vadd.f32 %v9807, %v9618
  %v9809 = vadd.f32 %v9808, %v9620
  %v9810 = vadd.f32 %v9809, %v9622
  %v9811 = vadd.f32 %v9810, %v9624
  %v9812 = vadd.f32 %v9811, %v9626
  %v9813 = vadd.f32 %v9812, %v9628
  %v9814 = vadd.f32 %v9813, %v9630
  %v9815 = vadd.f32 %v9814, %v9632
  %v9816 = vadd.f32 %v9815, %v9634
  %v9817 = vadd.f32 %v9816, %v9636
  %v9818 = vadd.f32 %v9817, %v9638
  %v9819 = vadd.f32 %v9818, %v9640
  %v9820 = vadd.f32 %v9819, %v9642
  %v9821 = vadd.f32 %v9820, %v9644
  %v9822 = vadd.f32 %v9821, %v9646
  %v9823 = vadd.f32 %v9822, %v9648
  %v9824 = vadd.f32 %v9823, %v9650
  %v9825 = vadd.f32 %v9824, %v9652
  %v9826 = vadd.f32 %v9825, %v9654
  %v9827 = vadd.f32 %v9826, %v9656
  %v9828 = vadd.f32 %v9827, %v9658
  %v9829 = vadd.f32 %v9828, %v9660
  %v9830 = vadd.f32 %v9829, %v9662
  %v9831 = vadd.f32 %v9830, %v9664
  %v9832 = vadd.f32 %v9831, %v9666
  %v9833 = vadd.f32 %v9832, %v9668
  %v9834 = vadd.f32 %v9833, %v9670
  %v9835 = vadd.f32 %v9834, %v9672
  %v9836 = vadd.f32 %v9835, %v9674
  %v9837 = vadd.f32 %v9836, %v9676
  %v9838 = vadd.f32 %v9837, %v9678
  %v9839 = vadd.f32 %v9838, %v9680
  %v9840 = vadd.f32 %v9839, %v9682
  %v9841 = vadd.f32 %v9840, %v9684
  %v9842 = vadd.f32 %v9841, %v9686
  %v9843 = vadd.f32 %v9842, %v9688
  %v9844 = vadd.f32 %v9843, %v9690
  %v9845 = vadd.f32 %v9844, %v9692
  %v9846 = vadd.f32 %v9845, %v9694
  %v9847 = vadd.f32 %v9846, %v9696
  %v9848 = vadd.f32 %v9847, %v9698
  %v9849 = vadd.f32 %v9848, %v9700
  %v9850 = vadd.f32 %v9849, %v9702
  %v9851 = vadd.f32 %v9850, %v9704
  %v9852 = vadd.f32 %v9851, %v9706
  %v9853 = vadd.f32 %v9852, %v9708
  %v9854 = vadd.f32 %v9853, %v9710
  %v9855 = vadd.f32 %v9854, %v9712
  %v9856 = vadd.f32 %v9855, %v9714
  %v9857 = vadd.f32 %v9856, %v9716
  %v9858 = vadd.f32 %v9857, %v9718
  %v9859 = vadd.f32 %v9858, %v9720
  %v9860 = vadd.f32 %v9859, %v9722
  %v9861 = vadd.f32 %v9860, %v9724
  %v9862 = vadd.f32 %v9861, %v9726
  %v9863 = vadd.f32 %v9862, %v9728
  %v9864 = vadd.f32 %v9863, %v9730
  %v9865 = vadd.f32 %v9864, %v9732
  %v9866 = vadd.f32 %v9865, %v9734
  %v9867 = vrot.slane %v9866, 4
  %v9868 = vadd.f32 %v9866, %v9867
  %v9869 = vrot.slane %v9868, 2
  %v9870 = vadd.f32 %v9868, %v9869
  %v9871 = vrot.slane %v9870, 1
  %v9872 = vadd.f32 %v9870, %v9871
  %v9873 = vmul.f32 %v9803, %v4923
  %v9874 = vmul.f32 %v9872, %v4923
  %v9875 = vld [vmem:[%s5] sm:$0x3]
  %v9876 = vadd.f32 %v9873, 1e-05
  %v9877 = vadd.f32 %v9874, 1e-05
  %v9878 = vrsqrt.pop %v9876
  %v9879 = vrsqrt.pop %v9877
  %v9882 = vcombine.low %v9878, %v9879
  %v9884 = vunpack.c.l.s4 1966171168
  %v9885 = vunpack.c.0.s8 %v9884
  %v9886 = vlaneseq
  %v9887 = vshrl.u32 %v9886, 7
  %v9888 = vsub.s32 %v9885, %v9887
  %v9889 = vrot.slane %v9882, %v9888
  %v9891 = vunpack.c.l.s4 1966171168
  %v9892 = vunpack.c.0.s8 %v9891
  %v9893 = vlaneseq
  %v9894 = vshrl.u32 %v9893, 7
  %v9895 = vsub.s32 %v9892, %v9894
  %v9896 = vrot.slane %v9889, %v9895
  %v9898 = vmul.f32 %v9875, %v9896
  %v9900 = vlaneseq
  %v9901 = vshrl.u32 %v9900, 7
  %v9902 = vsub.s32 0, %v9901
  %v9903 = vrot.slane %v9898, %v9902
  %v9904 = vlaneseq
  %v9905 = vshrl.u32 %v9904, 7
  %v9906 = vsub.s32 1, %v9905
  %v9907 = vrot.slane %v9898, %v9906
  %v9910 = vmul.f32 %v9479, %v9903
  %v9911 = vmul.f32 %v9480, %v9907
  %v9912 = vmul.f32 %v9481, %v9903
  %v9913 = vmul.f32 %v9482, %v9907
  %v9914 = vmul.f32 %v9483, %v9903
  %v9915 = vmul.f32 %v9484, %v9907
  %v9916 = vmul.f32 %v9485, %v9903
  %v9917 = vmul.f32 %v9486, %v9907
  %v9918 = vmul.f32 %v9487, %v9903
  %v9919 = vmul.f32 %v9488, %v9907
  %v9920 = vmul.f32 %v9489, %v9903
  %v9921 = vmul.f32 %v9490, %v9907
  %v9922 = vmul.f32 %v9491, %v9903
  %v9923 = vmul.f32 %v9492, %v9907
  %v9924 = vmul.f32 %v9493, %v9903
  %v9925 = vmul.f32 %v9494, %v9907
  %v9926 = vmul.f32 %v9495, %v9903
  %v9927 = vmul.f32 %v9496, %v9907
  %v9928 = vmul.f32 %v9497, %v9903
  %v9929 = vmul.f32 %v9498, %v9907
  %v9930 = vmul.f32 %v9499, %v9903
  %v9931 = vmul.f32 %v9500, %v9907
  %v9932 = vmul.f32 %v9501, %v9903
  %v9933 = vmul.f32 %v9502, %v9907
  %v9934 = vmul.f32 %v9503, %v9903
  %v9935 = vmul.f32 %v9504, %v9907
  %v9936 = vmul.f32 %v9505, %v9903
  %v9937 = vmul.f32 %v9506, %v9907
  %v9938 = vmul.f32 %v9507, %v9903
  %v9939 = vmul.f32 %v9508, %v9907
  %v9940 = vmul.f32 %v9509, %v9903
  %v9941 = vmul.f32 %v9510, %v9907
  %v9942 = vmul.f32 %v9511, %v9903
  %v9943 = vmul.f32 %v9512, %v9907
  %v9944 = vmul.f32 %v9513, %v9903
  %v9945 = vmul.f32 %v9514, %v9907
  %v9946 = vmul.f32 %v9515, %v9903
  %v9947 = vmul.f32 %v9516, %v9907
  %v9948 = vmul.f32 %v9517, %v9903
  %v9949 = vmul.f32 %v9518, %v9907
  %v9950 = vmul.f32 %v9519, %v9903
  %v9951 = vmul.f32 %v9520, %v9907
  %v9952 = vmul.f32 %v9521, %v9903
  %v9953 = vmul.f32 %v9522, %v9907
  %v9954 = vmul.f32 %v9523, %v9903
  %v9955 = vmul.f32 %v9524, %v9907
  %v9956 = vmul.f32 %v9525, %v9903
  %v9957 = vmul.f32 %v9526, %v9907
  %v9958 = vmul.f32 %v9527, %v9903
  %v9959 = vmul.f32 %v9528, %v9907
  %v9960 = vmul.f32 %v9529, %v9903
  %v9961 = vmul.f32 %v9530, %v9907
  %v9962 = vmul.f32 %v9531, %v9903
  %v9963 = vmul.f32 %v9532, %v9907
  %v9964 = vmul.f32 %v9533, %v9903
  %v9965 = vmul.f32 %v9534, %v9907
  %v9966 = vmul.f32 %v9535, %v9903
  %v9967 = vmul.f32 %v9536, %v9907
  %v9968 = vmul.f32 %v9537, %v9903
  %v9969 = vmul.f32 %v9538, %v9907
  %v9970 = vmul.f32 %v9539, %v9903
  %v9971 = vmul.f32 %v9540, %v9907
  %v9972 = vmul.f32 %v9541, %v9903
  %v9973 = vmul.f32 %v9542, %v9907
  %v9974 = vmul.f32 %v9543, %v9903
  %v9975 = vmul.f32 %v9544, %v9907
  %v9976 = vmul.f32 %v9545, %v9903
  %v9977 = vmul.f32 %v9546, %v9907
  %v9978 = vmul.f32 %v9547, %v9903
  %v9979 = vmul.f32 %v9548, %v9907
  %v9980 = vmul.f32 %v9549, %v9903
  %v9981 = vmul.f32 %v9550, %v9907
  %v9982 = vmul.f32 %v9551, %v9903
  %v9983 = vmul.f32 %v9552, %v9907
  %v9984 = vmul.f32 %v9553, %v9903
  %v9985 = vmul.f32 %v9554, %v9907
  %v9986 = vmul.f32 %v9555, %v9903
  %v9987 = vmul.f32 %v9556, %v9907
  %v9988 = vmul.f32 %v9557, %v9903
  %v9989 = vmul.f32 %v9558, %v9907
  %v9990 = vmul.f32 %v9559, %v9903
  %v9991 = vmul.f32 %v9560, %v9907
  %v9992 = vmul.f32 %v9561, %v9903
  %v9993 = vmul.f32 %v9562, %v9907
  %v9994 = vmul.f32 %v9563, %v9903
  %v9995 = vmul.f32 %v9564, %v9907
  %v9996 = vmul.f32 %v9565, %v9903
  %v9997 = vmul.f32 %v9566, %v9907
  %v9998 = vmul.f32 %v9567, %v9903
  %v9999 = vmul.f32 %v9568, %v9907
  %v10000 = vmul.f32 %v9569, %v9903
  %v10001 = vmul.f32 %v9570, %v9907
  %v10002 = vmul.f32 %v9571, %v9903
  %v10003 = vmul.f32 %v9572, %v9907
  %v10004 = vmul.f32 %v9573, %v9903
  %v10005 = vmul.f32 %v9574, %v9907
  %v10006 = vmul.f32 %v9575, %v9903
  %v10007 = vmul.f32 %v9576, %v9907
  %v10008 = vmul.f32 %v9577, %v9903
  %v10009 = vmul.f32 %v9578, %v9907
  %v10010 = vmul.f32 %v9579, %v9903
  %v10011 = vmul.f32 %v9580, %v9907
  %v10012 = vmul.f32 %v9581, %v9903
  %v10013 = vmul.f32 %v9582, %v9907
  %v10014 = vmul.f32 %v9583, %v9903
  %v10015 = vmul.f32 %v9584, %v9907
  %v10016 = vmul.f32 %v9585, %v9903
  %v10017 = vmul.f32 %v9586, %v9907
  %v10018 = vmul.f32 %v9587, %v9903
  %v10019 = vmul.f32 %v9588, %v9907
  %v10020 = vmul.f32 %v9589, %v9903
  %v10021 = vmul.f32 %v9590, %v9907
  %v10022 = vmul.f32 %v9591, %v9903
  %v10023 = vmul.f32 %v9592, %v9907
  %v10024 = vmul.f32 %v9593, %v9903
  %v10025 = vmul.f32 %v9594, %v9907
  %v10026 = vmul.f32 %v9595, %v9903
  %v10027 = vmul.f32 %v9596, %v9907
  %v10028 = vmul.f32 %v9597, %v9903
  %v10029 = vmul.f32 %v9598, %v9907
  %v10030 = vmul.f32 %v9599, %v9903
  %v10031 = vmul.f32 %v9600, %v9907
  %v10032 = vmul.f32 %v9601, %v9903
  %v10033 = vmul.f32 %v9602, %v9907
  %v10034 = vmul.f32 %v9603, %v9903
  %v10035 = vmul.f32 %v9604, %v9907
  %v10036 = vmul.f32 %v9605, %v9903
  %v10037 = vmul.f32 %v9606, %v9907
  %v10038 = vld [vmem:[%s6] sm:$0x3]
  %v10040 = vlaneseq
  %v10041 = vshrl.u32 %v10040, 7
  %v10042 = vsub.s32 0, %v10041
  %v10043 = vrot.slane %v10038, %v10042
  %v10044 = vlaneseq
  %v10045 = vshrl.u32 %v10044, 7
  %v10046 = vsub.s32 1, %v10045
  %v10047 = vrot.slane %v10038, %v10046
  %v10050 = vadd.f32 %v9910, %v10043
  %v10051 = vadd.f32 %v9911, %v10047
  %v10052 = vadd.f32 %v9912, %v10043
  %v10053 = vadd.f32 %v9913, %v10047
  %v10054 = vadd.f32 %v9914, %v10043
  %v10055 = vadd.f32 %v9915, %v10047
  %v10056 = vadd.f32 %v9916, %v10043
  %v10057 = vadd.f32 %v9917, %v10047
  %v10058 = vadd.f32 %v9918, %v10043
  %v10059 = vadd.f32 %v9919, %v10047
  %v10060 = vadd.f32 %v9920, %v10043
  %v10061 = vadd.f32 %v9921, %v10047
  %v10062 = vadd.f32 %v9922, %v10043
  %v10063 = vadd.f32 %v9923, %v10047
  %v10064 = vadd.f32 %v9924, %v10043
  %v10065 = vadd.f32 %v9925, %v10047
  %v10066 = vadd.f32 %v9926, %v10043
  %v10067 = vadd.f32 %v9927, %v10047
  %v10068 = vadd.f32 %v9928, %v10043
  %v10069 = vadd.f32 %v9929, %v10047
  %v10070 = vadd.f32 %v9930, %v10043
  %v10071 = vadd.f32 %v9931, %v10047
  %v10072 = vadd.f32 %v9932, %v10043
  %v10073 = vadd.f32 %v9933, %v10047
  %v10074 = vadd.f32 %v9934, %v10043
  %v10075 = vadd.f32 %v9935, %v10047
  %v10076 = vadd.f32 %v9936, %v10043
  %v10077 = vadd.f32 %v9937, %v10047
  %v10078 = vadd.f32 %v9938, %v10043
  %v10079 = vadd.f32 %v9939, %v10047
  %v10080 = vadd.f32 %v9940, %v10043
  %v10081 = vadd.f32 %v9941, %v10047
  %v10082 = vadd.f32 %v9942, %v10043
  %v10083 = vadd.f32 %v9943, %v10047
  %v10084 = vadd.f32 %v9944, %v10043
  %v10085 = vadd.f32 %v9945, %v10047
  %v10086 = vadd.f32 %v9946, %v10043
  %v10087 = vadd.f32 %v9947, %v10047
  %v10088 = vadd.f32 %v9948, %v10043
  %v10089 = vadd.f32 %v9949, %v10047
  %v10090 = vadd.f32 %v9950, %v10043
  %v10091 = vadd.f32 %v9951, %v10047
  %v10092 = vadd.f32 %v9952, %v10043
  %v10093 = vadd.f32 %v9953, %v10047
  %v10094 = vadd.f32 %v9954, %v10043
  %v10095 = vadd.f32 %v9955, %v10047
  %v10096 = vadd.f32 %v9956, %v10043
  %v10097 = vadd.f32 %v9957, %v10047
  %v10098 = vadd.f32 %v9958, %v10043
  %v10099 = vadd.f32 %v9959, %v10047
  %v10100 = vadd.f32 %v9960, %v10043
  %v10101 = vadd.f32 %v9961, %v10047
  %v10102 = vadd.f32 %v9962, %v10043
  %v10103 = vadd.f32 %v9963, %v10047
  %v10104 = vadd.f32 %v9964, %v10043
  %v10105 = vadd.f32 %v9965, %v10047
  %v10106 = vadd.f32 %v9966, %v10043
  %v10107 = vadd.f32 %v9967, %v10047
  %v10108 = vadd.f32 %v9968, %v10043
  %v10109 = vadd.f32 %v9969, %v10047
  %v10110 = vadd.f32 %v9970, %v10043
  %v10111 = vadd.f32 %v9971, %v10047
  %v10112 = vadd.f32 %v9972, %v10043
  %v10113 = vadd.f32 %v9973, %v10047
  %v10114 = vadd.f32 %v9974, %v10043
  %v10115 = vadd.f32 %v9975, %v10047
  %v10116 = vadd.f32 %v9976, %v10043
  %v10117 = vadd.f32 %v9977, %v10047
  %v10118 = vadd.f32 %v9978, %v10043
  %v10119 = vadd.f32 %v9979, %v10047
  %v10120 = vadd.f32 %v9980, %v10043
  %v10121 = vadd.f32 %v9981, %v10047
  %v10122 = vadd.f32 %v9982, %v10043
  %v10123 = vadd.f32 %v9983, %v10047
  %v10124 = vadd.f32 %v9984, %v10043
  %v10125 = vadd.f32 %v9985, %v10047
  %v10126 = vadd.f32 %v9986, %v10043
  %v10127 = vadd.f32 %v9987, %v10047
  %v10128 = vadd.f32 %v9988, %v10043
  %v10129 = vadd.f32 %v9989, %v10047
  %v10130 = vadd.f32 %v9990, %v10043
  %v10131 = vadd.f32 %v9991, %v10047
  %v10132 = vadd.f32 %v9992, %v10043
  %v10133 = vadd.f32 %v9993, %v10047
  %v10134 = vadd.f32 %v9994, %v10043
  %v10135 = vadd.f32 %v9995, %v10047
  %v10136 = vadd.f32 %v9996, %v10043
  %v10137 = vadd.f32 %v9997, %v10047
  %v10138 = vadd.f32 %v9998, %v10043
  %v10139 = vadd.f32 %v9999, %v10047
  %v10140 = vadd.f32 %v10000, %v10043
  %v10141 = vadd.f32 %v10001, %v10047
  %v10142 = vadd.f32 %v10002, %v10043
  %v10143 = vadd.f32 %v10003, %v10047
  %v10144 = vadd.f32 %v10004, %v10043
  %v10145 = vadd.f32 %v10005, %v10047
  %v10146 = vadd.f32 %v10006, %v10043
  %v10147 = vadd.f32 %v10007, %v10047
  %v10148 = vadd.f32 %v10008, %v10043
  %v10149 = vadd.f32 %v10009, %v10047
  %v10150 = vadd.f32 %v10010, %v10043
  %v10151 = vadd.f32 %v10011, %v10047
  %v10152 = vadd.f32 %v10012, %v10043
  %v10153 = vadd.f32 %v10013, %v10047
  %v10154 = vadd.f32 %v10014, %v10043
  %v10155 = vadd.f32 %v10015, %v10047
  %v10156 = vadd.f32 %v10016, %v10043
  %v10157 = vadd.f32 %v10017, %v10047
  %v10158 = vadd.f32 %v10018, %v10043
  %v10159 = vadd.f32 %v10019, %v10047
  %v10160 = vadd.f32 %v10020, %v10043
  %v10161 = vadd.f32 %v10021, %v10047
  %v10162 = vadd.f32 %v10022, %v10043
  %v10163 = vadd.f32 %v10023, %v10047
  %v10164 = vadd.f32 %v10024, %v10043
  %v10165 = vadd.f32 %v10025, %v10047
  %v10166 = vadd.f32 %v10026, %v10043
  %v10167 = vadd.f32 %v10027, %v10047
  %v10168 = vadd.f32 %v10028, %v10043
  %v10169 = vadd.f32 %v10029, %v10047
  %v10170 = vadd.f32 %v10030, %v10043
  %v10171 = vadd.f32 %v10031, %v10047
  %v10172 = vadd.f32 %v10032, %v10043
  %v10173 = vadd.f32 %v10033, %v10047
  %v10174 = vadd.f32 %v10034, %v10043
  %v10175 = vadd.f32 %v10035, %v10047
  %v10176 = vadd.f32 %v10036, %v10043
  %v10177 = vadd.f32 %v10037, %v10047
  %v10178 = vadd.f32 %v10050, %v10052
  %v10179 = vadd.f32 %v10178, %v10054
  %v10180 = vadd.f32 %v10179, %v10056
  %v10181 = vadd.f32 %v10180, %v10058
  %v10182 = vadd.f32 %v10181, %v10060
  %v10183 = vadd.f32 %v10182, %v10062
  %v10184 = vadd.f32 %v10183, %v10064
  %v10185 = vadd.f32 %v10184, %v10066
  %v10186 = vadd.f32 %v10185, %v10068
  %v10187 = vadd.f32 %v10186, %v10070
  %v10188 = vadd.f32 %v10187, %v10072
  %v10189 = vadd.f32 %v10188, %v10074
  %v10190 = vadd.f32 %v10189, %v10076
  %v10191 = vadd.f32 %v10190, %v10078
  %v10192 = vadd.f32 %v10191, %v10080
  %v10193 = vadd.f32 %v10192, %v10082
  %v10194 = vadd.f32 %v10193, %v10084
  %v10195 = vadd.f32 %v10194, %v10086
  %v10196 = vadd.f32 %v10195, %v10088
  %v10197 = vadd.f32 %v10196, %v10090
  %v10198 = vadd.f32 %v10197, %v10092
  %v10199 = vadd.f32 %v10198, %v10094
  %v10200 = vadd.f32 %v10199, %v10096
  %v10201 = vadd.f32 %v10200, %v10098
  %v10202 = vadd.f32 %v10201, %v10100
  %v10203 = vadd.f32 %v10202, %v10102
  %v10204 = vadd.f32 %v10203, %v10104
  %v10205 = vadd.f32 %v10204, %v10106
  %v10206 = vadd.f32 %v10205, %v10108
  %v10207 = vadd.f32 %v10206, %v10110
  %v10208 = vadd.f32 %v10207, %v10112
  %v10209 = vrot.slane %v10208, 4
  %v10210 = vadd.f32 %v10208, %v10209
  %v10211 = vrot.slane %v10210, 2
  %v10212 = vadd.f32 %v10210, %v10211
  %v10213 = vrot.slane %v10212, 1
  %v10214 = vadd.f32 %v10212, %v10213
  %v10215 = vadd.f32 %v10051, %v10053
  %v10216 = vadd.f32 %v10215, %v10055
  %v10217 = vadd.f32 %v10216, %v10057
  %v10218 = vadd.f32 %v10217, %v10059
  %v10219 = vadd.f32 %v10218, %v10061
  %v10220 = vadd.f32 %v10219, %v10063
  %v10221 = vadd.f32 %v10220, %v10065
  %v10222 = vadd.f32 %v10221, %v10067
  %v10223 = vadd.f32 %v10222, %v10069
  %v10224 = vadd.f32 %v10223, %v10071
  %v10225 = vadd.f32 %v10224, %v10073
  %v10226 = vadd.f32 %v10225, %v10075
  %v10227 = vadd.f32 %v10226, %v10077
  %v10228 = vadd.f32 %v10227, %v10079
  %v10229 = vadd.f32 %v10228, %v10081
  %v10230 = vadd.f32 %v10229, %v10083
  %v10231 = vadd.f32 %v10230, %v10085
  %v10232 = vadd.f32 %v10231, %v10087
  %v10233 = vadd.f32 %v10232, %v10089
  %v10234 = vadd.f32 %v10233, %v10091
  %v10235 = vadd.f32 %v10234, %v10093
  %v10236 = vadd.f32 %v10235, %v10095
  %v10237 = vadd.f32 %v10236, %v10097
  %v10238 = vadd.f32 %v10237, %v10099
  %v10239 = vadd.f32 %v10238, %v10101
  %v10240 = vadd.f32 %v10239, %v10103
  %v10241 = vadd.f32 %v10240, %v10105
  %v10242 = vadd.f32 %v10241, %v10107
  %v10243 = vadd.f32 %v10242, %v10109
  %v10244 = vadd.f32 %v10243, %v10111
  %v10245 = vadd.f32 %v10244, %v10113
  %v10246 = vrot.slane %v10245, 4
  %v10247 = vadd.f32 %v10245, %v10246
  %v10248 = vrot.slane %v10247, 2
  %v10249 = vadd.f32 %v10247, %v10248
  %v10250 = vrot.slane %v10249, 1
  %v10251 = vadd.f32 %v10249, %v10250
  %v10252 = vadd.f32 %v10114, %v10116
  %v10253 = vadd.f32 %v10252, %v10118
  %v10254 = vadd.f32 %v10253, %v10120
  %v10255 = vadd.f32 %v10254, %v10122
  %v10256 = vadd.f32 %v10255, %v10124
  %v10257 = vadd.f32 %v10256, %v10126
  %v10258 = vadd.f32 %v10257, %v10128
  %v10259 = vadd.f32 %v10258, %v10130
  %v10260 = vadd.f32 %v10259, %v10132
  %v10261 = vadd.f32 %v10260, %v10134
  %v10262 = vadd.f32 %v10261, %v10136
  %v10263 = vadd.f32 %v10262, %v10138
  %v10264 = vadd.f32 %v10263, %v10140
  %v10265 = vadd.f32 %v10264, %v10142
  %v10266 = vadd.f32 %v10265, %v10144
  %v10267 = vadd.f32 %v10266, %v10146
  %v10268 = vadd.f32 %v10267, %v10148
  %v10269 = vadd.f32 %v10268, %v10150
  %v10270 = vadd.f32 %v10269, %v10152
  %v10271 = vadd.f32 %v10270, %v10154
  %v10272 = vadd.f32 %v10271, %v10156
  %v10273 = vadd.f32 %v10272, %v10158
  %v10274 = vadd.f32 %v10273, %v10160
  %v10275 = vadd.f32 %v10274, %v10162
  %v10276 = vadd.f32 %v10275, %v10164
  %v10277 = vadd.f32 %v10276, %v10166
  %v10278 = vadd.f32 %v10277, %v10168
  %v10279 = vadd.f32 %v10278, %v10170
  %v10280 = vadd.f32 %v10279, %v10172
  %v10281 = vadd.f32 %v10280, %v10174
  %v10282 = vadd.f32 %v10281, %v10176
  %v10283 = vrot.slane %v10282, 4
  %v10284 = vadd.f32 %v10282, %v10283
  %v10285 = vrot.slane %v10284, 2
  %v10286 = vadd.f32 %v10284, %v10285
  %v10287 = vrot.slane %v10286, 1
  %v10288 = vadd.f32 %v10286, %v10287
  %v10289 = vadd.f32 %v10115, %v10117
  %v10290 = vadd.f32 %v10289, %v10119
  %v10291 = vadd.f32 %v10290, %v10121
  %v10292 = vadd.f32 %v10291, %v10123
  %v10293 = vadd.f32 %v10292, %v10125
  %v10294 = vadd.f32 %v10293, %v10127
  %v10295 = vadd.f32 %v10294, %v10129
  %v10296 = vadd.f32 %v10295, %v10131
  %v10297 = vadd.f32 %v10296, %v10133
  %v10298 = vadd.f32 %v10297, %v10135
  %v10299 = vadd.f32 %v10298, %v10137
  %v10300 = vadd.f32 %v10299, %v10139
  %v10301 = vadd.f32 %v10300, %v10141
  %v10302 = vadd.f32 %v10301, %v10143
  %v10303 = vadd.f32 %v10302, %v10145
  %v10304 = vadd.f32 %v10303, %v10147
  %v10305 = vadd.f32 %v10304, %v10149
  %v10306 = vadd.f32 %v10305, %v10151
  %v10307 = vadd.f32 %v10306, %v10153
  %v10308 = vadd.f32 %v10307, %v10155
  %v10309 = vadd.f32 %v10308, %v10157
  %v10310 = vadd.f32 %v10309, %v10159
  %v10311 = vadd.f32 %v10310, %v10161
  %v10312 = vadd.f32 %v10311, %v10163
  %v10313 = vadd.f32 %v10312, %v10165
  %v10314 = vadd.f32 %v10313, %v10167
  %v10315 = vadd.f32 %v10314, %v10169
  %v10316 = vadd.f32 %v10315, %v10171
  %v10317 = vadd.f32 %v10316, %v10173
  %v10318 = vadd.f32 %v10317, %v10175
  %v10319 = vadd.f32 %v10318, %v10177
  %v10320 = vrot.slane %v10319, 4
  %v10321 = vadd.f32 %v10319, %v10320
  %v10322 = vrot.slane %v10321, 2
  %v10323 = vadd.f32 %v10321, %v10322
  %v10324 = vrot.slane %v10323, 1
  %v10325 = vadd.f32 %v10323, %v10324
  %v10326 = vrcp.pop 256.0
  %v10327 = vmul.f32 %v10214, %v10326
  %v10328 = vmul.f32 %v10251, %v10326
  %v10329 = vmul.f32 %v10288, %v10326
  %v10330 = vmul.f32 %v10325, %v10326
  %vm10335 = vcmask 1041409
  %v10336 = vsel %vm10335, %v10329, %v10327
  %v10337 = vsel %vm10335, %v10330, %v10328
  %vm10340 = vcmask 1041408
  %v10341 = vsel %vm10340, %v10336, -inf
  %v10342 = vsel %vm10340, %v10337, -inf
  %v10343 = vmax.f32 %v10341, %v10342
  %10344 = vmax.xlane.f32.xlu0 %v10343
  %v10345 = vpop.xlane.xlu0 %10344
  %v10347 = vrot.slane %v10345, 1
  %v10350 = vsub.f32 %v10327, %v10345
  %v10351 = vsub.f32 %v10328, %v10345
  %v10352 = vsub.f32 %v10329, %v10347
  %v10353 = vsub.f32 %v10330, %v10347
  %v10354 = vmul.f32 %v10350, 1.442695
  %v10355 = vpow.pop %v10354
  %v10356 = vmul.f32 %v10351, 1.442695
  %v10357 = vpow.pop %v10356
  %v10358 = vmul.f32 %v10352, 1.442695
  %v10359 = vpow.pop %v10358
  %v10360 = vmul.f32 %v10353, 1.442695
  %v10361 = vpow.pop %v10360
  %v10366 = vrot.slane %v10359, 7
  %v10367 = vsel %vm10335, %v10366, %v10355
  %v10368 = vrot.slane %v10361, 7
  %v10369 = vsel %vm10335, %v10368, %v10357
  %v10372 = vsel %vm10340, %v10367, 0.0
  %v10373 = vsel %vm10340, %v10369, 0.0
  %v10374 = vadd.f32 %v10372, %v10373
  %10375 = vadd.xlane.f32.xlu0 %v10374
  %v10376 = vpop.xlane.xlu0 %10375
  %v10378 = vrot.slane %v10376, 1
  %v10381 = vrcp.pop %v10376
  %v10382 = vmul.f32 %v10355, %v10381
  %v10383 = vmul.f32 %v10357, %v10381
  %v10384 = vrcp.pop %v10378
  %v10385 = vmul.f32 %v10359, %v10384
  %v10386 = vmul.f32 %v10361, %v10384
  %v10387 = vld [vmem:[%s0] sm:$0xff]
  %v10388 = vld [vmem:[%s0 + $0x8] sm:$0xff]
  %v10389 = vld [vmem:[%s0 + $0x10] sm:$0xff]
  %v10390 = vld [vmem:[%s0 + $0x18] sm:$0xff]
  %v10391 = vld [vmem:[%s0 + $0x20] sm:$0xff]
  %v10392 = vld [vmem:[%s0 + $0x28] sm:$0xff]
  %v10393 = vld [vmem:[%s0 + $0x30] sm:$0xff]
  %v10394 = vld [vmem:[%s0 + $0x38] sm:$0xff]
  %v10395 = vld [vmem:[%s0 + $0x40] sm:$0xff]
  %v10396 = vld [vmem:[%s0 + $0x48] sm:$0xff]
  %v10397 = vld [vmem:[%s0 + $0x50] sm:$0xff]
  %v10398 = vld [vmem:[%s0 + $0x58] sm:$0xff]
  %v10399 = vld [vmem:[%s0 + $0x60] sm:$0xff]
  %v10400 = vld [vmem:[%s0 + $0x68] sm:$0xff]
  %v10401 = vld [vmem:[%s0 + $0x70] sm:$0xff]
  %v10402 = vld [vmem:[%s0 + $0x78] sm:$0xff]
  %v10403 = vld [vmem:[%s0 + $0x80] sm:$0xff]
  %v10404 = vld [vmem:[%s0 + $0x88] sm:$0xff]
  %v10405 = vld [vmem:[%s0 + $0x90] sm:$0xff]
  %v10406 = vld [vmem:[%s0 + $0x98] sm:$0xff]
  %v10407 = vld [vmem:[%s0 + $0xa0] sm:$0xff]
  %v10408 = vld [vmem:[%s0 + $0xa8] sm:$0xff]
  %v10409 = vld [vmem:[%s0 + $0xb0] sm:$0xff]
  %v10410 = vld [vmem:[%s0 + $0xb8] sm:$0xff]
  %v10411 = vld [vmem:[%s0 + $0xc0] sm:$0xff]
  %v10412 = vld [vmem:[%s0 + $0xc8] sm:$0xff]
  %v10413 = vld [vmem:[%s0 + $0xd0] sm:$0xff]
  %v10414 = vld [vmem:[%s0 + $0xd8] sm:$0xff]
  %v10415 = vld [vmem:[%s0 + $0xe0] sm:$0xff]
  %v10416 = vld [vmem:[%s0 + $0xe8] sm:$0xff]
  %v10417 = vld [vmem:[%s0 + $0xf0] sm:$0xff]
  %v10418 = vld [vmem:[%s0 + $0xf8] sm:$0xff]
  %v10419 = vld [vmem:[%s0 + $0x100] sm:$0xff]
  %v10420 = vld [vmem:[%s0 + $0x108] sm:$0xff]
  %v10421 = vld [vmem:[%s0 + $0x110] sm:$0xff]
  %v10422 = vld [vmem:[%s0 + $0x118] sm:$0xff]
  %v10423 = vld [vmem:[%s0 + $0x120] sm:$0xff]
  %v10424 = vld [vmem:[%s0 + $0x128] sm:$0xff]
  %v10425 = vld [vmem:[%s0 + $0x130] sm:$0xff]
  %v10426 = vld [vmem:[%s0 + $0x138] sm:$0xff]
  %v10427 = vld [vmem:[%s0 + $0x140] sm:$0xff]
  %v10428 = vld [vmem:[%s0 + $0x148] sm:$0xff]
  %v10429 = vld [vmem:[%s0 + $0x150] sm:$0xff]
  %v10430 = vld [vmem:[%s0 + $0x158] sm:$0xff]
  %v10431 = vld [vmem:[%s0 + $0x160] sm:$0xff]
  %v10432 = vld [vmem:[%s0 + $0x168] sm:$0xff]
  %v10433 = vld [vmem:[%s0 + $0x170] sm:$0xff]
  %v10434 = vld [vmem:[%s0 + $0x178] sm:$0xff]
  %v10435 = vld [vmem:[%s0 + $0x180] sm:$0xff]
  %v10436 = vld [vmem:[%s0 + $0x188] sm:$0xff]
  %v10437 = vld [vmem:[%s0 + $0x190] sm:$0xff]
  %v10438 = vld [vmem:[%s0 + $0x198] sm:$0xff]
  %v10439 = vld [vmem:[%s0 + $0x1a0] sm:$0xff]
  %v10440 = vld [vmem:[%s0 + $0x1a8] sm:$0xff]
  %v10441 = vld [vmem:[%s0 + $0x1b0] sm:$0xff]
  %v10442 = vld [vmem:[%s0 + $0x1b8] sm:$0xff]
  %v10443 = vld [vmem:[%s0 + $0x1c0] sm:$0xff]
  %v10444 = vld [vmem:[%s0 + $0x1c8] sm:$0xff]
  %v10445 = vld [vmem:[%s0 + $0x1d0] sm:$0xff]
  %v10446 = vld [vmem:[%s0 + $0x1d8] sm:$0xff]
  %v10447 = vld [vmem:[%s0 + $0x1e0] sm:$0xff]
  %v10448 = vld [vmem:[%s0 + $0x1e8] sm:$0xff]
  %v10449 = vld [vmem:[%s0 + $0x1f0] sm:$0xff]
  %v10450 = vld [vmem:[%s0 + $0x1f8] sm:$0xff]
  %v10451 = vld [vmem:[%s0 + $0x200] sm:$0xff]
  %v10452 = vld [vmem:[%s0 + $0x208] sm:$0xff]
  %v10453 = vld [vmem:[%s0 + $0x210] sm:$0xff]
  %v10454 = vld [vmem:[%s0 + $0x218] sm:$0xff]
  %v10455 = vld [vmem:[%s0 + $0x220] sm:$0xff]
  %v10456 = vld [vmem:[%s0 + $0x228] sm:$0xff]
  %v10457 = vld [vmem:[%s0 + $0x230] sm:$0xff]
  %v10458 = vld [vmem:[%s0 + $0x238] sm:$0xff]
  %v10459 = vld [vmem:[%s0 + $0x240] sm:$0xff]
  %v10460 = vld [vmem:[%s0 + $0x248] sm:$0xff]
  %v10461 = vld [vmem:[%s0 + $0x250] sm:$0xff]
  %v10462 = vld [vmem:[%s0 + $0x258] sm:$0xff]
  %v10463 = vld [vmem:[%s0 + $0x260] sm:$0xff]
  %v10464 = vld [vmem:[%s0 + $0x268] sm:$0xff]
  %v10465 = vld [vmem:[%s0 + $0x270] sm:$0xff]
  %v10466 = vld [vmem:[%s0 + $0x278] sm:$0xff]
  %v10467 = vld [vmem:[%s0 + $0x280] sm:$0xff]
  %v10468 = vld [vmem:[%s0 + $0x288] sm:$0xff]
  %v10469 = vld [vmem:[%s0 + $0x290] sm:$0xff]
  %v10470 = vld [vmem:[%s0 + $0x298] sm:$0xff]
  %v10471 = vld [vmem:[%s0 + $0x2a0] sm:$0xff]
  %v10472 = vld [vmem:[%s0 + $0x2a8] sm:$0xff]
  %v10473 = vld [vmem:[%s0 + $0x2b0] sm:$0xff]
  %v10474 = vld [vmem:[%s0 + $0x2b8] sm:$0xff]
  %v10475 = vld [vmem:[%s0 + $0x2c0] sm:$0xff]
  %v10476 = vld [vmem:[%s0 + $0x2c8] sm:$0xff]
  %v10477 = vld [vmem:[%s0 + $0x2d0] sm:$0xff]
  %v10478 = vld [vmem:[%s0 + $0x2d8] sm:$0xff]
  %v10479 = vld [vmem:[%s0 + $0x2e0] sm:$0xff]
  %v10480 = vld [vmem:[%s0 + $0x2e8] sm:$0xff]
  %v10481 = vld [vmem:[%s0 + $0x2f0] sm:$0xff]
  %v10482 = vld [vmem:[%s0 + $0x2f8] sm:$0xff]
  %v10483 = vld [vmem:[%s0 + $0x300] sm:$0xff]
  %v10484 = vld [vmem:[%s0 + $0x308] sm:$0xff]
  %v10485 = vld [vmem:[%s0 + $0x310] sm:$0xff]
  %v10486 = vld [vmem:[%s0 + $0x318] sm:$0xff]
  %v10487 = vld [vmem:[%s0 + $0x320] sm:$0xff]
  %v10488 = vld [vmem:[%s0 + $0x328] sm:$0xff]
  %v10489 = vld [vmem:[%s0 + $0x330] sm:$0xff]
  %v10490 = vld [vmem:[%s0 + $0x338] sm:$0xff]
  %v10491 = vld [vmem:[%s0 + $0x340] sm:$0xff]
  %v10492 = vld [vmem:[%s0 + $0x348] sm:$0xff]
  %v10493 = vld [vmem:[%s0 + $0x350] sm:$0xff]
  %v10494 = vld [vmem:[%s0 + $0x358] sm:$0xff]
  %v10495 = vld [vmem:[%s0 + $0x360] sm:$0xff]
  %v10496 = vld [vmem:[%s0 + $0x368] sm:$0xff]
  %v10497 = vld [vmem:[%s0 + $0x370] sm:$0xff]
  %v10498 = vld [vmem:[%s0 + $0x378] sm:$0xff]
  %v10499 = vld [vmem:[%s0 + $0x380] sm:$0xff]
  %v10500 = vld [vmem:[%s0 + $0x388] sm:$0xff]
  %v10501 = vld [vmem:[%s0 + $0x390] sm:$0xff]
  %v10502 = vld [vmem:[%s0 + $0x398] sm:$0xff]
  %v10503 = vld [vmem:[%s0 + $0x3a0] sm:$0xff]
  %v10504 = vld [vmem:[%s0 + $0x3a8] sm:$0xff]
  %v10505 = vld [vmem:[%s0 + $0x3b0] sm:$0xff]
  %v10506 = vld [vmem:[%s0 + $0x3b8] sm:$0xff]
  %v10507 = vld [vmem:[%s0 + $0x3c0] sm:$0xff]
  %v10508 = vld [vmem:[%s0 + $0x3c8] sm:$0xff]
  %v10509 = vld [vmem:[%s0 + $0x3d0] sm:$0xff]
  %v10510 = vld [vmem:[%s0 + $0x3d8] sm:$0xff]
  %v10511 = vld [vmem:[%s0 + $0x3e0] sm:$0xff]
  %v10512 = vld [vmem:[%s0 + $0x3e8] sm:$0xff]
  %v10513 = vld [vmem:[%s0 + $0x3f0] sm:$0xff]
  %v10514 = vld [vmem:[%s0 + $0x3f8] sm:$0xff]
  %v10515 = vlaneseq
  %v10516 = vshrl.u32 %v10515, 7
  %v10517 = vsub.s32 0, %v10516
  %v10518 = vrot.slane %v10382, %v10517
  %v10519 = vlaneseq
  %v10520 = vshrl.u32 %v10519, 7
  %v10521 = vsub.s32 0, %v10520
  %v10522 = vrot.slane %v10383, %v10521
  %v10523 = vlaneseq
  %v10524 = vshrl.u32 %v10523, 7
  %v10525 = vsub.s32 0, %v10524
  %v10526 = vrot.slane %v10385, %v10525
  %v10527 = vlaneseq
  %v10528 = vshrl.u32 %v10527, 7
  %v10529 = vsub.s32 0, %v10528
  %v10530 = vrot.slane %v10386, %v10529
  %v10531 = vmul.f32 %v10518, %v10387
  %v10532 = vmul.f32 %v10522, %v10388
  %v10533 = vmul.f32 %v10518, %v10389
  %v10534 = vmul.f32 %v10522, %v10390
  %v10535 = vmul.f32 %v10518, %v10391
  %v10536 = vmul.f32 %v10522, %v10392
  %v10537 = vmul.f32 %v10518, %v10393
  %v10538 = vmul.f32 %v10522, %v10394
  %v10539 = vmul.f32 %v10518, %v10395
  %v10540 = vmul.f32 %v10522, %v10396
  %v10541 = vmul.f32 %v10518, %v10397
  %v10542 = vmul.f32 %v10522, %v10398
  %v10543 = vmul.f32 %v10518, %v10399
  %v10544 = vmul.f32 %v10522, %v10400
  %v10545 = vmul.f32 %v10518, %v10401
  %v10546 = vmul.f32 %v10522, %v10402
  %v10547 = vmul.f32 %v10518, %v10403
  %v10548 = vmul.f32 %v10522, %v10404
  %v10549 = vmul.f32 %v10518, %v10405
  %v10550 = vmul.f32 %v10522, %v10406
  %v10551 = vmul.f32 %v10518, %v10407
  %v10552 = vmul.f32 %v10522, %v10408
  %v10553 = vmul.f32 %v10518, %v10409
  %v10554 = vmul.f32 %v10522, %v10410
  %v10555 = vmul.f32 %v10518, %v10411
  %v10556 = vmul.f32 %v10522, %v10412
  %v10557 = vmul.f32 %v10518, %v10413
  %v10558 = vmul.f32 %v10522, %v10414
  %v10559 = vmul.f32 %v10518, %v10415
  %v10560 = vmul.f32 %v10522, %v10416
  %v10561 = vmul.f32 %v10518, %v10417
  %v10562 = vmul.f32 %v10522, %v10418
  %v10563 = vmul.f32 %v10518, %v10419
  %v10564 = vmul.f32 %v10522, %v10420
  %v10565 = vmul.f32 %v10518, %v10421
  %v10566 = vmul.f32 %v10522, %v10422
  %v10567 = vmul.f32 %v10518, %v10423
  %v10568 = vmul.f32 %v10522, %v10424
  %v10569 = vmul.f32 %v10518, %v10425
  %v10570 = vmul.f32 %v10522, %v10426
  %v10571 = vmul.f32 %v10518, %v10427
  %v10572 = vmul.f32 %v10522, %v10428
  %v10573 = vmul.f32 %v10518, %v10429
  %v10574 = vmul.f32 %v10522, %v10430
  %v10575 = vmul.f32 %v10518, %v10431
  %v10576 = vmul.f32 %v10522, %v10432
  %v10577 = vmul.f32 %v10518, %v10433
  %v10578 = vmul.f32 %v10522, %v10434
  %v10579 = vmul.f32 %v10518, %v10435
  %v10580 = vmul.f32 %v10522, %v10436
  %v10581 = vmul.f32 %v10518, %v10437
  %v10582 = vmul.f32 %v10522, %v10438
  %v10583 = vmul.f32 %v10518, %v10439
  %v10584 = vmul.f32 %v10522, %v10440
  %v10585 = vmul.f32 %v10518, %v10441
  %v10586 = vmul.f32 %v10522, %v10442
  %v10587 = vmul.f32 %v10518, %v10443
  %v10588 = vmul.f32 %v10522, %v10444
  %v10589 = vmul.f32 %v10518, %v10445
  %v10590 = vmul.f32 %v10522, %v10446
  %v10591 = vmul.f32 %v10518, %v10447
  %v10592 = vmul.f32 %v10522, %v10448
  %v10593 = vmul.f32 %v10518, %v10449
  %v10594 = vmul.f32 %v10522, %v10450
  %v10595 = vmul.f32 %v10526, %v10451
  %v10596 = vmul.f32 %v10530, %v10452
  %v10597 = vmul.f32 %v10526, %v10453
  %v10598 = vmul.f32 %v10530, %v10454
  %v10599 = vmul.f32 %v10526, %v10455
  %v10600 = vmul.f32 %v10530, %v10456
  %v10601 = vmul.f32 %v10526, %v10457
  %v10602 = vmul.f32 %v10530, %v10458
  %v10603 = vmul.f32 %v10526, %v10459
  %v10604 = vmul.f32 %v10530, %v10460
  %v10605 = vmul.f32 %v10526, %v10461
  %v10606 = vmul.f32 %v10530, %v10462
  %v10607 = vmul.f32 %v10526, %v10463
  %v10608 = vmul.f32 %v10530, %v10464
  %v10609 = vmul.f32 %v10526, %v10465
  %v10610 = vmul.f32 %v10530, %v10466
  %v10611 = vmul.f32 %v10526, %v10467
  %v10612 = vmul.f32 %v10530, %v10468
  %v10613 = vmul.f32 %v10526, %v10469
  %v10614 = vmul.f32 %v10530, %v10470
  %v10615 = vmul.f32 %v10526, %v10471
  %v10616 = vmul.f32 %v10530, %v10472
  %v10617 = vmul.f32 %v10526, %v10473
  %v10618 = vmul.f32 %v10530, %v10474
  %v10619 = vmul.f32 %v10526, %v10475
  %v10620 = vmul.f32 %v10530, %v10476
  %v10621 = vmul.f32 %v10526, %v10477
  %v10622 = vmul.f32 %v10530, %v10478
  %v10623 = vmul.f32 %v10526, %v10479
  %v10624 = vmul.f32 %v10530, %v10480
  %v10625 = vmul.f32 %v10526, %v10481
  %v10626 = vmul.f32 %v10530, %v10482
  %v10627 = vmul.f32 %v10526, %v10483
  %v10628 = vmul.f32 %v10530, %v10484
  %v10629 = vmul.f32 %v10526, %v10485
  %v10630 = vmul.f32 %v10530, %v10486
  %v10631 = vmul.f32 %v10526, %v10487
  %v10632 = vmul.f32 %v10530, %v10488
  %v10633 = vmul.f32 %v10526, %v10489
  %v10634 = vmul.f32 %v10530, %v10490
  %v10635 = vmul.f32 %v10526, %v10491
  %v10636 = vmul.f32 %v10530, %v10492
  %v10637 = vmul.f32 %v10526, %v10493
  %v10638 = vmul.f32 %v10530, %v10494
  %v10639 = vmul.f32 %v10526, %v10495
  %v10640 = vmul.f32 %v10530, %v10496
  %v10641 = vmul.f32 %v10526, %v10497
  %v10642 = vmul.f32 %v10530, %v10498
  %v10643 = vmul.f32 %v10526, %v10499
  %v10644 = vmul.f32 %v10530, %v10500
  %v10645 = vmul.f32 %v10526, %v10501
  %v10646 = vmul.f32 %v10530, %v10502
  %v10647 = vmul.f32 %v10526, %v10503
  %v10648 = vmul.f32 %v10530, %v10504
  %v10649 = vmul.f32 %v10526, %v10505
  %v10650 = vmul.f32 %v10530, %v10506
  %v10651 = vmul.f32 %v10526, %v10507
  %v10652 = vmul.f32 %v10530, %v10508
  %v10653 = vmul.f32 %v10526, %v10509
  %v10654 = vmul.f32 %v10530, %v10510
  %v10655 = vmul.f32 %v10526, %v10511
  %v10656 = vmul.f32 %v10530, %v10512
  %v10657 = vmul.f32 %v10526, %v10513
  %v10658 = vmul.f32 %v10530, %v10514
  %10659 = vst [vmem:[%s7] sm:$0xff] %v10531
  %10660 = vst [vmem:[%s7 + $0x8] sm:$0xff] %v10532
  %10661 = vst [vmem:[%s7 + $0x10] sm:$0xff] %v10533
  %10662 = vst [vmem:[%s7 + $0x18] sm:$0xff] %v10534
  %10663 = vst [vmem:[%s7 + $0x20] sm:$0xff] %v10535
  %10664 = vst [vmem:[%s7 + $0x28] sm:$0xff] %v10536
  %10665 = vst [vmem:[%s7 + $0x30] sm:$0xff] %v10537
  %10666 = vst [vmem:[%s7 + $0x38] sm:$0xff] %v10538
  %10667 = vst [vmem:[%s7 + $0x40] sm:$0xff] %v10539
  %10668 = vst [vmem:[%s7 + $0x48] sm:$0xff] %v10540
  %10669 = vst [vmem:[%s7 + $0x50] sm:$0xff] %v10541
  %10670 = vst [vmem:[%s7 + $0x58] sm:$0xff] %v10542
  %10671 = vst [vmem:[%s7 + $0x60] sm:$0xff] %v10543
  %10672 = vst [vmem:[%s7 + $0x68] sm:$0xff] %v10544
  %10673 = vst [vmem:[%s7 + $0x70] sm:$0xff] %v10545
  %10674 = vst [vmem:[%s7 + $0x78] sm:$0xff] %v10546
  %10675 = vst [vmem:[%s7 + $0x80] sm:$0xff] %v10547
  %10676 = vst [vmem:[%s7 + $0x88] sm:$0xff] %v10548
  %10677 = vst [vmem:[%s7 + $0x90] sm:$0xff] %v10549
  %10678 = vst [vmem:[%s7 + $0x98] sm:$0xff] %v10550
  %10679 = vst [vmem:[%s7 + $0xa0] sm:$0xff] %v10551
  %10680 = vst [vmem:[%s7 + $0xa8] sm:$0xff] %v10552
  %10681 = vst [vmem:[%s7 + $0xb0] sm:$0xff] %v10553
  %10682 = vst [vmem:[%s7 + $0xb8] sm:$0xff] %v10554
  %10683 = vst [vmem:[%s7 + $0xc0] sm:$0xff] %v10555
  %10684 = vst [vmem:[%s7 + $0xc8] sm:$0xff] %v10556
  %10685 = vst [vmem:[%s7 + $0xd0] sm:$0xff] %v10557
  %10686 = vst [vmem:[%s7 + $0xd8] sm:$0xff] %v10558
  %10687 = vst [vmem:[%s7 + $0xe0] sm:$0xff] %v10559
  %10688 = vst [vmem:[%s7 + $0xe8] sm:$0xff] %v10560
  %10689 = vst [vmem:[%s7 + $0xf0] sm:$0xff] %v10561
  %10690 = vst [vmem:[%s7 + $0xf8] sm:$0xff] %v10562
  %10691 = vst [vmem:[%s7 + $0x100] sm:$0xff] %v10563
  %10692 = vst [vmem:[%s7 + $0x108] sm:$0xff] %v10564
  %10693 = vst [vmem:[%s7 + $0x110] sm:$0xff] %v10565
  %10694 = vst [vmem:[%s7 + $0x118] sm:$0xff] %v10566
  %10695 = vst [vmem:[%s7 + $0x120] sm:$0xff] %v10567
  %10696 = vst [vmem:[%s7 + $0x128] sm:$0xff] %v10568
  %10697 = vst [vmem:[%s7 + $0x130] sm:$0xff] %v10569
  %10698 = vst [vmem:[%s7 + $0x138] sm:$0xff] %v10570
  %10699 = vst [vmem:[%s7 + $0x140] sm:$0xff] %v10571
  %10700 = vst [vmem:[%s7 + $0x148] sm:$0xff] %v10572
  %10701 = vst [vmem:[%s7 + $0x150] sm:$0xff] %v10573
  %10702 = vst [vmem:[%s7 + $0x158] sm:$0xff] %v10574
  %10703 = vst [vmem:[%s7 + $0x160] sm:$0xff] %v10575
  %10704 = vst [vmem:[%s7 + $0x168] sm:$0xff] %v10576
  %10705 = vst [vmem:[%s7 + $0x170] sm:$0xff] %v10577
  %10706 = vst [vmem:[%s7 + $0x178] sm:$0xff] %v10578
  %10707 = vst [vmem:[%s7 + $0x180] sm:$0xff] %v10579
  %10708 = vst [vmem:[%s7 + $0x188] sm:$0xff] %v10580
  %10709 = vst [vmem:[%s7 + $0x190] sm:$0xff] %v10581
  %10710 = vst [vmem:[%s7 + $0x198] sm:$0xff] %v10582
  %10711 = vst [vmem:[%s7 + $0x1a0] sm:$0xff] %v10583
  %10712 = vst [vmem:[%s7 + $0x1a8] sm:$0xff] %v10584
  %10713 = vst [vmem:[%s7 + $0x1b0] sm:$0xff] %v10585
  %10714 = vst [vmem:[%s7 + $0x1b8] sm:$0xff] %v10586
  %10715 = vst [vmem:[%s7 + $0x1c0] sm:$0xff] %v10587
  %10716 = vst [vmem:[%s7 + $0x1c8] sm:$0xff] %v10588
  %10717 = vst [vmem:[%s7 + $0x1d0] sm:$0xff] %v10589
  %10718 = vst [vmem:[%s7 + $0x1d8] sm:$0xff] %v10590
  %10719 = vst [vmem:[%s7 + $0x1e0] sm:$0xff] %v10591
  %10720 = vst [vmem:[%s7 + $0x1e8] sm:$0xff] %v10592
  %10721 = vst [vmem:[%s7 + $0x1f0] sm:$0xff] %v10593
  %10722 = vst [vmem:[%s7 + $0x1f8] sm:$0xff] %v10594
  %10723 = vst [vmem:[%s7 + $0x200] sm:$0xff] %v10595
  %10724 = vst [vmem:[%s7 + $0x208] sm:$0xff] %v10596
  %10725 = vst [vmem:[%s7 + $0x210] sm:$0xff] %v10597
  %10726 = vst [vmem:[%s7 + $0x218] sm:$0xff] %v10598
  %10727 = vst [vmem:[%s7 + $0x220] sm:$0xff] %v10599
  %10728 = vst [vmem:[%s7 + $0x228] sm:$0xff] %v10600
  %10729 = vst [vmem:[%s7 + $0x230] sm:$0xff] %v10601
  %10730 = vst [vmem:[%s7 + $0x238] sm:$0xff] %v10602
  %10731 = vst [vmem:[%s7 + $0x240] sm:$0xff] %v10603
  %10732 = vst [vmem:[%s7 + $0x248] sm:$0xff] %v10604
  %10733 = vst [vmem:[%s7 + $0x250] sm:$0xff] %v10605
  %10734 = vst [vmem:[%s7 + $0x258] sm:$0xff] %v10606
  %10735 = vst [vmem:[%s7 + $0x260] sm:$0xff] %v10607
  %10736 = vst [vmem:[%s7 + $0x268] sm:$0xff] %v10608
  %10737 = vst [vmem:[%s7 + $0x270] sm:$0xff] %v10609
  %10738 = vst [vmem:[%s7 + $0x278] sm:$0xff] %v10610
  %10739 = vst [vmem:[%s7 + $0x280] sm:$0xff] %v10611
  %10740 = vst [vmem:[%s7 + $0x288] sm:$0xff] %v10612
  %10741 = vst [vmem:[%s7 + $0x290] sm:$0xff] %v10613
  %10742 = vst [vmem:[%s7 + $0x298] sm:$0xff] %v10614
  %10743 = vst [vmem:[%s7 + $0x2a0] sm:$0xff] %v10615
  %10744 = vst [vmem:[%s7 + $0x2a8] sm:$0xff] %v10616
  %10745 = vst [vmem:[%s7 + $0x2b0] sm:$0xff] %v10617
  %10746 = vst [vmem:[%s7 + $0x2b8] sm:$0xff] %v10618
  %10747 = vst [vmem:[%s7 + $0x2c0] sm:$0xff] %v10619
  %10748 = vst [vmem:[%s7 + $0x2c8] sm:$0xff] %v10620
  %10749 = vst [vmem:[%s7 + $0x2d0] sm:$0xff] %v10621
  %10750 = vst [vmem:[%s7 + $0x2d8] sm:$0xff] %v10622
  %10751 = vst [vmem:[%s7 + $0x2e0] sm:$0xff] %v10623
  %10752 = vst [vmem:[%s7 + $0x2e8] sm:$0xff] %v10624
  %10753 = vst [vmem:[%s7 + $0x2f0] sm:$0xff] %v10625
  %10754 = vst [vmem:[%s7 + $0x2f8] sm:$0xff] %v10626
  %10755 = vst [vmem:[%s7 + $0x300] sm:$0xff] %v10627
  %10756 = vst [vmem:[%s7 + $0x308] sm:$0xff] %v10628
  %10757 = vst [vmem:[%s7 + $0x310] sm:$0xff] %v10629
  %10758 = vst [vmem:[%s7 + $0x318] sm:$0xff] %v10630
  %10759 = vst [vmem:[%s7 + $0x320] sm:$0xff] %v10631
  %10760 = vst [vmem:[%s7 + $0x328] sm:$0xff] %v10632
  %10761 = vst [vmem:[%s7 + $0x330] sm:$0xff] %v10633
  %10762 = vst [vmem:[%s7 + $0x338] sm:$0xff] %v10634
  %10763 = vst [vmem:[%s7 + $0x340] sm:$0xff] %v10635
  %10764 = vst [vmem:[%s7 + $0x348] sm:$0xff] %v10636
  %10765 = vst [vmem:[%s7 + $0x350] sm:$0xff] %v10637
  %10766 = vst [vmem:[%s7 + $0x358] sm:$0xff] %v10638
  %10767 = vst [vmem:[%s7 + $0x360] sm:$0xff] %v10639
  %10768 = vst [vmem:[%s7 + $0x368] sm:$0xff] %v10640
  %10769 = vst [vmem:[%s7 + $0x370] sm:$0xff] %v10641
  %10770 = vst [vmem:[%s7 + $0x378] sm:$0xff] %v10642
  %10771 = vst [vmem:[%s7 + $0x380] sm:$0xff] %v10643
  %10772 = vst [vmem:[%s7 + $0x388] sm:$0xff] %v10644
  %10773 = vst [vmem:[%s7 + $0x390] sm:$0xff] %v10645
  %10774 = vst [vmem:[%s7 + $0x398] sm:$0xff] %v10646
  %10775 = vst [vmem:[%s7 + $0x3a0] sm:$0xff] %v10647
  %10776 = vst [vmem:[%s7 + $0x3a8] sm:$0xff] %v10648
  %10777 = vst [vmem:[%s7 + $0x3b0] sm:$0xff] %v10649
  %10778 = vst [vmem:[%s7 + $0x3b8] sm:$0xff] %v10650
  %10779 = vst [vmem:[%s7 + $0x3c0] sm:$0xff] %v10651
  %10780 = vst [vmem:[%s7 + $0x3c8] sm:$0xff] %v10652
  %10781 = vst [vmem:[%s7 + $0x3d0] sm:$0xff] %v10653
  %10782 = vst [vmem:[%s7 + $0x3d8] sm:$0xff] %v10654
  %10783 = vst [vmem:[%s7 + $0x3e0] sm:$0xff] %v10655
  %10784 = vst [vmem:[%s7 + $0x3e8] sm:$0xff] %v10656
  %10785 = vst [vmem:[%s7 + $0x3f0] sm:$0xff] %v10657
  %10786 = vst [vmem:[%s7 + $0x3f8] sm:$0xff] %v10658
  // Predicated region
  $region30: #{se_block_forward.1} parent=0 // pred_check
    _
  $region31: #{se_block_forward.1} parent=0 // pred_check_branch
    %10788 = sbr.rel (0) target = $region33
  $region32: #{se_block_forward.1} parent=0 // pred_region
    _
  $region33: #{se_block_forward.1} parent=0 // pred_fallthru
    _
  // Predicated region
  $region34: #{se_block_forward.1} parent=0 // pred_check
    _
  $region35: #{se_block_forward.1} parent=0 // pred_check_branch
    %10790 = sbr.rel (0) target = $region37
  $region36: #{se_block_forward.1} parent=0 // pred_region
    _
  $region37: #{se_block_forward.1} parent=0 // pred_fallthru
    _

</llo_original>
